<compile_context>
chip_gen: v7x
topology: tpu7x:2x2x1
jax: 0.10.0
libtpu: 0.0.40
codegen_flags: <defaults>
</compile_context>

<pallas_src>
import jax
import jax.numpy as jnp
from jax.experimental import pallas as pl
from jax.experimental.pallas import tpu as pltpu

_LANE = 128


def _round_up(v, m):
    return ((v + m - 1) // m) * m


def _make_basic_block_kernel(Bblk, H, W, Cp, Cop):
    """Fused BasicBlock kernel for `Bblk` images per grid step.

    Refs:
      x_ref    : (Bblk, H, W, Cp)       lane-padded input block (f32)
      w1_ref   : (9, Cp, Cop)           conv1 weights, BN1 scale folded, bf16
      w2_ref   : (9, Cop, Cop)          conv2 weights, BN2 scale folded, bf16
      bias_ref : (2, Cop)               row 0 = bias1, row 1 = bias2 (f32)
      o_ref    : (Bblk, H, W, Cop)      output block
      xpad_scr : (Bblk, H+2, W+2, Cp)   VMEM scratch, padded conv1 input (bf16)
      mid_scr  : (Bblk, H+2, W+2, Cop)  VMEM scratch, padded conv2 input (bf16)
    """
    M = Bblk * H * W

    def _zero_halo(scr, C):
        # Only the 1-wide halo strips are zeroed; the interior is fully
        # overwritten below. Redone every step so the kernel stays correct
        # when the batch axis is sharded across TensorCores (v7x megacore).
        zr = jnp.zeros((Bblk, 1, W + 2, C), scr.dtype)
        zc = jnp.zeros((Bblk, H, 1, C), scr.dtype)
        scr[:, 0:1, :, :] = zr
        scr[:, H + 1:H + 2, :, :] = zr
        scr[:, 1:H + 1, 0:1, :] = zc
        scr[:, 1:H + 1, W + 1:W + 2, :] = zc

    def _conv3x3(src_scr, w_ref, c_in):
        # 9 accumulated MXU matmuls (no materialized im2col / lane concat).
        acc = jnp.zeros((M, Cop), jnp.float32)
        for t in range(9):
            kh, kw = divmod(t, 3)
            tap = src_scr[:, kh:kh + H, kw:kw + W, :].reshape(M, c_in)
            acc = acc + jnp.dot(tap, w_ref[t],
                                preferred_element_type=jnp.float32)
        return acc

    def kernel(x_ref, w1_ref, w2_ref, bias_ref, o_ref, xpad_scr, mid_scr):
        _zero_halo(xpad_scr, Cp)
        _zero_halo(mid_scr, Cop)

        x = x_ref[...]                                      # (Bblk,H,W,Cp) f32
        xpad_scr[:, 1:H + 1, 1:W + 1, :] = x.astype(xpad_scr.dtype)

        # ---- conv1 (3x3, pad=1) ; BN1 scale folded into w1 ; bias + ReLU ----
        acc1 = _conv3x3(xpad_scr, w1_ref, Cp)               # (M, Cop) f32
        y1 = jnp.maximum(acc1 + bias_ref[0:1, :], 0.0)
        mid_scr[:, 1:H + 1, 1:W + 1, :] = (
            y1.reshape(Bblk, H, W, Cop).astype(mid_scr.dtype))

        # ---- conv2 (3x3, pad=1) ; BN2 scale folded ; bias + residual + ReLU
        acc2 = _conv3x3(mid_scr, w2_ref, Cop)               # (M, Cop) f32
        resid = x.reshape(M, Cp).astype(jnp.float32)        # exact f32 identity
        y2 = jnp.maximum(acc2 + bias_ref[1:2, :] + resid, 0.0)
        o_ref[...] = y2.reshape(Bblk, H, W, Cop).astype(o_ref.dtype)

    return kernel


def fold_bn(gamma, beta, running_mean, running_var, eps=1e-5):
    """Eval-mode BatchNorm folded to per-channel scale/bias."""
    scale = gamma / jnp.sqrt(running_var + eps)
    bias = beta - running_mean * scale
    return scale, bias


def basic_block_forward(x_nchw, params, *, block_batch=None):
    """BasicBlock forward (stride=1, dilation=1, downsample=None)."""
    x = jnp.transpose(x_nchw, (0, 2, 3, 1)).astype(jnp.float32)  # NCHW -> NHWC
    B, H, W, Cin = x.shape

    w1 = params["w1"]  # (3, 3, Cin, Cout)  HWIO
    w2 = params["w2"]  # (3, 3, Cout, Cout) HWIO
    Cout = w1.shape[-1]
    assert w2.shape == (3, 3, Cout, Cout)
    # downsample=None => identity residual requires matching shapes.
    assert Cin == Cout, "BasicBlock with downsample=None needs inplanes==planes"

    Cp = _round_up(Cin, _LANE)     # lane-dense input channels
    Cop = _round_up(Cout, _LANE)   # lane-dense output channels
    assert Cp == Cop

    s1, b1 = fold_bn(*params["bn1"])
    s2, b2 = fold_bn(*params["bn2"])

    # Fold BN scale into the conv weights (one-time wrapper op), pad channels
    # to the lane-dense size, reshape to 9 per-tap (Cin, Cout) matrices
    # (kh-major, matching divmod(t, 3) in the kernel) and cast to bf16.
    def prep_w(w, scale, cin):
        wf = w * scale                                        # fold into out-ch
        wf = jnp.pad(wf, ((0, 0), (0, 0), (0, Cp - cin), (0, Cop - Cout)))
        return wf.reshape(9, Cp, Cop).astype(jnp.bfloat16)

    w1_t = prep_w(w1, s1, Cin)
    w2_t = prep_w(w2, s2, Cout)

    # Single packed bias array (one DMA instead of four tiny ones).
    bias = jnp.stack([
        jnp.pad(b1, (0, Cop - Cout)),
        jnp.pad(b2, (0, Cop - Cout)),
    ]).astype(jnp.float32)                                    # (2, Cop)

    # Lane-dense input block (padded channels are zero, so padded output
    # channels come out zero and are sliced away below).
    x_p = jnp.pad(x, ((0, 0), (0, 0), (0, 0), (0, Cp - Cin)))

    if block_batch is None:
        # Fold batch into the matmul M dimension while keeping >=2 grid steps
        # so both v7x TensorCores get work on the "parallel" batch axis.
        block_batch = max(1, B // 2)
    assert B % block_batch == 0
    grid = (B // block_batch,)

    kernel = _make_basic_block_kernel(block_batch, H, W, Cp, Cop)

    out = pl.pallas_call(
        kernel,
        out_shape=jax.ShapeDtypeStruct((B, H, W, Cop), x.dtype),
        grid=grid,
        in_specs=[
            pl.BlockSpec((block_batch, H, W, Cp), lambda b: (b, 0, 0, 0)),
            pl.BlockSpec((9, Cp, Cop), lambda b: (0, 0, 0)),
            pl.BlockSpec((9, Cop, Cop), lambda b: (0, 0, 0)),
            pl.BlockSpec((2, Cop), lambda b: (0, 0)),
        ],
        out_specs=pl.BlockSpec((block_batch, H, W, Cop),
                               lambda b: (b, 0, 0, 0)),
        scratch_shapes=[
            pltpu.VMEM((block_batch, H + 2, W + 2, Cp), jnp.bfloat16),
            pltpu.VMEM((block_batch, H + 2, W + 2, Cop), jnp.bfloat16),
        ],
        compiler_params=pltpu.CompilerParams(
            dimension_semantics=("parallel",),
            vmem_limit_bytes=32 * 1024 * 1024,
        ),
    )(x_p, w1_t, w2_t, bias)

    out = out[..., :Cout]
    return jnp.transpose(out, (0, 3, 1, 2))  # NHWC -> NCHW


def basic_block_reference(x_nchw, params):
    """Pure-JAX f32 reference (lax conv) for correctness checking."""
    x = jnp.transpose(x_nchw, (0, 2, 3, 1))
    dn = ("NHWC", "HWIO", "NHWC")

    def conv(h, w):
        return jax.lax.conv_general_dilated(
            h, w, window_strides=(1, 1), padding=((1, 1), (1, 1)),
            dimension_numbers=dn,
        )

    s1, b1 = fold_bn(*params["bn1"])
    out = jnp.maximum(conv(x, params["w1"]) * s1 + b1, 0.0)
    s2, b2 = fold_bn(*params["bn2"])
    out = jnp.maximum(conv(out, params["w2"]) * s2 + b2 + x, 0.0)
    return jnp.transpose(out, (0, 3, 1, 2))


def make_params(key, inplanes, planes):
    k1, k2, k3, k4, k5, k6, k7, k8 = jax.random.split(key, 8)
    w1 = 0.1 * jax.random.normal(k1, (3, 3, inplanes, planes), jnp.float32)
    w2 = 0.1 * jax.random.normal(k2, (3, 3, planes, planes), jnp.float32)
    bn1 = (
        1.0 + 0.1 * jax.random.normal(k3, (planes,), jnp.float32),   # gamma
        0.1 * jax.random.normal(k4, (planes,), jnp.float32),         # beta
        0.05 * jax.random.normal(k5, (planes,), jnp.float32),        # running_mean
        1.0 + 0.1 * jnp.abs(jax.random.normal(k6, (planes,))),       # running_var
    )
    bn2 = (
        1.0 + 0.1 * jax.random.normal(k7, (planes,), jnp.float32),
        0.1 * jax.random.normal(k8, (planes,), jnp.float32),
        0.05 * jax.random.normal(k5, (planes,), jnp.float32),
        1.0 + 0.1 * jnp.abs(jax.random.normal(k6, (planes,))),
    )
    return {"w1": w1, "w2": w2, "bn1": bn1, "bn2": bn2}


if __name__ == "__main__":
    # inplanes = planes = 4, stride=1, dilation=1, downsample=None.
    B, C, H, W = 2, 4, 16, 16
    key = jax.random.PRNGKey(0)
    kx, kp = jax.random.split(key)
    x = jax.random.normal(kx, (B, C, H, W), jnp.float32)
    params = make_params(kp, C, C)

    out = basic_block_forward(x, params)
    out = jax.block_until_ready(out)

    ref = basic_block_reference(x, params)
    assert out.shape == (B, C, H, W), out.shape
    # Tolerance loosened vs. the pure-f32 version because the MXU operands
    # (weights + intermediate activation) are deliberately bf16.
    assert jnp.allclose(out, ref, atol=2e-2, rtol=2e-2), "mismatch vs reference"

    print("KERNEL_OK")
</pallas_src>

<mosaic_0001>
module attributes {stable_mosaic.version = 11 : i64} {
  func.func @kernel(%arg0: i32, %arg1: memref<1x16x16x128xf32, #tpu.memory_space<vmem>>, %arg2: memref<9x128x128xbf16, #tpu.memory_space<vmem>>, %arg3: memref<9x128x128xbf16, #tpu.memory_space<vmem>>, %arg4: memref<2x128xf32, #tpu.memory_space<vmem>>, %arg5: memref<1x16x16x128xf32, #tpu.memory_space<vmem>>, %arg6: memref<1x18x18x128xbf16, #tpu.memory_space<vmem>>, %arg7: memref<1x18x18x128xbf16, #tpu.memory_space<vmem>>) attributes {dimension_semantics = [#tpu.dimension_semantics<parallel>], iteration_bounds = array<i64: 2>, scalar_prefetch = 0 : i64, scratch_operands = 2 : i64, tpu.core_type = #tpu.core_type<tc>, window_params = [{transform_indices = @transform_0, window_bounds = array<i64: 1, 16, 16, 128>}, {pipeline_mode = #tpu.pipeline_mode<synchronous>, transform_indices = @transform_1, window_bounds = array<i64: 9, 128, 128>}, {pipeline_mode = #tpu.pipeline_mode<synchronous>, transform_indices = @transform_2, window_bounds = array<i64: 9, 128, 128>}, {pipeline_mode = #tpu.pipeline_mode<synchronous>, transform_indices = @transform_3, window_bounds = array<i64: 2, 128>}, {transform_indices = @transform_4, window_bounds = array<i64: 1, 16, 16, 128>}]} {
    %cst = arith.constant 0.000000e+00 : bf16
    %0 = vector.broadcast %cst : bf16 to vector<1x1x18x128xbf16>
    %cst_0 = arith.constant 0.000000e+00 : bf16
    %1 = vector.broadcast %cst_0 : bf16 to vector<1x16x1x128xbf16>
    %c0 = arith.constant 0 : index
    %c0_1 = arith.constant 0 : index
    %c0_2 = arith.constant 0 : index
    %c0_3 = arith.constant 0 : index
    %2 = vector.load %arg6[%c0, %c0_1, %c0_2, %c0_3] : memref<1x18x18x128xbf16, #tpu.memory_space<vmem>>, vector<1x1x18x128xbf16>
    tpu.vector_store %arg6[%c0, %c0_1, %c0_2, %c0_3], %0 {strides = array<i32>} : memref<1x18x18x128xbf16, #tpu.memory_space<vmem>>, vector<1x1x18x128xbf16>,
    %c0_4 = arith.constant 0 : index
    %c17 = arith.constant 17 : index
    %c0_5 = arith.constant 0 : index
    %c0_6 = arith.constant 0 : index
    %3 = vector.load %arg6[%c0_4, %c17, %c0_5, %c0_6] : memref<1x18x18x128xbf16, #tpu.memory_space<vmem>>, vector<1x1x18x128xbf16>
    tpu.vector_store %arg6[%c0_4, %c17, %c0_5, %c0_6], %0 {strides = array<i32>} : memref<1x18x18x128xbf16, #tpu.memory_space<vmem>>, vector<1x1x18x128xbf16>,
    %c0_7 = arith.constant 0 : index
    %c1 = arith.constant 1 : index
    %c0_8 = arith.constant 0 : index
    %c0_9 = arith.constant 0 : index
    %4 = vector.load %arg6[%c0_7, %c1, %c0_8, %c0_9] : memref<1x18x18x128xbf16, #tpu.memory_space<vmem>>, vector<1x16x1x128xbf16>
    tpu.vector_store %arg6[%c0_7, %c1, %c0_8, %c0_9], %1 {strides = array<i32>} : memref<1x18x18x128xbf16, #tpu.memory_space<vmem>>, vector<1x16x1x128xbf16>,
    %c0_10 = arith.constant 0 : index
    %c1_11 = arith.constant 1 : index
    %c17_12 = arith.constant 17 : index
    %c0_13 = arith.constant 0 : index
    %5 = vector.load %arg6[%c0_10, %c1_11, %c17_12, %c0_13] : memref<1x18x18x128xbf16, #tpu.memory_space<vmem>>, vector<1x16x1x128xbf16>
    tpu.vector_store %arg6[%c0_10, %c1_11, %c17_12, %c0_13], %1 {strides = array<i32>} : memref<1x18x18x128xbf16, #tpu.memory_space<vmem>>, vector<1x16x1x128xbf16>,
    %cst_14 = arith.constant 0.000000e+00 : bf16
    %6 = vector.broadcast %cst_14 : bf16 to vector<1x1x18x128xbf16>
    %cst_15 = arith.constant 0.000000e+00 : bf16
    %7 = vector.broadcast %cst_15 : bf16 to vector<1x16x1x128xbf16>
    %c0_16 = arith.constant 0 : index
    %c0_17 = arith.constant 0 : index
    %c0_18 = arith.constant 0 : index
    %c0_19 = arith.constant 0 : index
    %8 = vector.load %arg7[%c0_16, %c0_17, %c0_18, %c0_19] : memref<1x18x18x128xbf16, #tpu.memory_space<vmem>>, vector<1x1x18x128xbf16>
    tpu.vector_store %arg7[%c0_16, %c0_17, %c0_18, %c0_19], %6 {strides = array<i32>} : memref<1x18x18x128xbf16, #tpu.memory_space<vmem>>, vector<1x1x18x128xbf16>,
    %c0_20 = arith.constant 0 : index
    %c17_21 = arith.constant 17 : index
    %c0_22 = arith.constant 0 : index
    %c0_23 = arith.constant 0 : index
    %9 = vector.load %arg7[%c0_20, %c17_21, %c0_22, %c0_23] : memref<1x18x18x128xbf16, #tpu.memory_space<vmem>>, vector<1x1x18x128xbf16>
    tpu.vector_store %arg7[%c0_20, %c17_21, %c0_22, %c0_23], %6 {strides = array<i32>} : memref<1x18x18x128xbf16, #tpu.memory_space<vmem>>, vector<1x1x18x128xbf16>,
    %c0_24 = arith.constant 0 : index
    %c1_25 = arith.constant 1 : index
    %c0_26 = arith.constant 0 : index
    %c0_27 = arith.constant 0 : index
    %10 = vector.load %arg7[%c0_24, %c1_25, %c0_26, %c0_27] : memref<1x18x18x128xbf16, #tpu.memory_space<vmem>>, vector<1x16x1x128xbf16>
    tpu.vector_store %arg7[%c0_24, %c1_25, %c0_26, %c0_27], %7 {strides = array<i32>} : memref<1x18x18x128xbf16, #tpu.memory_space<vmem>>, vector<1x16x1x128xbf16>,
    %c0_28 = arith.constant 0 : index
    %c1_29 = arith.constant 1 : index
    %c17_30 = arith.constant 17 : index
    %c0_31 = arith.constant 0 : index
    %11 = vector.load %arg7[%c0_28, %c1_29, %c17_30, %c0_31] : memref<1x18x18x128xbf16, #tpu.memory_space<vmem>>, vector<1x16x1x128xbf16>
    tpu.vector_store %arg7[%c0_28, %c1_29, %c17_30, %c0_31], %7 {strides = array<i32>} : memref<1x18x18x128xbf16, #tpu.memory_space<vmem>>, vector<1x16x1x128xbf16>,
    %c0_32 = arith.constant 0 : index
    %c0_33 = arith.constant 0 : index
    %c0_34 = arith.constant 0 : index
    %c0_35 = arith.constant 0 : index
    %12 = vector.load %arg1[%c0_32, %c0_33, %c0_34, %c0_35] : memref<1x16x16x128xf32, #tpu.memory_space<vmem>>, vector<1x16x16x128xf32>
    %13 = arith.truncf %12 : vector<1x16x16x128xf32> to vector<1x16x16x128xbf16>
    %c0_36 = arith.constant 0 : index
    %c1_37 = arith.constant 1 : index
    %c1_38 = arith.constant 1 : index
    %c0_39 = arith.constant 0 : index
    %14 = vector.load %arg6[%c0_36, %c1_37, %c1_38, %c0_39] : memref<1x18x18x128xbf16, #tpu.memory_space<vmem>>, vector<1x16x16x128xbf16>
    tpu.vector_store %arg6[%c0_36, %c1_37, %c1_38, %c0_39], %13 {strides = array<i32>} : memref<1x18x18x128xbf16, #tpu.memory_space<vmem>>, vector<1x16x16x128xbf16>,
    %cst_40 = arith.constant 0.000000e+00 : f32
    %15 = vector.broadcast %cst_40 : f32 to vector<256x128xf32>
    %c0_41 = arith.constant 0 : index
    %c0_42 = arith.constant 0 : index
    %c0_43 = arith.constant 0 : index
    %c0_44 = arith.constant 0 : index
    %16 = vector.load %arg6[%c0_41, %c0_42, %c0_43, %c0_44] : memref<1x18x18x128xbf16, #tpu.memory_space<vmem>>, vector<1x16x16x128xbf16>
    %17 = vector.shape_cast %16 : vector<1x16x16x128xbf16> to vector<256x128xbf16>
    %c0_45 = arith.constant 0 : index
    %c0_46 = arith.constant 0 : index
    %c0_47 = arith.constant 0 : index
    %18 = vector.load %arg2[%c0_45, %c0_46, %c0_47] : memref<9x128x128xbf16, #tpu.memory_space<vmem>>, vector<1x128x128xbf16>
    %19 = vector.shape_cast %18 : vector<1x128x128xbf16> to vector<128x128xbf16>
    %cst_48 = arith.constant dense<0.000000e+00> : vector<256x128xf32>
    %20 = tpu.matmul %17, %19, %cst_48 {dimension_numbers = #tpu.dot_dimension_numbers<[1], [0], [0], [1], [0, 0, 1, 1], [], []>} : vector<256x128xbf16>, vector<128x128xbf16>, vector<256x128xf32> -> vector<256x128xf32>
    %21 = arith.addf %15, %20 : vector<256x128xf32>
    %c0_49 = arith.constant 0 : index
    %c0_50 = arith.constant 0 : index
    %c1_51 = arith.constant 1 : index
    %c0_52 = arith.constant 0 : index
    %22 = vector.load %arg6[%c0_49, %c0_50, %c1_51, %c0_52] : memref<1x18x18x128xbf16, #tpu.memory_space<vmem>>, vector<1x16x16x128xbf16>
    %23 = vector.shape_cast %22 : vector<1x16x16x128xbf16> to vector<256x128xbf16>
    %c1_53 = arith.constant 1 : index
    %c0_54 = arith.constant 0 : index
    %c0_55 = arith.constant 0 : index
    %24 = vector.load %arg2[%c1_53, %c0_54, %c0_55] : memref<9x128x128xbf16, #tpu.memory_space<vmem>>, vector<1x128x128xbf16>
    %25 = vector.shape_cast %24 : vector<1x128x128xbf16> to vector<128x128xbf16>
    %cst_56 = arith.constant dense<0.000000e+00> : vector<256x128xf32>
    %26 = tpu.matmul %23, %25, %cst_56 {dimension_numbers = #tpu.dot_dimension_numbers<[1], [0], [0], [1], [0, 0, 1, 1], [], []>} : vector<256x128xbf16>, vector<128x128xbf16>, vector<256x128xf32> -> vector<256x128xf32>
    %27 = arith.addf %21, %26 : vector<256x128xf32>
    %c0_57 = arith.constant 0 : index
    %c0_58 = arith.constant 0 : index
    %c2 = arith.constant 2 : index
    %c0_59 = arith.constant 0 : index
    %28 = vector.load %arg6[%c0_57, %c0_58, %c2, %c0_59] : memref<1x18x18x128xbf16, #tpu.memory_space<vmem>>, vector<1x16x16x128xbf16>
    %29 = vector.shape_cast %28 : vector<1x16x16x128xbf16> to vector<256x128xbf16>
    %c2_60 = arith.constant 2 : index
    %c0_61 = arith.constant 0 : index
    %c0_62 = arith.constant 0 : index
    %30 = vector.load %arg2[%c2_60, %c0_61, %c0_62] : memref<9x128x128xbf16, #tpu.memory_space<vmem>>, vector<1x128x128xbf16>
    %31 = vector.shape_cast %30 : vector<1x128x128xbf16> to vector<128x128xbf16>
    %cst_63 = arith.constant dense<0.000000e+00> : vector<256x128xf32>
    %32 = tpu.matmul %29, %31, %cst_63 {dimension_numbers = #tpu.dot_dimension_numbers<[1], [0], [0], [1], [0, 0, 1, 1], [], []>} : vector<256x128xbf16>, vector<128x128xbf16>, vector<256x128xf32> -> vector<256x128xf32>
    %33 = arith.addf %27, %32 : vector<256x128xf32>
    %c0_64 = arith.constant 0 : index
    %c1_65 = arith.constant 1 : index
    %c0_66 = arith.constant 0 : index
    %c0_67 = arith.constant 0 : index
    %34 = vector.load %arg6[%c0_64, %c1_65, %c0_66, %c0_67] : memref<1x18x18x128xbf16, #tpu.memory_space<vmem>>, vector<1x16x16x128xbf16>
    %35 = vector.shape_cast %34 : vector<1x16x16x128xbf16> to vector<256x128xbf16>
    %c3 = arith.constant 3 : index
    %c0_68 = arith.constant 0 : index
    %c0_69 = arith.constant 0 : index
    %36 = vector.load %arg2[%c3, %c0_68, %c0_69] : memref<9x128x128xbf16, #tpu.memory_space<vmem>>, vector<1x128x128xbf16>
    %37 = vector.shape_cast %36 : vector<1x128x128xbf16> to vector<128x128xbf16>
    %cst_70 = arith.constant dense<0.000000e+00> : vector<256x128xf32>
    %38 = tpu.matmul %35, %37, %cst_70 {dimension_numbers = #tpu.dot_dimension_numbers<[1], [0], [0], [1], [0, 0, 1, 1], [], []>} : vector<256x128xbf16>, vector<128x128xbf16>, vector<256x128xf32> -> vector<256x128xf32>
    %39 = arith.addf %33, %38 : vector<256x128xf32>
    %c0_71 = arith.constant 0 : index
    %c1_72 = arith.constant 1 : index
    %c1_73 = arith.constant 1 : index
    %c0_74 = arith.constant 0 : index
    %40 = vector.load %arg6[%c0_71, %c1_72, %c1_73, %c0_74] : memref<1x18x18x128xbf16, #tpu.memory_space<vmem>>, vector<1x16x16x128xbf16>
    %41 = vector.shape_cast %40 : vector<1x16x16x128xbf16> to vector<256x128xbf16>
    %c4 = arith.constant 4 : index
    %c0_75 = arith.constant 0 : index
    %c0_76 = arith.constant 0 : index
    %42 = vector.load %arg2[%c4, %c0_75, %c0_76] : memref<9x128x128xbf16, #tpu.memory_space<vmem>>, vector<1x128x128xbf16>
    %43 = vector.shape_cast %42 : vector<1x128x128xbf16> to vector<128x128xbf16>
    %cst_77 = arith.constant dense<0.000000e+00> : vector<256x128xf32>
    %44 = tpu.matmul %41, %43, %cst_77 {dimension_numbers = #tpu.dot_dimension_numbers<[1], [0], [0], [1], [0, 0, 1, 1], [], []>} : vector<256x128xbf16>, vector<128x128xbf16>, vector<256x128xf32> -> vector<256x128xf32>
    %45 = arith.addf %39, %44 : vector<256x128xf32>
    %c0_78 = arith.constant 0 : index
    %c1_79 = arith.constant 1 : index
    %c2_80 = arith.constant 2 : index
    %c0_81 = arith.constant 0 : index
    %46 = vector.load %arg6[%c0_78, %c1_79, %c2_80, %c0_81] : memref<1x18x18x128xbf16, #tpu.memory_space<vmem>>, vector<1x16x16x128xbf16>
    %47 = vector.shape_cast %46 : vector<1x16x16x128xbf16> to vector<256x128xbf16>
    %c5 = arith.constant 5 : index
    %c0_82 = arith.constant 0 : index
    %c0_83 = arith.constant 0 : index
    %48 = vector.load %arg2[%c5, %c0_82, %c0_83] : memref<9x128x128xbf16, #tpu.memory_space<vmem>>, vector<1x128x128xbf16>
    %49 = vector.shape_cast %48 : vector<1x128x128xbf16> to vector<128x128xbf16>
    %cst_84 = arith.constant dense<0.000000e+00> : vector<256x128xf32>
    %50 = tpu.matmul %47, %49, %cst_84 {dimension_numbers = #tpu.dot_dimension_numbers<[1], [0], [0], [1], [0, 0, 1, 1], [], []>} : vector<256x128xbf16>, vector<128x128xbf16>, vector<256x128xf32> -> vector<256x128xf32>
    %51 = arith.addf %45, %50 : vector<256x128xf32>
    %c0_85 = arith.constant 0 : index
    %c2_86 = arith.constant 2 : index
    %c0_87 = arith.constant 0 : index
    %c0_88 = arith.constant 0 : index
    %52 = vector.load %arg6[%c0_85, %c2_86, %c0_87, %c0_88] : memref<1x18x18x128xbf16, #tpu.memory_space<vmem>>, vector<1x16x16x128xbf16>
    %53 = vector.shape_cast %52 : vector<1x16x16x128xbf16> to vector<256x128xbf16>
    %c6 = arith.constant 6 : index
    %c0_89 = arith.constant 0 : index
    %c0_90 = arith.constant 0 : index
    %54 = vector.load %arg2[%c6, %c0_89, %c0_90] : memref<9x128x128xbf16, #tpu.memory_space<vmem>>, vector<1x128x128xbf16>
    %55 = vector.shape_cast %54 : vector<1x128x128xbf16> to vector<128x128xbf16>
    %cst_91 = arith.constant dense<0.000000e+00> : vector<256x128xf32>
    %56 = tpu.matmul %53, %55, %cst_91 {dimension_numbers = #tpu.dot_dimension_numbers<[1], [0], [0], [1], [0, 0, 1, 1], [], []>} : vector<256x128xbf16>, vector<128x128xbf16>, vector<256x128xf32> -> vector<256x128xf32>
    %57 = arith.addf %51, %56 : vector<256x128xf32>
    %c0_92 = arith.constant 0 : index
    %c2_93 = arith.constant 2 : index
    %c1_94 = arith.constant 1 : index
    %c0_95 = arith.constant 0 : index
    %58 = vector.load %arg6[%c0_92, %c2_93, %c1_94, %c0_95] : memref<1x18x18x128xbf16, #tpu.memory_space<vmem>>, vector<1x16x16x128xbf16>
    %59 = vector.shape_cast %58 : vector<1x16x16x128xbf16> to vector<256x128xbf16>
    %c7 = arith.constant 7 : index
    %c0_96 = arith.constant 0 : index
    %c0_97 = arith.constant 0 : index
    %60 = vector.load %arg2[%c7, %c0_96, %c0_97] : memref<9x128x128xbf16, #tpu.memory_space<vmem>>, vector<1x128x128xbf16>
    %61 = vector.shape_cast %60 : vector<1x128x128xbf16> to vector<128x128xbf16>
    %cst_98 = arith.constant dense<0.000000e+00> : vector<256x128xf32>
    %62 = tpu.matmul %59, %61, %cst_98 {dimension_numbers = #tpu.dot_dimension_numbers<[1], [0], [0], [1], [0, 0, 1, 1], [], []>} : vector<256x128xbf16>, vector<128x128xbf16>, vector<256x128xf32> -> vector<256x128xf32>
    %63 = arith.addf %57, %62 : vector<256x128xf32>
    %c0_99 = arith.constant 0 : index
    %c2_100 = arith.constant 2 : index
    %c2_101 = arith.constant 2 : index
    %c0_102 = arith.constant 0 : index
    %64 = vector.load %arg6[%c0_99, %c2_100, %c2_101, %c0_102] : memref<1x18x18x128xbf16, #tpu.memory_space<vmem>>, vector<1x16x16x128xbf16>
    %65 = vector.shape_cast %64 : vector<1x16x16x128xbf16> to vector<256x128xbf16>
    %c8 = arith.constant 8 : index
    %c0_103 = arith.constant 0 : index
    %c0_104 = arith.constant 0 : index
    %66 = vector.load %arg2[%c8, %c0_103, %c0_104] : memref<9x128x128xbf16, #tpu.memory_space<vmem>>, vector<1x128x128xbf16>
    %67 = vector.shape_cast %66 : vector<1x128x128xbf16> to vector<128x128xbf16>
    %cst_105 = arith.constant dense<0.000000e+00> : vector<256x128xf32>
    %68 = tpu.matmul %65, %67, %cst_105 {dimension_numbers = #tpu.dot_dimension_numbers<[1], [0], [0], [1], [0, 0, 1, 1], [], []>} : vector<256x128xbf16>, vector<128x128xbf16>, vector<256x128xf32> -> vector<256x128xf32>
    %69 = arith.addf %63, %68 : vector<256x128xf32>
    %c0_106 = arith.constant 0 : index
    %c0_107 = arith.constant 0 : index
    %70 = vector.load %arg4[%c0_106, %c0_107] : memref<2x128xf32, #tpu.memory_space<vmem>>, vector<1x128xf32>
    %71 = vector.broadcast %70 : vector<1x128xf32> to vector<256x128xf32>
    %72 = arith.addf %69, %71 : vector<256x128xf32>
    %cst_108 = arith.constant 0.000000e+00 : f32
    %73 = vector.broadcast %cst_108 : f32 to vector<256x128xf32>
    %74 = arith.maximumf %72, %73 : vector<256x128xf32>
    %75 = vector.shape_cast %74 : vector<256x128xf32> to vector<1x16x16x128xf32>
    %76 = arith.truncf %75 : vector<1x16x16x128xf32> to vector<1x16x16x128xbf16>
    %c0_109 = arith.constant 0 : index
    %c1_110 = arith.constant 1 : index
    %c1_111 = arith.constant 1 : index
    %c0_112 = arith.constant 0 : index
    %77 = vector.load %arg7[%c0_109, %c1_110, %c1_111, %c0_112] : memref<1x18x18x128xbf16, #tpu.memory_space<vmem>>, vector<1x16x16x128xbf16>
    tpu.vector_store %arg7[%c0_109, %c1_110, %c1_111, %c0_112], %76 {strides = array<i32>} : memref<1x18x18x128xbf16, #tpu.memory_space<vmem>>, vector<1x16x16x128xbf16>,
    %cst_113 = arith.constant 0.000000e+00 : f32
    %78 = vector.broadcast %cst_113 : f32 to vector<256x128xf32>
    %c0_114 = arith.constant 0 : index
    %c0_115 = arith.constant 0 : index
    %c0_116 = arith.constant 0 : index
    %c0_117 = arith.constant 0 : index
    %79 = vector.load %arg7[%c0_114, %c0_115, %c0_116, %c0_117] : memref<1x18x18x128xbf16, #tpu.memory_space<vmem>>, vector<1x16x16x128xbf16>
    %80 = vector.shape_cast %79 : vector<1x16x16x128xbf16> to vector<256x128xbf16>
    %c0_118 = arith.constant 0 : index
    %c0_119 = arith.constant 0 : index
    %c0_120 = arith.constant 0 : index
    %81 = vector.load %arg3[%c0_118, %c0_119, %c0_120] : memref<9x128x128xbf16, #tpu.memory_space<vmem>>, vector<1x128x128xbf16>
    %82 = vector.shape_cast %81 : vector<1x128x128xbf16> to vector<128x128xbf16>
    %cst_121 = arith.constant dense<0.000000e+00> : vector<256x128xf32>
    %83 = tpu.matmul %80, %82, %cst_121 {dimension_numbers = #tpu.dot_dimension_numbers<[1], [0], [0], [1], [0, 0, 1, 1], [], []>} : vector<256x128xbf16>, vector<128x128xbf16>, vector<256x128xf32> -> vector<256x128xf32>
    %84 = arith.addf %78, %83 : vector<256x128xf32>
    %c0_122 = arith.constant 0 : index
    %c0_123 = arith.constant 0 : index
    %c1_124 = arith.constant 1 : index
    %c0_125 = arith.constant 0 : index
    %85 = vector.load %arg7[%c0_122, %c0_123, %c1_124, %c0_125] : memref<1x18x18x128xbf16, #tpu.memory_space<vmem>>, vector<1x16x16x128xbf16>
    %86 = vector.shape_cast %85 : vector<1x16x16x128xbf16> to vector<256x128xbf16>
    %c1_126 = arith.constant 1 : index
    %c0_127 = arith.constant 0 : index
    %c0_128 = arith.constant 0 : index
    %87 = vector.load %arg3[%c1_126, %c0_127, %c0_128] : memref<9x128x128xbf16, #tpu.memory_space<vmem>>, vector<1x128x128xbf16>
    %88 = vector.shape_cast %87 : vector<1x128x128xbf16> to vector<128x128xbf16>
    %cst_129 = arith.constant dense<0.000000e+00> : vector<256x128xf32>
    %89 = tpu.matmul %86, %88, %cst_129 {dimension_numbers = #tpu.dot_dimension_numbers<[1], [0], [0], [1], [0, 0, 1, 1], [], []>} : vector<256x128xbf16>, vector<128x128xbf16>, vector<256x128xf32> -> vector<256x128xf32>
    %90 = arith.addf %84, %89 : vector<256x128xf32>
    %c0_130 = arith.constant 0 : index
    %c0_131 = arith.constant 0 : index
    %c2_132 = arith.constant 2 : index
    %c0_133 = arith.constant 0 : index
    %91 = vector.load %arg7[%c0_130, %c0_131, %c2_132, %c0_133] : memref<1x18x18x128xbf16, #tpu.memory_space<vmem>>, vector<1x16x16x128xbf16>
    %92 = vector.shape_cast %91 : vector<1x16x16x128xbf16> to vector<256x128xbf16>
    %c2_134 = arith.constant 2 : index
    %c0_135 = arith.constant 0 : index
    %c0_136 = arith.constant 0 : index
    %93 = vector.load %arg3[%c2_134, %c0_135, %c0_136] : memref<9x128x128xbf16, #tpu.memory_space<vmem>>, vector<1x128x128xbf16>
    %94 = vector.shape_cast %93 : vector<1x128x128xbf16> to vector<128x128xbf16>
    %cst_137 = arith.constant dense<0.000000e+00> : vector<256x128xf32>
    %95 = tpu.matmul %92, %94, %cst_137 {dimension_numbers = #tpu.dot_dimension_numbers<[1], [0], [0], [1], [0, 0, 1, 1], [], []>} : vector<256x128xbf16>, vector<128x128xbf16>, vector<256x128xf32> -> vector<256x128xf32>
    %96 = arith.addf %90, %95 : vector<256x128xf32>
    %c0_138 = arith.constant 0 : index
    %c1_139 = arith.constant 1 : index
    %c0_140 = arith.constant 0 : index
    %c0_141 = arith.constant 0 : index
    %97 = vector.load %arg7[%c0_138, %c1_139, %c0_140, %c0_141] : memref<1x18x18x128xbf16, #tpu.memory_space<vmem>>, vector<1x16x16x128xbf16>
    %98 = vector.shape_cast %97 : vector<1x16x16x128xbf16> to vector<256x128xbf16>
    %c3_142 = arith.constant 3 : index
    %c0_143 = arith.constant 0 : index
    %c0_144 = arith.constant 0 : index
    %99 = vector.load %arg3[%c3_142, %c0_143, %c0_144] : memref<9x128x128xbf16, #tpu.memory_space<vmem>>, vector<1x128x128xbf16>
    %100 = vector.shape_cast %99 : vector<1x128x128xbf16> to vector<128x128xbf16>
    %cst_145 = arith.constant dense<0.000000e+00> : vector<256x128xf32>
    %101 = tpu.matmul %98, %100, %cst_145 {dimension_numbers = #tpu.dot_dimension_numbers<[1], [0], [0], [1], [0, 0, 1, 1], [], []>} : vector<256x128xbf16>, vector<128x128xbf16>, vector<256x128xf32> -> vector<256x128xf32>
    %102 = arith.addf %96, %101 : vector<256x128xf32>
    %c0_146 = arith.constant 0 : index
    %c1_147 = arith.constant 1 : index
    %c1_148 = arith.constant 1 : index
    %c0_149 = arith.constant 0 : index
    %103 = vector.load %arg7[%c0_146, %c1_147, %c1_148, %c0_149] : memref<1x18x18x128xbf16, #tpu.memory_space<vmem>>, vector<1x16x16x128xbf16>
    %104 = vector.shape_cast %103 : vector<1x16x16x128xbf16> to vector<256x128xbf16>
    %c4_150 = arith.constant 4 : index
    %c0_151 = arith.constant 0 : index
    %c0_152 = arith.constant 0 : index
    %105 = vector.load %arg3[%c4_150, %c0_151, %c0_152] : memref<9x128x128xbf16, #tpu.memory_space<vmem>>, vector<1x128x128xbf16>
    %106 = vector.shape_cast %105 : vector<1x128x128xbf16> to vector<128x128xbf16>
    %cst_153 = arith.constant dense<0.000000e+00> : vector<256x128xf32>
    %107 = tpu.matmul %104, %106, %cst_153 {dimension_numbers = #tpu.dot_dimension_numbers<[1], [0], [0], [1], [0, 0, 1, 1], [], []>} : vector<256x128xbf16>, vector<128x128xbf16>, vector<256x128xf32> -> vector<256x128xf32>
    %108 = arith.addf %102, %107 : vector<256x128xf32>
    %c0_154 = arith.constant 0 : index
    %c1_155 = arith.constant 1 : index
    %c2_156 = arith.constant 2 : index
    %c0_157 = arith.constant 0 : index
    %109 = vector.load %arg7[%c0_154, %c1_155, %c2_156, %c0_157] : memref<1x18x18x128xbf16, #tpu.memory_space<vmem>>, vector<1x16x16x128xbf16>
    %110 = vector.shape_cast %109 : vector<1x16x16x128xbf16> to vector<256x128xbf16>
    %c5_158 = arith.constant 5 : index
    %c0_159 = arith.constant 0 : index
    %c0_160 = arith.constant 0 : index
    %111 = vector.load %arg3[%c5_158, %c0_159, %c0_160] : memref<9x128x128xbf16, #tpu.memory_space<vmem>>, vector<1x128x128xbf16>
    %112 = vector.shape_cast %111 : vector<1x128x128xbf16> to vector<128x128xbf16>
    %cst_161 = arith.constant dense<0.000000e+00> : vector<256x128xf32>
    %113 = tpu.matmul %110, %112, %cst_161 {dimension_numbers = #tpu.dot_dimension_numbers<[1], [0], [0], [1], [0, 0, 1, 1], [], []>} : vector<256x128xbf16>, vector<128x128xbf16>, vector<256x128xf32> -> vector<256x128xf32>
    %114 = arith.addf %108, %113 : vector<256x128xf32>
    %c0_162 = arith.constant 0 : index
    %c2_163 = arith.constant 2 : index
    %c0_164 = arith.constant 0 : index
    %c0_165 = arith.constant 0 : index
    %115 = vector.load %arg7[%c0_162, %c2_163, %c0_164, %c0_165] : memref<1x18x18x128xbf16, #tpu.memory_space<vmem>>, vector<1x16x16x128xbf16>
    %116 = vector.shape_cast %115 : vector<1x16x16x128xbf16> to vector<256x128xbf16>
    %c6_166 = arith.constant 6 : index
    %c0_167 = arith.constant 0 : index
    %c0_168 = arith.constant 0 : index
    %117 = vector.load %arg3[%c6_166, %c0_167, %c0_168] : memref<9x128x128xbf16, #tpu.memory_space<vmem>>, vector<1x128x128xbf16>
    %118 = vector.shape_cast %117 : vector<1x128x128xbf16> to vector<128x128xbf16>
    %cst_169 = arith.constant dense<0.000000e+00> : vector<256x128xf32>
    %119 = tpu.matmul %116, %118, %cst_169 {dimension_numbers = #tpu.dot_dimension_numbers<[1], [0], [0], [1], [0, 0, 1, 1], [], []>} : vector<256x128xbf16>, vector<128x128xbf16>, vector<256x128xf32> -> vector<256x128xf32>
    %120 = arith.addf %114, %119 : vector<256x128xf32>
    %c0_170 = arith.constant 0 : index
    %c2_171 = arith.constant 2 : index
    %c1_172 = arith.constant 1 : index
    %c0_173 = arith.constant 0 : index
    %121 = vector.load %arg7[%c0_170, %c2_171, %c1_172, %c0_173] : memref<1x18x18x128xbf16, #tpu.memory_space<vmem>>, vector<1x16x16x128xbf16>
    %122 = vector.shape_cast %121 : vector<1x16x16x128xbf16> to vector<256x128xbf16>
    %c7_174 = arith.constant 7 : index
    %c0_175 = arith.constant 0 : index
    %c0_176 = arith.constant 0 : index
    %123 = vector.load %arg3[%c7_174, %c0_175, %c0_176] : memref<9x128x128xbf16, #tpu.memory_space<vmem>>, vector<1x128x128xbf16>
    %124 = vector.shape_cast %123 : vector<1x128x128xbf16> to vector<128x128xbf16>
    %cst_177 = arith.constant dense<0.000000e+00> : vector<256x128xf32>
    %125 = tpu.matmul %122, %124, %cst_177 {dimension_numbers = #tpu.dot_dimension_numbers<[1], [0], [0], [1], [0, 0, 1, 1], [], []>} : vector<256x128xbf16>, vector<128x128xbf16>, vector<256x128xf32> -> vector<256x128xf32>
    %126 = arith.addf %120, %125 : vector<256x128xf32>
    %c0_178 = arith.constant 0 : index
    %c2_179 = arith.constant 2 : index
    %c2_180 = arith.constant 2 : index
    %c0_181 = arith.constant 0 : index
    %127 = vector.load %arg7[%c0_178, %c2_179, %c2_180, %c0_181] : memref<1x18x18x128xbf16, #tpu.memory_space<vmem>>, vector<1x16x16x128xbf16>
    %128 = vector.shape_cast %127 : vector<1x16x16x128xbf16> to vector<256x128xbf16>
    %c8_182 = arith.constant 8 : index
    %c0_183 = arith.constant 0 : index
    %c0_184 = arith.constant 0 : index
    %129 = vector.load %arg3[%c8_182, %c0_183, %c0_184] : memref<9x128x128xbf16, #tpu.memory_space<vmem>>, vector<1x128x128xbf16>
    %130 = vector.shape_cast %129 : vector<1x128x128xbf16> to vector<128x128xbf16>
    %cst_185 = arith.constant dense<0.000000e+00> : vector<256x128xf32>
    %131 = tpu.matmul %128, %130, %cst_185 {dimension_numbers = #tpu.dot_dimension_numbers<[1], [0], [0], [1], [0, 0, 1, 1], [], []>} : vector<256x128xbf16>, vector<128x128xbf16>, vector<256x128xf32> -> vector<256x128xf32>
    %132 = arith.addf %126, %131 : vector<256x128xf32>
    %133 = vector.shape_cast %12 : vector<1x16x16x128xf32> to vector<256x128xf32>
    %c1_186 = arith.constant 1 : index
    %c0_187 = arith.constant 0 : index
    %134 = vector.load %arg4[%c1_186, %c0_187] : memref<2x128xf32, #tpu.memory_space<vmem>>, vector<1x128xf32>
    %135 = vector.broadcast %134 : vector<1x128xf32> to vector<256x128xf32>
    %136 = arith.addf %132, %135 : vector<256x128xf32>
    %137 = arith.addf %136, %133 : vector<256x128xf32>
    %cst_188 = arith.constant 0.000000e+00 : f32
    %138 = vector.broadcast %cst_188 : f32 to vector<256x128xf32>
    %139 = arith.maximumf %137, %138 : vector<256x128xf32>
    %140 = vector.shape_cast %139 : vector<256x128xf32> to vector<1x16x16x128xf32>
    %c0_189 = arith.constant 0 : index
    %c0_190 = arith.constant 0 : index
    %c0_191 = arith.constant 0 : index
    %c0_192 = arith.constant 0 : index
    %141 = vector.load %arg5[%c0_189, %c0_190, %c0_191, %c0_192] : memref<1x16x16x128xf32, #tpu.memory_space<vmem>>, vector<1x16x16x128xf32>
    tpu.vector_store %arg5[%c0_189, %c0_190, %c0_191, %c0_192], %140 {strides = array<i32>} : memref<1x16x16x128xf32, #tpu.memory_space<vmem>>, vector<1x16x16x128xf32>,
    return
  }
  func.func @transform_0(%arg0: i32) -> (i32, i32, i32, i32) {
    %c0_i32 = arith.constant 0 : i32
    %c0_i32_0 = arith.constant 0 : i32
    %c0_i32_1 = arith.constant 0 : i32
    %c0_i32_2 = arith.constant 0 : i32
    return %arg0, %c0_i32, %c0_i32_0, %c0_i32_1 : i32, i32, i32, i32
  }
  func.func @transform_1(%arg0: i32) -> (i32, i32, i32) {
    %c0_i32 = arith.constant 0 : i32
    %c0_i32_0 = arith.constant 0 : i32
    %c0_i32_1 = arith.constant 0 : i32
    %c0_i32_2 = arith.constant 0 : i32
    return %c0_i32, %c0_i32_0, %c0_i32_1 : i32, i32, i32
  }
  func.func @transform_2(%arg0: i32) -> (i32, i32, i32) {
    %c0_i32 = arith.constant 0 : i32
    %c0_i32_0 = arith.constant 0 : i32
    %c0_i32_1 = arith.constant 0 : i32
    %c0_i32_2 = arith.constant 0 : i32
    return %c0_i32, %c0_i32_0, %c0_i32_1 : i32, i32, i32
  }
  func.func @transform_3(%arg0: i32) -> (i32, i32) {
    %c0_i32 = arith.constant 0 : i32
    %c0_i32_0 = arith.constant 0 : i32
    %c0_i32_1 = arith.constant 0 : i32
    return %c0_i32, %c0_i32_0 : i32, i32
  }
  func.func @transform_4(%arg0: i32) -> (i32, i32, i32, i32) {
    %c0_i32 = arith.constant 0 : i32
    %c0_i32_0 = arith.constant 0 : i32
    %c0_i32_1 = arith.constant 0 : i32
    %c0_i32_2 = arith.constant 0 : i32
    return %arg0, %c0_i32, %c0_i32_0, %c0_i32_1 : i32, i32, i32, i32
  }
}

</mosaic_0001>

<llo_original>
// kernel: tpu_custom_call.1
$region0: #{tpu_custom_call.1}
  #allocation0 [shape = 'u32[]', space=smem, size = 0x4, offset = 0x4, fixed_abs, tag = 'smem constant byte address 0x4 - core index']
  #allocation1 [shape = 'u32[144,128]{1,0:T(1,128)}', space=vmem, size = 0x12000, scoped, tag = 'internal scratch']
  #allocation2 [shape = 'bf16[1,18,18,128]{3,2,1,0:T(8,128)(2,1)}', space=vmem, size = 0x1b000, scoped, tag = 'scratch operand']
  #allocation3 [shape = 'bf16[1,18,18,128]{3,2,1,0:T(8,128)(2,1)}', space=vmem, size = 0x1b000, scoped, tag = 'scratch operand']
  %s0 = inlined_call_operand.hbm [shape: f32[2,16,16,128], index: 0, kind: input, shape index: {}]
  %s1 = inlined_call_operand.hbm [shape: bf16[9,128,128], index: 1, kind: input, shape index: {}]
  %s2 = inlined_call_operand.hbm [shape: bf16[9,128,128], index: 2, kind: input, shape index: {}]
  %s3 = inlined_call_operand.vmem [shape: f32[2,128], index: 3, kind: input, shape index: {}]
  %s4 = inlined_call_operand.hbm [shape: f32[2,16,16,128], index: 4, kind: output, shape index: {}]
  %s5 = sld [smem:[#allocation0]]
  $region61: #{tpu_custom_call.1} parent=0
    _
  %s7 = ssub.s32 1, %s5
  %s8 = scalar_select 0, %s7, %s5
  $region1: #{tpu_custom_call.1} parent=0
    #allocation4 [shape = 'u8[262144]{0}', space=vmem, size = 0x40000, scoped, tag = 'input window, operand 0']
    #allocation5 [shape = 's32[2]{0}', space=sflag, size = 0x8, scoped, tag = 'scoped memory for tpu_custom_call.1']
    #allocation6 [shape = 's32[2]{0}', space=sflag, size = 0x8, scoped, tag = 'scoped memory for tpu_custom_call.1']
    #allocation7 [shape = 'u8[294912]{0}', space=vmem, size = 0x48000, scoped, tag = 'input window, operand 1, single buffered']
    #allocation8 [shape = 's32[1]{0}', space=sflag, size = 0x4, scoped, tag = 'scoped memory for tpu_custom_call.1']
    #allocation9 [shape = 'u8[294912]{0}', space=vmem, size = 0x48000, scoped, tag = 'input window, operand 2, single buffered']
    #allocation10 [shape = 'u8[262144]{0}', space=vmem, size = 0x40000, scoped, tag = 'output window, operand 0']
    %9 = vsyncpa [#allocation5], 0
    %s10 = scalar_lea.sflag [#allocation5], 1
    %11 = vsyncpa %s10, 0
    %12 = vsyncpa [#allocation8], 0
    %13 = vsyncpa [#allocation6], 0
    %s14 = scalar_lea.sflag [#allocation6], 1
    %15 = vsyncpa %s14, 0
    loop: start=0, step=1, limit=4
    $region2: #{tpu_custom_call.1} parent=1 // loop_pre_header
      _
    $region3: #{tpu_custom_call.1} parent=1 // loop_header
      %s17 = sphi 0, %s21
      %p18 = scmp.ge.s32.totalorder %s17, 4
      %s27 = sphi 0, %s29
      %s30 = sphi 0, %s27
      %s31 = sphi 0, %s30
      %s47 = sphi 0, %s31
      %s51 = sphi 0, %s51
      %s53 = sphi 0, %s51
      %s54 = sphi 0, %s53
      %s68 = sphi 0, %s54
      %s72 = sphi 0, %s72
      %s74 = sphi 0, %s72
      %s75 = sphi 0, %s74
      %s89 = sphi 0, %s75
      %s93 = sphi 0, %s93
      %s95 = sphi 0, %s93
      %s96 = sphi 0, %s95
      %s110 = sphi 0, %s96
      %s116 = sphi 0, %s118
      %s119 = sphi 0, %s116
      %s120 = sphi 0, %s119
      %s136 = sphi 0, %s120
    $region4: #{tpu_custom_call.1} parent=1 // loop_header_branch
      %20 = sbr.rel (%p18) target = $region8
    $region5: #{tpu_custom_call.1} parent=1 // loop_body
      %s22 = ssub.s32 %s17, 1
      %s23 = ssub.s32 %s17, 2
      %s24 = sadd.s32 %s17, 1
      %s25 = ssub.s32 %s17, %s24
      %p26 = scmp.eq.s32.totalorder %s25, 0
      %s28 = sadd.s32 %s27, 1
      %s29 = scalar_select %p26, %s27, %s28
      %p32 = pneg %p26
      %p33 = scmp.eq.s32.totalorder %s17, 1
      %p34 = por %p32, %p33
      %p35 = scmp.ne.s32.totalorder %s27, %s30
      %p36 = scmp.eq.s32.totalorder %s17, 0
      %p37 = por %p35, %p36
      %p38 = scmp.ne.s32.totalorder %s27, %s30
      %p39 = scmp.eq.s32.totalorder %s22, 1
      %p40 = por %p38, %p39
      %p41 = scmp.ne.s32.totalorder %s30, %s31
      %p42 = scmp.eq.s32.totalorder %s22, 0
      %p43 = por %p41, %p42
      %p44 = scmp.ne.s32.totalorder %s30, %s31
      %p45 = scmp.eq.s32.totalorder %s23, 1
      %p46 = por %p44, %p45
      %p48 = scmp.ne.s32.totalorder %s31, %s47
      %p49 = scmp.eq.s32.totalorder %s23, 0
      %p50 = por %p48, %p49
      %s52 = sadd.s32 %s51, 1
      %p55 = scmp.eq.s32.totalorder %s17, 1
      %p56 = scmp.ne.s32.totalorder %s51, %s53
      %p57 = scmp.eq.s32.totalorder %s17, 0
      %p58 = por %p56, %p57
      %p59 = scmp.ne.s32.totalorder %s51, %s53
      %p60 = scmp.eq.s32.totalorder %s22, 1
      %p61 = por %p59, %p60
      %p62 = scmp.ne.s32.totalorder %s53, %s54
      %p63 = scmp.eq.s32.totalorder %s22, 0
      %p64 = por %p62, %p63
      %p65 = scmp.ne.s32.totalorder %s53, %s54
      %p66 = scmp.eq.s32.totalorder %s23, 1
      %p67 = por %p65, %p66
      %p69 = scmp.ne.s32.totalorder %s54, %s68
      %p70 = scmp.eq.s32.totalorder %s23, 0
      %p71 = por %p69, %p70
      %s73 = sadd.s32 %s72, 1
      %p76 = scmp.eq.s32.totalorder %s17, 1
      %p77 = scmp.ne.s32.totalorder %s72, %s74
      %p78 = scmp.eq.s32.totalorder %s17, 0
      %p79 = por %p77, %p78
      %p80 = scmp.ne.s32.totalorder %s72, %s74
      %p81 = scmp.eq.s32.totalorder %s22, 1
      %p82 = por %p80, %p81
      %p83 = scmp.ne.s32.totalorder %s74, %s75
      %p84 = scmp.eq.s32.totalorder %s22, 0
      %p85 = por %p83, %p84
      %p86 = scmp.ne.s32.totalorder %s74, %s75
      %p87 = scmp.eq.s32.totalorder %s23, 1
      %p88 = por %p86, %p87
      %p90 = scmp.ne.s32.totalorder %s75, %s89
      %p91 = scmp.eq.s32.totalorder %s23, 0
      %p92 = por %p90, %p91
      %s94 = sadd.s32 %s93, 1
      %p97 = scmp.eq.s32.totalorder %s17, 1
      %p98 = scmp.ne.s32.totalorder %s93, %s95
      %p99 = scmp.eq.s32.totalorder %s17, 0
      %p100 = por %p98, %p99
      %p101 = scmp.ne.s32.totalorder %s93, %s95
      %p102 = scmp.eq.s32.totalorder %s22, 1
      %p103 = por %p101, %p102
      %p104 = scmp.ne.s32.totalorder %s95, %s96
      %p105 = scmp.eq.s32.totalorder %s22, 0
      %p106 = por %p104, %p105
      %p107 = scmp.ne.s32.totalorder %s95, %s96
      %p108 = scmp.eq.s32.totalorder %s23, 1
      %p109 = por %p107, %p108
      %p111 = scmp.ne.s32.totalorder %s96, %s110
      %p112 = scmp.eq.s32.totalorder %s23, 0
      %p113 = por %p111, %p112
      %s114 = ssub.s32 %s17, %s24
      %p115 = scmp.eq.s32.totalorder %s114, 0
      %s117 = sadd.s32 %s116, 1
      %s118 = scalar_select %p115, %s116, %s117
      %p121 = pneg %p115
      %p122 = scmp.eq.s32.totalorder %s17, 1
      %p123 = por %p121, %p122
      %p124 = scmp.ne.s32.totalorder %s116, %s119
      %p125 = scmp.eq.s32.totalorder %s17, 0
      %p126 = por %p124, %p125
      %p127 = scmp.ne.s32.totalorder %s116, %s119
      %p128 = scmp.eq.s32.totalorder %s22, 1
      %p129 = por %p127, %p128
      %p130 = scmp.ne.s32.totalorder %s119, %s120
      %p131 = scmp.eq.s32.totalorder %s22, 0
      %p132 = por %p130, %p131
      %p133 = scmp.ne.s32.totalorder %s119, %s120
      %p134 = scmp.eq.s32.totalorder %s23, 1
      %p135 = por %p133, %p134
      %p137 = scmp.ne.s32.totalorder %s120, %s136
      %p138 = scmp.eq.s32.totalorder %s23, 0
      %p139 = por %p137, %p138
      %p140 = scmp.le.s32.totalorder 1, %s17
      %p141 = scmp.lt.s32.totalorder %s17, 3
      %p142 = pnand %p140, %p141
      %p143 = pneg %p142
      // Predicated region
      $region9: #{tpu_custom_call.1} parent=5 // pred_check
        _
      $region10: #{tpu_custom_call.1} parent=5 // pred_check_branch
        %145 = sbr.rel (%p142) target = $region12
      $region11: #{tpu_custom_call.1} parent=5 // pred_region
        %s146 = ssub.s32 %s17, 1
        // Predicated region
        $region13: #{tpu_custom_call.1} parent=11 // pred_check
          %p147 = pneg %p64
        $region14: #{tpu_custom_call.1} parent=11 // pred_check_branch
          %149 = sbr.rel (%p147) target = $region16
        $region15: #{tpu_custom_call.1} parent=11 // pred_region
          %s151 = ssub.s32 9216, 9216
          %152 = vsyncadd [#allocation8], %s151
          %s153 = sshll.u32 [#allocation7], 4
          %s154 = int_to_ptr.vmem [resolvable:$true] %s153
          %159 = dma.hbm_to_vmem [thread:$0]  %s1, 9216, %s154, [#allocation8], 64, 64, 4
        $region16: #{tpu_custom_call.1} parent=11 // pred_fallthru
          _
        // Predicated region
        $region17: #{tpu_custom_call.1} parent=11 // pred_check
          %p160 = pneg %p85
        $region18: #{tpu_custom_call.1} parent=11 // pred_check_branch
          %162 = sbr.rel (%p160) target = $region20
        $region19: #{tpu_custom_call.1} parent=11 // pred_region
          %s164 = ssub.s32 9216, 9216
          %165 = vsyncadd [#allocation8], %s164
          %s166 = sshll.u32 [#allocation9], 4
          %s167 = int_to_ptr.vmem [resolvable:$true] %s166
          %172 = dma.hbm_to_vmem [thread:$0]  %s2, 9216, %s167, [#allocation8], 64, 64, 4
        $region20: #{tpu_custom_call.1} parent=11 // pred_fallthru
          _
        // Predicated region
        $region21: #{tpu_custom_call.1} parent=11 // pred_check
          %p173 = pneg %p106
        $region22: #{tpu_custom_call.1} parent=11 // pred_check_branch
          %175 = sbr.rel (%p173) target = $region24
        $region23: #{tpu_custom_call.1} parent=11 // pred_region
          _
        $region24: #{tpu_custom_call.1} parent=11 // pred_fallthru
          _
      $region12: #{tpu_custom_call.1} parent=5 // pred_fallthru
        _
      %p176 = scmp.lt.s32.totalorder %s17, 2
      // Predicated region
      $region25: #{tpu_custom_call.1} parent=5 // pred_check
        %p177 = pneg %p176
      $region26: #{tpu_custom_call.1} parent=5 // pred_check_branch
        %179 = sbr.rel (%p177) target = $region28
      $region27: #{tpu_custom_call.1} parent=5 // pred_region
        // Predicated region
        $region29: #{tpu_custom_call.1} parent=27 // pred_check
          %p180 = pneg %p37
        $region30: #{tpu_custom_call.1} parent=27 // pred_check_branch
          %182 = sbr.rel (%p180) target = $region32
        $region31: #{tpu_custom_call.1} parent=27 // pred_region
          %s183 = sand.u32 %s27, 1
          %s184 = scalar_lea.sflag [#allocation5], %s183
          %s185 = sand.u32 %s27, 1
          %s186 = smul.addr %s185, 256
          %s187 = scalar_lea.vmem [#allocation4], %s186
          %s189 = ssub.s32 4096, 4096
          %190 = vsyncadd %s184, %s189
          %s191 = smul.addr %s17, 32
          %s192 = smul.addr %s191, 128
          %s193 = scalar_lea.hbm %s0, %s192
          %s194 = sshll.u32 %s187, 4
          %s195 = int_to_ptr.vmem [resolvable:$true] %s194
          %200 = dma.hbm_to_vmem [thread:$0]  %s193, 4096, %s195, %s184, 128, 128, 8
        $region32: #{tpu_custom_call.1} parent=27 // pred_fallthru
          _
      $region28: #{tpu_custom_call.1} parent=5 // pred_fallthru
        _
      %p201 = scmp.le.s32.totalorder 1, %s17
      %p202 = scmp.lt.s32.totalorder %s17, 3
      %p203 = pnand %p201, %p202
      %p204 = pneg %p203
      // Predicated region
      $region33: #{tpu_custom_call.1} parent=5 // pred_check
        _
      $region34: #{tpu_custom_call.1} parent=5 // pred_check_branch
        %206 = sbr.rel (%p203) target = $region36
      $region35: #{tpu_custom_call.1} parent=5 // pred_region
        %s207 = ssub.s32 %s17, 1
        %s208 = sand.u32 %s30, 1
        %s209 = scalar_lea.sflag [#allocation5], %s208
        %s210 = sand.u32 %s30, 1
        %s211 = smul.addr %s210, 256
        %s212 = scalar_lea.vmem [#allocation4], %s211
        // Predicated region
        $region37: #{tpu_custom_call.1} parent=35 // pred_check
          %p213 = pneg %p43
        $region38: #{tpu_custom_call.1} parent=35 // pred_check_branch
          %215 = sbr.rel (%p213) target = $region40
        $region39: #{tpu_custom_call.1} parent=35 // pred_region
          %216 = dma.done %s209, 4096
        $region40: #{tpu_custom_call.1} parent=35 // pred_fallthru
          _
        // Predicated region
        $region41: #{tpu_custom_call.1} parent=35 // pred_check
          %p217 = pneg %p64
        $region42: #{tpu_custom_call.1} parent=35 // pred_check_branch
          %219 = sbr.rel (%p217) target = $region44
        $region43: #{tpu_custom_call.1} parent=35 // pred_region
          %220 = dma.done [#allocation8], 9216
        $region44: #{tpu_custom_call.1} parent=35 // pred_fallthru
          _
        // Predicated region
        $region45: #{tpu_custom_call.1} parent=35 // pred_check
          %p221 = pneg %p85
        $region46: #{tpu_custom_call.1} parent=35 // pred_check_branch
          %223 = sbr.rel (%p221) target = $region48
        $region47: #{tpu_custom_call.1} parent=35 // pred_region
          %224 = dma.done [#allocation8], 9216
        $region48: #{tpu_custom_call.1} parent=35 // pred_fallthru
          _
        %s225 = sand.u32 %s30, 1
        %s226 = scalar_lea.sflag [#allocation5], %s225
        %s227 = sand.u32 %s30, 1
        %s228 = smul.addr %s227, 256
        %s229 = scalar_lea.vmem [#allocation4], %s228
        %p230 = pneg %p43
        %p231 = pneg %p40
        %p232 = pneg %p64
        %p233 = pneg %p61
        %p234 = pneg %p85
        %p235 = pneg %p82
        %p236 = pneg %p106
        %p237 = pneg %p103
        %p238 = pneg %p132
        %p239 = pneg %p129
        %s240 = sand.u32 %s119, 1
        %s241 = scalar_lea.sflag [#allocation6], %s240
        %s242 = sand.u32 %s119, 1
        %s243 = smul.addr %s242, 256
        %s244 = scalar_lea.vmem [#allocation10], %s243
        %246 = vst [vmem:[#allocation2] sm:$0xf] 0
        %247 = vst [vmem:[#allocation2 + $0x4] sm:$0xf] 0
        %248 = vst [vmem:[#allocation2 + $0x8] sm:$0x1] 0
        %s249 = scalar_lea.vmem [#allocation2], 204
        %250 = vst [vmem:[%s249] sm:$0xf] 0
        %251 = vst [vmem:[%s249 + $0x4] sm:$0xf] 0
        %252 = vst [vmem:[%s249 + $0x8] sm:$0x1] 0
        %s253 = scalar_lea.vmem [#allocation2], 12
        %vm254 = vcmask 1040384
        %vm255 = vsmask.f32 256
        %vm256 = vmand %vm254, %vm255
        %v257 = vld [vmem:[%s253] sm:$0x1]
        %v258 = vsel %vm256, 0, %v257
        %259 = vst [vmem:[%s253] sm:$0x1] %v258
        %v260 = vld [vmem:[%s253 + $0xc] sm:$0x1]
        %v261 = vsel %vm256, 0, %v260
        %262 = vst [vmem:[%s253 + $0xc] sm:$0x1] %v261
        %v263 = vld [vmem:[%s253 + $0x18] sm:$0x1]
        %v264 = vsel %vm256, 0, %v263
        %265 = vst [vmem:[%s253 + $0x18] sm:$0x1] %v264
        %v266 = vld [vmem:[%s253 + $0x24] sm:$0x1]
        %v267 = vsel %vm256, 0, %v266
        %268 = vst [vmem:[%s253 + $0x24] sm:$0x1] %v267
        %v269 = vld [vmem:[%s253 + $0x30] sm:$0x1]
        %v270 = vsel %vm256, 0, %v269
        %271 = vst [vmem:[%s253 + $0x30] sm:$0x1] %v270
        %v272 = vld [vmem:[%s253 + $0x3c] sm:$0x1]
        %v273 = vsel %vm256, 0, %v272
        %274 = vst [vmem:[%s253 + $0x3c] sm:$0x1] %v273
        %v275 = vld [vmem:[%s253 + $0x48] sm:$0x1]
        %v276 = vsel %vm256, 0, %v275
        %277 = vst [vmem:[%s253 + $0x48] sm:$0x1] %v276
        %v278 = vld [vmem:[%s253 + $0x54] sm:$0x1]
        %v279 = vsel %vm256, 0, %v278
        %280 = vst [vmem:[%s253 + $0x54] sm:$0x1] %v279
        %v281 = vld [vmem:[%s253 + $0x60] sm:$0x1]
        %v282 = vsel %vm256, 0, %v281
        %283 = vst [vmem:[%s253 + $0x60] sm:$0x1] %v282
        %v284 = vld [vmem:[%s253 + $0x6c] sm:$0x1]
        %v285 = vsel %vm256, 0, %v284
        %286 = vst [vmem:[%s253 + $0x6c] sm:$0x1] %v285
        %v287 = vld [vmem:[%s253 + $0x78] sm:$0x1]
        %v288 = vsel %vm256, 0, %v287
        %289 = vst [vmem:[%s253 + $0x78] sm:$0x1] %v288
        %v290 = vld [vmem:[%s253 + $0x84] sm:$0x1]
        %v291 = vsel %vm256, 0, %v290
        %292 = vst [vmem:[%s253 + $0x84] sm:$0x1] %v291
        %v293 = vld [vmem:[%s253 + $0x90] sm:$0x1]
        %v294 = vsel %vm256, 0, %v293
        %295 = vst [vmem:[%s253 + $0x90] sm:$0x1] %v294
        %v296 = vld [vmem:[%s253 + $0x9c] sm:$0x1]
        %v297 = vsel %vm256, 0, %v296
        %298 = vst [vmem:[%s253 + $0x9c] sm:$0x1] %v297
        %v299 = vld [vmem:[%s253 + $0xa8] sm:$0x1]
        %v300 = vsel %vm256, 0, %v299
        %301 = vst [vmem:[%s253 + $0xa8] sm:$0x1] %v300
        %v302 = vld [vmem:[%s253 + $0xb4] sm:$0x1]
        %v303 = vsel %vm256, 0, %v302
        %304 = vst [vmem:[%s253 + $0xb4] sm:$0x1] %v303
        %vm305 = vsmask.f32 7938
        %vm306 = vmand %vm254, %vm305
        %v307 = vld [vmem:[%s253 + $0x8] sm:$0x1]
        %v308 = vsel %vm306, 0, %v307
        %309 = vst [vmem:[%s253 + $0x8] sm:$0x1] %v308
        %v310 = vld [vmem:[%s253 + $0x14] sm:$0x1]
        %v311 = vsel %vm306, 0, %v310
        %312 = vst [vmem:[%s253 + $0x14] sm:$0x1] %v311
        %v313 = vld [vmem:[%s253 + $0x20] sm:$0x1]
        %v314 = vsel %vm306, 0, %v313
        %315 = vst [vmem:[%s253 + $0x20] sm:$0x1] %v314
        %v316 = vld [vmem:[%s253 + $0x2c] sm:$0x1]
        %v317 = vsel %vm306, 0, %v316
        %318 = vst [vmem:[%s253 + $0x2c] sm:$0x1] %v317
        %v319 = vld [vmem:[%s253 + $0x38] sm:$0x1]
        %v320 = vsel %vm306, 0, %v319
        %321 = vst [vmem:[%s253 + $0x38] sm:$0x1] %v320
        %v322 = vld [vmem:[%s253 + $0x44] sm:$0x1]
        %v323 = vsel %vm306, 0, %v322
        %324 = vst [vmem:[%s253 + $0x44] sm:$0x1] %v323
        %v325 = vld [vmem:[%s253 + $0x50] sm:$0x1]
        %v326 = vsel %vm306, 0, %v325
        %327 = vst [vmem:[%s253 + $0x50] sm:$0x1] %v326
        %v328 = vld [vmem:[%s253 + $0x5c] sm:$0x1]
        %v329 = vsel %vm306, 0, %v328
        %330 = vst [vmem:[%s253 + $0x5c] sm:$0x1] %v329
        %v331 = vld [vmem:[%s253 + $0x68] sm:$0x1]
        %v332 = vsel %vm306, 0, %v331
        %333 = vst [vmem:[%s253 + $0x68] sm:$0x1] %v332
        %v334 = vld [vmem:[%s253 + $0x74] sm:$0x1]
        %v335 = vsel %vm306, 0, %v334
        %336 = vst [vmem:[%s253 + $0x74] sm:$0x1] %v335
        %v337 = vld [vmem:[%s253 + $0x80] sm:$0x1]
        %v338 = vsel %vm306, 0, %v337
        %339 = vst [vmem:[%s253 + $0x80] sm:$0x1] %v338
        %v340 = vld [vmem:[%s253 + $0x8c] sm:$0x1]
        %v341 = vsel %vm306, 0, %v340
        %342 = vst [vmem:[%s253 + $0x8c] sm:$0x1] %v341
        %v343 = vld [vmem:[%s253 + $0x98] sm:$0x1]
        %v344 = vsel %vm306, 0, %v343
        %345 = vst [vmem:[%s253 + $0x98] sm:$0x1] %v344
        %v346 = vld [vmem:[%s253 + $0xa4] sm:$0x1]
        %v347 = vsel %vm306, 0, %v346
        %348 = vst [vmem:[%s253 + $0xa4] sm:$0x1] %v347
        %v349 = vld [vmem:[%s253 + $0xb0] sm:$0x1]
        %v350 = vsel %vm306, 0, %v349
        %351 = vst [vmem:[%s253 + $0xb0] sm:$0x1] %v350
        %v352 = vld [vmem:[%s253 + $0xbc] sm:$0x1]
        %v353 = vsel %vm306, 0, %v352
        %354 = vst [vmem:[%s253 + $0xbc] sm:$0x1] %v353
        %355 = vst [vmem:[#allocation3] sm:$0xf] 0
        %356 = vst [vmem:[#allocation3 + $0x4] sm:$0xf] 0
        %357 = vst [vmem:[#allocation3 + $0x8] sm:$0x1] 0
        %s358 = scalar_lea.vmem [#allocation3], 204
        %359 = vst [vmem:[%s358] sm:$0xf] 0
        %360 = vst [vmem:[%s358 + $0x4] sm:$0xf] 0
        %361 = vst [vmem:[%s358 + $0x8] sm:$0x1] 0
        %s362 = scalar_lea.vmem [#allocation3], 12
        %v363 = vld [vmem:[%s362] sm:$0x1]
        %v364 = vsel %vm256, 0, %v363
        %365 = vst [vmem:[%s362] sm:$0x1] %v364
        %v366 = vld [vmem:[%s362 + $0xc] sm:$0x1]
        %v367 = vsel %vm256, 0, %v366
        %368 = vst [vmem:[%s362 + $0xc] sm:$0x1] %v367
        %v369 = vld [vmem:[%s362 + $0x18] sm:$0x1]
        %v370 = vsel %vm256, 0, %v369
        %371 = vst [vmem:[%s362 + $0x18] sm:$0x1] %v370
        %v372 = vld [vmem:[%s362 + $0x24] sm:$0x1]
        %v373 = vsel %vm256, 0, %v372
        %374 = vst [vmem:[%s362 + $0x24] sm:$0x1] %v373
        %v375 = vld [vmem:[%s362 + $0x30] sm:$0x1]
        %v376 = vsel %vm256, 0, %v375
        %377 = vst [vmem:[%s362 + $0x30] sm:$0x1] %v376
        %v378 = vld [vmem:[%s362 + $0x3c] sm:$0x1]
        %v379 = vsel %vm256, 0, %v378
        %380 = vst [vmem:[%s362 + $0x3c] sm:$0x1] %v379
        %v381 = vld [vmem:[%s362 + $0x48] sm:$0x1]
        %v382 = vsel %vm256, 0, %v381
        %383 = vst [vmem:[%s362 + $0x48] sm:$0x1] %v382
        %v384 = vld [vmem:[%s362 + $0x54] sm:$0x1]
        %v385 = vsel %vm256, 0, %v384
        %386 = vst [vmem:[%s362 + $0x54] sm:$0x1] %v385
        %v387 = vld [vmem:[%s362 + $0x60] sm:$0x1]
        %v388 = vsel %vm256, 0, %v387
        %389 = vst [vmem:[%s362 + $0x60] sm:$0x1] %v388
        %v390 = vld [vmem:[%s362 + $0x6c] sm:$0x1]
        %v391 = vsel %vm256, 0, %v390
        %392 = vst [vmem:[%s362 + $0x6c] sm:$0x1] %v391
        %v393 = vld [vmem:[%s362 + $0x78] sm:$0x1]
        %v394 = vsel %vm256, 0, %v393
        %395 = vst [vmem:[%s362 + $0x78] sm:$0x1] %v394
        %v396 = vld [vmem:[%s362 + $0x84] sm:$0x1]
        %v397 = vsel %vm256, 0, %v396
        %398 = vst [vmem:[%s362 + $0x84] sm:$0x1] %v397
        %v399 = vld [vmem:[%s362 + $0x90] sm:$0x1]
        %v400 = vsel %vm256, 0, %v399
        %401 = vst [vmem:[%s362 + $0x90] sm:$0x1] %v400
        %v402 = vld [vmem:[%s362 + $0x9c] sm:$0x1]
        %v403 = vsel %vm256, 0, %v402
        %404 = vst [vmem:[%s362 + $0x9c] sm:$0x1] %v403
        %v405 = vld [vmem:[%s362 + $0xa8] sm:$0x1]
        %v406 = vsel %vm256, 0, %v405
        %407 = vst [vmem:[%s362 + $0xa8] sm:$0x1] %v406
        %v408 = vld [vmem:[%s362 + $0xb4] sm:$0x1]
        %v409 = vsel %vm256, 0, %v408
        %410 = vst [vmem:[%s362 + $0xb4] sm:$0x1] %v409
        %v411 = vld [vmem:[%s362 + $0x8] sm:$0x1]
        %v412 = vsel %vm306, 0, %v411
        %413 = vst [vmem:[%s362 + $0x8] sm:$0x1] %v412
        %v414 = vld [vmem:[%s362 + $0x14] sm:$0x1]
        %v415 = vsel %vm306, 0, %v414
        %416 = vst [vmem:[%s362 + $0x14] sm:$0x1] %v415
        %v417 = vld [vmem:[%s362 + $0x20] sm:$0x1]
        %v418 = vsel %vm306, 0, %v417
        %419 = vst [vmem:[%s362 + $0x20] sm:$0x1] %v418
        %v420 = vld [vmem:[%s362 + $0x2c] sm:$0x1]
        %v421 = vsel %vm306, 0, %v420
        %422 = vst [vmem:[%s362 + $0x2c] sm:$0x1] %v421
        %v423 = vld [vmem:[%s362 + $0x38] sm:$0x1]
        %v424 = vsel %vm306, 0, %v423
        %425 = vst [vmem:[%s362 + $0x38] sm:$0x1] %v424
        %v426 = vld [vmem:[%s362 + $0x44] sm:$0x1]
        %v427 = vsel %vm306, 0, %v426
        %428 = vst [vmem:[%s362 + $0x44] sm:$0x1] %v427
        %v429 = vld [vmem:[%s362 + $0x50] sm:$0x1]
        %v430 = vsel %vm306, 0, %v429
        %431 = vst [vmem:[%s362 + $0x50] sm:$0x1] %v430
        %v432 = vld [vmem:[%s362 + $0x5c] sm:$0x1]
        %v433 = vsel %vm306, 0, %v432
        %434 = vst [vmem:[%s362 + $0x5c] sm:$0x1] %v433
        %v435 = vld [vmem:[%s362 + $0x68] sm:$0x1]
        %v436 = vsel %vm306, 0, %v435
        %437 = vst [vmem:[%s362 + $0x68] sm:$0x1] %v436
        %v438 = vld [vmem:[%s362 + $0x74] sm:$0x1]
        %v439 = vsel %vm306, 0, %v438
        %440 = vst [vmem:[%s362 + $0x74] sm:$0x1] %v439
        %v441 = vld [vmem:[%s362 + $0x80] sm:$0x1]
        %v442 = vsel %vm306, 0, %v441
        %443 = vst [vmem:[%s362 + $0x80] sm:$0x1] %v442
        %v444 = vld [vmem:[%s362 + $0x8c] sm:$0x1]
        %v445 = vsel %vm306, 0, %v444
        %446 = vst [vmem:[%s362 + $0x8c] sm:$0x1] %v445
        %v447 = vld [vmem:[%s362 + $0x98] sm:$0x1]
        %v448 = vsel %vm306, 0, %v447
        %449 = vst [vmem:[%s362 + $0x98] sm:$0x1] %v448
        %v450 = vld [vmem:[%s362 + $0xa4] sm:$0x1]
        %v451 = vsel %vm306, 0, %v450
        %452 = vst [vmem:[%s362 + $0xa4] sm:$0x1] %v451
        %v453 = vld [vmem:[%s362 + $0xb0] sm:$0x1]
        %v454 = vsel %vm306, 0, %v453
        %455 = vst [vmem:[%s362 + $0xb0] sm:$0x1] %v454
        %v456 = vld [vmem:[%s362 + $0xbc] sm:$0x1]
        %v457 = vsel %vm306, 0, %v456
        %458 = vst [vmem:[%s362 + $0xbc] sm:$0x1] %v457
        %v459 = vld [vmem:[%s212] sm:$0xff]
        %v460 = vld [vmem:[%s212 + $0x8] sm:$0xff]
        %v461 = vld [vmem:[%s212 + $0x10] sm:$0xff]
        %v462 = vld [vmem:[%s212 + $0x18] sm:$0xff]
        %v463 = vld [vmem:[%s212 + $0x20] sm:$0xff]
        %v464 = vld [vmem:[%s212 + $0x28] sm:$0xff]
        %v465 = vld [vmem:[%s212 + $0x30] sm:$0xff]
        %v466 = vld [vmem:[%s212 + $0x38] sm:$0xff]
        %v467 = vld [vmem:[%s212 + $0x40] sm:$0xff]
        %v468 = vld [vmem:[%s212 + $0x48] sm:$0xff]
        %v469 = vld [vmem:[%s212 + $0x50] sm:$0xff]
        %v470 = vld [vmem:[%s212 + $0x58] sm:$0xff]
        %v471 = vld [vmem:[%s212 + $0x60] sm:$0xff]
        %v472 = vld [vmem:[%s212 + $0x68] sm:$0xff]
        %v473 = vld [vmem:[%s212 + $0x70] sm:$0xff]
        %v474 = vld [vmem:[%s212 + $0x78] sm:$0xff]
        %v475 = vld [vmem:[%s212 + $0x80] sm:$0xff]
        %v476 = vld [vmem:[%s212 + $0x88] sm:$0xff]
        %v477 = vld [vmem:[%s212 + $0x90] sm:$0xff]
        %v478 = vld [vmem:[%s212 + $0x98] sm:$0xff]
        %v479 = vld [vmem:[%s212 + $0xa0] sm:$0xff]
        %v480 = vld [vmem:[%s212 + $0xa8] sm:$0xff]
        %v481 = vld [vmem:[%s212 + $0xb0] sm:$0xff]
        %v482 = vld [vmem:[%s212 + $0xb8] sm:$0xff]
        %v483 = vld [vmem:[%s212 + $0xc0] sm:$0xff]
        %v484 = vld [vmem:[%s212 + $0xc8] sm:$0xff]
        %v485 = vld [vmem:[%s212 + $0xd0] sm:$0xff]
        %v486 = vld [vmem:[%s212 + $0xd8] sm:$0xff]
        %v487 = vld [vmem:[%s212 + $0xe0] sm:$0xff]
        %v488 = vld [vmem:[%s212 + $0xe8] sm:$0xff]
        %v489 = vld [vmem:[%s212 + $0xf0] sm:$0xff]
        %v490 = vld [vmem:[%s212 + $0xf8] sm:$0xff]
        %v491 = vpack.c.bf16 %v460, %v459
        %v492 = vpack.c.bf16 %v462, %v461
        %v493 = vpack.c.bf16 %v464, %v463
        %v494 = vpack.c.bf16 %v466, %v465
        %v495 = vpack.c.bf16 %v468, %v467
        %v496 = vpack.c.bf16 %v470, %v469
        %v497 = vpack.c.bf16 %v472, %v471
        %v498 = vpack.c.bf16 %v474, %v473
        %v499 = vpack.c.bf16 %v476, %v475
        %v500 = vpack.c.bf16 %v478, %v477
        %v501 = vpack.c.bf16 %v480, %v479
        %v502 = vpack.c.bf16 %v482, %v481
        %v503 = vpack.c.bf16 %v484, %v483
        %v504 = vpack.c.bf16 %v486, %v485
        %v505 = vpack.c.bf16 %v488, %v487
        %v506 = vpack.c.bf16 %v490, %v489
        %v523 = vunpack.c.l.b16 %v491
        %v524 = vunpack.c.h.b16 %v491
        %v525 = vunpack.c.l.b16 %v492
        %v526 = vunpack.c.h.b16 %v492
        %v527 = vunpack.c.l.b16 %v493
        %v528 = vunpack.c.h.b16 %v493
        %v529 = vunpack.c.l.b16 %v494
        %v530 = vunpack.c.h.b16 %v494
        %v531 = vunpack.c.l.b16 %v495
        %v532 = vunpack.c.h.b16 %v495
        %v533 = vunpack.c.l.b16 %v496
        %v534 = vunpack.c.h.b16 %v496
        %v535 = vunpack.c.l.b16 %v497
        %v536 = vunpack.c.h.b16 %v497
        %v537 = vunpack.c.l.b16 %v498
        %v538 = vunpack.c.h.b16 %v498
        %v539 = vunpack.c.l.b16 %v499
        %v540 = vunpack.c.h.b16 %v499
        %v541 = vunpack.c.l.b16 %v500
        %v542 = vunpack.c.h.b16 %v500
        %v543 = vunpack.c.l.b16 %v501
        %v544 = vunpack.c.h.b16 %v501
        %v545 = vunpack.c.l.b16 %v502
        %v546 = vunpack.c.h.b16 %v502
        %v547 = vunpack.c.l.b16 %v503
        %v548 = vunpack.c.h.b16 %v503
        %v549 = vunpack.c.l.b16 %v504
        %v550 = vunpack.c.h.b16 %v504
        %v551 = vunpack.c.l.b16 %v505
        %v552 = vunpack.c.h.b16 %v505
        %v553 = vunpack.c.l.b16 %v506
        %v554 = vunpack.c.h.b16 %v506
        %v555 = vpack.c.b16 %v523, %v523
        %v556 = vpack.c.b16 %v524, %v524
        %v557 = vpack.c.b16 %v525, %v525
        %v558 = vpack.c.b16 %v526, %v526
        %v559 = vpack.c.b16 %v527, %v527
        %v560 = vpack.c.b16 %v528, %v528
        %v561 = vpack.c.b16 %v529, %v529
        %v562 = vpack.c.b16 %v530, %v530
        %v563 = vpack.c.b16 %v531, %v531
        %v564 = vpack.c.b16 %v532, %v532
        %v565 = vpack.c.b16 %v533, %v533
        %v566 = vpack.c.b16 %v534, %v534
        %v567 = vpack.c.b16 %v535, %v535
        %v568 = vpack.c.b16 %v536, %v536
        %v569 = vpack.c.b16 %v537, %v537
        %v570 = vpack.c.b16 %v538, %v538
        %v571 = vpack.c.b16 %v539, %v539
        %v572 = vpack.c.b16 %v540, %v540
        %v573 = vpack.c.b16 %v541, %v541
        %v574 = vpack.c.b16 %v542, %v542
        %v575 = vpack.c.b16 %v543, %v543
        %v576 = vpack.c.b16 %v544, %v544
        %v577 = vpack.c.b16 %v545, %v545
        %v578 = vpack.c.b16 %v546, %v546
        %v579 = vpack.c.b16 %v547, %v547
        %v580 = vpack.c.b16 %v548, %v548
        %v581 = vpack.c.b16 %v549, %v549
        %v582 = vpack.c.b16 %v550, %v550
        %v583 = vpack.c.b16 %v551, %v551
        %v584 = vpack.c.b16 %v552, %v552
        %v585 = vpack.c.b16 %v553, %v553
        %v586 = vpack.c.b16 %v554, %v554
        %vm587 = vsmask.f32 4368
        %vm588 = vmor %vm255, %vm587
        %v590 = vshrl.u32 %v555, 16
        %v592 = vrot.slane %v590, 7
        %v593 = vshll.u32 %v555, 16
        %v595 = vor.u32 %v592, %v593
        %v596 = vrot.slane %v592, 4
        %v598 = vshrl.u32 %v556, 16
        %v600 = vrot.slane %v598, 7
        %v601 = vshll.u32 %v556, 16
        %v603 = vor.u32 %v600, %v601
        %v604 = vsel %vm588, %v596, %v603
        %v605 = vrot.slane %v600, 4
        %v607 = vshrl.u32 %v557, 16
        %v609 = vrot.slane %v607, 7
        %v610 = vshll.u32 %v557, 16
        %v612 = vor.u32 %v609, %v610
        %v613 = vrot.slane %v609, 4
        %v615 = vshrl.u32 %v558, 16
        %v617 = vrot.slane %v615, 7
        %v618 = vshll.u32 %v558, 16
        %v620 = vor.u32 %v617, %v618
        %v621 = vsel %vm588, %v613, %v620
        %v622 = vrot.slane %v617, 4
        %v624 = vshrl.u32 %v559, 16
        %v626 = vrot.slane %v624, 7
        %v627 = vshll.u32 %v559, 16
        %v629 = vor.u32 %v626, %v627
        %v630 = vrot.slane %v626, 4
        %v632 = vshrl.u32 %v560, 16
        %v634 = vrot.slane %v632, 7
        %v635 = vshll.u32 %v560, 16
        %v637 = vor.u32 %v634, %v635
        %v638 = vsel %vm588, %v630, %v637
        %v639 = vrot.slane %v634, 4
        %v641 = vshrl.u32 %v561, 16
        %v643 = vrot.slane %v641, 7
        %v644 = vshll.u32 %v561, 16
        %v646 = vor.u32 %v643, %v644
        %v647 = vrot.slane %v643, 4
        %v649 = vshrl.u32 %v562, 16
        %v651 = vrot.slane %v649, 7
        %v652 = vshll.u32 %v562, 16
        %v654 = vor.u32 %v651, %v652
        %v655 = vsel %vm588, %v647, %v654
        %v656 = vrot.slane %v651, 4
        %v658 = vshrl.u32 %v563, 16
        %v660 = vrot.slane %v658, 7
        %v661 = vshll.u32 %v563, 16
        %v663 = vor.u32 %v660, %v661
        %v664 = vrot.slane %v660, 4
        %v666 = vshrl.u32 %v564, 16
        %v668 = vrot.slane %v666, 7
        %v669 = vshll.u32 %v564, 16
        %v671 = vor.u32 %v668, %v669
        %v672 = vsel %vm588, %v664, %v671
        %v673 = vrot.slane %v668, 4
        %v675 = vshrl.u32 %v565, 16
        %v677 = vrot.slane %v675, 7
        %v678 = vshll.u32 %v565, 16
        %v680 = vor.u32 %v677, %v678
        %v681 = vrot.slane %v677, 4
        %v683 = vshrl.u32 %v566, 16
        %v685 = vrot.slane %v683, 7
        %v686 = vshll.u32 %v566, 16
        %v688 = vor.u32 %v685, %v686
        %v689 = vsel %vm588, %v681, %v688
        %v690 = vrot.slane %v685, 4
        %v692 = vshrl.u32 %v567, 16
        %v694 = vrot.slane %v692, 7
        %v695 = vshll.u32 %v567, 16
        %v697 = vor.u32 %v694, %v695
        %v698 = vrot.slane %v694, 4
        %v700 = vshrl.u32 %v568, 16
        %v702 = vrot.slane %v700, 7
        %v703 = vshll.u32 %v568, 16
        %v705 = vor.u32 %v702, %v703
        %v706 = vsel %vm588, %v698, %v705
        %v707 = vrot.slane %v702, 4
        %v709 = vshrl.u32 %v569, 16
        %v711 = vrot.slane %v709, 7
        %v712 = vshll.u32 %v569, 16
        %v714 = vor.u32 %v711, %v712
        %v715 = vrot.slane %v711, 4
        %v717 = vshrl.u32 %v570, 16
        %v719 = vrot.slane %v717, 7
        %v720 = vshll.u32 %v570, 16
        %v722 = vor.u32 %v719, %v720
        %v723 = vsel %vm588, %v715, %v722
        %v724 = vrot.slane %v719, 4
        %v726 = vshrl.u32 %v571, 16
        %v728 = vrot.slane %v726, 7
        %v729 = vshll.u32 %v571, 16
        %v731 = vor.u32 %v728, %v729
        %v732 = vrot.slane %v728, 4
        %v734 = vshrl.u32 %v572, 16
        %v736 = vrot.slane %v734, 7
        %v737 = vshll.u32 %v572, 16
        %v739 = vor.u32 %v736, %v737
        %v740 = vsel %vm588, %v732, %v739
        %v741 = vrot.slane %v736, 4
        %v743 = vshrl.u32 %v573, 16
        %v745 = vrot.slane %v743, 7
        %v746 = vshll.u32 %v573, 16
        %v748 = vor.u32 %v745, %v746
        %v749 = vrot.slane %v745, 4
        %v751 = vshrl.u32 %v574, 16
        %v753 = vrot.slane %v751, 7
        %v754 = vshll.u32 %v574, 16
        %v756 = vor.u32 %v753, %v754
        %v757 = vsel %vm588, %v749, %v756
        %v758 = vrot.slane %v753, 4
        %v760 = vshrl.u32 %v575, 16
        %v762 = vrot.slane %v760, 7
        %v763 = vshll.u32 %v575, 16
        %v765 = vor.u32 %v762, %v763
        %v766 = vrot.slane %v762, 4
        %v768 = vshrl.u32 %v576, 16
        %v770 = vrot.slane %v768, 7
        %v771 = vshll.u32 %v576, 16
        %v773 = vor.u32 %v770, %v771
        %v774 = vsel %vm588, %v766, %v773
        %v775 = vrot.slane %v770, 4
        %v777 = vshrl.u32 %v577, 16
        %v779 = vrot.slane %v777, 7
        %v780 = vshll.u32 %v577, 16
        %v782 = vor.u32 %v779, %v780
        %v783 = vrot.slane %v779, 4
        %v785 = vshrl.u32 %v578, 16
        %v787 = vrot.slane %v785, 7
        %v788 = vshll.u32 %v578, 16
        %v790 = vor.u32 %v787, %v788
        %v791 = vsel %vm588, %v783, %v790
        %v792 = vrot.slane %v787, 4
        %v794 = vshrl.u32 %v579, 16
        %v796 = vrot.slane %v794, 7
        %v797 = vshll.u32 %v579, 16
        %v799 = vor.u32 %v796, %v797
        %v800 = vrot.slane %v796, 4
        %v802 = vshrl.u32 %v580, 16
        %v804 = vrot.slane %v802, 7
        %v805 = vshll.u32 %v580, 16
        %v807 = vor.u32 %v804, %v805
        %v808 = vsel %vm588, %v800, %v807
        %v809 = vrot.slane %v804, 4
        %v811 = vshrl.u32 %v581, 16
        %v813 = vrot.slane %v811, 7
        %v814 = vshll.u32 %v581, 16
        %v816 = vor.u32 %v813, %v814
        %v817 = vrot.slane %v813, 4
        %v819 = vshrl.u32 %v582, 16
        %v821 = vrot.slane %v819, 7
        %v822 = vshll.u32 %v582, 16
        %v824 = vor.u32 %v821, %v822
        %v825 = vsel %vm588, %v817, %v824
        %v826 = vrot.slane %v821, 4
        %v828 = vshrl.u32 %v583, 16
        %v830 = vrot.slane %v828, 7
        %v831 = vshll.u32 %v583, 16
        %v833 = vor.u32 %v830, %v831
        %v834 = vrot.slane %v830, 4
        %v836 = vshrl.u32 %v584, 16
        %v838 = vrot.slane %v836, 7
        %v839 = vshll.u32 %v584, 16
        %v841 = vor.u32 %v838, %v839
        %v842 = vsel %vm588, %v834, %v841
        %v843 = vrot.slane %v838, 4
        %v845 = vshrl.u32 %v585, 16
        %v847 = vrot.slane %v845, 7
        %v848 = vshll.u32 %v585, 16
        %v850 = vor.u32 %v847, %v848
        %v851 = vrot.slane %v847, 4
        %v853 = vshrl.u32 %v586, 16
        %v855 = vrot.slane %v853, 7
        %v856 = vshll.u32 %v586, 16
        %v858 = vor.u32 %v855, %v856
        %v859 = vsel %vm588, %v851, %v858
        %v860 = vrot.slane %v855, 4
        %vm909 = vcmask 1043456
        %vm910 = vmand %vm909, %vm305
        %v911 = vld [vmem:[%s253] sm:$0xf]
        %v912 = vsel %vm910, %v595, %v911
        %913 = vst [vmem:[%s253] sm:$0xf] %v912
        %914 = vst [vmem:[%s253 + $0x4] sm:$0xf] %v604
        %v915 = vld [vmem:[%s253 + $0x8] sm:$0x1]
        %v916 = vsel %vm256, %v605, %v915
        %917 = vst [vmem:[%s253 + $0x8] sm:$0x1] %v916
        %v918 = vld [vmem:[%s253 + $0xc] sm:$0xf]
        %v919 = vsel %vm910, %v612, %v918
        %920 = vst [vmem:[%s253 + $0xc] sm:$0xf] %v919
        %921 = vst [vmem:[%s253 + $0x10] sm:$0xf] %v621
        %v922 = vld [vmem:[%s253 + $0x14] sm:$0x1]
        %v923 = vsel %vm256, %v622, %v922
        %924 = vst [vmem:[%s253 + $0x14] sm:$0x1] %v923
        %v925 = vld [vmem:[%s253 + $0x18] sm:$0xf]
        %v926 = vsel %vm910, %v629, %v925
        %927 = vst [vmem:[%s253 + $0x18] sm:$0xf] %v926
        %928 = vst [vmem:[%s253 + $0x1c] sm:$0xf] %v638
        %v929 = vld [vmem:[%s253 + $0x20] sm:$0x1]
        %v930 = vsel %vm256, %v639, %v929
        %931 = vst [vmem:[%s253 + $0x20] sm:$0x1] %v930
        %v932 = vld [vmem:[%s253 + $0x24] sm:$0xf]
        %v933 = vsel %vm910, %v646, %v932
        %934 = vst [vmem:[%s253 + $0x24] sm:$0xf] %v933
        %935 = vst [vmem:[%s253 + $0x28] sm:$0xf] %v655
        %v936 = vld [vmem:[%s253 + $0x2c] sm:$0x1]
        %v937 = vsel %vm256, %v656, %v936
        %938 = vst [vmem:[%s253 + $0x2c] sm:$0x1] %v937
        %v939 = vld [vmem:[%s253 + $0x30] sm:$0xf]
        %v940 = vsel %vm910, %v663, %v939
        %941 = vst [vmem:[%s253 + $0x30] sm:$0xf] %v940
        %942 = vst [vmem:[%s253 + $0x34] sm:$0xf] %v672
        %v943 = vld [vmem:[%s253 + $0x38] sm:$0x1]
        %v944 = vsel %vm256, %v673, %v943
        %945 = vst [vmem:[%s253 + $0x38] sm:$0x1] %v944
        %v946 = vld [vmem:[%s253 + $0x3c] sm:$0xf]
        %v947 = vsel %vm910, %v680, %v946
        %948 = vst [vmem:[%s253 + $0x3c] sm:$0xf] %v947
        %949 = vst [vmem:[%s253 + $0x40] sm:$0xf] %v689
        %v950 = vld [vmem:[%s253 + $0x44] sm:$0x1]
        %v951 = vsel %vm256, %v690, %v950
        %952 = vst [vmem:[%s253 + $0x44] sm:$0x1] %v951
        %v953 = vld [vmem:[%s253 + $0x48] sm:$0xf]
        %v954 = vsel %vm910, %v697, %v953
        %955 = vst [vmem:[%s253 + $0x48] sm:$0xf] %v954
        %956 = vst [vmem:[%s253 + $0x4c] sm:$0xf] %v706
        %v957 = vld [vmem:[%s253 + $0x50] sm:$0x1]
        %v958 = vsel %vm256, %v707, %v957
        %959 = vst [vmem:[%s253 + $0x50] sm:$0x1] %v958
        %v960 = vld [vmem:[%s253 + $0x54] sm:$0xf]
        %v961 = vsel %vm910, %v714, %v960
        %962 = vst [vmem:[%s253 + $0x54] sm:$0xf] %v961
        %963 = vst [vmem:[%s253 + $0x58] sm:$0xf] %v723
        %v964 = vld [vmem:[%s253 + $0x5c] sm:$0x1]
        %v965 = vsel %vm256, %v724, %v964
        %966 = vst [vmem:[%s253 + $0x5c] sm:$0x1] %v965
        %v967 = vld [vmem:[%s253 + $0x60] sm:$0xf]
        %v968 = vsel %vm910, %v731, %v967
        %969 = vst [vmem:[%s253 + $0x60] sm:$0xf] %v968
        %970 = vst [vmem:[%s253 + $0x64] sm:$0xf] %v740
        %v971 = vld [vmem:[%s253 + $0x68] sm:$0x1]
        %v972 = vsel %vm256, %v741, %v971
        %973 = vst [vmem:[%s253 + $0x68] sm:$0x1] %v972
        %v974 = vld [vmem:[%s253 + $0x6c] sm:$0xf]
        %v975 = vsel %vm910, %v748, %v974
        %976 = vst [vmem:[%s253 + $0x6c] sm:$0xf] %v975
        %977 = vst [vmem:[%s253 + $0x70] sm:$0xf] %v757
        %v978 = vld [vmem:[%s253 + $0x74] sm:$0x1]
        %v979 = vsel %vm256, %v758, %v978
        %980 = vst [vmem:[%s253 + $0x74] sm:$0x1] %v979
        %v981 = vld [vmem:[%s253 + $0x78] sm:$0xf]
        %v982 = vsel %vm910, %v765, %v981
        %983 = vst [vmem:[%s253 + $0x78] sm:$0xf] %v982
        %984 = vst [vmem:[%s253 + $0x7c] sm:$0xf] %v774
        %v985 = vld [vmem:[%s253 + $0x80] sm:$0x1]
        %v986 = vsel %vm256, %v775, %v985
        %987 = vst [vmem:[%s253 + $0x80] sm:$0x1] %v986
        %v988 = vld [vmem:[%s253 + $0x84] sm:$0xf]
        %v989 = vsel %vm910, %v782, %v988
        %990 = vst [vmem:[%s253 + $0x84] sm:$0xf] %v989
        %991 = vst [vmem:[%s253 + $0x88] sm:$0xf] %v791
        %v992 = vld [vmem:[%s253 + $0x8c] sm:$0x1]
        %v993 = vsel %vm256, %v792, %v992
        %994 = vst [vmem:[%s253 + $0x8c] sm:$0x1] %v993
        %v995 = vld [vmem:[%s253 + $0x90] sm:$0xf]
        %v996 = vsel %vm910, %v799, %v995
        %997 = vst [vmem:[%s253 + $0x90] sm:$0xf] %v996
        %998 = vst [vmem:[%s253 + $0x94] sm:$0xf] %v808
        %v999 = vld [vmem:[%s253 + $0x98] sm:$0x1]
        %v1000 = vsel %vm256, %v809, %v999
        %1001 = vst [vmem:[%s253 + $0x98] sm:$0x1] %v1000
        %v1002 = vld [vmem:[%s253 + $0x9c] sm:$0xf]
        %v1003 = vsel %vm910, %v816, %v1002
        %1004 = vst [vmem:[%s253 + $0x9c] sm:$0xf] %v1003
        %1005 = vst [vmem:[%s253 + $0xa0] sm:$0xf] %v825
        %v1006 = vld [vmem:[%s253 + $0xa4] sm:$0x1]
        %v1007 = vsel %vm256, %v826, %v1006
        %1008 = vst [vmem:[%s253 + $0xa4] sm:$0x1] %v1007
        %v1009 = vld [vmem:[%s253 + $0xa8] sm:$0xf]
        %v1010 = vsel %vm910, %v833, %v1009
        %1011 = vst [vmem:[%s253 + $0xa8] sm:$0xf] %v1010
        %1012 = vst [vmem:[%s253 + $0xac] sm:$0xf] %v842
        %v1013 = vld [vmem:[%s253 + $0xb0] sm:$0x1]
        %v1014 = vsel %vm256, %v843, %v1013
        %1015 = vst [vmem:[%s253 + $0xb0] sm:$0x1] %v1014
        %v1016 = vld [vmem:[%s253 + $0xb4] sm:$0xf]
        %v1017 = vsel %vm910, %v850, %v1016
        %1018 = vst [vmem:[%s253 + $0xb4] sm:$0xf] %v1017
        %1019 = vst [vmem:[%s253 + $0xb8] sm:$0xf] %v859
        %v1020 = vld [vmem:[%s253 + $0xbc] sm:$0x1]
        %v1021 = vsel %vm256, %v860, %v1020
        %1022 = vst [vmem:[%s253 + $0xbc] sm:$0x1] %v1021
        %v1023 = vld [vmem:[#allocation2] sm:$0xf]
        %v1024 = vld [vmem:[#allocation2 + $0x4] sm:$0xf]
        %v1025 = vld [vmem:[#allocation2 + $0xc] sm:$0xf]
        %v1026 = vld [vmem:[#allocation2 + $0x10] sm:$0xf]
        %v1027 = vld [vmem:[#allocation2 + $0x18] sm:$0xf]
        %v1028 = vld [vmem:[#allocation2 + $0x1c] sm:$0xf]
        %v1029 = vld [vmem:[#allocation2 + $0x24] sm:$0xf]
        %v1030 = vld [vmem:[#allocation2 + $0x28] sm:$0xf]
        %v1031 = vld [vmem:[#allocation2 + $0x30] sm:$0xf]
        %v1032 = vld [vmem:[#allocation2 + $0x34] sm:$0xf]
        %v1033 = vld [vmem:[#allocation2 + $0x3c] sm:$0xf]
        %v1034 = vld [vmem:[#allocation2 + $0x40] sm:$0xf]
        %v1035 = vld [vmem:[#allocation2 + $0x48] sm:$0xf]
        %v1036 = vld [vmem:[#allocation2 + $0x4c] sm:$0xf]
        %v1037 = vld [vmem:[#allocation2 + $0x54] sm:$0xf]
        %v1038 = vld [vmem:[#allocation2 + $0x58] sm:$0xf]
        %v1039 = vld [vmem:[#allocation2 + $0x60] sm:$0xf]
        %v1040 = vld [vmem:[#allocation2 + $0x64] sm:$0xf]
        %v1041 = vld [vmem:[#allocation2 + $0x6c] sm:$0xf]
        %v1042 = vld [vmem:[#allocation2 + $0x70] sm:$0xf]
        %v1043 = vld [vmem:[#allocation2 + $0x78] sm:$0xf]
        %v1044 = vld [vmem:[#allocation2 + $0x7c] sm:$0xf]
        %v1045 = vld [vmem:[#allocation2 + $0x84] sm:$0xf]
        %v1046 = vld [vmem:[#allocation2 + $0x88] sm:$0xf]
        %v1047 = vld [vmem:[#allocation2 + $0x90] sm:$0xf]
        %v1048 = vld [vmem:[#allocation2 + $0x94] sm:$0xf]
        %v1049 = vld [vmem:[#allocation2 + $0x9c] sm:$0xf]
        %v1050 = vld [vmem:[#allocation2 + $0xa0] sm:$0xf]
        %v1051 = vld [vmem:[#allocation2 + $0xa8] sm:$0xf]
        %v1052 = vld [vmem:[#allocation2 + $0xac] sm:$0xf]
        %v1053 = vld [vmem:[#allocation2 + $0xb4] sm:$0xf]
        %v1054 = vld [vmem:[#allocation2 + $0xb8] sm:$0xf]
        %v1055 = vld [vmem:[#allocation7] sm:$0xf]
        %v1056 = vld [vmem:[#allocation7 + $0x4] sm:$0xf]
        %v1057 = vld [vmem:[#allocation7 + $0x8] sm:$0xf]
        %v1058 = vld [vmem:[#allocation7 + $0xc] sm:$0xf]
        %v1059 = vld [vmem:[#allocation7 + $0x10] sm:$0xf]
        %v1060 = vld [vmem:[#allocation7 + $0x14] sm:$0xf]
        %v1061 = vld [vmem:[#allocation7 + $0x18] sm:$0xf]
        %v1062 = vld [vmem:[#allocation7 + $0x1c] sm:$0xf]
        %v1063 = vld [vmem:[#allocation7 + $0x20] sm:$0xf]
        %v1064 = vld [vmem:[#allocation7 + $0x24] sm:$0xf]
        %v1065 = vld [vmem:[#allocation7 + $0x28] sm:$0xf]
        %v1066 = vld [vmem:[#allocation7 + $0x2c] sm:$0xf]
        %v1067 = vld [vmem:[#allocation7 + $0x30] sm:$0xf]
        %v1068 = vld [vmem:[#allocation7 + $0x34] sm:$0xf]
        %v1069 = vld [vmem:[#allocation7 + $0x38] sm:$0xf]
        %v1070 = vld [vmem:[#allocation7 + $0x3c] sm:$0xf]
        %v1071 = vld [vmem:[#allocation2 + $0x8] sm:$0x1]
        %v1072 = vld [vmem:[#allocation2 + $0x14] sm:$0x1]
        %v1073 = vld [vmem:[#allocation2 + $0x20] sm:$0x1]
        %v1074 = vld [vmem:[#allocation2 + $0x2c] sm:$0x1]
        %v1075 = vld [vmem:[#allocation2 + $0x38] sm:$0x1]
        %v1076 = vld [vmem:[#allocation2 + $0x44] sm:$0x1]
        %v1077 = vld [vmem:[#allocation2 + $0x50] sm:$0x1]
        %v1078 = vld [vmem:[#allocation2 + $0x5c] sm:$0x1]
        %v1079 = vld [vmem:[#allocation2 + $0x68] sm:$0x1]
        %v1080 = vld [vmem:[#allocation2 + $0x74] sm:$0x1]
        %v1081 = vld [vmem:[#allocation2 + $0x80] sm:$0x1]
        %v1082 = vld [vmem:[#allocation2 + $0x8c] sm:$0x1]
        %v1083 = vld [vmem:[#allocation2 + $0x98] sm:$0x1]
        %v1084 = vld [vmem:[#allocation2 + $0xa4] sm:$0x1]
        %v1085 = vld [vmem:[#allocation2 + $0xb0] sm:$0x1]
        %v1086 = vld [vmem:[#allocation2 + $0xbc] sm:$0x1]
        %vm1087 = vsmask.f32 3328
        %vm1088 = vsmask.f32 7440
        %vm1089 = vmor %vm1087, %vm1088
        %v1091 = vshrl.u32 %v1023, 16
        %v1093 = vrot.slane %v1091, 4
        %v1094 = vshll.u32 %v1023, 16
        %v1096 = vrot.slane %v1094, 5
        %v1097 = vor.u32 %v1093, %v1096
        %v1098 = vrot.slane %v1097, 4
        %v1100 = vshll.u32 %v1024, 16
        %v1102 = vrot.slane %v1100, 5
        %v1103 = vsel %vm1089, %v1098, %v1102
        %v1104 = vshrl.u32 %v1024, 16
        %v1106 = vrot.slane %v1104, 4
        %v1107 = vor.u32 %v1106, %v1102
        %v1108 = vrot.slane %v1107, 4
        %v1110 = vshll.u32 %v1071, 16
        %v1112 = vrot.slane %v1110, 5
        %v1113 = vsel %vm1089, %v1108, %v1112
        %v1115 = vshrl.u32 %v1025, 16
        %v1117 = vrot.slane %v1115, 4
        %v1118 = vshll.u32 %v1025, 16
        %v1120 = vrot.slane %v1118, 5
        %v1121 = vor.u32 %v1117, %v1120
        %v1122 = vrot.slane %v1121, 4
        %v1124 = vshll.u32 %v1026, 16
        %v1126 = vrot.slane %v1124, 5
        %v1127 = vsel %vm1089, %v1122, %v1126
        %v1128 = vshrl.u32 %v1026, 16
        %v1130 = vrot.slane %v1128, 4
        %v1131 = vor.u32 %v1130, %v1126
        %v1132 = vrot.slane %v1131, 4
        %v1134 = vshll.u32 %v1072, 16
        %v1136 = vrot.slane %v1134, 5
        %v1137 = vsel %vm1089, %v1132, %v1136
        %v1139 = vshrl.u32 %v1027, 16
        %v1141 = vrot.slane %v1139, 4
        %v1142 = vshll.u32 %v1027, 16
        %v1144 = vrot.slane %v1142, 5
        %v1145 = vor.u32 %v1141, %v1144
        %v1146 = vrot.slane %v1145, 4
        %v1148 = vshll.u32 %v1028, 16
        %v1150 = vrot.slane %v1148, 5
        %v1151 = vsel %vm1089, %v1146, %v1150
        %v1152 = vshrl.u32 %v1028, 16
        %v1154 = vrot.slane %v1152, 4
        %v1155 = vor.u32 %v1154, %v1150
        %v1156 = vrot.slane %v1155, 4
        %v1158 = vshll.u32 %v1073, 16
        %v1160 = vrot.slane %v1158, 5
        %v1161 = vsel %vm1089, %v1156, %v1160
        %v1163 = vshrl.u32 %v1029, 16
        %v1165 = vrot.slane %v1163, 4
        %v1166 = vshll.u32 %v1029, 16
        %v1168 = vrot.slane %v1166, 5
        %v1169 = vor.u32 %v1165, %v1168
        %v1170 = vrot.slane %v1169, 4
        %v1172 = vshll.u32 %v1030, 16
        %v1174 = vrot.slane %v1172, 5
        %v1175 = vsel %vm1089, %v1170, %v1174
        %v1176 = vshrl.u32 %v1030, 16
        %v1178 = vrot.slane %v1176, 4
        %v1179 = vor.u32 %v1178, %v1174
        %v1180 = vrot.slane %v1179, 4
        %v1182 = vshll.u32 %v1074, 16
        %v1184 = vrot.slane %v1182, 5
        %v1185 = vsel %vm1089, %v1180, %v1184
        %v1187 = vshrl.u32 %v1031, 16
        %v1189 = vrot.slane %v1187, 4
        %v1190 = vshll.u32 %v1031, 16
        %v1192 = vrot.slane %v1190, 5
        %v1193 = vor.u32 %v1189, %v1192
        %v1194 = vrot.slane %v1193, 4
        %v1196 = vshll.u32 %v1032, 16
        %v1198 = vrot.slane %v1196, 5
        %v1199 = vsel %vm1089, %v1194, %v1198
        %v1200 = vshrl.u32 %v1032, 16
        %v1202 = vrot.slane %v1200, 4
        %v1203 = vor.u32 %v1202, %v1198
        %v1204 = vrot.slane %v1203, 4
        %v1206 = vshll.u32 %v1075, 16
        %v1208 = vrot.slane %v1206, 5
        %v1209 = vsel %vm1089, %v1204, %v1208
        %v1211 = vshrl.u32 %v1033, 16
        %v1213 = vrot.slane %v1211, 4
        %v1214 = vshll.u32 %v1033, 16
        %v1216 = vrot.slane %v1214, 5
        %v1217 = vor.u32 %v1213, %v1216
        %v1218 = vrot.slane %v1217, 4
        %v1220 = vshll.u32 %v1034, 16
        %v1222 = vrot.slane %v1220, 5
        %v1223 = vsel %vm1089, %v1218, %v1222
        %v1224 = vshrl.u32 %v1034, 16
        %v1226 = vrot.slane %v1224, 4
        %v1227 = vor.u32 %v1226, %v1222
        %v1228 = vrot.slane %v1227, 4
        %v1230 = vshll.u32 %v1076, 16
        %v1232 = vrot.slane %v1230, 5
        %v1233 = vsel %vm1089, %v1228, %v1232
        %v1235 = vshrl.u32 %v1035, 16
        %v1237 = vrot.slane %v1235, 4
        %v1238 = vshll.u32 %v1035, 16
        %v1240 = vrot.slane %v1238, 5
        %v1241 = vor.u32 %v1237, %v1240
        %v1242 = vrot.slane %v1241, 4
        %v1244 = vshll.u32 %v1036, 16
        %v1246 = vrot.slane %v1244, 5
        %v1247 = vsel %vm1089, %v1242, %v1246
        %v1248 = vshrl.u32 %v1036, 16
        %v1250 = vrot.slane %v1248, 4
        %v1251 = vor.u32 %v1250, %v1246
        %v1252 = vrot.slane %v1251, 4
        %v1254 = vshll.u32 %v1077, 16
        %v1256 = vrot.slane %v1254, 5
        %v1257 = vsel %vm1089, %v1252, %v1256
        %v1259 = vshrl.u32 %v1037, 16
        %v1261 = vrot.slane %v1259, 4
        %v1262 = vshll.u32 %v1037, 16
        %v1264 = vrot.slane %v1262, 5
        %v1265 = vor.u32 %v1261, %v1264
        %v1266 = vrot.slane %v1265, 4
        %v1268 = vshll.u32 %v1038, 16
        %v1270 = vrot.slane %v1268, 5
        %v1271 = vsel %vm1089, %v1266, %v1270
        %v1272 = vshrl.u32 %v1038, 16
        %v1274 = vrot.slane %v1272, 4
        %v1275 = vor.u32 %v1274, %v1270
        %v1276 = vrot.slane %v1275, 4
        %v1278 = vshll.u32 %v1078, 16
        %v1280 = vrot.slane %v1278, 5
        %v1281 = vsel %vm1089, %v1276, %v1280
        %v1283 = vshrl.u32 %v1039, 16
        %v1285 = vrot.slane %v1283, 4
        %v1286 = vshll.u32 %v1039, 16
        %v1288 = vrot.slane %v1286, 5
        %v1289 = vor.u32 %v1285, %v1288
        %v1290 = vrot.slane %v1289, 4
        %v1292 = vshll.u32 %v1040, 16
        %v1294 = vrot.slane %v1292, 5
        %v1295 = vsel %vm1089, %v1290, %v1294
        %v1296 = vshrl.u32 %v1040, 16
        %v1298 = vrot.slane %v1296, 4
        %v1299 = vor.u32 %v1298, %v1294
        %v1300 = vrot.slane %v1299, 4
        %v1302 = vshll.u32 %v1079, 16
        %v1304 = vrot.slane %v1302, 5
        %v1305 = vsel %vm1089, %v1300, %v1304
        %v1307 = vshrl.u32 %v1041, 16
        %v1309 = vrot.slane %v1307, 4
        %v1310 = vshll.u32 %v1041, 16
        %v1312 = vrot.slane %v1310, 5
        %v1313 = vor.u32 %v1309, %v1312
        %v1314 = vrot.slane %v1313, 4
        %v1316 = vshll.u32 %v1042, 16
        %v1318 = vrot.slane %v1316, 5
        %v1319 = vsel %vm1089, %v1314, %v1318
        %v1320 = vshrl.u32 %v1042, 16
        %v1322 = vrot.slane %v1320, 4
        %v1323 = vor.u32 %v1322, %v1318
        %v1324 = vrot.slane %v1323, 4
        %v1326 = vshll.u32 %v1080, 16
        %v1328 = vrot.slane %v1326, 5
        %v1329 = vsel %vm1089, %v1324, %v1328
        %v1331 = vshrl.u32 %v1043, 16
        %v1333 = vrot.slane %v1331, 4
        %v1334 = vshll.u32 %v1043, 16
        %v1336 = vrot.slane %v1334, 5
        %v1337 = vor.u32 %v1333, %v1336
        %v1338 = vrot.slane %v1337, 4
        %v1340 = vshll.u32 %v1044, 16
        %v1342 = vrot.slane %v1340, 5
        %v1343 = vsel %vm1089, %v1338, %v1342
        %v1344 = vshrl.u32 %v1044, 16
        %v1346 = vrot.slane %v1344, 4
        %v1347 = vor.u32 %v1346, %v1342
        %v1348 = vrot.slane %v1347, 4
        %v1350 = vshll.u32 %v1081, 16
        %v1352 = vrot.slane %v1350, 5
        %v1353 = vsel %vm1089, %v1348, %v1352
        %v1355 = vshrl.u32 %v1045, 16
        %v1357 = vrot.slane %v1355, 4
        %v1358 = vshll.u32 %v1045, 16
        %v1360 = vrot.slane %v1358, 5
        %v1361 = vor.u32 %v1357, %v1360
        %v1362 = vrot.slane %v1361, 4
        %v1364 = vshll.u32 %v1046, 16
        %v1366 = vrot.slane %v1364, 5
        %v1367 = vsel %vm1089, %v1362, %v1366
        %v1368 = vshrl.u32 %v1046, 16
        %v1370 = vrot.slane %v1368, 4
        %v1371 = vor.u32 %v1370, %v1366
        %v1372 = vrot.slane %v1371, 4
        %v1374 = vshll.u32 %v1082, 16
        %v1376 = vrot.slane %v1374, 5
        %v1377 = vsel %vm1089, %v1372, %v1376
        %v1379 = vshrl.u32 %v1047, 16
        %v1381 = vrot.slane %v1379, 4
        %v1382 = vshll.u32 %v1047, 16
        %v1384 = vrot.slane %v1382, 5
        %v1385 = vor.u32 %v1381, %v1384
        %v1386 = vrot.slane %v1385, 4
        %v1388 = vshll.u32 %v1048, 16
        %v1390 = vrot.slane %v1388, 5
        %v1391 = vsel %vm1089, %v1386, %v1390
        %v1392 = vshrl.u32 %v1048, 16
        %v1394 = vrot.slane %v1392, 4
        %v1395 = vor.u32 %v1394, %v1390
        %v1396 = vrot.slane %v1395, 4
        %v1398 = vshll.u32 %v1083, 16
        %v1400 = vrot.slane %v1398, 5
        %v1401 = vsel %vm1089, %v1396, %v1400
        %v1403 = vshrl.u32 %v1049, 16
        %v1405 = vrot.slane %v1403, 4
        %v1406 = vshll.u32 %v1049, 16
        %v1408 = vrot.slane %v1406, 5
        %v1409 = vor.u32 %v1405, %v1408
        %v1410 = vrot.slane %v1409, 4
        %v1412 = vshll.u32 %v1050, 16
        %v1414 = vrot.slane %v1412, 5
        %v1415 = vsel %vm1089, %v1410, %v1414
        %v1416 = vshrl.u32 %v1050, 16
        %v1418 = vrot.slane %v1416, 4
        %v1419 = vor.u32 %v1418, %v1414
        %v1420 = vrot.slane %v1419, 4
        %v1422 = vshll.u32 %v1084, 16
        %v1424 = vrot.slane %v1422, 5
        %v1425 = vsel %vm1089, %v1420, %v1424
        %v1427 = vshrl.u32 %v1051, 16
        %v1429 = vrot.slane %v1427, 4
        %v1430 = vshll.u32 %v1051, 16
        %v1432 = vrot.slane %v1430, 5
        %v1433 = vor.u32 %v1429, %v1432
        %v1434 = vrot.slane %v1433, 4
        %v1436 = vshll.u32 %v1052, 16
        %v1438 = vrot.slane %v1436, 5
        %v1439 = vsel %vm1089, %v1434, %v1438
        %v1440 = vshrl.u32 %v1052, 16
        %v1442 = vrot.slane %v1440, 4
        %v1443 = vor.u32 %v1442, %v1438
        %v1444 = vrot.slane %v1443, 4
        %v1446 = vshll.u32 %v1085, 16
        %v1448 = vrot.slane %v1446, 5
        %v1449 = vsel %vm1089, %v1444, %v1448
        %v1451 = vshrl.u32 %v1053, 16
        %v1453 = vrot.slane %v1451, 4
        %v1454 = vshll.u32 %v1053, 16
        %v1456 = vrot.slane %v1454, 5
        %v1457 = vor.u32 %v1453, %v1456
        %v1458 = vrot.slane %v1457, 4
        %v1460 = vshll.u32 %v1054, 16
        %v1462 = vrot.slane %v1460, 5
        %v1463 = vsel %vm1089, %v1458, %v1462
        %v1464 = vshrl.u32 %v1054, 16
        %v1466 = vrot.slane %v1464, 4
        %v1467 = vor.u32 %v1466, %v1462
        %v1468 = vrot.slane %v1467, 4
        %v1470 = vshll.u32 %v1086, 16
        %v1472 = vrot.slane %v1470, 5
        %v1473 = vsel %vm1089, %v1468, %v1472
        %s1474 = scalar_lea.vmem [#allocation7], 64
        %v1475 = vld [vmem:[%s1474] sm:$0xf]
        %v1476 = vld [vmem:[%s1474 + $0x4] sm:$0xf]
        %v1477 = vld [vmem:[%s1474 + $0x8] sm:$0xf]
        %v1478 = vld [vmem:[%s1474 + $0xc] sm:$0xf]
        %v1479 = vld [vmem:[%s1474 + $0x10] sm:$0xf]
        %v1480 = vld [vmem:[%s1474 + $0x14] sm:$0xf]
        %v1481 = vld [vmem:[%s1474 + $0x18] sm:$0xf]
        %v1482 = vld [vmem:[%s1474 + $0x1c] sm:$0xf]
        %v1483 = vld [vmem:[%s1474 + $0x20] sm:$0xf]
        %v1484 = vld [vmem:[%s1474 + $0x24] sm:$0xf]
        %v1485 = vld [vmem:[%s1474 + $0x28] sm:$0xf]
        %v1486 = vld [vmem:[%s1474 + $0x2c] sm:$0xf]
        %v1487 = vld [vmem:[%s1474 + $0x30] sm:$0xf]
        %v1488 = vld [vmem:[%s1474 + $0x34] sm:$0xf]
        %v1489 = vld [vmem:[%s1474 + $0x38] sm:$0xf]
        %v1490 = vld [vmem:[%s1474 + $0x3c] sm:$0xf]
        %v1491 = vunpack.c.l.b16 %v1103
        %v1492 = vunpack.c.l.b16 %v1113
        %v1493 = vunpack.c.l.b16 %v1127
        %v1494 = vunpack.c.l.b16 %v1137
        %v1495 = vunpack.c.l.b16 %v1151
        %v1496 = vunpack.c.l.b16 %v1161
        %v1497 = vunpack.c.l.b16 %v1175
        %v1498 = vunpack.c.l.b16 %v1185
        %v1499 = vunpack.c.l.b16 %v1199
        %v1500 = vunpack.c.l.b16 %v1209
        %v1501 = vunpack.c.l.b16 %v1223
        %v1502 = vunpack.c.l.b16 %v1233
        %v1503 = vunpack.c.l.b16 %v1247
        %v1504 = vunpack.c.l.b16 %v1257
        %v1505 = vunpack.c.l.b16 %v1271
        %v1506 = vunpack.c.l.b16 %v1281
        %v1507 = vunpack.c.l.b16 %v1295
        %v1508 = vunpack.c.l.b16 %v1305
        %v1509 = vunpack.c.l.b16 %v1319
        %v1510 = vunpack.c.l.b16 %v1329
        %v1511 = vunpack.c.l.b16 %v1343
        %v1512 = vunpack.c.l.b16 %v1353
        %v1513 = vunpack.c.l.b16 %v1367
        %v1514 = vunpack.c.l.b16 %v1377
        %v1515 = vunpack.c.l.b16 %v1391
        %v1516 = vunpack.c.l.b16 %v1401
        %v1517 = vunpack.c.l.b16 %v1415
        %v1518 = vunpack.c.l.b16 %v1425
        %v1519 = vunpack.c.l.b16 %v1439
        %v1520 = vunpack.c.l.b16 %v1449
        %v1521 = vunpack.c.l.b16 %v1463
        %v1522 = vunpack.c.l.b16 %v1473
        %v1523 = vpack.c.b16 %v1492, %v1491
        %v1524 = vpack.c.b16 %v1494, %v1493
        %v1525 = vpack.c.b16 %v1496, %v1495
        %v1526 = vpack.c.b16 %v1498, %v1497
        %v1527 = vpack.c.b16 %v1500, %v1499
        %v1528 = vpack.c.b16 %v1502, %v1501
        %v1529 = vpack.c.b16 %v1504, %v1503
        %v1530 = vpack.c.b16 %v1506, %v1505
        %v1531 = vpack.c.b16 %v1508, %v1507
        %v1532 = vpack.c.b16 %v1510, %v1509
        %v1533 = vpack.c.b16 %v1512, %v1511
        %v1534 = vpack.c.b16 %v1514, %v1513
        %v1535 = vpack.c.b16 %v1516, %v1515
        %v1536 = vpack.c.b16 %v1518, %v1517
        %v1537 = vpack.c.b16 %v1520, %v1519
        %v1538 = vpack.c.b16 %v1522, %v1521
        %v1571 = vunpack.c.l.b16 %v1475
        %v1572 = vunpack.c.l.b16 %v1476
        %v1573 = vunpack.c.l.b16 %v1477
        %v1574 = vunpack.c.l.b16 %v1478
        %v1575 = vunpack.c.l.b16 %v1479
        %v1576 = vunpack.c.l.b16 %v1480
        %v1577 = vunpack.c.l.b16 %v1481
        %v1578 = vunpack.c.l.b16 %v1482
        %v1579 = vunpack.c.l.b16 %v1483
        %v1580 = vunpack.c.l.b16 %v1484
        %v1581 = vunpack.c.l.b16 %v1485
        %v1582 = vunpack.c.l.b16 %v1486
        %v1583 = vunpack.c.l.b16 %v1487
        %v1584 = vunpack.c.l.b16 %v1488
        %v1585 = vunpack.c.l.b16 %v1489
        %v1586 = vunpack.c.l.b16 %v1490
        %v1587 = vpack.c.b16 %v1572, %v1571
        %v1588 = vpack.c.b16 %v1574, %v1573
        %v1589 = vpack.c.b16 %v1576, %v1575
        %v1590 = vpack.c.b16 %v1578, %v1577
        %v1591 = vpack.c.b16 %v1580, %v1579
        %v1592 = vpack.c.b16 %v1582, %v1581
        %v1593 = vpack.c.b16 %v1584, %v1583
        %v1594 = vpack.c.b16 %v1586, %v1585
        %1603 = vmatprep.subr.bf16.mxu0 0
        %1604 = vmatpush1.bf16.msra.mxu0 %v1587
        %1605 = vmatprep.subr.bf16.mxu0 0
        %1606 = vmatpush1.bf16.msra.mxu0 %v1588
        %1607 = vmatprep.subr.bf16.mxu0 0
        %1608 = vmatpush1.bf16.msra.mxu0 %v1589
        %1609 = vmatprep.subr.bf16.mxu0 0
        %1610 = vmatpush1.bf16.msra.mxu0 %v1590
        %1611 = vmatprep.subr.bf16.mxu0 0
        %1612 = vmatpush1.bf16.msra.mxu0 %v1591
        %1613 = vmatprep.subr.bf16.mxu0 0
        %1614 = vmatpush1.bf16.msra.mxu0 %v1592
        %1615 = vmatprep.subr.bf16.mxu0 0
        %1616 = vmatpush1.bf16.msra.mxu0 %v1593
        %1617 = vmatprep.subr.bf16.mxu0 0
        %1618 = vmatpush1.bf16.msra.mxu0 %v1594
        %1619 = vmatprep.subr.bf16.mxu0 0
        %1620 = vmatpush1.bf16.msra.mxu0 0
        %1621 = vmatprep.subr.bf16.mxu0 0
        %1622 = vmatpush1.bf16.msra.mxu0 0
        %1623 = vmatprep.subr.bf16.mxu0 0
        %1624 = vmatpush1.bf16.msra.mxu0 0
        %1625 = vmatprep.subr.bf16.mxu0 0
        %1626 = vmatpush1.bf16.msra.mxu0 0
        %1627 = vmatprep.subr.bf16.mxu0 0
        %1628 = vmatpush1.bf16.msra.mxu0 0
        %1629 = vmatprep.subr.bf16.mxu0 0
        %1630 = vmatpush1.bf16.msra.mxu0 0
        %1631 = vmatprep.subr.bf16.mxu0 0
        %1632 = vmatpush1.bf16.msra.mxu0 0
        %1633 = vmatprep.subr.bf16.mxu0 0
        %1634 = vmatpush1.bf16.msra.mxu0 0
        %1635 = vmatprep.mubr.bf16.mxu0 0
        %1636 = vmatmul.mubr.bf16.gmra.mrb[0].mxu0 %v1523
        %v1637 = vpop.f32.mrb[0].mxu0
        %v1638 = vadd.f32 0.0, %v1637
        %v1639 = vpop.f32.mrb[0].mxu0
        %v1640 = vpop.f32.mrb[0].mxu0
        %v1641 = vadd.f32 0.0, %v1640
        %v1642 = vpop.f32.mrb[0].mxu0
        %1643 = vmatprep.mubr.bf16.mxu0 0
        %1644 = vmatmul.mubr.bf16.gmra.mrb[0].mxu0 %v1524
        %v1645 = vpop.f32.mrb[0].mxu0
        %v1646 = vadd.f32 0.0, %v1645
        %v1647 = vpop.f32.mrb[0].mxu0
        %v1648 = vpop.f32.mrb[0].mxu0
        %v1649 = vadd.f32 0.0, %v1648
        %v1650 = vpop.f32.mrb[0].mxu0
        %1651 = vmatprep.mubr.bf16.mxu0 0
        %1652 = vmatmul.mubr.bf16.gmra.mrb[0].mxu0 %v1525
        %v1653 = vpop.f32.mrb[0].mxu0
        %v1654 = vadd.f32 0.0, %v1653
        %v1655 = vpop.f32.mrb[0].mxu0
        %v1656 = vpop.f32.mrb[0].mxu0
        %v1657 = vadd.f32 0.0, %v1656
        %v1658 = vpop.f32.mrb[0].mxu0
        %1659 = vmatprep.mubr.bf16.mxu0 0
        %1660 = vmatmul.mubr.bf16.gmra.mrb[0].mxu0 %v1526
        %v1661 = vpop.f32.mrb[0].mxu0
        %v1662 = vadd.f32 0.0, %v1661
        %v1663 = vpop.f32.mrb[0].mxu0
        %v1664 = vpop.f32.mrb[0].mxu0
        %v1665 = vadd.f32 0.0, %v1664
        %v1666 = vpop.f32.mrb[0].mxu0
        %1667 = vmatprep.mubr.bf16.mxu0 0
        %1668 = vmatmul.mubr.bf16.gmra.mrb[0].mxu0 %v1527
        %v1669 = vpop.f32.mrb[0].mxu0
        %v1670 = vadd.f32 0.0, %v1669
        %v1671 = vpop.f32.mrb[0].mxu0
        %v1672 = vpop.f32.mrb[0].mxu0
        %v1673 = vadd.f32 0.0, %v1672
        %v1674 = vpop.f32.mrb[0].mxu0
        %1675 = vmatprep.mubr.bf16.mxu0 0
        %1676 = vmatmul.mubr.bf16.gmra.mrb[0].mxu0 %v1528
        %v1677 = vpop.f32.mrb[0].mxu0
        %v1678 = vadd.f32 0.0, %v1677
        %v1679 = vpop.f32.mrb[0].mxu0
        %v1680 = vpop.f32.mrb[0].mxu0
        %v1681 = vadd.f32 0.0, %v1680
        %v1682 = vpop.f32.mrb[0].mxu0
        %1683 = vmatprep.mubr.bf16.mxu0 0
        %1684 = vmatmul.mubr.bf16.gmra.mrb[0].mxu0 %v1529
        %v1685 = vpop.f32.mrb[0].mxu0
        %v1686 = vadd.f32 0.0, %v1685
        %v1687 = vpop.f32.mrb[0].mxu0
        %v1688 = vpop.f32.mrb[0].mxu0
        %v1689 = vadd.f32 0.0, %v1688
        %v1690 = vpop.f32.mrb[0].mxu0
        %1691 = vmatprep.mubr.bf16.mxu0 0
        %1692 = vmatmul.mubr.bf16.gmra.mrb[0].mxu0 %v1530
        %v1693 = vpop.f32.mrb[0].mxu0
        %v1694 = vadd.f32 0.0, %v1693
        %v1695 = vpop.f32.mrb[0].mxu0
        %v1696 = vpop.f32.mrb[0].mxu0
        %v1697 = vadd.f32 0.0, %v1696
        %v1698 = vpop.f32.mrb[0].mxu0
        %1699 = vmatprep.mubr.bf16.mxu0 0
        %1700 = vmatmul.mubr.bf16.gmra.mrb[0].mxu0 %v1531
        %v1701 = vpop.f32.mrb[0].mxu0
        %v1702 = vadd.f32 0.0, %v1701
        %v1703 = vpop.f32.mrb[0].mxu0
        %v1704 = vpop.f32.mrb[0].mxu0
        %v1705 = vadd.f32 0.0, %v1704
        %v1706 = vpop.f32.mrb[0].mxu0
        %1707 = vmatprep.mubr.bf16.mxu0 0
        %1708 = vmatmul.mubr.bf16.gmra.mrb[0].mxu0 %v1532
        %v1709 = vpop.f32.mrb[0].mxu0
        %v1710 = vadd.f32 0.0, %v1709
        %v1711 = vpop.f32.mrb[0].mxu0
        %v1712 = vpop.f32.mrb[0].mxu0
        %v1713 = vadd.f32 0.0, %v1712
        %v1714 = vpop.f32.mrb[0].mxu0
        %1715 = vmatprep.mubr.bf16.mxu0 0
        %1716 = vmatmul.mubr.bf16.gmra.mrb[0].mxu0 %v1533
        %v1717 = vpop.f32.mrb[0].mxu0
        %v1718 = vadd.f32 0.0, %v1717
        %v1719 = vpop.f32.mrb[0].mxu0
        %v1720 = vpop.f32.mrb[0].mxu0
        %v1721 = vadd.f32 0.0, %v1720
        %v1722 = vpop.f32.mrb[0].mxu0
        %1723 = vmatprep.mubr.bf16.mxu0 0
        %1724 = vmatmul.mubr.bf16.gmra.mrb[0].mxu0 %v1534
        %v1725 = vpop.f32.mrb[0].mxu0
        %v1726 = vadd.f32 0.0, %v1725
        %v1727 = vpop.f32.mrb[0].mxu0
        %v1728 = vpop.f32.mrb[0].mxu0
        %v1729 = vadd.f32 0.0, %v1728
        %v1730 = vpop.f32.mrb[0].mxu0
        %1731 = vmatprep.mubr.bf16.mxu0 0
        %1732 = vmatmul.mubr.bf16.gmra.mrb[0].mxu0 %v1535
        %v1733 = vpop.f32.mrb[0].mxu0
        %v1734 = vadd.f32 0.0, %v1733
        %v1735 = vpop.f32.mrb[0].mxu0
        %v1736 = vpop.f32.mrb[0].mxu0
        %v1737 = vadd.f32 0.0, %v1736
        %v1738 = vpop.f32.mrb[0].mxu0
        %1739 = vmatprep.mubr.bf16.mxu0 0
        %1740 = vmatmul.mubr.bf16.gmra.mrb[0].mxu0 %v1536
        %v1741 = vpop.f32.mrb[0].mxu0
        %v1742 = vadd.f32 0.0, %v1741
        %v1743 = vpop.f32.mrb[0].mxu0
        %v1744 = vpop.f32.mrb[0].mxu0
        %v1745 = vadd.f32 0.0, %v1744
        %v1746 = vpop.f32.mrb[0].mxu0
        %1747 = vmatprep.mubr.bf16.mxu0 0
        %1748 = vmatmul.mubr.bf16.gmra.mrb[0].mxu0 %v1537
        %v1749 = vpop.f32.mrb[0].mxu0
        %v1750 = vadd.f32 0.0, %v1749
        %v1751 = vpop.f32.mrb[0].mxu0
        %v1752 = vpop.f32.mrb[0].mxu0
        %v1753 = vadd.f32 0.0, %v1752
        %v1754 = vpop.f32.mrb[0].mxu0
        %1755 = vmatprep.mubr.bf16.mxu0 0
        %1756 = vmatmul.mubr.bf16.gmra.mrb[0].mxu0 %v1538
        %v1757 = vpop.f32.mrb[0].mxu0
        %v1758 = vadd.f32 0.0, %v1757
        %v1759 = vpop.f32.mrb[0].mxu0
        %v1760 = vpop.f32.mrb[0].mxu0
        %v1761 = vadd.f32 0.0, %v1760
        %v1762 = vpop.f32.mrb[0].mxu0
        %1763 = vdwg.mxu0
        %v1796 = vunpack.c.l.b16 %v1023
        %v1797 = vunpack.c.l.b16 %v1024
        %v1798 = vunpack.c.l.b16 %v1025
        %v1799 = vunpack.c.l.b16 %v1026
        %v1800 = vunpack.c.l.b16 %v1027
        %v1801 = vunpack.c.l.b16 %v1028
        %v1802 = vunpack.c.l.b16 %v1029
        %v1803 = vunpack.c.l.b16 %v1030
        %v1804 = vunpack.c.l.b16 %v1031
        %v1805 = vunpack.c.l.b16 %v1032
        %v1806 = vunpack.c.l.b16 %v1033
        %v1807 = vunpack.c.l.b16 %v1034
        %v1808 = vunpack.c.l.b16 %v1035
        %v1809 = vunpack.c.l.b16 %v1036
        %v1810 = vunpack.c.l.b16 %v1037
        %v1811 = vunpack.c.l.b16 %v1038
        %v1812 = vunpack.c.l.b16 %v1039
        %v1813 = vunpack.c.l.b16 %v1040
        %v1814 = vunpack.c.l.b16 %v1041
        %v1815 = vunpack.c.l.b16 %v1042
        %v1816 = vunpack.c.l.b16 %v1043
        %v1817 = vunpack.c.l.b16 %v1044
        %v1818 = vunpack.c.l.b16 %v1045
        %v1819 = vunpack.c.l.b16 %v1046
        %v1820 = vunpack.c.l.b16 %v1047
        %v1821 = vunpack.c.l.b16 %v1048
        %v1822 = vunpack.c.l.b16 %v1049
        %v1823 = vunpack.c.l.b16 %v1050
        %v1824 = vunpack.c.l.b16 %v1051
        %v1825 = vunpack.c.l.b16 %v1052
        %v1826 = vunpack.c.l.b16 %v1053
        %v1827 = vunpack.c.l.b16 %v1054
        %v1828 = vpack.c.b16 %v1797, %v1796
        %v1829 = vpack.c.b16 %v1799, %v1798
        %v1830 = vpack.c.b16 %v1801, %v1800
        %v1831 = vpack.c.b16 %v1803, %v1802
        %v1832 = vpack.c.b16 %v1805, %v1804
        %v1833 = vpack.c.b16 %v1807, %v1806
        %v1834 = vpack.c.b16 %v1809, %v1808
        %v1835 = vpack.c.b16 %v1811, %v1810
        %v1836 = vpack.c.b16 %v1813, %v1812
        %v1837 = vpack.c.b16 %v1815, %v1814
        %v1838 = vpack.c.b16 %v1817, %v1816
        %v1839 = vpack.c.b16 %v1819, %v1818
        %v1840 = vpack.c.b16 %v1821, %v1820
        %v1841 = vpack.c.b16 %v1823, %v1822
        %v1842 = vpack.c.b16 %v1825, %v1824
        %v1843 = vpack.c.b16 %v1827, %v1826
        %v1876 = vunpack.c.l.b16 %v1055
        %v1877 = vunpack.c.l.b16 %v1056
        %v1878 = vunpack.c.l.b16 %v1057
        %v1879 = vunpack.c.l.b16 %v1058
        %v1880 = vunpack.c.l.b16 %v1059
        %v1881 = vunpack.c.l.b16 %v1060
        %v1882 = vunpack.c.l.b16 %v1061
        %v1883 = vunpack.c.l.b16 %v1062
        %v1884 = vunpack.c.l.b16 %v1063
        %v1885 = vunpack.c.l.b16 %v1064
        %v1886 = vunpack.c.l.b16 %v1065
        %v1887 = vunpack.c.l.b16 %v1066
        %v1888 = vunpack.c.l.b16 %v1067
        %v1889 = vunpack.c.l.b16 %v1068
        %v1890 = vunpack.c.l.b16 %v1069
        %v1891 = vunpack.c.l.b16 %v1070
        %v1892 = vpack.c.b16 %v1877, %v1876
        %v1893 = vpack.c.b16 %v1879, %v1878
        %v1894 = vpack.c.b16 %v1881, %v1880
        %v1895 = vpack.c.b16 %v1883, %v1882
        %v1896 = vpack.c.b16 %v1885, %v1884
        %v1897 = vpack.c.b16 %v1887, %v1886
        %v1898 = vpack.c.b16 %v1889, %v1888
        %v1899 = vpack.c.b16 %v1891, %v1890
        %1908 = vmatprep.subr.bf16.mxu0 0
        %1909 = vmatpush1.bf16.msra.mxu0 %v1892
        %1910 = vmatprep.subr.bf16.mxu0 0
        %1911 = vmatpush1.bf16.msra.mxu0 %v1893
        %1912 = vmatprep.subr.bf16.mxu0 0
        %1913 = vmatpush1.bf16.msra.mxu0 %v1894
        %1914 = vmatprep.subr.bf16.mxu0 0
        %1915 = vmatpush1.bf16.msra.mxu0 %v1895
        %1916 = vmatprep.subr.bf16.mxu0 0
        %1917 = vmatpush1.bf16.msra.mxu0 %v1896
        %1918 = vmatprep.subr.bf16.mxu0 0
        %1919 = vmatpush1.bf16.msra.mxu0 %v1897
        %1920 = vmatprep.subr.bf16.mxu0 0
        %1921 = vmatpush1.bf16.msra.mxu0 %v1898
        %1922 = vmatprep.subr.bf16.mxu0 0
        %1923 = vmatpush1.bf16.msra.mxu0 %v1899
        %1924 = vmatprep.subr.bf16.mxu0 0
        %1925 = vmatpush1.bf16.msra.mxu0 0
        %1926 = vmatprep.subr.bf16.mxu0 0
        %1927 = vmatpush1.bf16.msra.mxu0 0
        %1928 = vmatprep.subr.bf16.mxu0 0
        %1929 = vmatpush1.bf16.msra.mxu0 0
        %1930 = vmatprep.subr.bf16.mxu0 0
        %1931 = vmatpush1.bf16.msra.mxu0 0
        %1932 = vmatprep.subr.bf16.mxu0 0
        %1933 = vmatpush1.bf16.msra.mxu0 0
        %1934 = vmatprep.subr.bf16.mxu0 0
        %1935 = vmatpush1.bf16.msra.mxu0 0
        %1936 = vmatprep.subr.bf16.mxu0 0
        %1937 = vmatpush1.bf16.msra.mxu0 0
        %1938 = vmatprep.subr.bf16.mxu0 0
        %1939 = vmatpush1.bf16.msra.mxu0 0
        %1940 = vmatprep.mubr.bf16.mxu0 0
        %1941 = vmatmul.mubr.bf16.gmra.mrb[0].mxu0 %v1828
        %v1942 = vpop.f32.mrb[0].mxu0
        %v1943 = vadd.f32 %v1638, %v1942
        %v1944 = vpop.f32.mrb[0].mxu0
        %v1945 = vpop.f32.mrb[0].mxu0
        %v1946 = vadd.f32 %v1641, %v1945
        %v1947 = vpop.f32.mrb[0].mxu0
        %1948 = vmatprep.mubr.bf16.mxu0 0
        %1949 = vmatmul.mubr.bf16.gmra.mrb[0].mxu0 %v1829
        %v1950 = vpop.f32.mrb[0].mxu0
        %v1951 = vadd.f32 %v1646, %v1950
        %v1952 = vpop.f32.mrb[0].mxu0
        %v1953 = vpop.f32.mrb[0].mxu0
        %v1954 = vadd.f32 %v1649, %v1953
        %v1955 = vpop.f32.mrb[0].mxu0
        %1956 = vmatprep.mubr.bf16.mxu0 0
        %1957 = vmatmul.mubr.bf16.gmra.mrb[0].mxu0 %v1830
        %v1958 = vpop.f32.mrb[0].mxu0
        %v1959 = vadd.f32 %v1654, %v1958
        %v1960 = vpop.f32.mrb[0].mxu0
        %v1961 = vpop.f32.mrb[0].mxu0
        %v1962 = vadd.f32 %v1657, %v1961
        %v1963 = vpop.f32.mrb[0].mxu0
        %1964 = vmatprep.mubr.bf16.mxu0 0
        %1965 = vmatmul.mubr.bf16.gmra.mrb[0].mxu0 %v1831
        %v1966 = vpop.f32.mrb[0].mxu0
        %v1967 = vadd.f32 %v1662, %v1966
        %v1968 = vpop.f32.mrb[0].mxu0
        %v1969 = vpop.f32.mrb[0].mxu0
        %v1970 = vadd.f32 %v1665, %v1969
        %v1971 = vpop.f32.mrb[0].mxu0
        %1972 = vmatprep.mubr.bf16.mxu0 0
        %1973 = vmatmul.mubr.bf16.gmra.mrb[0].mxu0 %v1832
        %v1974 = vpop.f32.mrb[0].mxu0
        %v1975 = vadd.f32 %v1670, %v1974
        %v1976 = vpop.f32.mrb[0].mxu0
        %v1977 = vpop.f32.mrb[0].mxu0
        %v1978 = vadd.f32 %v1673, %v1977
        %v1979 = vpop.f32.mrb[0].mxu0
        %1980 = vmatprep.mubr.bf16.mxu0 0
        %1981 = vmatmul.mubr.bf16.gmra.mrb[0].mxu0 %v1833
        %v1982 = vpop.f32.mrb[0].mxu0
        %v1983 = vadd.f32 %v1678, %v1982
        %v1984 = vpop.f32.mrb[0].mxu0
        %v1985 = vpop.f32.mrb[0].mxu0
        %v1986 = vadd.f32 %v1681, %v1985
        %v1987 = vpop.f32.mrb[0].mxu0
        %1988 = vmatprep.mubr.bf16.mxu0 0
        %1989 = vmatmul.mubr.bf16.gmra.mrb[0].mxu0 %v1834
        %v1990 = vpop.f32.mrb[0].mxu0
        %v1991 = vadd.f32 %v1686, %v1990
        %v1992 = vpop.f32.mrb[0].mxu0
        %v1993 = vpop.f32.mrb[0].mxu0
        %v1994 = vadd.f32 %v1689, %v1993
        %v1995 = vpop.f32.mrb[0].mxu0
        %1996 = vmatprep.mubr.bf16.mxu0 0
        %1997 = vmatmul.mubr.bf16.gmra.mrb[0].mxu0 %v1835
        %v1998 = vpop.f32.mrb[0].mxu0
        %v1999 = vadd.f32 %v1694, %v1998
        %v2000 = vpop.f32.mrb[0].mxu0
        %v2001 = vpop.f32.mrb[0].mxu0
        %v2002 = vadd.f32 %v1697, %v2001
        %v2003 = vpop.f32.mrb[0].mxu0
        %2004 = vmatprep.mubr.bf16.mxu0 0
        %2005 = vmatmul.mubr.bf16.gmra.mrb[0].mxu0 %v1836
        %v2006 = vpop.f32.mrb[0].mxu0
        %v2007 = vadd.f32 %v1702, %v2006
        %v2008 = vpop.f32.mrb[0].mxu0
        %v2009 = vpop.f32.mrb[0].mxu0
        %v2010 = vadd.f32 %v1705, %v2009
        %v2011 = vpop.f32.mrb[0].mxu0
        %2012 = vmatprep.mubr.bf16.mxu0 0
        %2013 = vmatmul.mubr.bf16.gmra.mrb[0].mxu0 %v1837
        %v2014 = vpop.f32.mrb[0].mxu0
        %v2015 = vadd.f32 %v1710, %v2014
        %v2016 = vpop.f32.mrb[0].mxu0
        %v2017 = vpop.f32.mrb[0].mxu0
        %v2018 = vadd.f32 %v1713, %v2017
        %v2019 = vpop.f32.mrb[0].mxu0
        %2020 = vmatprep.mubr.bf16.mxu0 0
        %2021 = vmatmul.mubr.bf16.gmra.mrb[0].mxu0 %v1838
        %v2022 = vpop.f32.mrb[0].mxu0
        %v2023 = vadd.f32 %v1718, %v2022
        %v2024 = vpop.f32.mrb[0].mxu0
        %v2025 = vpop.f32.mrb[0].mxu0
        %v2026 = vadd.f32 %v1721, %v2025
        %v2027 = vpop.f32.mrb[0].mxu0
        %2028 = vmatprep.mubr.bf16.mxu0 0
        %2029 = vmatmul.mubr.bf16.gmra.mrb[0].mxu0 %v1839
        %v2030 = vpop.f32.mrb[0].mxu0
        %v2031 = vadd.f32 %v1726, %v2030
        %v2032 = vpop.f32.mrb[0].mxu0
        %v2033 = vpop.f32.mrb[0].mxu0
        %v2034 = vadd.f32 %v1729, %v2033
        %v2035 = vpop.f32.mrb[0].mxu0
        %2036 = vmatprep.mubr.bf16.mxu0 0
        %2037 = vmatmul.mubr.bf16.gmra.mrb[0].mxu0 %v1840
        %v2038 = vpop.f32.mrb[0].mxu0
        %v2039 = vadd.f32 %v1734, %v2038
        %v2040 = vpop.f32.mrb[0].mxu0
        %v2041 = vpop.f32.mrb[0].mxu0
        %v2042 = vadd.f32 %v1737, %v2041
        %v2043 = vpop.f32.mrb[0].mxu0
        %2044 = vmatprep.mubr.bf16.mxu0 0
        %2045 = vmatmul.mubr.bf16.gmra.mrb[0].mxu0 %v1841
        %v2046 = vpop.f32.mrb[0].mxu0
        %v2047 = vadd.f32 %v1742, %v2046
        %v2048 = vpop.f32.mrb[0].mxu0
        %v2049 = vpop.f32.mrb[0].mxu0
        %v2050 = vadd.f32 %v1745, %v2049
        %v2051 = vpop.f32.mrb[0].mxu0
        %2052 = vmatprep.mubr.bf16.mxu0 0
        %2053 = vmatmul.mubr.bf16.gmra.mrb[0].mxu0 %v1842
        %v2054 = vpop.f32.mrb[0].mxu0
        %v2055 = vadd.f32 %v1750, %v2054
        %v2056 = vpop.f32.mrb[0].mxu0
        %v2057 = vpop.f32.mrb[0].mxu0
        %v2058 = vadd.f32 %v1753, %v2057
        %v2059 = vpop.f32.mrb[0].mxu0
        %2060 = vmatprep.mubr.bf16.mxu0 0
        %2061 = vmatmul.mubr.bf16.gmra.mrb[0].mxu0 %v1843
        %v2062 = vpop.f32.mrb[0].mxu0
        %v2063 = vadd.f32 %v1758, %v2062
        %v2064 = vpop.f32.mrb[0].mxu0
        %v2065 = vpop.f32.mrb[0].mxu0
        %v2066 = vadd.f32 %v1761, %v2065
        %v2067 = vpop.f32.mrb[0].mxu0
        %2068 = vdwg.mxu0
        %v2069 = vld [vmem:[#allocation2] sm:$0xe]
        %v2070 = vld [vmem:[#allocation2 + $0xc] sm:$0xe]
        %v2071 = vld [vmem:[#allocation2 + $0x18] sm:$0xe]
        %v2072 = vld [vmem:[#allocation2 + $0x24] sm:$0xe]
        %v2073 = vld [vmem:[#allocation2 + $0x30] sm:$0xe]
        %v2074 = vld [vmem:[#allocation2 + $0x3c] sm:$0xe]
        %v2075 = vld [vmem:[#allocation2 + $0x48] sm:$0xe]
        %v2076 = vld [vmem:[#allocation2 + $0x54] sm:$0xe]
        %v2077 = vld [vmem:[#allocation2 + $0x60] sm:$0xe]
        %v2078 = vld [vmem:[#allocation2 + $0x6c] sm:$0xe]
        %v2079 = vld [vmem:[#allocation2 + $0x78] sm:$0xe]
        %v2080 = vld [vmem:[#allocation2 + $0x84] sm:$0xe]
        %v2081 = vld [vmem:[#allocation2 + $0x90] sm:$0xe]
        %v2082 = vld [vmem:[#allocation2 + $0x9c] sm:$0xe]
        %v2083 = vld [vmem:[#allocation2 + $0xa8] sm:$0xe]
        %v2084 = vld [vmem:[#allocation2 + $0xb4] sm:$0xe]
        %vm2117 = vcmask 1042432
        %vm2118 = vcmask 1046532
        %vm2119 = vmor %vm2117, %vm2118
        %v2120 = vrot.slane %v2069, 5
        %v2121 = vrot.slane %v2120, 4
        %v2122 = vrot.slane %v1024, 5
        %v2123 = vsel %vm2119, %v2121, %v2122
        %v2124 = vrot.slane %v2122, 4
        %v2125 = vrot.slane %v1071, 5
        %v2126 = vsel %vm2119, %v2124, %v2125
        %v2127 = vrot.slane %v2070, 5
        %v2128 = vrot.slane %v2127, 4
        %v2129 = vrot.slane %v1026, 5
        %v2130 = vsel %vm2119, %v2128, %v2129
        %v2131 = vrot.slane %v2129, 4
        %v2132 = vrot.slane %v1072, 5
        %v2133 = vsel %vm2119, %v2131, %v2132
        %v2134 = vrot.slane %v2071, 5
        %v2135 = vrot.slane %v2134, 4
        %v2136 = vrot.slane %v1028, 5
        %v2137 = vsel %vm2119, %v2135, %v2136
        %v2138 = vrot.slane %v2136, 4
        %v2139 = vrot.slane %v1073, 5
        %v2140 = vsel %vm2119, %v2138, %v2139
        %v2141 = vrot.slane %v2072, 5
        %v2142 = vrot.slane %v2141, 4
        %v2143 = vrot.slane %v1030, 5
        %v2144 = vsel %vm2119, %v2142, %v2143
        %v2145 = vrot.slane %v2143, 4
        %v2146 = vrot.slane %v1074, 5
        %v2147 = vsel %vm2119, %v2145, %v2146
        %v2148 = vrot.slane %v2073, 5
        %v2149 = vrot.slane %v2148, 4
        %v2150 = vrot.slane %v1032, 5
        %v2151 = vsel %vm2119, %v2149, %v2150
        %v2152 = vrot.slane %v2150, 4
        %v2153 = vrot.slane %v1075, 5
        %v2154 = vsel %vm2119, %v2152, %v2153
        %v2155 = vrot.slane %v2074, 5
        %v2156 = vrot.slane %v2155, 4
        %v2157 = vrot.slane %v1034, 5
        %v2158 = vsel %vm2119, %v2156, %v2157
        %v2159 = vrot.slane %v2157, 4
        %v2160 = vrot.slane %v1076, 5
        %v2161 = vsel %vm2119, %v2159, %v2160
        %v2162 = vrot.slane %v2075, 5
        %v2163 = vrot.slane %v2162, 4
        %v2164 = vrot.slane %v1036, 5
        %v2165 = vsel %vm2119, %v2163, %v2164
        %v2166 = vrot.slane %v2164, 4
        %v2167 = vrot.slane %v1077, 5
        %v2168 = vsel %vm2119, %v2166, %v2167
        %v2169 = vrot.slane %v2076, 5
        %v2170 = vrot.slane %v2169, 4
        %v2171 = vrot.slane %v1038, 5
        %v2172 = vsel %vm2119, %v2170, %v2171
        %v2173 = vrot.slane %v2171, 4
        %v2174 = vrot.slane %v1078, 5
        %v2175 = vsel %vm2119, %v2173, %v2174
        %v2176 = vrot.slane %v2077, 5
        %v2177 = vrot.slane %v2176, 4
        %v2178 = vrot.slane %v1040, 5
        %v2179 = vsel %vm2119, %v2177, %v2178
        %v2180 = vrot.slane %v2178, 4
        %v2181 = vrot.slane %v1079, 5
        %v2182 = vsel %vm2119, %v2180, %v2181
        %v2183 = vrot.slane %v2078, 5
        %v2184 = vrot.slane %v2183, 4
        %v2185 = vrot.slane %v1042, 5
        %v2186 = vsel %vm2119, %v2184, %v2185
        %v2187 = vrot.slane %v2185, 4
        %v2188 = vrot.slane %v1080, 5
        %v2189 = vsel %vm2119, %v2187, %v2188
        %v2190 = vrot.slane %v2079, 5
        %v2191 = vrot.slane %v2190, 4
        %v2192 = vrot.slane %v1044, 5
        %v2193 = vsel %vm2119, %v2191, %v2192
        %v2194 = vrot.slane %v2192, 4
        %v2195 = vrot.slane %v1081, 5
        %v2196 = vsel %vm2119, %v2194, %v2195
        %v2197 = vrot.slane %v2080, 5
        %v2198 = vrot.slane %v2197, 4
        %v2199 = vrot.slane %v1046, 5
        %v2200 = vsel %vm2119, %v2198, %v2199
        %v2201 = vrot.slane %v2199, 4
        %v2202 = vrot.slane %v1082, 5
        %v2203 = vsel %vm2119, %v2201, %v2202
        %v2204 = vrot.slane %v2081, 5
        %v2205 = vrot.slane %v2204, 4
        %v2206 = vrot.slane %v1048, 5
        %v2207 = vsel %vm2119, %v2205, %v2206
        %v2208 = vrot.slane %v2206, 4
        %v2209 = vrot.slane %v1083, 5
        %v2210 = vsel %vm2119, %v2208, %v2209
        %v2211 = vrot.slane %v2082, 5
        %v2212 = vrot.slane %v2211, 4
        %v2213 = vrot.slane %v1050, 5
        %v2214 = vsel %vm2119, %v2212, %v2213
        %v2215 = vrot.slane %v2213, 4
        %v2216 = vrot.slane %v1084, 5
        %v2217 = vsel %vm2119, %v2215, %v2216
        %v2218 = vrot.slane %v2083, 5
        %v2219 = vrot.slane %v2218, 4
        %v2220 = vrot.slane %v1052, 5
        %v2221 = vsel %vm2119, %v2219, %v2220
        %v2222 = vrot.slane %v2220, 4
        %v2223 = vrot.slane %v1085, 5
        %v2224 = vsel %vm2119, %v2222, %v2223
        %v2225 = vrot.slane %v2084, 5
        %v2226 = vrot.slane %v2225, 4
        %v2227 = vrot.slane %v1054, 5
        %v2228 = vsel %vm2119, %v2226, %v2227
        %v2229 = vrot.slane %v2227, 4
        %v2230 = vrot.slane %v1086, 5
        %v2231 = vsel %vm2119, %v2229, %v2230
        %s2232 = scalar_lea.vmem [#allocation7], 128
        %v2233 = vld [vmem:[%s2232] sm:$0xf]
        %v2234 = vld [vmem:[%s2232 + $0x4] sm:$0xf]
        %v2235 = vld [vmem:[%s2232 + $0x8] sm:$0xf]
        %v2236 = vld [vmem:[%s2232 + $0xc] sm:$0xf]
        %v2237 = vld [vmem:[%s2232 + $0x10] sm:$0xf]
        %v2238 = vld [vmem:[%s2232 + $0x14] sm:$0xf]
        %v2239 = vld [vmem:[%s2232 + $0x18] sm:$0xf]
        %v2240 = vld [vmem:[%s2232 + $0x1c] sm:$0xf]
        %v2241 = vld [vmem:[%s2232 + $0x20] sm:$0xf]
        %v2242 = vld [vmem:[%s2232 + $0x24] sm:$0xf]
        %v2243 = vld [vmem:[%s2232 + $0x28] sm:$0xf]
        %v2244 = vld [vmem:[%s2232 + $0x2c] sm:$0xf]
        %v2245 = vld [vmem:[%s2232 + $0x30] sm:$0xf]
        %v2246 = vld [vmem:[%s2232 + $0x34] sm:$0xf]
        %v2247 = vld [vmem:[%s2232 + $0x38] sm:$0xf]
        %v2248 = vld [vmem:[%s2232 + $0x3c] sm:$0xf]
        %v2249 = vunpack.c.l.b16 %v2123
        %v2250 = vunpack.c.l.b16 %v2126
        %v2251 = vunpack.c.l.b16 %v2130
        %v2252 = vunpack.c.l.b16 %v2133
        %v2253 = vunpack.c.l.b16 %v2137
        %v2254 = vunpack.c.l.b16 %v2140
        %v2255 = vunpack.c.l.b16 %v2144
        %v2256 = vunpack.c.l.b16 %v2147
        %v2257 = vunpack.c.l.b16 %v2151
        %v2258 = vunpack.c.l.b16 %v2154
        %v2259 = vunpack.c.l.b16 %v2158
        %v2260 = vunpack.c.l.b16 %v2161
        %v2261 = vunpack.c.l.b16 %v2165
        %v2262 = vunpack.c.l.b16 %v2168
        %v2263 = vunpack.c.l.b16 %v2172
        %v2264 = vunpack.c.l.b16 %v2175
        %v2265 = vunpack.c.l.b16 %v2179
        %v2266 = vunpack.c.l.b16 %v2182
        %v2267 = vunpack.c.l.b16 %v2186
        %v2268 = vunpack.c.l.b16 %v2189
        %v2269 = vunpack.c.l.b16 %v2193
        %v2270 = vunpack.c.l.b16 %v2196
        %v2271 = vunpack.c.l.b16 %v2200
        %v2272 = vunpack.c.l.b16 %v2203
        %v2273 = vunpack.c.l.b16 %v2207
        %v2274 = vunpack.c.l.b16 %v2210
        %v2275 = vunpack.c.l.b16 %v2214
        %v2276 = vunpack.c.l.b16 %v2217
        %v2277 = vunpack.c.l.b16 %v2221
        %v2278 = vunpack.c.l.b16 %v2224
        %v2279 = vunpack.c.l.b16 %v2228
        %v2280 = vunpack.c.l.b16 %v2231
        %v2281 = vpack.c.b16 %v2250, %v2249
        %v2282 = vpack.c.b16 %v2252, %v2251
        %v2283 = vpack.c.b16 %v2254, %v2253
        %v2284 = vpack.c.b16 %v2256, %v2255
        %v2285 = vpack.c.b16 %v2258, %v2257
        %v2286 = vpack.c.b16 %v2260, %v2259
        %v2287 = vpack.c.b16 %v2262, %v2261
        %v2288 = vpack.c.b16 %v2264, %v2263
        %v2289 = vpack.c.b16 %v2266, %v2265
        %v2290 = vpack.c.b16 %v2268, %v2267
        %v2291 = vpack.c.b16 %v2270, %v2269
        %v2292 = vpack.c.b16 %v2272, %v2271
        %v2293 = vpack.c.b16 %v2274, %v2273
        %v2294 = vpack.c.b16 %v2276, %v2275
        %v2295 = vpack.c.b16 %v2278, %v2277
        %v2296 = vpack.c.b16 %v2280, %v2279
        %v2329 = vunpack.c.l.b16 %v2233
        %v2330 = vunpack.c.l.b16 %v2234
        %v2331 = vunpack.c.l.b16 %v2235
        %v2332 = vunpack.c.l.b16 %v2236
        %v2333 = vunpack.c.l.b16 %v2237
        %v2334 = vunpack.c.l.b16 %v2238
        %v2335 = vunpack.c.l.b16 %v2239
        %v2336 = vunpack.c.l.b16 %v2240
        %v2337 = vunpack.c.l.b16 %v2241
        %v2338 = vunpack.c.l.b16 %v2242
        %v2339 = vunpack.c.l.b16 %v2243
        %v2340 = vunpack.c.l.b16 %v2244
        %v2341 = vunpack.c.l.b16 %v2245
        %v2342 = vunpack.c.l.b16 %v2246
        %v2343 = vunpack.c.l.b16 %v2247
        %v2344 = vunpack.c.l.b16 %v2248
        %v2345 = vpack.c.b16 %v2330, %v2329
        %v2346 = vpack.c.b16 %v2332, %v2331
        %v2347 = vpack.c.b16 %v2334, %v2333
        %v2348 = vpack.c.b16 %v2336, %v2335
        %v2349 = vpack.c.b16 %v2338, %v2337
        %v2350 = vpack.c.b16 %v2340, %v2339
        %v2351 = vpack.c.b16 %v2342, %v2341
        %v2352 = vpack.c.b16 %v2344, %v2343
        %2361 = vmatprep.subr.bf16.mxu0 0
        %2362 = vmatpush1.bf16.msra.mxu0 %v2345
        %2363 = vmatprep.subr.bf16.mxu0 0
        %2364 = vmatpush1.bf16.msra.mxu0 %v2346
        %2365 = vmatprep.subr.bf16.mxu0 0
        %2366 = vmatpush1.bf16.msra.mxu0 %v2347
        %2367 = vmatprep.subr.bf16.mxu0 0
        %2368 = vmatpush1.bf16.msra.mxu0 %v2348
        %2369 = vmatprep.subr.bf16.mxu0 0
        %2370 = vmatpush1.bf16.msra.mxu0 %v2349
        %2371 = vmatprep.subr.bf16.mxu0 0
        %2372 = vmatpush1.bf16.msra.mxu0 %v2350
        %2373 = vmatprep.subr.bf16.mxu0 0
        %2374 = vmatpush1.bf16.msra.mxu0 %v2351
        %2375 = vmatprep.subr.bf16.mxu0 0
        %2376 = vmatpush1.bf16.msra.mxu0 %v2352
        %2377 = vmatprep.subr.bf16.mxu0 0
        %2378 = vmatpush1.bf16.msra.mxu0 0
        %2379 = vmatprep.subr.bf16.mxu0 0
        %2380 = vmatpush1.bf16.msra.mxu0 0
        %2381 = vmatprep.subr.bf16.mxu0 0
        %2382 = vmatpush1.bf16.msra.mxu0 0
        %2383 = vmatprep.subr.bf16.mxu0 0
        %2384 = vmatpush1.bf16.msra.mxu0 0
        %2385 = vmatprep.subr.bf16.mxu0 0
        %2386 = vmatpush1.bf16.msra.mxu0 0
        %2387 = vmatprep.subr.bf16.mxu0 0
        %2388 = vmatpush1.bf16.msra.mxu0 0
        %2389 = vmatprep.subr.bf16.mxu0 0
        %2390 = vmatpush1.bf16.msra.mxu0 0
        %2391 = vmatprep.subr.bf16.mxu0 0
        %2392 = vmatpush1.bf16.msra.mxu0 0
        %2393 = vmatprep.mubr.bf16.mxu0 0
        %2394 = vmatmul.mubr.bf16.gmra.mrb[0].mxu0 %v2281
        %v2395 = vpop.f32.mrb[0].mxu0
        %v2396 = vadd.f32 0.0, %v2395
        %v2397 = vpop.f32.mrb[0].mxu0
        %v2398 = vpop.f32.mrb[0].mxu0
        %v2399 = vadd.f32 0.0, %v2398
        %v2400 = vpop.f32.mrb[0].mxu0
        %2401 = vmatprep.mubr.bf16.mxu0 0
        %2402 = vmatmul.mubr.bf16.gmra.mrb[0].mxu0 %v2282
        %v2403 = vpop.f32.mrb[0].mxu0
        %v2404 = vadd.f32 0.0, %v2403
        %v2405 = vpop.f32.mrb[0].mxu0
        %v2406 = vpop.f32.mrb[0].mxu0
        %v2407 = vadd.f32 0.0, %v2406
        %v2408 = vpop.f32.mrb[0].mxu0
        %2409 = vmatprep.mubr.bf16.mxu0 0
        %2410 = vmatmul.mubr.bf16.gmra.mrb[0].mxu0 %v2283
        %v2411 = vpop.f32.mrb[0].mxu0
        %v2412 = vadd.f32 0.0, %v2411
        %v2413 = vpop.f32.mrb[0].mxu0
        %v2414 = vpop.f32.mrb[0].mxu0
        %v2415 = vadd.f32 0.0, %v2414
        %v2416 = vpop.f32.mrb[0].mxu0
        %2417 = vmatprep.mubr.bf16.mxu0 0
        %2418 = vmatmul.mubr.bf16.gmra.mrb[0].mxu0 %v2284
        %v2419 = vpop.f32.mrb[0].mxu0
        %v2420 = vadd.f32 0.0, %v2419
        %v2421 = vpop.f32.mrb[0].mxu0
        %v2422 = vpop.f32.mrb[0].mxu0
        %v2423 = vadd.f32 0.0, %v2422
        %v2424 = vpop.f32.mrb[0].mxu0
        %2425 = vmatprep.mubr.bf16.mxu0 0
        %2426 = vmatmul.mubr.bf16.gmra.mrb[0].mxu0 %v2285
        %v2427 = vpop.f32.mrb[0].mxu0
        %v2428 = vadd.f32 0.0, %v2427
        %v2429 = vpop.f32.mrb[0].mxu0
        %v2430 = vpop.f32.mrb[0].mxu0
        %v2431 = vadd.f32 0.0, %v2430
        %v2432 = vpop.f32.mrb[0].mxu0
        %2433 = vmatprep.mubr.bf16.mxu0 0
        %2434 = vmatmul.mubr.bf16.gmra.mrb[0].mxu0 %v2286
        %v2435 = vpop.f32.mrb[0].mxu0
        %v2436 = vadd.f32 0.0, %v2435
        %v2437 = vpop.f32.mrb[0].mxu0
        %v2438 = vpop.f32.mrb[0].mxu0
        %v2439 = vadd.f32 0.0, %v2438
        %v2440 = vpop.f32.mrb[0].mxu0
        %2441 = vmatprep.mubr.bf16.mxu0 0
        %2442 = vmatmul.mubr.bf16.gmra.mrb[0].mxu0 %v2287
        %v2443 = vpop.f32.mrb[0].mxu0
        %v2444 = vadd.f32 0.0, %v2443
        %v2445 = vpop.f32.mrb[0].mxu0
        %v2446 = vpop.f32.mrb[0].mxu0
        %v2447 = vadd.f32 0.0, %v2446
        %v2448 = vpop.f32.mrb[0].mxu0
        %2449 = vmatprep.mubr.bf16.mxu0 0
        %2450 = vmatmul.mubr.bf16.gmra.mrb[0].mxu0 %v2288
        %v2451 = vpop.f32.mrb[0].mxu0
        %v2452 = vadd.f32 0.0, %v2451
        %v2453 = vpop.f32.mrb[0].mxu0
        %v2454 = vpop.f32.mrb[0].mxu0
        %v2455 = vadd.f32 0.0, %v2454
        %v2456 = vpop.f32.mrb[0].mxu0
        %2457 = vmatprep.mubr.bf16.mxu0 0
        %2458 = vmatmul.mubr.bf16.gmra.mrb[0].mxu0 %v2289
        %v2459 = vpop.f32.mrb[0].mxu0
        %v2460 = vadd.f32 0.0, %v2459
        %v2461 = vpop.f32.mrb[0].mxu0
        %v2462 = vpop.f32.mrb[0].mxu0
        %v2463 = vadd.f32 0.0, %v2462
        %v2464 = vpop.f32.mrb[0].mxu0
        %2465 = vmatprep.mubr.bf16.mxu0 0
        %2466 = vmatmul.mubr.bf16.gmra.mrb[0].mxu0 %v2290
        %v2467 = vpop.f32.mrb[0].mxu0
        %v2468 = vadd.f32 0.0, %v2467
        %v2469 = vpop.f32.mrb[0].mxu0
        %v2470 = vpop.f32.mrb[0].mxu0
        %v2471 = vadd.f32 0.0, %v2470
        %v2472 = vpop.f32.mrb[0].mxu0
        %2473 = vmatprep.mubr.bf16.mxu0 0
        %2474 = vmatmul.mubr.bf16.gmra.mrb[0].mxu0 %v2291
        %v2475 = vpop.f32.mrb[0].mxu0
        %v2476 = vadd.f32 0.0, %v2475
        %v2477 = vpop.f32.mrb[0].mxu0
        %v2478 = vpop.f32.mrb[0].mxu0
        %v2479 = vadd.f32 0.0, %v2478
        %v2480 = vpop.f32.mrb[0].mxu0
        %2481 = vmatprep.mubr.bf16.mxu0 0
        %2482 = vmatmul.mubr.bf16.gmra.mrb[0].mxu0 %v2292
        %v2483 = vpop.f32.mrb[0].mxu0
        %v2484 = vadd.f32 0.0, %v2483
        %v2485 = vpop.f32.mrb[0].mxu0
        %v2486 = vpop.f32.mrb[0].mxu0
        %v2487 = vadd.f32 0.0, %v2486
        %v2488 = vpop.f32.mrb[0].mxu0
        %2489 = vmatprep.mubr.bf16.mxu0 0
        %2490 = vmatmul.mubr.bf16.gmra.mrb[0].mxu0 %v2293
        %v2491 = vpop.f32.mrb[0].mxu0
        %v2492 = vadd.f32 0.0, %v2491
        %v2493 = vpop.f32.mrb[0].mxu0
        %v2494 = vpop.f32.mrb[0].mxu0
        %v2495 = vadd.f32 0.0, %v2494
        %v2496 = vpop.f32.mrb[0].mxu0
        %2497 = vmatprep.mubr.bf16.mxu0 0
        %2498 = vmatmul.mubr.bf16.gmra.mrb[0].mxu0 %v2294
        %v2499 = vpop.f32.mrb[0].mxu0
        %v2500 = vadd.f32 0.0, %v2499
        %v2501 = vpop.f32.mrb[0].mxu0
        %v2502 = vpop.f32.mrb[0].mxu0
        %v2503 = vadd.f32 0.0, %v2502
        %v2504 = vpop.f32.mrb[0].mxu0
        %2505 = vmatprep.mubr.bf16.mxu0 0
        %2506 = vmatmul.mubr.bf16.gmra.mrb[0].mxu0 %v2295
        %v2507 = vpop.f32.mrb[0].mxu0
        %v2508 = vadd.f32 0.0, %v2507
        %v2509 = vpop.f32.mrb[0].mxu0
        %v2510 = vpop.f32.mrb[0].mxu0
        %v2511 = vadd.f32 0.0, %v2510
        %v2512 = vpop.f32.mrb[0].mxu0
        %2513 = vmatprep.mubr.bf16.mxu0 0
        %2514 = vmatmul.mubr.bf16.gmra.mrb[0].mxu0 %v2296
        %v2515 = vpop.f32.mrb[0].mxu0
        %v2516 = vadd.f32 0.0, %v2515
        %v2517 = vpop.f32.mrb[0].mxu0
        %v2518 = vpop.f32.mrb[0].mxu0
        %v2519 = vadd.f32 0.0, %v2518
        %v2520 = vpop.f32.mrb[0].mxu0
        %2521 = vdwg.mxu0
        %v2522 = vadd.f32 %v1943, %v2396
        %v2523 = vadd.f32 %v1946, %v2399
        %v2524 = vadd.f32 %v1951, %v2404
        %v2525 = vadd.f32 %v1954, %v2407
        %v2526 = vadd.f32 %v1959, %v2412
        %v2527 = vadd.f32 %v1962, %v2415
        %v2528 = vadd.f32 %v1967, %v2420
        %v2529 = vadd.f32 %v1970, %v2423
        %v2530 = vadd.f32 %v1975, %v2428
        %v2531 = vadd.f32 %v1978, %v2431
        %v2532 = vadd.f32 %v1983, %v2436
        %v2533 = vadd.f32 %v1986, %v2439
        %v2534 = vadd.f32 %v1991, %v2444
        %v2535 = vadd.f32 %v1994, %v2447
        %v2536 = vadd.f32 %v1999, %v2452
        %v2537 = vadd.f32 %v2002, %v2455
        %v2538 = vadd.f32 %v2007, %v2460
        %v2539 = vadd.f32 %v2010, %v2463
        %v2540 = vadd.f32 %v2015, %v2468
        %v2541 = vadd.f32 %v2018, %v2471
        %v2542 = vadd.f32 %v2023, %v2476
        %v2543 = vadd.f32 %v2026, %v2479
        %v2544 = vadd.f32 %v2031, %v2484
        %v2545 = vadd.f32 %v2034, %v2487
        %v2546 = vadd.f32 %v2039, %v2492
        %v2547 = vadd.f32 %v2042, %v2495
        %v2548 = vadd.f32 %v2047, %v2500
        %v2549 = vadd.f32 %v2050, %v2503
        %v2550 = vadd.f32 %v2055, %v2508
        %v2551 = vadd.f32 %v2058, %v2511
        %v2552 = vadd.f32 %v2063, %v2516
        %v2553 = vadd.f32 %v2066, %v2519
        %v2554 = vld [vmem:[%s253] sm:$0xf]
        %v2555 = vld [vmem:[%s253 + $0x4] sm:$0xf]
        %v2556 = vld [vmem:[%s253 + $0xc] sm:$0xf]
        %v2557 = vld [vmem:[%s253 + $0x10] sm:$0xf]
        %v2558 = vld [vmem:[%s253 + $0x18] sm:$0xf]
        %v2559 = vld [vmem:[%s253 + $0x1c] sm:$0xf]
        %v2560 = vld [vmem:[%s253 + $0x24] sm:$0xf]
        %v2561 = vld [vmem:[%s253 + $0x28] sm:$0xf]
        %v2562 = vld [vmem:[%s253 + $0x30] sm:$0xf]
        %v2563 = vld [vmem:[%s253 + $0x34] sm:$0xf]
        %v2564 = vld [vmem:[%s253 + $0x3c] sm:$0xf]
        %v2565 = vld [vmem:[%s253 + $0x40] sm:$0xf]
        %v2566 = vld [vmem:[%s253 + $0x48] sm:$0xf]
        %v2567 = vld [vmem:[%s253 + $0x4c] sm:$0xf]
        %v2568 = vld [vmem:[%s253 + $0x54] sm:$0xf]
        %v2569 = vld [vmem:[%s253 + $0x58] sm:$0xf]
        %v2570 = vld [vmem:[%s253 + $0x60] sm:$0xf]
        %v2571 = vld [vmem:[%s253 + $0x64] sm:$0xf]
        %v2572 = vld [vmem:[%s253 + $0x6c] sm:$0xf]
        %v2573 = vld [vmem:[%s253 + $0x70] sm:$0xf]
        %v2574 = vld [vmem:[%s253 + $0x78] sm:$0xf]
        %v2575 = vld [vmem:[%s253 + $0x7c] sm:$0xf]
        %v2576 = vld [vmem:[%s253 + $0x84] sm:$0xf]
        %v2577 = vld [vmem:[%s253 + $0x88] sm:$0xf]
        %v2578 = vld [vmem:[%s253 + $0x90] sm:$0xf]
        %v2579 = vld [vmem:[%s253 + $0x94] sm:$0xf]
        %v2580 = vld [vmem:[%s253 + $0x9c] sm:$0xf]
        %v2581 = vld [vmem:[%s253 + $0xa0] sm:$0xf]
        %v2582 = vld [vmem:[%s253 + $0xa8] sm:$0xf]
        %v2583 = vld [vmem:[%s253 + $0xac] sm:$0xf]
        %v2584 = vld [vmem:[%s253 + $0xb4] sm:$0xf]
        %v2585 = vld [vmem:[%s253 + $0xb8] sm:$0xf]
        %s2586 = scalar_lea.vmem [#allocation7], 192
        %v2587 = vld [vmem:[%s2586] sm:$0xf]
        %v2588 = vld [vmem:[%s2586 + $0x4] sm:$0xf]
        %v2589 = vld [vmem:[%s2586 + $0x8] sm:$0xf]
        %v2590 = vld [vmem:[%s2586 + $0xc] sm:$0xf]
        %v2591 = vld [vmem:[%s2586 + $0x10] sm:$0xf]
        %v2592 = vld [vmem:[%s2586 + $0x14] sm:$0xf]
        %v2593 = vld [vmem:[%s2586 + $0x18] sm:$0xf]
        %v2594 = vld [vmem:[%s2586 + $0x1c] sm:$0xf]
        %v2595 = vld [vmem:[%s2586 + $0x20] sm:$0xf]
        %v2596 = vld [vmem:[%s2586 + $0x24] sm:$0xf]
        %v2597 = vld [vmem:[%s2586 + $0x28] sm:$0xf]
        %v2598 = vld [vmem:[%s2586 + $0x2c] sm:$0xf]
        %v2599 = vld [vmem:[%s2586 + $0x30] sm:$0xf]
        %v2600 = vld [vmem:[%s2586 + $0x34] sm:$0xf]
        %v2601 = vld [vmem:[%s2586 + $0x38] sm:$0xf]
        %v2602 = vld [vmem:[%s2586 + $0x3c] sm:$0xf]
        %v2635 = vunpack.c.l.b16 %v2554
        %v2636 = vunpack.c.l.b16 %v2555
        %v2637 = vunpack.c.l.b16 %v2556
        %v2638 = vunpack.c.l.b16 %v2557
        %v2639 = vunpack.c.l.b16 %v2558
        %v2640 = vunpack.c.l.b16 %v2559
        %v2641 = vunpack.c.l.b16 %v2560
        %v2642 = vunpack.c.l.b16 %v2561
        %v2643 = vunpack.c.l.b16 %v2562
        %v2644 = vunpack.c.l.b16 %v2563
        %v2645 = vunpack.c.l.b16 %v2564
        %v2646 = vunpack.c.l.b16 %v2565
        %v2647 = vunpack.c.l.b16 %v2566
        %v2648 = vunpack.c.l.b16 %v2567
        %v2649 = vunpack.c.l.b16 %v2568
        %v2650 = vunpack.c.l.b16 %v2569
        %v2651 = vunpack.c.l.b16 %v2570
        %v2652 = vunpack.c.l.b16 %v2571
        %v2653 = vunpack.c.l.b16 %v2572
        %v2654 = vunpack.c.l.b16 %v2573
        %v2655 = vunpack.c.l.b16 %v2574
        %v2656 = vunpack.c.l.b16 %v2575
        %v2657 = vunpack.c.l.b16 %v2576
        %v2658 = vunpack.c.l.b16 %v2577
        %v2659 = vunpack.c.l.b16 %v2578
        %v2660 = vunpack.c.l.b16 %v2579
        %v2661 = vunpack.c.l.b16 %v2580
        %v2662 = vunpack.c.l.b16 %v2581
        %v2663 = vunpack.c.l.b16 %v2582
        %v2664 = vunpack.c.l.b16 %v2583
        %v2665 = vunpack.c.l.b16 %v2584
        %v2666 = vunpack.c.l.b16 %v2585
        %v2667 = vpack.c.b16 %v2636, %v2635
        %v2668 = vpack.c.b16 %v2638, %v2637
        %v2669 = vpack.c.b16 %v2640, %v2639
        %v2670 = vpack.c.b16 %v2642, %v2641
        %v2671 = vpack.c.b16 %v2644, %v2643
        %v2672 = vpack.c.b16 %v2646, %v2645
        %v2673 = vpack.c.b16 %v2648, %v2647
        %v2674 = vpack.c.b16 %v2650, %v2649
        %v2675 = vpack.c.b16 %v2652, %v2651
        %v2676 = vpack.c.b16 %v2654, %v2653
        %v2677 = vpack.c.b16 %v2656, %v2655
        %v2678 = vpack.c.b16 %v2658, %v2657
        %v2679 = vpack.c.b16 %v2660, %v2659
        %v2680 = vpack.c.b16 %v2662, %v2661
        %v2681 = vpack.c.b16 %v2664, %v2663
        %v2682 = vpack.c.b16 %v2666, %v2665
        %v2715 = vunpack.c.l.b16 %v2587
        %v2716 = vunpack.c.l.b16 %v2588
        %v2717 = vunpack.c.l.b16 %v2589
        %v2718 = vunpack.c.l.b16 %v2590
        %v2719 = vunpack.c.l.b16 %v2591
        %v2720 = vunpack.c.l.b16 %v2592
        %v2721 = vunpack.c.l.b16 %v2593
        %v2722 = vunpack.c.l.b16 %v2594
        %v2723 = vunpack.c.l.b16 %v2595
        %v2724 = vunpack.c.l.b16 %v2596
        %v2725 = vunpack.c.l.b16 %v2597
        %v2726 = vunpack.c.l.b16 %v2598
        %v2727 = vunpack.c.l.b16 %v2599
        %v2728 = vunpack.c.l.b16 %v2600
        %v2729 = vunpack.c.l.b16 %v2601
        %v2730 = vunpack.c.l.b16 %v2602
        %v2731 = vpack.c.b16 %v2716, %v2715
        %v2732 = vpack.c.b16 %v2718, %v2717
        %v2733 = vpack.c.b16 %v2720, %v2719
        %v2734 = vpack.c.b16 %v2722, %v2721
        %v2735 = vpack.c.b16 %v2724, %v2723
        %v2736 = vpack.c.b16 %v2726, %v2725
        %v2737 = vpack.c.b16 %v2728, %v2727
        %v2738 = vpack.c.b16 %v2730, %v2729
        %2747 = vmatprep.subr.bf16.mxu0 0
        %2748 = vmatpush1.bf16.msra.mxu0 %v2731
        %2749 = vmatprep.subr.bf16.mxu0 0
        %2750 = vmatpush1.bf16.msra.mxu0 %v2732
        %2751 = vmatprep.subr.bf16.mxu0 0
        %2752 = vmatpush1.bf16.msra.mxu0 %v2733
        %2753 = vmatprep.subr.bf16.mxu0 0
        %2754 = vmatpush1.bf16.msra.mxu0 %v2734
        %2755 = vmatprep.subr.bf16.mxu0 0
        %2756 = vmatpush1.bf16.msra.mxu0 %v2735
        %2757 = vmatprep.subr.bf16.mxu0 0
        %2758 = vmatpush1.bf16.msra.mxu0 %v2736
        %2759 = vmatprep.subr.bf16.mxu0 0
        %2760 = vmatpush1.bf16.msra.mxu0 %v2737
        %2761 = vmatprep.subr.bf16.mxu0 0
        %2762 = vmatpush1.bf16.msra.mxu0 %v2738
        %2763 = vmatprep.subr.bf16.mxu0 0
        %2764 = vmatpush1.bf16.msra.mxu0 0
        %2765 = vmatprep.subr.bf16.mxu0 0
        %2766 = vmatpush1.bf16.msra.mxu0 0
        %2767 = vmatprep.subr.bf16.mxu0 0
        %2768 = vmatpush1.bf16.msra.mxu0 0
        %2769 = vmatprep.subr.bf16.mxu0 0
        %2770 = vmatpush1.bf16.msra.mxu0 0
        %2771 = vmatprep.subr.bf16.mxu0 0
        %2772 = vmatpush1.bf16.msra.mxu0 0
        %2773 = vmatprep.subr.bf16.mxu0 0
        %2774 = vmatpush1.bf16.msra.mxu0 0
        %2775 = vmatprep.subr.bf16.mxu0 0
        %2776 = vmatpush1.bf16.msra.mxu0 0
        %2777 = vmatprep.subr.bf16.mxu0 0
        %2778 = vmatpush1.bf16.msra.mxu0 0
        %2779 = vmatprep.mubr.bf16.mxu0 0
        %2780 = vmatmul.mubr.bf16.gmra.mrb[0].mxu0 %v2667
        %v2781 = vpop.f32.mrb[0].mxu0
        %v2782 = vadd.f32 0.0, %v2781
        %v2783 = vpop.f32.mrb[0].mxu0
        %v2784 = vpop.f32.mrb[0].mxu0
        %v2785 = vadd.f32 0.0, %v2784
        %v2786 = vpop.f32.mrb[0].mxu0
        %2787 = vmatprep.mubr.bf16.mxu0 0
        %2788 = vmatmul.mubr.bf16.gmra.mrb[0].mxu0 %v2668
        %v2789 = vpop.f32.mrb[0].mxu0
        %v2790 = vadd.f32 0.0, %v2789
        %v2791 = vpop.f32.mrb[0].mxu0
        %v2792 = vpop.f32.mrb[0].mxu0
        %v2793 = vadd.f32 0.0, %v2792
        %v2794 = vpop.f32.mrb[0].mxu0
        %2795 = vmatprep.mubr.bf16.mxu0 0
        %2796 = vmatmul.mubr.bf16.gmra.mrb[0].mxu0 %v2669
        %v2797 = vpop.f32.mrb[0].mxu0
        %v2798 = vadd.f32 0.0, %v2797
        %v2799 = vpop.f32.mrb[0].mxu0
        %v2800 = vpop.f32.mrb[0].mxu0
        %v2801 = vadd.f32 0.0, %v2800
        %v2802 = vpop.f32.mrb[0].mxu0
        %2803 = vmatprep.mubr.bf16.mxu0 0
        %2804 = vmatmul.mubr.bf16.gmra.mrb[0].mxu0 %v2670
        %v2805 = vpop.f32.mrb[0].mxu0
        %v2806 = vadd.f32 0.0, %v2805
        %v2807 = vpop.f32.mrb[0].mxu0
        %v2808 = vpop.f32.mrb[0].mxu0
        %v2809 = vadd.f32 0.0, %v2808
        %v2810 = vpop.f32.mrb[0].mxu0
        %2811 = vmatprep.mubr.bf16.mxu0 0
        %2812 = vmatmul.mubr.bf16.gmra.mrb[0].mxu0 %v2671
        %v2813 = vpop.f32.mrb[0].mxu0
        %v2814 = vadd.f32 0.0, %v2813
        %v2815 = vpop.f32.mrb[0].mxu0
        %v2816 = vpop.f32.mrb[0].mxu0
        %v2817 = vadd.f32 0.0, %v2816
        %v2818 = vpop.f32.mrb[0].mxu0
        %2819 = vmatprep.mubr.bf16.mxu0 0
        %2820 = vmatmul.mubr.bf16.gmra.mrb[0].mxu0 %v2672
        %v2821 = vpop.f32.mrb[0].mxu0
        %v2822 = vadd.f32 0.0, %v2821
        %v2823 = vpop.f32.mrb[0].mxu0
        %v2824 = vpop.f32.mrb[0].mxu0
        %v2825 = vadd.f32 0.0, %v2824
        %v2826 = vpop.f32.mrb[0].mxu0
        %2827 = vmatprep.mubr.bf16.mxu0 0
        %2828 = vmatmul.mubr.bf16.gmra.mrb[0].mxu0 %v2673
        %v2829 = vpop.f32.mrb[0].mxu0
        %v2830 = vadd.f32 0.0, %v2829
        %v2831 = vpop.f32.mrb[0].mxu0
        %v2832 = vpop.f32.mrb[0].mxu0
        %v2833 = vadd.f32 0.0, %v2832
        %v2834 = vpop.f32.mrb[0].mxu0
        %2835 = vmatprep.mubr.bf16.mxu0 0
        %2836 = vmatmul.mubr.bf16.gmra.mrb[0].mxu0 %v2674
        %v2837 = vpop.f32.mrb[0].mxu0
        %v2838 = vadd.f32 0.0, %v2837
        %v2839 = vpop.f32.mrb[0].mxu0
        %v2840 = vpop.f32.mrb[0].mxu0
        %v2841 = vadd.f32 0.0, %v2840
        %v2842 = vpop.f32.mrb[0].mxu0
        %2843 = vmatprep.mubr.bf16.mxu0 0
        %2844 = vmatmul.mubr.bf16.gmra.mrb[0].mxu0 %v2675
        %v2845 = vpop.f32.mrb[0].mxu0
        %v2846 = vadd.f32 0.0, %v2845
        %v2847 = vpop.f32.mrb[0].mxu0
        %v2848 = vpop.f32.mrb[0].mxu0
        %v2849 = vadd.f32 0.0, %v2848
        %v2850 = vpop.f32.mrb[0].mxu0
        %2851 = vmatprep.mubr.bf16.mxu0 0
        %2852 = vmatmul.mubr.bf16.gmra.mrb[0].mxu0 %v2676
        %v2853 = vpop.f32.mrb[0].mxu0
        %v2854 = vadd.f32 0.0, %v2853
        %v2855 = vpop.f32.mrb[0].mxu0
        %v2856 = vpop.f32.mrb[0].mxu0
        %v2857 = vadd.f32 0.0, %v2856
        %v2858 = vpop.f32.mrb[0].mxu0
        %2859 = vmatprep.mubr.bf16.mxu0 0
        %2860 = vmatmul.mubr.bf16.gmra.mrb[0].mxu0 %v2677
        %v2861 = vpop.f32.mrb[0].mxu0
        %v2862 = vadd.f32 0.0, %v2861
        %v2863 = vpop.f32.mrb[0].mxu0
        %v2864 = vpop.f32.mrb[0].mxu0
        %v2865 = vadd.f32 0.0, %v2864
        %v2866 = vpop.f32.mrb[0].mxu0
        %2867 = vmatprep.mubr.bf16.mxu0 0
        %2868 = vmatmul.mubr.bf16.gmra.mrb[0].mxu0 %v2678
        %v2869 = vpop.f32.mrb[0].mxu0
        %v2870 = vadd.f32 0.0, %v2869
        %v2871 = vpop.f32.mrb[0].mxu0
        %v2872 = vpop.f32.mrb[0].mxu0
        %v2873 = vadd.f32 0.0, %v2872
        %v2874 = vpop.f32.mrb[0].mxu0
        %2875 = vmatprep.mubr.bf16.mxu0 0
        %2876 = vmatmul.mubr.bf16.gmra.mrb[0].mxu0 %v2679
        %v2877 = vpop.f32.mrb[0].mxu0
        %v2878 = vadd.f32 0.0, %v2877
        %v2879 = vpop.f32.mrb[0].mxu0
        %v2880 = vpop.f32.mrb[0].mxu0
        %v2881 = vadd.f32 0.0, %v2880
        %v2882 = vpop.f32.mrb[0].mxu0
        %2883 = vmatprep.mubr.bf16.mxu0 0
        %2884 = vmatmul.mubr.bf16.gmra.mrb[0].mxu0 %v2680
        %v2885 = vpop.f32.mrb[0].mxu0
        %v2886 = vadd.f32 0.0, %v2885
        %v2887 = vpop.f32.mrb[0].mxu0
        %v2888 = vpop.f32.mrb[0].mxu0
        %v2889 = vadd.f32 0.0, %v2888
        %v2890 = vpop.f32.mrb[0].mxu0
        %2891 = vmatprep.mubr.bf16.mxu0 0
        %2892 = vmatmul.mubr.bf16.gmra.mrb[0].mxu0 %v2681
        %v2893 = vpop.f32.mrb[0].mxu0
        %v2894 = vadd.f32 0.0, %v2893
        %v2895 = vpop.f32.mrb[0].mxu0
        %v2896 = vpop.f32.mrb[0].mxu0
        %v2897 = vadd.f32 0.0, %v2896
        %v2898 = vpop.f32.mrb[0].mxu0
        %2899 = vmatprep.mubr.bf16.mxu0 0
        %2900 = vmatmul.mubr.bf16.gmra.mrb[0].mxu0 %v2682
        %v2901 = vpop.f32.mrb[0].mxu0
        %v2902 = vadd.f32 0.0, %v2901
        %v2903 = vpop.f32.mrb[0].mxu0
        %v2904 = vpop.f32.mrb[0].mxu0
        %v2905 = vadd.f32 0.0, %v2904
        %v2906 = vpop.f32.mrb[0].mxu0
        %2907 = vdwg.mxu0
        %v2908 = vadd.f32 %v2522, %v2782
        %v2909 = vadd.f32 %v2523, %v2785
        %v2910 = vadd.f32 %v2524, %v2790
        %v2911 = vadd.f32 %v2525, %v2793
        %v2912 = vadd.f32 %v2526, %v2798
        %v2913 = vadd.f32 %v2527, %v2801
        %v2914 = vadd.f32 %v2528, %v2806
        %v2915 = vadd.f32 %v2529, %v2809
        %v2916 = vadd.f32 %v2530, %v2814
        %v2917 = vadd.f32 %v2531, %v2817
        %v2918 = vadd.f32 %v2532, %v2822
        %v2919 = vadd.f32 %v2533, %v2825
        %v2920 = vadd.f32 %v2534, %v2830
        %v2921 = vadd.f32 %v2535, %v2833
        %v2922 = vadd.f32 %v2536, %v2838
        %v2923 = vadd.f32 %v2537, %v2841
        %v2924 = vadd.f32 %v2538, %v2846
        %v2925 = vadd.f32 %v2539, %v2849
        %v2926 = vadd.f32 %v2540, %v2854
        %v2927 = vadd.f32 %v2541, %v2857
        %v2928 = vadd.f32 %v2542, %v2862
        %v2929 = vadd.f32 %v2543, %v2865
        %v2930 = vadd.f32 %v2544, %v2870
        %v2931 = vadd.f32 %v2545, %v2873
        %v2932 = vadd.f32 %v2546, %v2878
        %v2933 = vadd.f32 %v2547, %v2881
        %v2934 = vadd.f32 %v2548, %v2886
        %v2935 = vadd.f32 %v2549, %v2889
        %v2936 = vadd.f32 %v2550, %v2894
        %v2937 = vadd.f32 %v2551, %v2897
        %v2938 = vadd.f32 %v2552, %v2902
        %v2939 = vadd.f32 %v2553, %v2905
        %v2940 = vld [vmem:[%s253] sm:$0xf]
        %v2941 = vld [vmem:[%s253 + $0x4] sm:$0xf]
        %v2942 = vld [vmem:[%s253 + $0x8] sm:$0x1]
        %v2943 = vld [vmem:[%s253 + $0xc] sm:$0xf]
        %v2944 = vld [vmem:[%s253 + $0x10] sm:$0xf]
        %v2945 = vld [vmem:[%s253 + $0x14] sm:$0x1]
        %v2946 = vld [vmem:[%s253 + $0x18] sm:$0xf]
        %v2947 = vld [vmem:[%s253 + $0x1c] sm:$0xf]
        %v2948 = vld [vmem:[%s253 + $0x20] sm:$0x1]
        %v2949 = vld [vmem:[%s253 + $0x24] sm:$0xf]
        %v2950 = vld [vmem:[%s253 + $0x28] sm:$0xf]
        %v2951 = vld [vmem:[%s253 + $0x2c] sm:$0x1]
        %v2952 = vld [vmem:[%s253 + $0x30] sm:$0xf]
        %v2953 = vld [vmem:[%s253 + $0x34] sm:$0xf]
        %v2954 = vld [vmem:[%s253 + $0x38] sm:$0x1]
        %v2955 = vld [vmem:[%s253 + $0x3c] sm:$0xf]
        %v2956 = vld [vmem:[%s253 + $0x40] sm:$0xf]
        %v2957 = vld [vmem:[%s253 + $0x44] sm:$0x1]
        %v2958 = vld [vmem:[%s253 + $0x48] sm:$0xf]
        %v2959 = vld [vmem:[%s253 + $0x4c] sm:$0xf]
        %v2960 = vld [vmem:[%s253 + $0x50] sm:$0x1]
        %v2961 = vld [vmem:[%s253 + $0x54] sm:$0xf]
        %v2962 = vld [vmem:[%s253 + $0x58] sm:$0xf]
        %v2963 = vld [vmem:[%s253 + $0x5c] sm:$0x1]
        %v2964 = vld [vmem:[%s253 + $0x60] sm:$0xf]
        %v2965 = vld [vmem:[%s253 + $0x64] sm:$0xf]
        %v2966 = vld [vmem:[%s253 + $0x68] sm:$0x1]
        %v2967 = vld [vmem:[%s253 + $0x6c] sm:$0xf]
        %v2968 = vld [vmem:[%s253 + $0x70] sm:$0xf]
        %v2969 = vld [vmem:[%s253 + $0x74] sm:$0x1]
        %v2970 = vld [vmem:[%s253 + $0x78] sm:$0xf]
        %v2971 = vld [vmem:[%s253 + $0x7c] sm:$0xf]
        %v2972 = vld [vmem:[%s253 + $0x80] sm:$0x1]
        %v2973 = vld [vmem:[%s253 + $0x84] sm:$0xf]
        %v2974 = vld [vmem:[%s253 + $0x88] sm:$0xf]
        %v2975 = vld [vmem:[%s253 + $0x8c] sm:$0x1]
        %v2976 = vld [vmem:[%s253 + $0x90] sm:$0xf]
        %v2977 = vld [vmem:[%s253 + $0x94] sm:$0xf]
        %v2978 = vld [vmem:[%s253 + $0x98] sm:$0x1]
        %v2979 = vld [vmem:[%s253 + $0x9c] sm:$0xf]
        %v2980 = vld [vmem:[%s253 + $0xa0] sm:$0xf]
        %v2981 = vld [vmem:[%s253 + $0xa4] sm:$0x1]
        %v2982 = vld [vmem:[%s253 + $0xa8] sm:$0xf]
        %v2983 = vld [vmem:[%s253 + $0xac] sm:$0xf]
        %v2984 = vld [vmem:[%s253 + $0xb0] sm:$0x1]
        %v2985 = vld [vmem:[%s253 + $0xb4] sm:$0xf]
        %v2986 = vld [vmem:[%s253 + $0xb8] sm:$0xf]
        %v2987 = vld [vmem:[%s253 + $0xbc] sm:$0x1]
        %v2989 = vshrl.u32 %v2940, 16
        %v2991 = vrot.slane %v2989, 4
        %v2992 = vshll.u32 %v2940, 16
        %v2994 = vrot.slane %v2992, 5
        %v2995 = vor.u32 %v2991, %v2994
        %v2996 = vrot.slane %v2995, 4
        %v2998 = vshll.u32 %v2941, 16
        %v3000 = vrot.slane %v2998, 5
        %v3001 = vsel %vm1089, %v2996, %v3000
        %v3002 = vshrl.u32 %v2941, 16
        %v3004 = vrot.slane %v3002, 4
        %v3005 = vor.u32 %v3004, %v3000
        %v3006 = vrot.slane %v3005, 4
        %v3008 = vshll.u32 %v2942, 16
        %v3010 = vrot.slane %v3008, 5
        %v3011 = vsel %vm1089, %v3006, %v3010
        %v3013 = vshrl.u32 %v2943, 16
        %v3015 = vrot.slane %v3013, 4
        %v3016 = vshll.u32 %v2943, 16
        %v3018 = vrot.slane %v3016, 5
        %v3019 = vor.u32 %v3015, %v3018
        %v3020 = vrot.slane %v3019, 4
        %v3022 = vshll.u32 %v2944, 16
        %v3024 = vrot.slane %v3022, 5
        %v3025 = vsel %vm1089, %v3020, %v3024
        %v3026 = vshrl.u32 %v2944, 16
        %v3028 = vrot.slane %v3026, 4
        %v3029 = vor.u32 %v3028, %v3024
        %v3030 = vrot.slane %v3029, 4
        %v3032 = vshll.u32 %v2945, 16
        %v3034 = vrot.slane %v3032, 5
        %v3035 = vsel %vm1089, %v3030, %v3034
        %v3037 = vshrl.u32 %v2946, 16
        %v3039 = vrot.slane %v3037, 4
        %v3040 = vshll.u32 %v2946, 16
        %v3042 = vrot.slane %v3040, 5
        %v3043 = vor.u32 %v3039, %v3042
        %v3044 = vrot.slane %v3043, 4
        %v3046 = vshll.u32 %v2947, 16
        %v3048 = vrot.slane %v3046, 5
        %v3049 = vsel %vm1089, %v3044, %v3048
        %v3050 = vshrl.u32 %v2947, 16
        %v3052 = vrot.slane %v3050, 4
        %v3053 = vor.u32 %v3052, %v3048
        %v3054 = vrot.slane %v3053, 4
        %v3056 = vshll.u32 %v2948, 16
        %v3058 = vrot.slane %v3056, 5
        %v3059 = vsel %vm1089, %v3054, %v3058
        %v3061 = vshrl.u32 %v2949, 16
        %v3063 = vrot.slane %v3061, 4
        %v3064 = vshll.u32 %v2949, 16
        %v3066 = vrot.slane %v3064, 5
        %v3067 = vor.u32 %v3063, %v3066
        %v3068 = vrot.slane %v3067, 4
        %v3070 = vshll.u32 %v2950, 16
        %v3072 = vrot.slane %v3070, 5
        %v3073 = vsel %vm1089, %v3068, %v3072
        %v3074 = vshrl.u32 %v2950, 16
        %v3076 = vrot.slane %v3074, 4
        %v3077 = vor.u32 %v3076, %v3072
        %v3078 = vrot.slane %v3077, 4
        %v3080 = vshll.u32 %v2951, 16
        %v3082 = vrot.slane %v3080, 5
        %v3083 = vsel %vm1089, %v3078, %v3082
        %v3085 = vshrl.u32 %v2952, 16
        %v3087 = vrot.slane %v3085, 4
        %v3088 = vshll.u32 %v2952, 16
        %v3090 = vrot.slane %v3088, 5
        %v3091 = vor.u32 %v3087, %v3090
        %v3092 = vrot.slane %v3091, 4
        %v3094 = vshll.u32 %v2953, 16
        %v3096 = vrot.slane %v3094, 5
        %v3097 = vsel %vm1089, %v3092, %v3096
        %v3098 = vshrl.u32 %v2953, 16
        %v3100 = vrot.slane %v3098, 4
        %v3101 = vor.u32 %v3100, %v3096
        %v3102 = vrot.slane %v3101, 4
        %v3104 = vshll.u32 %v2954, 16
        %v3106 = vrot.slane %v3104, 5
        %v3107 = vsel %vm1089, %v3102, %v3106
        %v3109 = vshrl.u32 %v2955, 16
        %v3111 = vrot.slane %v3109, 4
        %v3112 = vshll.u32 %v2955, 16
        %v3114 = vrot.slane %v3112, 5
        %v3115 = vor.u32 %v3111, %v3114
        %v3116 = vrot.slane %v3115, 4
        %v3118 = vshll.u32 %v2956, 16
        %v3120 = vrot.slane %v3118, 5
        %v3121 = vsel %vm1089, %v3116, %v3120
        %v3122 = vshrl.u32 %v2956, 16
        %v3124 = vrot.slane %v3122, 4
        %v3125 = vor.u32 %v3124, %v3120
        %v3126 = vrot.slane %v3125, 4
        %v3128 = vshll.u32 %v2957, 16
        %v3130 = vrot.slane %v3128, 5
        %v3131 = vsel %vm1089, %v3126, %v3130
        %v3133 = vshrl.u32 %v2958, 16
        %v3135 = vrot.slane %v3133, 4
        %v3136 = vshll.u32 %v2958, 16
        %v3138 = vrot.slane %v3136, 5
        %v3139 = vor.u32 %v3135, %v3138
        %v3140 = vrot.slane %v3139, 4
        %v3142 = vshll.u32 %v2959, 16
        %v3144 = vrot.slane %v3142, 5
        %v3145 = vsel %vm1089, %v3140, %v3144
        %v3146 = vshrl.u32 %v2959, 16
        %v3148 = vrot.slane %v3146, 4
        %v3149 = vor.u32 %v3148, %v3144
        %v3150 = vrot.slane %v3149, 4
        %v3152 = vshll.u32 %v2960, 16
        %v3154 = vrot.slane %v3152, 5
        %v3155 = vsel %vm1089, %v3150, %v3154
        %v3157 = vshrl.u32 %v2961, 16
        %v3159 = vrot.slane %v3157, 4
        %v3160 = vshll.u32 %v2961, 16
        %v3162 = vrot.slane %v3160, 5
        %v3163 = vor.u32 %v3159, %v3162
        %v3164 = vrot.slane %v3163, 4
        %v3166 = vshll.u32 %v2962, 16
        %v3168 = vrot.slane %v3166, 5
        %v3169 = vsel %vm1089, %v3164, %v3168
        %v3170 = vshrl.u32 %v2962, 16
        %v3172 = vrot.slane %v3170, 4
        %v3173 = vor.u32 %v3172, %v3168
        %v3174 = vrot.slane %v3173, 4
        %v3176 = vshll.u32 %v2963, 16
        %v3178 = vrot.slane %v3176, 5
        %v3179 = vsel %vm1089, %v3174, %v3178
        %v3181 = vshrl.u32 %v2964, 16
        %v3183 = vrot.slane %v3181, 4
        %v3184 = vshll.u32 %v2964, 16
        %v3186 = vrot.slane %v3184, 5
        %v3187 = vor.u32 %v3183, %v3186
        %v3188 = vrot.slane %v3187, 4
        %v3190 = vshll.u32 %v2965, 16
        %v3192 = vrot.slane %v3190, 5
        %v3193 = vsel %vm1089, %v3188, %v3192
        %v3194 = vshrl.u32 %v2965, 16
        %v3196 = vrot.slane %v3194, 4
        %v3197 = vor.u32 %v3196, %v3192
        %v3198 = vrot.slane %v3197, 4
        %v3200 = vshll.u32 %v2966, 16
        %v3202 = vrot.slane %v3200, 5
        %v3203 = vsel %vm1089, %v3198, %v3202
        %v3205 = vshrl.u32 %v2967, 16
        %v3207 = vrot.slane %v3205, 4
        %v3208 = vshll.u32 %v2967, 16
        %v3210 = vrot.slane %v3208, 5
        %v3211 = vor.u32 %v3207, %v3210
        %v3212 = vrot.slane %v3211, 4
        %v3214 = vshll.u32 %v2968, 16
        %v3216 = vrot.slane %v3214, 5
        %v3217 = vsel %vm1089, %v3212, %v3216
        %v3218 = vshrl.u32 %v2968, 16
        %v3220 = vrot.slane %v3218, 4
        %v3221 = vor.u32 %v3220, %v3216
        %v3222 = vrot.slane %v3221, 4
        %v3224 = vshll.u32 %v2969, 16
        %v3226 = vrot.slane %v3224, 5
        %v3227 = vsel %vm1089, %v3222, %v3226
        %v3229 = vshrl.u32 %v2970, 16
        %v3231 = vrot.slane %v3229, 4
        %v3232 = vshll.u32 %v2970, 16
        %v3234 = vrot.slane %v3232, 5
        %v3235 = vor.u32 %v3231, %v3234
        %v3236 = vrot.slane %v3235, 4
        %v3238 = vshll.u32 %v2971, 16
        %v3240 = vrot.slane %v3238, 5
        %v3241 = vsel %vm1089, %v3236, %v3240
        %v3242 = vshrl.u32 %v2971, 16
        %v3244 = vrot.slane %v3242, 4
        %v3245 = vor.u32 %v3244, %v3240
        %v3246 = vrot.slane %v3245, 4
        %v3248 = vshll.u32 %v2972, 16
        %v3250 = vrot.slane %v3248, 5
        %v3251 = vsel %vm1089, %v3246, %v3250
        %v3253 = vshrl.u32 %v2973, 16
        %v3255 = vrot.slane %v3253, 4
        %v3256 = vshll.u32 %v2973, 16
        %v3258 = vrot.slane %v3256, 5
        %v3259 = vor.u32 %v3255, %v3258
        %v3260 = vrot.slane %v3259, 4
        %v3262 = vshll.u32 %v2974, 16
        %v3264 = vrot.slane %v3262, 5
        %v3265 = vsel %vm1089, %v3260, %v3264
        %v3266 = vshrl.u32 %v2974, 16
        %v3268 = vrot.slane %v3266, 4
        %v3269 = vor.u32 %v3268, %v3264
        %v3270 = vrot.slane %v3269, 4
        %v3272 = vshll.u32 %v2975, 16
        %v3274 = vrot.slane %v3272, 5
        %v3275 = vsel %vm1089, %v3270, %v3274
        %v3277 = vshrl.u32 %v2976, 16
        %v3279 = vrot.slane %v3277, 4
        %v3280 = vshll.u32 %v2976, 16
        %v3282 = vrot.slane %v3280, 5
        %v3283 = vor.u32 %v3279, %v3282
        %v3284 = vrot.slane %v3283, 4
        %v3286 = vshll.u32 %v2977, 16
        %v3288 = vrot.slane %v3286, 5
        %v3289 = vsel %vm1089, %v3284, %v3288
        %v3290 = vshrl.u32 %v2977, 16
        %v3292 = vrot.slane %v3290, 4
        %v3293 = vor.u32 %v3292, %v3288
        %v3294 = vrot.slane %v3293, 4
        %v3296 = vshll.u32 %v2978, 16
        %v3298 = vrot.slane %v3296, 5
        %v3299 = vsel %vm1089, %v3294, %v3298
        %v3301 = vshrl.u32 %v2979, 16
        %v3303 = vrot.slane %v3301, 4
        %v3304 = vshll.u32 %v2979, 16
        %v3306 = vrot.slane %v3304, 5
        %v3307 = vor.u32 %v3303, %v3306
        %v3308 = vrot.slane %v3307, 4
        %v3310 = vshll.u32 %v2980, 16
        %v3312 = vrot.slane %v3310, 5
        %v3313 = vsel %vm1089, %v3308, %v3312
        %v3314 = vshrl.u32 %v2980, 16
        %v3316 = vrot.slane %v3314, 4
        %v3317 = vor.u32 %v3316, %v3312
        %v3318 = vrot.slane %v3317, 4
        %v3320 = vshll.u32 %v2981, 16
        %v3322 = vrot.slane %v3320, 5
        %v3323 = vsel %vm1089, %v3318, %v3322
        %v3325 = vshrl.u32 %v2982, 16
        %v3327 = vrot.slane %v3325, 4
        %v3328 = vshll.u32 %v2982, 16
        %v3330 = vrot.slane %v3328, 5
        %v3331 = vor.u32 %v3327, %v3330
        %v3332 = vrot.slane %v3331, 4
        %v3334 = vshll.u32 %v2983, 16
        %v3336 = vrot.slane %v3334, 5
        %v3337 = vsel %vm1089, %v3332, %v3336
        %v3338 = vshrl.u32 %v2983, 16
        %v3340 = vrot.slane %v3338, 4
        %v3341 = vor.u32 %v3340, %v3336
        %v3342 = vrot.slane %v3341, 4
        %v3344 = vshll.u32 %v2984, 16
        %v3346 = vrot.slane %v3344, 5
        %v3347 = vsel %vm1089, %v3342, %v3346
        %v3349 = vshrl.u32 %v2985, 16
        %v3351 = vrot.slane %v3349, 4
        %v3352 = vshll.u32 %v2985, 16
        %v3354 = vrot.slane %v3352, 5
        %v3355 = vor.u32 %v3351, %v3354
        %v3356 = vrot.slane %v3355, 4
        %v3358 = vshll.u32 %v2986, 16
        %v3360 = vrot.slane %v3358, 5
        %v3361 = vsel %vm1089, %v3356, %v3360
        %v3362 = vshrl.u32 %v2986, 16
        %v3364 = vrot.slane %v3362, 4
        %v3365 = vor.u32 %v3364, %v3360
        %v3366 = vrot.slane %v3365, 4
        %v3368 = vshll.u32 %v2987, 16
        %v3370 = vrot.slane %v3368, 5
        %v3371 = vsel %vm1089, %v3366, %v3370
        %s3372 = scalar_lea.vmem [#allocation7], 256
        %v3373 = vld [vmem:[%s3372] sm:$0xf]
        %v3374 = vld [vmem:[%s3372 + $0x4] sm:$0xf]
        %v3375 = vld [vmem:[%s3372 + $0x8] sm:$0xf]
        %v3376 = vld [vmem:[%s3372 + $0xc] sm:$0xf]
        %v3377 = vld [vmem:[%s3372 + $0x10] sm:$0xf]
        %v3378 = vld [vmem:[%s3372 + $0x14] sm:$0xf]
        %v3379 = vld [vmem:[%s3372 + $0x18] sm:$0xf]
        %v3380 = vld [vmem:[%s3372 + $0x1c] sm:$0xf]
        %v3381 = vld [vmem:[%s3372 + $0x20] sm:$0xf]
        %v3382 = vld [vmem:[%s3372 + $0x24] sm:$0xf]
        %v3383 = vld [vmem:[%s3372 + $0x28] sm:$0xf]
        %v3384 = vld [vmem:[%s3372 + $0x2c] sm:$0xf]
        %v3385 = vld [vmem:[%s3372 + $0x30] sm:$0xf]
        %v3386 = vld [vmem:[%s3372 + $0x34] sm:$0xf]
        %v3387 = vld [vmem:[%s3372 + $0x38] sm:$0xf]
        %v3388 = vld [vmem:[%s3372 + $0x3c] sm:$0xf]
        %v3389 = vunpack.c.l.b16 %v3001
        %v3390 = vunpack.c.l.b16 %v3011
        %v3391 = vunpack.c.l.b16 %v3025
        %v3392 = vunpack.c.l.b16 %v3035
        %v3393 = vunpack.c.l.b16 %v3049
        %v3394 = vunpack.c.l.b16 %v3059
        %v3395 = vunpack.c.l.b16 %v3073
        %v3396 = vunpack.c.l.b16 %v3083
        %v3397 = vunpack.c.l.b16 %v3097
        %v3398 = vunpack.c.l.b16 %v3107
        %v3399 = vunpack.c.l.b16 %v3121
        %v3400 = vunpack.c.l.b16 %v3131
        %v3401 = vunpack.c.l.b16 %v3145
        %v3402 = vunpack.c.l.b16 %v3155
        %v3403 = vunpack.c.l.b16 %v3169
        %v3404 = vunpack.c.l.b16 %v3179
        %v3405 = vunpack.c.l.b16 %v3193
        %v3406 = vunpack.c.l.b16 %v3203
        %v3407 = vunpack.c.l.b16 %v3217
        %v3408 = vunpack.c.l.b16 %v3227
        %v3409 = vunpack.c.l.b16 %v3241
        %v3410 = vunpack.c.l.b16 %v3251
        %v3411 = vunpack.c.l.b16 %v3265
        %v3412 = vunpack.c.l.b16 %v3275
        %v3413 = vunpack.c.l.b16 %v3289
        %v3414 = vunpack.c.l.b16 %v3299
        %v3415 = vunpack.c.l.b16 %v3313
        %v3416 = vunpack.c.l.b16 %v3323
        %v3417 = vunpack.c.l.b16 %v3337
        %v3418 = vunpack.c.l.b16 %v3347
        %v3419 = vunpack.c.l.b16 %v3361
        %v3420 = vunpack.c.l.b16 %v3371
        %v3421 = vpack.c.b16 %v3390, %v3389
        %v3422 = vpack.c.b16 %v3392, %v3391
        %v3423 = vpack.c.b16 %v3394, %v3393
        %v3424 = vpack.c.b16 %v3396, %v3395
        %v3425 = vpack.c.b16 %v3398, %v3397
        %v3426 = vpack.c.b16 %v3400, %v3399
        %v3427 = vpack.c.b16 %v3402, %v3401
        %v3428 = vpack.c.b16 %v3404, %v3403
        %v3429 = vpack.c.b16 %v3406, %v3405
        %v3430 = vpack.c.b16 %v3408, %v3407
        %v3431 = vpack.c.b16 %v3410, %v3409
        %v3432 = vpack.c.b16 %v3412, %v3411
        %v3433 = vpack.c.b16 %v3414, %v3413
        %v3434 = vpack.c.b16 %v3416, %v3415
        %v3435 = vpack.c.b16 %v3418, %v3417
        %v3436 = vpack.c.b16 %v3420, %v3419
        %v3469 = vunpack.c.l.b16 %v3373
        %v3470 = vunpack.c.l.b16 %v3374
        %v3471 = vunpack.c.l.b16 %v3375
        %v3472 = vunpack.c.l.b16 %v3376
        %v3473 = vunpack.c.l.b16 %v3377
        %v3474 = vunpack.c.l.b16 %v3378
        %v3475 = vunpack.c.l.b16 %v3379
        %v3476 = vunpack.c.l.b16 %v3380
        %v3477 = vunpack.c.l.b16 %v3381
        %v3478 = vunpack.c.l.b16 %v3382
        %v3479 = vunpack.c.l.b16 %v3383
        %v3480 = vunpack.c.l.b16 %v3384
        %v3481 = vunpack.c.l.b16 %v3385
        %v3482 = vunpack.c.l.b16 %v3386
        %v3483 = vunpack.c.l.b16 %v3387
        %v3484 = vunpack.c.l.b16 %v3388
        %v3485 = vpack.c.b16 %v3470, %v3469
        %v3486 = vpack.c.b16 %v3472, %v3471
        %v3487 = vpack.c.b16 %v3474, %v3473
        %v3488 = vpack.c.b16 %v3476, %v3475
        %v3489 = vpack.c.b16 %v3478, %v3477
        %v3490 = vpack.c.b16 %v3480, %v3479
        %v3491 = vpack.c.b16 %v3482, %v3481
        %v3492 = vpack.c.b16 %v3484, %v3483
        %3501 = vmatprep.subr.bf16.mxu0 0
        %3502 = vmatpush1.bf16.msra.mxu0 %v3485
        %3503 = vmatprep.subr.bf16.mxu0 0
        %3504 = vmatpush1.bf16.msra.mxu0 %v3486
        %3505 = vmatprep.subr.bf16.mxu0 0
        %3506 = vmatpush1.bf16.msra.mxu0 %v3487
        %3507 = vmatprep.subr.bf16.mxu0 0
        %3508 = vmatpush1.bf16.msra.mxu0 %v3488
        %3509 = vmatprep.subr.bf16.mxu0 0
        %3510 = vmatpush1.bf16.msra.mxu0 %v3489
        %3511 = vmatprep.subr.bf16.mxu0 0
        %3512 = vmatpush1.bf16.msra.mxu0 %v3490
        %3513 = vmatprep.subr.bf16.mxu0 0
        %3514 = vmatpush1.bf16.msra.mxu0 %v3491
        %3515 = vmatprep.subr.bf16.mxu0 0
        %3516 = vmatpush1.bf16.msra.mxu0 %v3492
        %3517 = vmatprep.subr.bf16.mxu0 0
        %3518 = vmatpush1.bf16.msra.mxu0 0
        %3519 = vmatprep.subr.bf16.mxu0 0
        %3520 = vmatpush1.bf16.msra.mxu0 0
        %3521 = vmatprep.subr.bf16.mxu0 0
        %3522 = vmatpush1.bf16.msra.mxu0 0
        %3523 = vmatprep.subr.bf16.mxu0 0
        %3524 = vmatpush1.bf16.msra.mxu0 0
        %3525 = vmatprep.subr.bf16.mxu0 0
        %3526 = vmatpush1.bf16.msra.mxu0 0
        %3527 = vmatprep.subr.bf16.mxu0 0
        %3528 = vmatpush1.bf16.msra.mxu0 0
        %3529 = vmatprep.subr.bf16.mxu0 0
        %3530 = vmatpush1.bf16.msra.mxu0 0
        %3531 = vmatprep.subr.bf16.mxu0 0
        %3532 = vmatpush1.bf16.msra.mxu0 0
        %3533 = vmatprep.mubr.bf16.mxu0 0
        %3534 = vmatmul.mubr.bf16.gmra.mrb[0].mxu0 %v3421
        %v3535 = vpop.f32.mrb[0].mxu0
        %v3536 = vadd.f32 0.0, %v3535
        %v3537 = vpop.f32.mrb[0].mxu0
        %v3538 = vpop.f32.mrb[0].mxu0
        %v3539 = vadd.f32 0.0, %v3538
        %v3540 = vpop.f32.mrb[0].mxu0
        %3541 = vmatprep.mubr.bf16.mxu0 0
        %3542 = vmatmul.mubr.bf16.gmra.mrb[0].mxu0 %v3422
        %v3543 = vpop.f32.mrb[0].mxu0
        %v3544 = vadd.f32 0.0, %v3543
        %v3545 = vpop.f32.mrb[0].mxu0
        %v3546 = vpop.f32.mrb[0].mxu0
        %v3547 = vadd.f32 0.0, %v3546
        %v3548 = vpop.f32.mrb[0].mxu0
        %3549 = vmatprep.mubr.bf16.mxu0 0
        %3550 = vmatmul.mubr.bf16.gmra.mrb[0].mxu0 %v3423
        %v3551 = vpop.f32.mrb[0].mxu0
        %v3552 = vadd.f32 0.0, %v3551
        %v3553 = vpop.f32.mrb[0].mxu0
        %v3554 = vpop.f32.mrb[0].mxu0
        %v3555 = vadd.f32 0.0, %v3554
        %v3556 = vpop.f32.mrb[0].mxu0
        %3557 = vmatprep.mubr.bf16.mxu0 0
        %3558 = vmatmul.mubr.bf16.gmra.mrb[0].mxu0 %v3424
        %v3559 = vpop.f32.mrb[0].mxu0
        %v3560 = vadd.f32 0.0, %v3559
        %v3561 = vpop.f32.mrb[0].mxu0
        %v3562 = vpop.f32.mrb[0].mxu0
        %v3563 = vadd.f32 0.0, %v3562
        %v3564 = vpop.f32.mrb[0].mxu0
        %3565 = vmatprep.mubr.bf16.mxu0 0
        %3566 = vmatmul.mubr.bf16.gmra.mrb[0].mxu0 %v3425
        %v3567 = vpop.f32.mrb[0].mxu0
        %v3568 = vadd.f32 0.0, %v3567
        %v3569 = vpop.f32.mrb[0].mxu0
        %v3570 = vpop.f32.mrb[0].mxu0
        %v3571 = vadd.f32 0.0, %v3570
        %v3572 = vpop.f32.mrb[0].mxu0
        %3573 = vmatprep.mubr.bf16.mxu0 0
        %3574 = vmatmul.mubr.bf16.gmra.mrb[0].mxu0 %v3426
        %v3575 = vpop.f32.mrb[0].mxu0
        %v3576 = vadd.f32 0.0, %v3575
        %v3577 = vpop.f32.mrb[0].mxu0
        %v3578 = vpop.f32.mrb[0].mxu0
        %v3579 = vadd.f32 0.0, %v3578
        %v3580 = vpop.f32.mrb[0].mxu0
        %3581 = vmatprep.mubr.bf16.mxu0 0
        %3582 = vmatmul.mubr.bf16.gmra.mrb[0].mxu0 %v3427
        %v3583 = vpop.f32.mrb[0].mxu0
        %v3584 = vadd.f32 0.0, %v3583
        %v3585 = vpop.f32.mrb[0].mxu0
        %v3586 = vpop.f32.mrb[0].mxu0
        %v3587 = vadd.f32 0.0, %v3586
        %v3588 = vpop.f32.mrb[0].mxu0
        %3589 = vmatprep.mubr.bf16.mxu0 0
        %3590 = vmatmul.mubr.bf16.gmra.mrb[0].mxu0 %v3428
        %v3591 = vpop.f32.mrb[0].mxu0
        %v3592 = vadd.f32 0.0, %v3591
        %v3593 = vpop.f32.mrb[0].mxu0
        %v3594 = vpop.f32.mrb[0].mxu0
        %v3595 = vadd.f32 0.0, %v3594
        %v3596 = vpop.f32.mrb[0].mxu0
        %3597 = vmatprep.mubr.bf16.mxu0 0
        %3598 = vmatmul.mubr.bf16.gmra.mrb[0].mxu0 %v3429
        %v3599 = vpop.f32.mrb[0].mxu0
        %v3600 = vadd.f32 0.0, %v3599
        %v3601 = vpop.f32.mrb[0].mxu0
        %v3602 = vpop.f32.mrb[0].mxu0
        %v3603 = vadd.f32 0.0, %v3602
        %v3604 = vpop.f32.mrb[0].mxu0
        %3605 = vmatprep.mubr.bf16.mxu0 0
        %3606 = vmatmul.mubr.bf16.gmra.mrb[0].mxu0 %v3430
        %v3607 = vpop.f32.mrb[0].mxu0
        %v3608 = vadd.f32 0.0, %v3607
        %v3609 = vpop.f32.mrb[0].mxu0
        %v3610 = vpop.f32.mrb[0].mxu0
        %v3611 = vadd.f32 0.0, %v3610
        %v3612 = vpop.f32.mrb[0].mxu0
        %3613 = vmatprep.mubr.bf16.mxu0 0
        %3614 = vmatmul.mubr.bf16.gmra.mrb[0].mxu0 %v3431
        %v3615 = vpop.f32.mrb[0].mxu0
        %v3616 = vadd.f32 0.0, %v3615
        %v3617 = vpop.f32.mrb[0].mxu0
        %v3618 = vpop.f32.mrb[0].mxu0
        %v3619 = vadd.f32 0.0, %v3618
        %v3620 = vpop.f32.mrb[0].mxu0
        %3621 = vmatprep.mubr.bf16.mxu0 0
        %3622 = vmatmul.mubr.bf16.gmra.mrb[0].mxu0 %v3432
        %v3623 = vpop.f32.mrb[0].mxu0
        %v3624 = vadd.f32 0.0, %v3623
        %v3625 = vpop.f32.mrb[0].mxu0
        %v3626 = vpop.f32.mrb[0].mxu0
        %v3627 = vadd.f32 0.0, %v3626
        %v3628 = vpop.f32.mrb[0].mxu0
        %3629 = vmatprep.mubr.bf16.mxu0 0
        %3630 = vmatmul.mubr.bf16.gmra.mrb[0].mxu0 %v3433
        %v3631 = vpop.f32.mrb[0].mxu0
        %v3632 = vadd.f32 0.0, %v3631
        %v3633 = vpop.f32.mrb[0].mxu0
        %v3634 = vpop.f32.mrb[0].mxu0
        %v3635 = vadd.f32 0.0, %v3634
        %v3636 = vpop.f32.mrb[0].mxu0
        %3637 = vmatprep.mubr.bf16.mxu0 0
        %3638 = vmatmul.mubr.bf16.gmra.mrb[0].mxu0 %v3434
        %v3639 = vpop.f32.mrb[0].mxu0
        %v3640 = vadd.f32 0.0, %v3639
        %v3641 = vpop.f32.mrb[0].mxu0
        %v3642 = vpop.f32.mrb[0].mxu0
        %v3643 = vadd.f32 0.0, %v3642
        %v3644 = vpop.f32.mrb[0].mxu0
        %3645 = vmatprep.mubr.bf16.mxu0 0
        %3646 = vmatmul.mubr.bf16.gmra.mrb[0].mxu0 %v3435
        %v3647 = vpop.f32.mrb[0].mxu0
        %v3648 = vadd.f32 0.0, %v3647
        %v3649 = vpop.f32.mrb[0].mxu0
        %v3650 = vpop.f32.mrb[0].mxu0
        %v3651 = vadd.f32 0.0, %v3650
        %v3652 = vpop.f32.mrb[0].mxu0
        %3653 = vmatprep.mubr.bf16.mxu0 0
        %3654 = vmatmul.mubr.bf16.gmra.mrb[0].mxu0 %v3436
        %v3655 = vpop.f32.mrb[0].mxu0
        %v3656 = vadd.f32 0.0, %v3655
        %v3657 = vpop.f32.mrb[0].mxu0
        %v3658 = vpop.f32.mrb[0].mxu0
        %v3659 = vadd.f32 0.0, %v3658
        %v3660 = vpop.f32.mrb[0].mxu0
        %3661 = vdwg.mxu0
        %v3662 = vadd.f32 %v2908, %v3536
        %v3663 = vadd.f32 %v2909, %v3539
        %v3664 = vadd.f32 %v2910, %v3544
        %v3665 = vadd.f32 %v2911, %v3547
        %v3666 = vadd.f32 %v2912, %v3552
        %v3667 = vadd.f32 %v2913, %v3555
        %v3668 = vadd.f32 %v2914, %v3560
        %v3669 = vadd.f32 %v2915, %v3563
        %v3670 = vadd.f32 %v2916, %v3568
        %v3671 = vadd.f32 %v2917, %v3571
        %v3672 = vadd.f32 %v2918, %v3576
        %v3673 = vadd.f32 %v2919, %v3579
        %v3674 = vadd.f32 %v2920, %v3584
        %v3675 = vadd.f32 %v2921, %v3587
        %v3676 = vadd.f32 %v2922, %v3592
        %v3677 = vadd.f32 %v2923, %v3595
        %v3678 = vadd.f32 %v2924, %v3600
        %v3679 = vadd.f32 %v2925, %v3603
        %v3680 = vadd.f32 %v2926, %v3608
        %v3681 = vadd.f32 %v2927, %v3611
        %v3682 = vadd.f32 %v2928, %v3616
        %v3683 = vadd.f32 %v2929, %v3619
        %v3684 = vadd.f32 %v2930, %v3624
        %v3685 = vadd.f32 %v2931, %v3627
        %v3686 = vadd.f32 %v2932, %v3632
        %v3687 = vadd.f32 %v2933, %v3635
        %v3688 = vadd.f32 %v2934, %v3640
        %v3689 = vadd.f32 %v2935, %v3643
        %v3690 = vadd.f32 %v2936, %v3648
        %v3691 = vadd.f32 %v2937, %v3651
        %v3692 = vadd.f32 %v2938, %v3656
        %v3693 = vadd.f32 %v2939, %v3659
        %v3694 = vld [vmem:[%s253] sm:$0xe]
        %v3695 = vld [vmem:[%s253 + $0xc] sm:$0xe]
        %v3696 = vld [vmem:[%s253 + $0x18] sm:$0xe]
        %v3697 = vld [vmem:[%s253 + $0x24] sm:$0xe]
        %v3698 = vld [vmem:[%s253 + $0x30] sm:$0xe]
        %v3699 = vld [vmem:[%s253 + $0x3c] sm:$0xe]
        %v3700 = vld [vmem:[%s253 + $0x48] sm:$0xe]
        %v3701 = vld [vmem:[%s253 + $0x54] sm:$0xe]
        %v3702 = vld [vmem:[%s253 + $0x60] sm:$0xe]
        %v3703 = vld [vmem:[%s253 + $0x6c] sm:$0xe]
        %v3704 = vld [vmem:[%s253 + $0x78] sm:$0xe]
        %v3705 = vld [vmem:[%s253 + $0x84] sm:$0xe]
        %v3706 = vld [vmem:[%s253 + $0x90] sm:$0xe]
        %v3707 = vld [vmem:[%s253 + $0x9c] sm:$0xe]
        %v3708 = vld [vmem:[%s253 + $0xa8] sm:$0xe]
        %v3709 = vld [vmem:[%s253 + $0xb4] sm:$0xe]
        %v3758 = vrot.slane %v3694, 5
        %v3759 = vrot.slane %v3758, 4
        %v3760 = vrot.slane %v2941, 5
        %v3761 = vsel %vm2119, %v3759, %v3760
        %v3762 = vrot.slane %v3760, 4
        %v3763 = vrot.slane %v2942, 5
        %v3764 = vsel %vm2119, %v3762, %v3763
        %v3765 = vrot.slane %v3695, 5
        %v3766 = vrot.slane %v3765, 4
        %v3767 = vrot.slane %v2944, 5
        %v3768 = vsel %vm2119, %v3766, %v3767
        %v3769 = vrot.slane %v3767, 4
        %v3770 = vrot.slane %v2945, 5
        %v3771 = vsel %vm2119, %v3769, %v3770
        %v3772 = vrot.slane %v3696, 5
        %v3773 = vrot.slane %v3772, 4
        %v3774 = vrot.slane %v2947, 5
        %v3775 = vsel %vm2119, %v3773, %v3774
        %v3776 = vrot.slane %v3774, 4
        %v3777 = vrot.slane %v2948, 5
        %v3778 = vsel %vm2119, %v3776, %v3777
        %v3779 = vrot.slane %v3697, 5
        %v3780 = vrot.slane %v3779, 4
        %v3781 = vrot.slane %v2950, 5
        %v3782 = vsel %vm2119, %v3780, %v3781
        %v3783 = vrot.slane %v3781, 4
        %v3784 = vrot.slane %v2951, 5
        %v3785 = vsel %vm2119, %v3783, %v3784
        %v3786 = vrot.slane %v3698, 5
        %v3787 = vrot.slane %v3786, 4
        %v3788 = vrot.slane %v2953, 5
        %v3789 = vsel %vm2119, %v3787, %v3788
        %v3790 = vrot.slane %v3788, 4
        %v3791 = vrot.slane %v2954, 5
        %v3792 = vsel %vm2119, %v3790, %v3791
        %v3793 = vrot.slane %v3699, 5
        %v3794 = vrot.slane %v3793, 4
        %v3795 = vrot.slane %v2956, 5
        %v3796 = vsel %vm2119, %v3794, %v3795
        %v3797 = vrot.slane %v3795, 4
        %v3798 = vrot.slane %v2957, 5
        %v3799 = vsel %vm2119, %v3797, %v3798
        %v3800 = vrot.slane %v3700, 5
        %v3801 = vrot.slane %v3800, 4
        %v3802 = vrot.slane %v2959, 5
        %v3803 = vsel %vm2119, %v3801, %v3802
        %v3804 = vrot.slane %v3802, 4
        %v3805 = vrot.slane %v2960, 5
        %v3806 = vsel %vm2119, %v3804, %v3805
        %v3807 = vrot.slane %v3701, 5
        %v3808 = vrot.slane %v3807, 4
        %v3809 = vrot.slane %v2962, 5
        %v3810 = vsel %vm2119, %v3808, %v3809
        %v3811 = vrot.slane %v3809, 4
        %v3812 = vrot.slane %v2963, 5
        %v3813 = vsel %vm2119, %v3811, %v3812
        %v3814 = vrot.slane %v3702, 5
        %v3815 = vrot.slane %v3814, 4
        %v3816 = vrot.slane %v2965, 5
        %v3817 = vsel %vm2119, %v3815, %v3816
        %v3818 = vrot.slane %v3816, 4
        %v3819 = vrot.slane %v2966, 5
        %v3820 = vsel %vm2119, %v3818, %v3819
        %v3821 = vrot.slane %v3703, 5
        %v3822 = vrot.slane %v3821, 4
        %v3823 = vrot.slane %v2968, 5
        %v3824 = vsel %vm2119, %v3822, %v3823
        %v3825 = vrot.slane %v3823, 4
        %v3826 = vrot.slane %v2969, 5
        %v3827 = vsel %vm2119, %v3825, %v3826
        %v3828 = vrot.slane %v3704, 5
        %v3829 = vrot.slane %v3828, 4
        %v3830 = vrot.slane %v2971, 5
        %v3831 = vsel %vm2119, %v3829, %v3830
        %v3832 = vrot.slane %v3830, 4
        %v3833 = vrot.slane %v2972, 5
        %v3834 = vsel %vm2119, %v3832, %v3833
        %v3835 = vrot.slane %v3705, 5
        %v3836 = vrot.slane %v3835, 4
        %v3837 = vrot.slane %v2974, 5
        %v3838 = vsel %vm2119, %v3836, %v3837
        %v3839 = vrot.slane %v3837, 4
        %v3840 = vrot.slane %v2975, 5
        %v3841 = vsel %vm2119, %v3839, %v3840
        %v3842 = vrot.slane %v3706, 5
        %v3843 = vrot.slane %v3842, 4
        %v3844 = vrot.slane %v2977, 5
        %v3845 = vsel %vm2119, %v3843, %v3844
        %v3846 = vrot.slane %v3844, 4
        %v3847 = vrot.slane %v2978, 5
        %v3848 = vsel %vm2119, %v3846, %v3847
        %v3849 = vrot.slane %v3707, 5
        %v3850 = vrot.slane %v3849, 4
        %v3851 = vrot.slane %v2980, 5
        %v3852 = vsel %vm2119, %v3850, %v3851
        %v3853 = vrot.slane %v3851, 4
        %v3854 = vrot.slane %v2981, 5
        %v3855 = vsel %vm2119, %v3853, %v3854
        %v3856 = vrot.slane %v3708, 5
        %v3857 = vrot.slane %v3856, 4
        %v3858 = vrot.slane %v2983, 5
        %v3859 = vsel %vm2119, %v3857, %v3858
        %v3860 = vrot.slane %v3858, 4
        %v3861 = vrot.slane %v2984, 5
        %v3862 = vsel %vm2119, %v3860, %v3861
        %v3863 = vrot.slane %v3709, 5
        %v3864 = vrot.slane %v3863, 4
        %v3865 = vrot.slane %v2986, 5
        %v3866 = vsel %vm2119, %v3864, %v3865
        %v3867 = vrot.slane %v3865, 4
        %v3868 = vrot.slane %v2987, 5
        %v3869 = vsel %vm2119, %v3867, %v3868
        %s3870 = scalar_lea.vmem [#allocation7], 320
        %v3871 = vld [vmem:[%s3870] sm:$0xf]
        %v3872 = vld [vmem:[%s3870 + $0x4] sm:$0xf]
        %v3873 = vld [vmem:[%s3870 + $0x8] sm:$0xf]
        %v3874 = vld [vmem:[%s3870 + $0xc] sm:$0xf]
        %v3875 = vld [vmem:[%s3870 + $0x10] sm:$0xf]
        %v3876 = vld [vmem:[%s3870 + $0x14] sm:$0xf]
        %v3877 = vld [vmem:[%s3870 + $0x18] sm:$0xf]
        %v3878 = vld [vmem:[%s3870 + $0x1c] sm:$0xf]
        %v3879 = vld [vmem:[%s3870 + $0x20] sm:$0xf]
        %v3880 = vld [vmem:[%s3870 + $0x24] sm:$0xf]
        %v3881 = vld [vmem:[%s3870 + $0x28] sm:$0xf]
        %v3882 = vld [vmem:[%s3870 + $0x2c] sm:$0xf]
        %v3883 = vld [vmem:[%s3870 + $0x30] sm:$0xf]
        %v3884 = vld [vmem:[%s3870 + $0x34] sm:$0xf]
        %v3885 = vld [vmem:[%s3870 + $0x38] sm:$0xf]
        %v3886 = vld [vmem:[%s3870 + $0x3c] sm:$0xf]
        %v3887 = vunpack.c.l.b16 %v3761
        %v3888 = vunpack.c.l.b16 %v3764
        %v3889 = vunpack.c.l.b16 %v3768
        %v3890 = vunpack.c.l.b16 %v3771
        %v3891 = vunpack.c.l.b16 %v3775
        %v3892 = vunpack.c.l.b16 %v3778
        %v3893 = vunpack.c.l.b16 %v3782
        %v3894 = vunpack.c.l.b16 %v3785
        %v3895 = vunpack.c.l.b16 %v3789
        %v3896 = vunpack.c.l.b16 %v3792
        %v3897 = vunpack.c.l.b16 %v3796
        %v3898 = vunpack.c.l.b16 %v3799
        %v3899 = vunpack.c.l.b16 %v3803
        %v3900 = vunpack.c.l.b16 %v3806
        %v3901 = vunpack.c.l.b16 %v3810
        %v3902 = vunpack.c.l.b16 %v3813
        %v3903 = vunpack.c.l.b16 %v3817
        %v3904 = vunpack.c.l.b16 %v3820
        %v3905 = vunpack.c.l.b16 %v3824
        %v3906 = vunpack.c.l.b16 %v3827
        %v3907 = vunpack.c.l.b16 %v3831
        %v3908 = vunpack.c.l.b16 %v3834
        %v3909 = vunpack.c.l.b16 %v3838
        %v3910 = vunpack.c.l.b16 %v3841
        %v3911 = vunpack.c.l.b16 %v3845
        %v3912 = vunpack.c.l.b16 %v3848
        %v3913 = vunpack.c.l.b16 %v3852
        %v3914 = vunpack.c.l.b16 %v3855
        %v3915 = vunpack.c.l.b16 %v3859
        %v3916 = vunpack.c.l.b16 %v3862
        %v3917 = vunpack.c.l.b16 %v3866
        %v3918 = vunpack.c.l.b16 %v3869
        %v3919 = vpack.c.b16 %v3888, %v3887
        %v3920 = vpack.c.b16 %v3890, %v3889
        %v3921 = vpack.c.b16 %v3892, %v3891
        %v3922 = vpack.c.b16 %v3894, %v3893
        %v3923 = vpack.c.b16 %v3896, %v3895
        %v3924 = vpack.c.b16 %v3898, %v3897
        %v3925 = vpack.c.b16 %v3900, %v3899
        %v3926 = vpack.c.b16 %v3902, %v3901
        %v3927 = vpack.c.b16 %v3904, %v3903
        %v3928 = vpack.c.b16 %v3906, %v3905
        %v3929 = vpack.c.b16 %v3908, %v3907
        %v3930 = vpack.c.b16 %v3910, %v3909
        %v3931 = vpack.c.b16 %v3912, %v3911
        %v3932 = vpack.c.b16 %v3914, %v3913
        %v3933 = vpack.c.b16 %v3916, %v3915
        %v3934 = vpack.c.b16 %v3918, %v3917
        %v3967 = vunpack.c.l.b16 %v3871
        %v3968 = vunpack.c.l.b16 %v3872
        %v3969 = vunpack.c.l.b16 %v3873
        %v3970 = vunpack.c.l.b16 %v3874
        %v3971 = vunpack.c.l.b16 %v3875
        %v3972 = vunpack.c.l.b16 %v3876
        %v3973 = vunpack.c.l.b16 %v3877
        %v3974 = vunpack.c.l.b16 %v3878
        %v3975 = vunpack.c.l.b16 %v3879
        %v3976 = vunpack.c.l.b16 %v3880
        %v3977 = vunpack.c.l.b16 %v3881
        %v3978 = vunpack.c.l.b16 %v3882
        %v3979 = vunpack.c.l.b16 %v3883
        %v3980 = vunpack.c.l.b16 %v3884
        %v3981 = vunpack.c.l.b16 %v3885
        %v3982 = vunpack.c.l.b16 %v3886
        %v3983 = vpack.c.b16 %v3968, %v3967
        %v3984 = vpack.c.b16 %v3970, %v3969
        %v3985 = vpack.c.b16 %v3972, %v3971
        %v3986 = vpack.c.b16 %v3974, %v3973
        %v3987 = vpack.c.b16 %v3976, %v3975
        %v3988 = vpack.c.b16 %v3978, %v3977
        %v3989 = vpack.c.b16 %v3980, %v3979
        %v3990 = vpack.c.b16 %v3982, %v3981
        %3999 = vmatprep.subr.bf16.mxu0 0
        %4000 = vmatpush1.bf16.msra.mxu0 %v3983
        %4001 = vmatprep.subr.bf16.mxu0 0
        %4002 = vmatpush1.bf16.msra.mxu0 %v3984
        %4003 = vmatprep.subr.bf16.mxu0 0
        %4004 = vmatpush1.bf16.msra.mxu0 %v3985
        %4005 = vmatprep.subr.bf16.mxu0 0
        %4006 = vmatpush1.bf16.msra.mxu0 %v3986
        %4007 = vmatprep.subr.bf16.mxu0 0
        %4008 = vmatpush1.bf16.msra.mxu0 %v3987
        %4009 = vmatprep.subr.bf16.mxu0 0
        %4010 = vmatpush1.bf16.msra.mxu0 %v3988
        %4011 = vmatprep.subr.bf16.mxu0 0
        %4012 = vmatpush1.bf16.msra.mxu0 %v3989
        %4013 = vmatprep.subr.bf16.mxu0 0
        %4014 = vmatpush1.bf16.msra.mxu0 %v3990
        %4015 = vmatprep.subr.bf16.mxu0 0
        %4016 = vmatpush1.bf16.msra.mxu0 0
        %4017 = vmatprep.subr.bf16.mxu0 0
        %4018 = vmatpush1.bf16.msra.mxu0 0
        %4019 = vmatprep.subr.bf16.mxu0 0
        %4020 = vmatpush1.bf16.msra.mxu0 0
        %4021 = vmatprep.subr.bf16.mxu0 0
        %4022 = vmatpush1.bf16.msra.mxu0 0
        %4023 = vmatprep.subr.bf16.mxu0 0
        %4024 = vmatpush1.bf16.msra.mxu0 0
        %4025 = vmatprep.subr.bf16.mxu0 0
        %4026 = vmatpush1.bf16.msra.mxu0 0
        %4027 = vmatprep.subr.bf16.mxu0 0
        %4028 = vmatpush1.bf16.msra.mxu0 0
        %4029 = vmatprep.subr.bf16.mxu0 0
        %4030 = vmatpush1.bf16.msra.mxu0 0
        %4031 = vmatprep.mubr.bf16.mxu0 0
        %4032 = vmatmul.mubr.bf16.gmra.mrb[0].mxu0 %v3919
        %v4033 = vpop.f32.mrb[0].mxu0
        %v4034 = vadd.f32 0.0, %v4033
        %v4035 = vpop.f32.mrb[0].mxu0
        %v4036 = vpop.f32.mrb[0].mxu0
        %v4037 = vadd.f32 0.0, %v4036
        %v4038 = vpop.f32.mrb[0].mxu0
        %4039 = vmatprep.mubr.bf16.mxu0 0
        %4040 = vmatmul.mubr.bf16.gmra.mrb[0].mxu0 %v3920
        %v4041 = vpop.f32.mrb[0].mxu0
        %v4042 = vadd.f32 0.0, %v4041
        %v4043 = vpop.f32.mrb[0].mxu0
        %v4044 = vpop.f32.mrb[0].mxu0
        %v4045 = vadd.f32 0.0, %v4044
        %v4046 = vpop.f32.mrb[0].mxu0
        %4047 = vmatprep.mubr.bf16.mxu0 0
        %4048 = vmatmul.mubr.bf16.gmra.mrb[0].mxu0 %v3921
        %v4049 = vpop.f32.mrb[0].mxu0
        %v4050 = vadd.f32 0.0, %v4049
        %v4051 = vpop.f32.mrb[0].mxu0
        %v4052 = vpop.f32.mrb[0].mxu0
        %v4053 = vadd.f32 0.0, %v4052
        %v4054 = vpop.f32.mrb[0].mxu0
        %4055 = vmatprep.mubr.bf16.mxu0 0
        %4056 = vmatmul.mubr.bf16.gmra.mrb[0].mxu0 %v3922
        %v4057 = vpop.f32.mrb[0].mxu0
        %v4058 = vadd.f32 0.0, %v4057
        %v4059 = vpop.f32.mrb[0].mxu0
        %v4060 = vpop.f32.mrb[0].mxu0
        %v4061 = vadd.f32 0.0, %v4060
        %v4062 = vpop.f32.mrb[0].mxu0
        %4063 = vmatprep.mubr.bf16.mxu0 0
        %4064 = vmatmul.mubr.bf16.gmra.mrb[0].mxu0 %v3923
        %v4065 = vpop.f32.mrb[0].mxu0
        %v4066 = vadd.f32 0.0, %v4065
        %v4067 = vpop.f32.mrb[0].mxu0
        %v4068 = vpop.f32.mrb[0].mxu0
        %v4069 = vadd.f32 0.0, %v4068
        %v4070 = vpop.f32.mrb[0].mxu0
        %4071 = vmatprep.mubr.bf16.mxu0 0
        %4072 = vmatmul.mubr.bf16.gmra.mrb[0].mxu0 %v3924
        %v4073 = vpop.f32.mrb[0].mxu0
        %v4074 = vadd.f32 0.0, %v4073
        %v4075 = vpop.f32.mrb[0].mxu0
        %v4076 = vpop.f32.mrb[0].mxu0
        %v4077 = vadd.f32 0.0, %v4076
        %v4078 = vpop.f32.mrb[0].mxu0
        %4079 = vmatprep.mubr.bf16.mxu0 0
        %4080 = vmatmul.mubr.bf16.gmra.mrb[0].mxu0 %v3925
        %v4081 = vpop.f32.mrb[0].mxu0
        %v4082 = vadd.f32 0.0, %v4081
        %v4083 = vpop.f32.mrb[0].mxu0
        %v4084 = vpop.f32.mrb[0].mxu0
        %v4085 = vadd.f32 0.0, %v4084
        %v4086 = vpop.f32.mrb[0].mxu0
        %4087 = vmatprep.mubr.bf16.mxu0 0
        %4088 = vmatmul.mubr.bf16.gmra.mrb[0].mxu0 %v3926
        %v4089 = vpop.f32.mrb[0].mxu0
        %v4090 = vadd.f32 0.0, %v4089
        %v4091 = vpop.f32.mrb[0].mxu0
        %v4092 = vpop.f32.mrb[0].mxu0
        %v4093 = vadd.f32 0.0, %v4092
        %v4094 = vpop.f32.mrb[0].mxu0
        %4095 = vmatprep.mubr.bf16.mxu0 0
        %4096 = vmatmul.mubr.bf16.gmra.mrb[0].mxu0 %v3927
        %v4097 = vpop.f32.mrb[0].mxu0
        %v4098 = vadd.f32 0.0, %v4097
        %v4099 = vpop.f32.mrb[0].mxu0
        %v4100 = vpop.f32.mrb[0].mxu0
        %v4101 = vadd.f32 0.0, %v4100
        %v4102 = vpop.f32.mrb[0].mxu0
        %4103 = vmatprep.mubr.bf16.mxu0 0
        %4104 = vmatmul.mubr.bf16.gmra.mrb[0].mxu0 %v3928
        %v4105 = vpop.f32.mrb[0].mxu0
        %v4106 = vadd.f32 0.0, %v4105
        %v4107 = vpop.f32.mrb[0].mxu0
        %v4108 = vpop.f32.mrb[0].mxu0
        %v4109 = vadd.f32 0.0, %v4108
        %v4110 = vpop.f32.mrb[0].mxu0
        %4111 = vmatprep.mubr.bf16.mxu0 0
        %4112 = vmatmul.mubr.bf16.gmra.mrb[0].mxu0 %v3929
        %v4113 = vpop.f32.mrb[0].mxu0
        %v4114 = vadd.f32 0.0, %v4113
        %v4115 = vpop.f32.mrb[0].mxu0
        %v4116 = vpop.f32.mrb[0].mxu0
        %v4117 = vadd.f32 0.0, %v4116
        %v4118 = vpop.f32.mrb[0].mxu0
        %4119 = vmatprep.mubr.bf16.mxu0 0
        %4120 = vmatmul.mubr.bf16.gmra.mrb[0].mxu0 %v3930
        %v4121 = vpop.f32.mrb[0].mxu0
        %v4122 = vadd.f32 0.0, %v4121
        %v4123 = vpop.f32.mrb[0].mxu0
        %v4124 = vpop.f32.mrb[0].mxu0
        %v4125 = vadd.f32 0.0, %v4124
        %v4126 = vpop.f32.mrb[0].mxu0
        %4127 = vmatprep.mubr.bf16.mxu0 0
        %4128 = vmatmul.mubr.bf16.gmra.mrb[0].mxu0 %v3931
        %v4129 = vpop.f32.mrb[0].mxu0
        %v4130 = vadd.f32 0.0, %v4129
        %v4131 = vpop.f32.mrb[0].mxu0
        %v4132 = vpop.f32.mrb[0].mxu0
        %v4133 = vadd.f32 0.0, %v4132
        %v4134 = vpop.f32.mrb[0].mxu0
        %4135 = vmatprep.mubr.bf16.mxu0 0
        %4136 = vmatmul.mubr.bf16.gmra.mrb[0].mxu0 %v3932
        %v4137 = vpop.f32.mrb[0].mxu0
        %v4138 = vadd.f32 0.0, %v4137
        %v4139 = vpop.f32.mrb[0].mxu0
        %v4140 = vpop.f32.mrb[0].mxu0
        %v4141 = vadd.f32 0.0, %v4140
        %v4142 = vpop.f32.mrb[0].mxu0
        %4143 = vmatprep.mubr.bf16.mxu0 0
        %4144 = vmatmul.mubr.bf16.gmra.mrb[0].mxu0 %v3933
        %v4145 = vpop.f32.mrb[0].mxu0
        %v4146 = vadd.f32 0.0, %v4145
        %v4147 = vpop.f32.mrb[0].mxu0
        %v4148 = vpop.f32.mrb[0].mxu0
        %v4149 = vadd.f32 0.0, %v4148
        %v4150 = vpop.f32.mrb[0].mxu0
        %4151 = vmatprep.mubr.bf16.mxu0 0
        %4152 = vmatmul.mubr.bf16.gmra.mrb[0].mxu0 %v3934
        %v4153 = vpop.f32.mrb[0].mxu0
        %v4154 = vadd.f32 0.0, %v4153
        %v4155 = vpop.f32.mrb[0].mxu0
        %v4156 = vpop.f32.mrb[0].mxu0
        %v4157 = vadd.f32 0.0, %v4156
        %v4158 = vpop.f32.mrb[0].mxu0
        %4159 = vdwg.mxu0
        %v4160 = vadd.f32 %v3662, %v4034
        %v4161 = vadd.f32 %v3663, %v4037
        %v4162 = vadd.f32 %v3664, %v4042
        %v4163 = vadd.f32 %v3665, %v4045
        %v4164 = vadd.f32 %v3666, %v4050
        %v4165 = vadd.f32 %v3667, %v4053
        %v4166 = vadd.f32 %v3668, %v4058
        %v4167 = vadd.f32 %v3669, %v4061
        %v4168 = vadd.f32 %v3670, %v4066
        %v4169 = vadd.f32 %v3671, %v4069
        %v4170 = vadd.f32 %v3672, %v4074
        %v4171 = vadd.f32 %v3673, %v4077
        %v4172 = vadd.f32 %v3674, %v4082
        %v4173 = vadd.f32 %v3675, %v4085
        %v4174 = vadd.f32 %v3676, %v4090
        %v4175 = vadd.f32 %v3677, %v4093
        %v4176 = vadd.f32 %v3678, %v4098
        %v4177 = vadd.f32 %v3679, %v4101
        %v4178 = vadd.f32 %v3680, %v4106
        %v4179 = vadd.f32 %v3681, %v4109
        %v4180 = vadd.f32 %v3682, %v4114
        %v4181 = vadd.f32 %v3683, %v4117
        %v4182 = vadd.f32 %v3684, %v4122
        %v4183 = vadd.f32 %v3685, %v4125
        %v4184 = vadd.f32 %v3686, %v4130
        %v4185 = vadd.f32 %v3687, %v4133
        %v4186 = vadd.f32 %v3688, %v4138
        %v4187 = vadd.f32 %v3689, %v4141
        %v4188 = vadd.f32 %v3690, %v4146
        %v4189 = vadd.f32 %v3691, %v4149
        %v4190 = vadd.f32 %v3692, %v4154
        %v4191 = vadd.f32 %v3693, %v4157
        %s4192 = scalar_lea.vmem [#allocation2], 24
        %v4193 = vld [vmem:[%s4192] sm:$0xf]
        %v4194 = vld [vmem:[%s4192 + $0x4] sm:$0xf]
        %v4195 = vld [vmem:[%s4192 + $0xc] sm:$0xf]
        %v4196 = vld [vmem:[%s4192 + $0x10] sm:$0xf]
        %v4197 = vld [vmem:[%s4192 + $0x18] sm:$0xf]
        %v4198 = vld [vmem:[%s4192 + $0x1c] sm:$0xf]
        %v4199 = vld [vmem:[%s4192 + $0x24] sm:$0xf]
        %v4200 = vld [vmem:[%s4192 + $0x28] sm:$0xf]
        %v4201 = vld [vmem:[%s4192 + $0x30] sm:$0xf]
        %v4202 = vld [vmem:[%s4192 + $0x34] sm:$0xf]
        %v4203 = vld [vmem:[%s4192 + $0x3c] sm:$0xf]
        %v4204 = vld [vmem:[%s4192 + $0x40] sm:$0xf]
        %v4205 = vld [vmem:[%s4192 + $0x48] sm:$0xf]
        %v4206 = vld [vmem:[%s4192 + $0x4c] sm:$0xf]
        %v4207 = vld [vmem:[%s4192 + $0x54] sm:$0xf]
        %v4208 = vld [vmem:[%s4192 + $0x58] sm:$0xf]
        %v4209 = vld [vmem:[%s4192 + $0x60] sm:$0xf]
        %v4210 = vld [vmem:[%s4192 + $0x64] sm:$0xf]
        %v4211 = vld [vmem:[%s4192 + $0x6c] sm:$0xf]
        %v4212 = vld [vmem:[%s4192 + $0x70] sm:$0xf]
        %v4213 = vld [vmem:[%s4192 + $0x78] sm:$0xf]
        %v4214 = vld [vmem:[%s4192 + $0x7c] sm:$0xf]
        %v4215 = vld [vmem:[%s4192 + $0x84] sm:$0xf]
        %v4216 = vld [vmem:[%s4192 + $0x88] sm:$0xf]
        %v4217 = vld [vmem:[%s4192 + $0x90] sm:$0xf]
        %v4218 = vld [vmem:[%s4192 + $0x94] sm:$0xf]
        %v4219 = vld [vmem:[%s4192 + $0x9c] sm:$0xf]
        %v4220 = vld [vmem:[%s4192 + $0xa0] sm:$0xf]
        %v4221 = vld [vmem:[%s4192 + $0xa8] sm:$0xf]
        %v4222 = vld [vmem:[%s4192 + $0xac] sm:$0xf]
        %v4223 = vld [vmem:[%s4192 + $0xb4] sm:$0xf]
        %v4224 = vld [vmem:[%s4192 + $0xb8] sm:$0xf]
        %s4225 = scalar_lea.vmem [#allocation7], 384
        %v4226 = vld [vmem:[%s4225] sm:$0xf]
        %v4227 = vld [vmem:[%s4225 + $0x4] sm:$0xf]
        %v4228 = vld [vmem:[%s4225 + $0x8] sm:$0xf]
        %v4229 = vld [vmem:[%s4225 + $0xc] sm:$0xf]
        %v4230 = vld [vmem:[%s4225 + $0x10] sm:$0xf]
        %v4231 = vld [vmem:[%s4225 + $0x14] sm:$0xf]
        %v4232 = vld [vmem:[%s4225 + $0x18] sm:$0xf]
        %v4233 = vld [vmem:[%s4225 + $0x1c] sm:$0xf]
        %v4234 = vld [vmem:[%s4225 + $0x20] sm:$0xf]
        %v4235 = vld [vmem:[%s4225 + $0x24] sm:$0xf]
        %v4236 = vld [vmem:[%s4225 + $0x28] sm:$0xf]
        %v4237 = vld [vmem:[%s4225 + $0x2c] sm:$0xf]
        %v4238 = vld [vmem:[%s4225 + $0x30] sm:$0xf]
        %v4239 = vld [vmem:[%s4225 + $0x34] sm:$0xf]
        %v4240 = vld [vmem:[%s4225 + $0x38] sm:$0xf]
        %v4241 = vld [vmem:[%s4225 + $0x3c] sm:$0xf]
        %v4274 = vunpack.c.l.b16 %v4193
        %v4275 = vunpack.c.l.b16 %v4194
        %v4276 = vunpack.c.l.b16 %v4195
        %v4277 = vunpack.c.l.b16 %v4196
        %v4278 = vunpack.c.l.b16 %v4197
        %v4279 = vunpack.c.l.b16 %v4198
        %v4280 = vunpack.c.l.b16 %v4199
        %v4281 = vunpack.c.l.b16 %v4200
        %v4282 = vunpack.c.l.b16 %v4201
        %v4283 = vunpack.c.l.b16 %v4202
        %v4284 = vunpack.c.l.b16 %v4203
        %v4285 = vunpack.c.l.b16 %v4204
        %v4286 = vunpack.c.l.b16 %v4205
        %v4287 = vunpack.c.l.b16 %v4206
        %v4288 = vunpack.c.l.b16 %v4207
        %v4289 = vunpack.c.l.b16 %v4208
        %v4290 = vunpack.c.l.b16 %v4209
        %v4291 = vunpack.c.l.b16 %v4210
        %v4292 = vunpack.c.l.b16 %v4211
        %v4293 = vunpack.c.l.b16 %v4212
        %v4294 = vunpack.c.l.b16 %v4213
        %v4295 = vunpack.c.l.b16 %v4214
        %v4296 = vunpack.c.l.b16 %v4215
        %v4297 = vunpack.c.l.b16 %v4216
        %v4298 = vunpack.c.l.b16 %v4217
        %v4299 = vunpack.c.l.b16 %v4218
        %v4300 = vunpack.c.l.b16 %v4219
        %v4301 = vunpack.c.l.b16 %v4220
        %v4302 = vunpack.c.l.b16 %v4221
        %v4303 = vunpack.c.l.b16 %v4222
        %v4304 = vunpack.c.l.b16 %v4223
        %v4305 = vunpack.c.l.b16 %v4224
        %v4306 = vpack.c.b16 %v4275, %v4274
        %v4307 = vpack.c.b16 %v4277, %v4276
        %v4308 = vpack.c.b16 %v4279, %v4278
        %v4309 = vpack.c.b16 %v4281, %v4280
        %v4310 = vpack.c.b16 %v4283, %v4282
        %v4311 = vpack.c.b16 %v4285, %v4284
        %v4312 = vpack.c.b16 %v4287, %v4286
        %v4313 = vpack.c.b16 %v4289, %v4288
        %v4314 = vpack.c.b16 %v4291, %v4290
        %v4315 = vpack.c.b16 %v4293, %v4292
        %v4316 = vpack.c.b16 %v4295, %v4294
        %v4317 = vpack.c.b16 %v4297, %v4296
        %v4318 = vpack.c.b16 %v4299, %v4298
        %v4319 = vpack.c.b16 %v4301, %v4300
        %v4320 = vpack.c.b16 %v4303, %v4302
        %v4321 = vpack.c.b16 %v4305, %v4304
        %v4354 = vunpack.c.l.b16 %v4226
        %v4355 = vunpack.c.l.b16 %v4227
        %v4356 = vunpack.c.l.b16 %v4228
        %v4357 = vunpack.c.l.b16 %v4229
        %v4358 = vunpack.c.l.b16 %v4230
        %v4359 = vunpack.c.l.b16 %v4231
        %v4360 = vunpack.c.l.b16 %v4232
        %v4361 = vunpack.c.l.b16 %v4233
        %v4362 = vunpack.c.l.b16 %v4234
        %v4363 = vunpack.c.l.b16 %v4235
        %v4364 = vunpack.c.l.b16 %v4236
        %v4365 = vunpack.c.l.b16 %v4237
        %v4366 = vunpack.c.l.b16 %v4238
        %v4367 = vunpack.c.l.b16 %v4239
        %v4368 = vunpack.c.l.b16 %v4240
        %v4369 = vunpack.c.l.b16 %v4241
        %v4370 = vpack.c.b16 %v4355, %v4354
        %v4371 = vpack.c.b16 %v4357, %v4356
        %v4372 = vpack.c.b16 %v4359, %v4358
        %v4373 = vpack.c.b16 %v4361, %v4360
        %v4374 = vpack.c.b16 %v4363, %v4362
        %v4375 = vpack.c.b16 %v4365, %v4364
        %v4376 = vpack.c.b16 %v4367, %v4366
        %v4377 = vpack.c.b16 %v4369, %v4368
        %4386 = vmatprep.subr.bf16.mxu0 0
        %4387 = vmatpush1.bf16.msra.mxu0 %v4370
        %4388 = vmatprep.subr.bf16.mxu0 0
        %4389 = vmatpush1.bf16.msra.mxu0 %v4371
        %4390 = vmatprep.subr.bf16.mxu0 0
        %4391 = vmatpush1.bf16.msra.mxu0 %v4372
        %4392 = vmatprep.subr.bf16.mxu0 0
        %4393 = vmatpush1.bf16.msra.mxu0 %v4373
        %4394 = vmatprep.subr.bf16.mxu0 0
        %4395 = vmatpush1.bf16.msra.mxu0 %v4374
        %4396 = vmatprep.subr.bf16.mxu0 0
        %4397 = vmatpush1.bf16.msra.mxu0 %v4375
        %4398 = vmatprep.subr.bf16.mxu0 0
        %4399 = vmatpush1.bf16.msra.mxu0 %v4376
        %4400 = vmatprep.subr.bf16.mxu0 0
        %4401 = vmatpush1.bf16.msra.mxu0 %v4377
        %4402 = vmatprep.subr.bf16.mxu0 0
        %4403 = vmatpush1.bf16.msra.mxu0 0
        %4404 = vmatprep.subr.bf16.mxu0 0
        %4405 = vmatpush1.bf16.msra.mxu0 0
        %4406 = vmatprep.subr.bf16.mxu0 0
        %4407 = vmatpush1.bf16.msra.mxu0 0
        %4408 = vmatprep.subr.bf16.mxu0 0
        %4409 = vmatpush1.bf16.msra.mxu0 0
        %4410 = vmatprep.subr.bf16.mxu0 0
        %4411 = vmatpush1.bf16.msra.mxu0 0
        %4412 = vmatprep.subr.bf16.mxu0 0
        %4413 = vmatpush1.bf16.msra.mxu0 0
        %4414 = vmatprep.subr.bf16.mxu0 0
        %4415 = vmatpush1.bf16.msra.mxu0 0
        %4416 = vmatprep.subr.bf16.mxu0 0
        %4417 = vmatpush1.bf16.msra.mxu0 0
        %4418 = vmatprep.mubr.bf16.mxu0 0
        %4419 = vmatmul.mubr.bf16.gmra.mrb[0].mxu0 %v4306
        %v4420 = vpop.f32.mrb[0].mxu0
        %v4421 = vadd.f32 0.0, %v4420
        %v4422 = vpop.f32.mrb[0].mxu0
        %v4423 = vpop.f32.mrb[0].mxu0
        %v4424 = vadd.f32 0.0, %v4423
        %v4425 = vpop.f32.mrb[0].mxu0
        %4426 = vmatprep.mubr.bf16.mxu0 0
        %4427 = vmatmul.mubr.bf16.gmra.mrb[0].mxu0 %v4307
        %v4428 = vpop.f32.mrb[0].mxu0
        %v4429 = vadd.f32 0.0, %v4428
        %v4430 = vpop.f32.mrb[0].mxu0
        %v4431 = vpop.f32.mrb[0].mxu0
        %v4432 = vadd.f32 0.0, %v4431
        %v4433 = vpop.f32.mrb[0].mxu0
        %4434 = vmatprep.mubr.bf16.mxu0 0
        %4435 = vmatmul.mubr.bf16.gmra.mrb[0].mxu0 %v4308
        %v4436 = vpop.f32.mrb[0].mxu0
        %v4437 = vadd.f32 0.0, %v4436
        %v4438 = vpop.f32.mrb[0].mxu0
        %v4439 = vpop.f32.mrb[0].mxu0
        %v4440 = vadd.f32 0.0, %v4439
        %v4441 = vpop.f32.mrb[0].mxu0
        %4442 = vmatprep.mubr.bf16.mxu0 0
        %4443 = vmatmul.mubr.bf16.gmra.mrb[0].mxu0 %v4309
        %v4444 = vpop.f32.mrb[0].mxu0
        %v4445 = vadd.f32 0.0, %v4444
        %v4446 = vpop.f32.mrb[0].mxu0
        %v4447 = vpop.f32.mrb[0].mxu0
        %v4448 = vadd.f32 0.0, %v4447
        %v4449 = vpop.f32.mrb[0].mxu0
        %4450 = vmatprep.mubr.bf16.mxu0 0
        %4451 = vmatmul.mubr.bf16.gmra.mrb[0].mxu0 %v4310
        %v4452 = vpop.f32.mrb[0].mxu0
        %v4453 = vadd.f32 0.0, %v4452
        %v4454 = vpop.f32.mrb[0].mxu0
        %v4455 = vpop.f32.mrb[0].mxu0
        %v4456 = vadd.f32 0.0, %v4455
        %v4457 = vpop.f32.mrb[0].mxu0
        %4458 = vmatprep.mubr.bf16.mxu0 0
        %4459 = vmatmul.mubr.bf16.gmra.mrb[0].mxu0 %v4311
        %v4460 = vpop.f32.mrb[0].mxu0
        %v4461 = vadd.f32 0.0, %v4460
        %v4462 = vpop.f32.mrb[0].mxu0
        %v4463 = vpop.f32.mrb[0].mxu0
        %v4464 = vadd.f32 0.0, %v4463
        %v4465 = vpop.f32.mrb[0].mxu0
        %4466 = vmatprep.mubr.bf16.mxu0 0
        %4467 = vmatmul.mubr.bf16.gmra.mrb[0].mxu0 %v4312
        %v4468 = vpop.f32.mrb[0].mxu0
        %v4469 = vadd.f32 0.0, %v4468
        %v4470 = vpop.f32.mrb[0].mxu0
        %v4471 = vpop.f32.mrb[0].mxu0
        %v4472 = vadd.f32 0.0, %v4471
        %v4473 = vpop.f32.mrb[0].mxu0
        %4474 = vmatprep.mubr.bf16.mxu0 0
        %4475 = vmatmul.mubr.bf16.gmra.mrb[0].mxu0 %v4313
        %v4476 = vpop.f32.mrb[0].mxu0
        %v4477 = vadd.f32 0.0, %v4476
        %v4478 = vpop.f32.mrb[0].mxu0
        %v4479 = vpop.f32.mrb[0].mxu0
        %v4480 = vadd.f32 0.0, %v4479
        %v4481 = vpop.f32.mrb[0].mxu0
        %4482 = vmatprep.mubr.bf16.mxu0 0
        %4483 = vmatmul.mubr.bf16.gmra.mrb[0].mxu0 %v4314
        %v4484 = vpop.f32.mrb[0].mxu0
        %v4485 = vadd.f32 0.0, %v4484
        %v4486 = vpop.f32.mrb[0].mxu0
        %v4487 = vpop.f32.mrb[0].mxu0
        %v4488 = vadd.f32 0.0, %v4487
        %v4489 = vpop.f32.mrb[0].mxu0
        %4490 = vmatprep.mubr.bf16.mxu0 0
        %4491 = vmatmul.mubr.bf16.gmra.mrb[0].mxu0 %v4315
        %v4492 = vpop.f32.mrb[0].mxu0
        %v4493 = vadd.f32 0.0, %v4492
        %v4494 = vpop.f32.mrb[0].mxu0
        %v4495 = vpop.f32.mrb[0].mxu0
        %v4496 = vadd.f32 0.0, %v4495
        %v4497 = vpop.f32.mrb[0].mxu0
        %4498 = vmatprep.mubr.bf16.mxu0 0
        %4499 = vmatmul.mubr.bf16.gmra.mrb[0].mxu0 %v4316
        %v4500 = vpop.f32.mrb[0].mxu0
        %v4501 = vadd.f32 0.0, %v4500
        %v4502 = vpop.f32.mrb[0].mxu0
        %v4503 = vpop.f32.mrb[0].mxu0
        %v4504 = vadd.f32 0.0, %v4503
        %v4505 = vpop.f32.mrb[0].mxu0
        %4506 = vmatprep.mubr.bf16.mxu0 0
        %4507 = vmatmul.mubr.bf16.gmra.mrb[0].mxu0 %v4317
        %v4508 = vpop.f32.mrb[0].mxu0
        %v4509 = vadd.f32 0.0, %v4508
        %v4510 = vpop.f32.mrb[0].mxu0
        %v4511 = vpop.f32.mrb[0].mxu0
        %v4512 = vadd.f32 0.0, %v4511
        %v4513 = vpop.f32.mrb[0].mxu0
        %4514 = vmatprep.mubr.bf16.mxu0 0
        %4515 = vmatmul.mubr.bf16.gmra.mrb[0].mxu0 %v4318
        %v4516 = vpop.f32.mrb[0].mxu0
        %v4517 = vadd.f32 0.0, %v4516
        %v4518 = vpop.f32.mrb[0].mxu0
        %v4519 = vpop.f32.mrb[0].mxu0
        %v4520 = vadd.f32 0.0, %v4519
        %v4521 = vpop.f32.mrb[0].mxu0
        %4522 = vmatprep.mubr.bf16.mxu0 0
        %4523 = vmatmul.mubr.bf16.gmra.mrb[0].mxu0 %v4319
        %v4524 = vpop.f32.mrb[0].mxu0
        %v4525 = vadd.f32 0.0, %v4524
        %v4526 = vpop.f32.mrb[0].mxu0
        %v4527 = vpop.f32.mrb[0].mxu0
        %v4528 = vadd.f32 0.0, %v4527
        %v4529 = vpop.f32.mrb[0].mxu0
        %4530 = vmatprep.mubr.bf16.mxu0 0
        %4531 = vmatmul.mubr.bf16.gmra.mrb[0].mxu0 %v4320
        %v4532 = vpop.f32.mrb[0].mxu0
        %v4533 = vadd.f32 0.0, %v4532
        %v4534 = vpop.f32.mrb[0].mxu0
        %v4535 = vpop.f32.mrb[0].mxu0
        %v4536 = vadd.f32 0.0, %v4535
        %v4537 = vpop.f32.mrb[0].mxu0
        %4538 = vmatprep.mubr.bf16.mxu0 0
        %4539 = vmatmul.mubr.bf16.gmra.mrb[0].mxu0 %v4321
        %v4540 = vpop.f32.mrb[0].mxu0
        %v4541 = vadd.f32 0.0, %v4540
        %v4542 = vpop.f32.mrb[0].mxu0
        %v4543 = vpop.f32.mrb[0].mxu0
        %v4544 = vadd.f32 0.0, %v4543
        %v4545 = vpop.f32.mrb[0].mxu0
        %4546 = vdwg.mxu0
        %v4547 = vadd.f32 %v4160, %v4421
        %v4548 = vadd.f32 %v4161, %v4424
        %v4549 = vadd.f32 %v4162, %v4429
        %v4550 = vadd.f32 %v4163, %v4432
        %v4551 = vadd.f32 %v4164, %v4437
        %v4552 = vadd.f32 %v4165, %v4440
        %v4553 = vadd.f32 %v4166, %v4445
        %v4554 = vadd.f32 %v4167, %v4448
        %v4555 = vadd.f32 %v4168, %v4453
        %v4556 = vadd.f32 %v4169, %v4456
        %v4557 = vadd.f32 %v4170, %v4461
        %v4558 = vadd.f32 %v4171, %v4464
        %v4559 = vadd.f32 %v4172, %v4469
        %v4560 = vadd.f32 %v4173, %v4472
        %v4561 = vadd.f32 %v4174, %v4477
        %v4562 = vadd.f32 %v4175, %v4480
        %v4563 = vadd.f32 %v4176, %v4485
        %v4564 = vadd.f32 %v4177, %v4488
        %v4565 = vadd.f32 %v4178, %v4493
        %v4566 = vadd.f32 %v4179, %v4496
        %v4567 = vadd.f32 %v4180, %v4501
        %v4568 = vadd.f32 %v4181, %v4504
        %v4569 = vadd.f32 %v4182, %v4509
        %v4570 = vadd.f32 %v4183, %v4512
        %v4571 = vadd.f32 %v4184, %v4517
        %v4572 = vadd.f32 %v4185, %v4520
        %v4573 = vadd.f32 %v4186, %v4525
        %v4574 = vadd.f32 %v4187, %v4528
        %v4575 = vadd.f32 %v4188, %v4533
        %v4576 = vadd.f32 %v4189, %v4536
        %v4577 = vadd.f32 %v4190, %v4541
        %v4578 = vadd.f32 %v4191, %v4544
        %v4579 = vld [vmem:[%s4192] sm:$0xf]
        %v4580 = vld [vmem:[%s4192 + $0x4] sm:$0xf]
        %v4581 = vld [vmem:[%s4192 + $0x8] sm:$0x1]
        %v4582 = vld [vmem:[%s4192 + $0xc] sm:$0xf]
        %v4583 = vld [vmem:[%s4192 + $0x10] sm:$0xf]
        %v4584 = vld [vmem:[%s4192 + $0x14] sm:$0x1]
        %v4585 = vld [vmem:[%s4192 + $0x18] sm:$0xf]
        %v4586 = vld [vmem:[%s4192 + $0x1c] sm:$0xf]
        %v4587 = vld [vmem:[%s4192 + $0x20] sm:$0x1]
        %v4588 = vld [vmem:[%s4192 + $0x24] sm:$0xf]
        %v4589 = vld [vmem:[%s4192 + $0x28] sm:$0xf]
        %v4590 = vld [vmem:[%s4192 + $0x2c] sm:$0x1]
        %v4591 = vld [vmem:[%s4192 + $0x30] sm:$0xf]
        %v4592 = vld [vmem:[%s4192 + $0x34] sm:$0xf]
        %v4593 = vld [vmem:[%s4192 + $0x38] sm:$0x1]
        %v4594 = vld [vmem:[%s4192 + $0x3c] sm:$0xf]
        %v4595 = vld [vmem:[%s4192 + $0x40] sm:$0xf]
        %v4596 = vld [vmem:[%s4192 + $0x44] sm:$0x1]
        %v4597 = vld [vmem:[%s4192 + $0x48] sm:$0xf]
        %v4598 = vld [vmem:[%s4192 + $0x4c] sm:$0xf]
        %v4599 = vld [vmem:[%s4192 + $0x50] sm:$0x1]
        %v4600 = vld [vmem:[%s4192 + $0x54] sm:$0xf]
        %v4601 = vld [vmem:[%s4192 + $0x58] sm:$0xf]
        %v4602 = vld [vmem:[%s4192 + $0x5c] sm:$0x1]
        %v4603 = vld [vmem:[%s4192 + $0x60] sm:$0xf]
        %v4604 = vld [vmem:[%s4192 + $0x64] sm:$0xf]
        %v4605 = vld [vmem:[%s4192 + $0x68] sm:$0x1]
        %v4606 = vld [vmem:[%s4192 + $0x6c] sm:$0xf]
        %v4607 = vld [vmem:[%s4192 + $0x70] sm:$0xf]
        %v4608 = vld [vmem:[%s4192 + $0x74] sm:$0x1]
        %v4609 = vld [vmem:[%s4192 + $0x78] sm:$0xf]
        %v4610 = vld [vmem:[%s4192 + $0x7c] sm:$0xf]
        %v4611 = vld [vmem:[%s4192 + $0x80] sm:$0x1]
        %v4612 = vld [vmem:[%s4192 + $0x84] sm:$0xf]
        %v4613 = vld [vmem:[%s4192 + $0x88] sm:$0xf]
        %v4614 = vld [vmem:[%s4192 + $0x8c] sm:$0x1]
        %v4615 = vld [vmem:[%s4192 + $0x90] sm:$0xf]
        %v4616 = vld [vmem:[%s4192 + $0x94] sm:$0xf]
        %v4617 = vld [vmem:[%s4192 + $0x98] sm:$0x1]
        %v4618 = vld [vmem:[%s4192 + $0x9c] sm:$0xf]
        %v4619 = vld [vmem:[%s4192 + $0xa0] sm:$0xf]
        %v4620 = vld [vmem:[%s4192 + $0xa4] sm:$0x1]
        %v4621 = vld [vmem:[%s4192 + $0xa8] sm:$0xf]
        %v4622 = vld [vmem:[%s4192 + $0xac] sm:$0xf]
        %v4623 = vld [vmem:[%s4192 + $0xb0] sm:$0x1]
        %v4624 = vld [vmem:[%s4192 + $0xb4] sm:$0xf]
        %v4625 = vld [vmem:[%s4192 + $0xb8] sm:$0xf]
        %v4626 = vld [vmem:[%s4192 + $0xbc] sm:$0x1]
        %v4628 = vshrl.u32 %v4579, 16
        %v4630 = vrot.slane %v4628, 4
        %v4631 = vshll.u32 %v4579, 16
        %v4633 = vrot.slane %v4631, 5
        %v4634 = vor.u32 %v4630, %v4633
        %v4635 = vrot.slane %v4634, 4
        %v4637 = vshll.u32 %v4580, 16
        %v4639 = vrot.slane %v4637, 5
        %v4640 = vsel %vm1089, %v4635, %v4639
        %v4641 = vshrl.u32 %v4580, 16
        %v4643 = vrot.slane %v4641, 4
        %v4644 = vor.u32 %v4643, %v4639
        %v4645 = vrot.slane %v4644, 4
        %v4647 = vshll.u32 %v4581, 16
        %v4649 = vrot.slane %v4647, 5
        %v4650 = vsel %vm1089, %v4645, %v4649
        %v4652 = vshrl.u32 %v4582, 16
        %v4654 = vrot.slane %v4652, 4
        %v4655 = vshll.u32 %v4582, 16
        %v4657 = vrot.slane %v4655, 5
        %v4658 = vor.u32 %v4654, %v4657
        %v4659 = vrot.slane %v4658, 4
        %v4661 = vshll.u32 %v4583, 16
        %v4663 = vrot.slane %v4661, 5
        %v4664 = vsel %vm1089, %v4659, %v4663
        %v4665 = vshrl.u32 %v4583, 16
        %v4667 = vrot.slane %v4665, 4
        %v4668 = vor.u32 %v4667, %v4663
        %v4669 = vrot.slane %v4668, 4
        %v4671 = vshll.u32 %v4584, 16
        %v4673 = vrot.slane %v4671, 5
        %v4674 = vsel %vm1089, %v4669, %v4673
        %v4676 = vshrl.u32 %v4585, 16
        %v4678 = vrot.slane %v4676, 4
        %v4679 = vshll.u32 %v4585, 16
        %v4681 = vrot.slane %v4679, 5
        %v4682 = vor.u32 %v4678, %v4681
        %v4683 = vrot.slane %v4682, 4
        %v4685 = vshll.u32 %v4586, 16
        %v4687 = vrot.slane %v4685, 5
        %v4688 = vsel %vm1089, %v4683, %v4687
        %v4689 = vshrl.u32 %v4586, 16
        %v4691 = vrot.slane %v4689, 4
        %v4692 = vor.u32 %v4691, %v4687
        %v4693 = vrot.slane %v4692, 4
        %v4695 = vshll.u32 %v4587, 16
        %v4697 = vrot.slane %v4695, 5
        %v4698 = vsel %vm1089, %v4693, %v4697
        %v4700 = vshrl.u32 %v4588, 16
        %v4702 = vrot.slane %v4700, 4
        %v4703 = vshll.u32 %v4588, 16
        %v4705 = vrot.slane %v4703, 5
        %v4706 = vor.u32 %v4702, %v4705
        %v4707 = vrot.slane %v4706, 4
        %v4709 = vshll.u32 %v4589, 16
        %v4711 = vrot.slane %v4709, 5
        %v4712 = vsel %vm1089, %v4707, %v4711
        %v4713 = vshrl.u32 %v4589, 16
        %v4715 = vrot.slane %v4713, 4
        %v4716 = vor.u32 %v4715, %v4711
        %v4717 = vrot.slane %v4716, 4
        %v4719 = vshll.u32 %v4590, 16
        %v4721 = vrot.slane %v4719, 5
        %v4722 = vsel %vm1089, %v4717, %v4721
        %v4724 = vshrl.u32 %v4591, 16
        %v4726 = vrot.slane %v4724, 4
        %v4727 = vshll.u32 %v4591, 16
        %v4729 = vrot.slane %v4727, 5
        %v4730 = vor.u32 %v4726, %v4729
        %v4731 = vrot.slane %v4730, 4
        %v4733 = vshll.u32 %v4592, 16
        %v4735 = vrot.slane %v4733, 5
        %v4736 = vsel %vm1089, %v4731, %v4735
        %v4737 = vshrl.u32 %v4592, 16
        %v4739 = vrot.slane %v4737, 4
        %v4740 = vor.u32 %v4739, %v4735
        %v4741 = vrot.slane %v4740, 4
        %v4743 = vshll.u32 %v4593, 16
        %v4745 = vrot.slane %v4743, 5
        %v4746 = vsel %vm1089, %v4741, %v4745
        %v4748 = vshrl.u32 %v4594, 16
        %v4750 = vrot.slane %v4748, 4
        %v4751 = vshll.u32 %v4594, 16
        %v4753 = vrot.slane %v4751, 5
        %v4754 = vor.u32 %v4750, %v4753
        %v4755 = vrot.slane %v4754, 4
        %v4757 = vshll.u32 %v4595, 16
        %v4759 = vrot.slane %v4757, 5
        %v4760 = vsel %vm1089, %v4755, %v4759
        %v4761 = vshrl.u32 %v4595, 16
        %v4763 = vrot.slane %v4761, 4
        %v4764 = vor.u32 %v4763, %v4759
        %v4765 = vrot.slane %v4764, 4
        %v4767 = vshll.u32 %v4596, 16
        %v4769 = vrot.slane %v4767, 5
        %v4770 = vsel %vm1089, %v4765, %v4769
        %v4772 = vshrl.u32 %v4597, 16
        %v4774 = vrot.slane %v4772, 4
        %v4775 = vshll.u32 %v4597, 16
        %v4777 = vrot.slane %v4775, 5
        %v4778 = vor.u32 %v4774, %v4777
        %v4779 = vrot.slane %v4778, 4
        %v4781 = vshll.u32 %v4598, 16
        %v4783 = vrot.slane %v4781, 5
        %v4784 = vsel %vm1089, %v4779, %v4783
        %v4785 = vshrl.u32 %v4598, 16
        %v4787 = vrot.slane %v4785, 4
        %v4788 = vor.u32 %v4787, %v4783
        %v4789 = vrot.slane %v4788, 4
        %v4791 = vshll.u32 %v4599, 16
        %v4793 = vrot.slane %v4791, 5
        %v4794 = vsel %vm1089, %v4789, %v4793
        %v4796 = vshrl.u32 %v4600, 16
        %v4798 = vrot.slane %v4796, 4
        %v4799 = vshll.u32 %v4600, 16
        %v4801 = vrot.slane %v4799, 5
        %v4802 = vor.u32 %v4798, %v4801
        %v4803 = vrot.slane %v4802, 4
        %v4805 = vshll.u32 %v4601, 16
        %v4807 = vrot.slane %v4805, 5
        %v4808 = vsel %vm1089, %v4803, %v4807
        %v4809 = vshrl.u32 %v4601, 16
        %v4811 = vrot.slane %v4809, 4
        %v4812 = vor.u32 %v4811, %v4807
        %v4813 = vrot.slane %v4812, 4
        %v4815 = vshll.u32 %v4602, 16
        %v4817 = vrot.slane %v4815, 5
        %v4818 = vsel %vm1089, %v4813, %v4817
        %v4820 = vshrl.u32 %v4603, 16
        %v4822 = vrot.slane %v4820, 4
        %v4823 = vshll.u32 %v4603, 16
        %v4825 = vrot.slane %v4823, 5
        %v4826 = vor.u32 %v4822, %v4825
        %v4827 = vrot.slane %v4826, 4
        %v4829 = vshll.u32 %v4604, 16
        %v4831 = vrot.slane %v4829, 5
        %v4832 = vsel %vm1089, %v4827, %v4831
        %v4833 = vshrl.u32 %v4604, 16
        %v4835 = vrot.slane %v4833, 4
        %v4836 = vor.u32 %v4835, %v4831
        %v4837 = vrot.slane %v4836, 4
        %v4839 = vshll.u32 %v4605, 16
        %v4841 = vrot.slane %v4839, 5
        %v4842 = vsel %vm1089, %v4837, %v4841
        %v4844 = vshrl.u32 %v4606, 16
        %v4846 = vrot.slane %v4844, 4
        %v4847 = vshll.u32 %v4606, 16
        %v4849 = vrot.slane %v4847, 5
        %v4850 = vor.u32 %v4846, %v4849
        %v4851 = vrot.slane %v4850, 4
        %v4853 = vshll.u32 %v4607, 16
        %v4855 = vrot.slane %v4853, 5
        %v4856 = vsel %vm1089, %v4851, %v4855
        %v4857 = vshrl.u32 %v4607, 16
        %v4859 = vrot.slane %v4857, 4
        %v4860 = vor.u32 %v4859, %v4855
        %v4861 = vrot.slane %v4860, 4
        %v4863 = vshll.u32 %v4608, 16
        %v4865 = vrot.slane %v4863, 5
        %v4866 = vsel %vm1089, %v4861, %v4865
        %v4868 = vshrl.u32 %v4609, 16
        %v4870 = vrot.slane %v4868, 4
        %v4871 = vshll.u32 %v4609, 16
        %v4873 = vrot.slane %v4871, 5
        %v4874 = vor.u32 %v4870, %v4873
        %v4875 = vrot.slane %v4874, 4
        %v4877 = vshll.u32 %v4610, 16
        %v4879 = vrot.slane %v4877, 5
        %v4880 = vsel %vm1089, %v4875, %v4879
        %v4881 = vshrl.u32 %v4610, 16
        %v4883 = vrot.slane %v4881, 4
        %v4884 = vor.u32 %v4883, %v4879
        %v4885 = vrot.slane %v4884, 4
        %v4887 = vshll.u32 %v4611, 16
        %v4889 = vrot.slane %v4887, 5
        %v4890 = vsel %vm1089, %v4885, %v4889
        %v4892 = vshrl.u32 %v4612, 16
        %v4894 = vrot.slane %v4892, 4
        %v4895 = vshll.u32 %v4612, 16
        %v4897 = vrot.slane %v4895, 5
        %v4898 = vor.u32 %v4894, %v4897
        %v4899 = vrot.slane %v4898, 4
        %v4901 = vshll.u32 %v4613, 16
        %v4903 = vrot.slane %v4901, 5
        %v4904 = vsel %vm1089, %v4899, %v4903
        %v4905 = vshrl.u32 %v4613, 16
        %v4907 = vrot.slane %v4905, 4
        %v4908 = vor.u32 %v4907, %v4903
        %v4909 = vrot.slane %v4908, 4
        %v4911 = vshll.u32 %v4614, 16
        %v4913 = vrot.slane %v4911, 5
        %v4914 = vsel %vm1089, %v4909, %v4913
        %v4916 = vshrl.u32 %v4615, 16
        %v4918 = vrot.slane %v4916, 4
        %v4919 = vshll.u32 %v4615, 16
        %v4921 = vrot.slane %v4919, 5
        %v4922 = vor.u32 %v4918, %v4921
        %v4923 = vrot.slane %v4922, 4
        %v4925 = vshll.u32 %v4616, 16
        %v4927 = vrot.slane %v4925, 5
        %v4928 = vsel %vm1089, %v4923, %v4927
        %v4929 = vshrl.u32 %v4616, 16
        %v4931 = vrot.slane %v4929, 4
        %v4932 = vor.u32 %v4931, %v4927
        %v4933 = vrot.slane %v4932, 4
        %v4935 = vshll.u32 %v4617, 16
        %v4937 = vrot.slane %v4935, 5
        %v4938 = vsel %vm1089, %v4933, %v4937
        %v4940 = vshrl.u32 %v4618, 16
        %v4942 = vrot.slane %v4940, 4
        %v4943 = vshll.u32 %v4618, 16
        %v4945 = vrot.slane %v4943, 5
        %v4946 = vor.u32 %v4942, %v4945
        %v4947 = vrot.slane %v4946, 4
        %v4949 = vshll.u32 %v4619, 16
        %v4951 = vrot.slane %v4949, 5
        %v4952 = vsel %vm1089, %v4947, %v4951
        %v4953 = vshrl.u32 %v4619, 16
        %v4955 = vrot.slane %v4953, 4
        %v4956 = vor.u32 %v4955, %v4951
        %v4957 = vrot.slane %v4956, 4
        %v4959 = vshll.u32 %v4620, 16
        %v4961 = vrot.slane %v4959, 5
        %v4962 = vsel %vm1089, %v4957, %v4961
        %v4964 = vshrl.u32 %v4621, 16
        %v4966 = vrot.slane %v4964, 4
        %v4967 = vshll.u32 %v4621, 16
        %v4969 = vrot.slane %v4967, 5
        %v4970 = vor.u32 %v4966, %v4969
        %v4971 = vrot.slane %v4970, 4
        %v4973 = vshll.u32 %v4622, 16
        %v4975 = vrot.slane %v4973, 5
        %v4976 = vsel %vm1089, %v4971, %v4975
        %v4977 = vshrl.u32 %v4622, 16
        %v4979 = vrot.slane %v4977, 4
        %v4980 = vor.u32 %v4979, %v4975
        %v4981 = vrot.slane %v4980, 4
        %v4983 = vshll.u32 %v4623, 16
        %v4985 = vrot.slane %v4983, 5
        %v4986 = vsel %vm1089, %v4981, %v4985
        %v4988 = vshrl.u32 %v4624, 16
        %v4990 = vrot.slane %v4988, 4
        %v4991 = vshll.u32 %v4624, 16
        %v4993 = vrot.slane %v4991, 5
        %v4994 = vor.u32 %v4990, %v4993
        %v4995 = vrot.slane %v4994, 4
        %v4997 = vshll.u32 %v4625, 16
        %v4999 = vrot.slane %v4997, 5
        %v5000 = vsel %vm1089, %v4995, %v4999
        %v5001 = vshrl.u32 %v4625, 16
        %v5003 = vrot.slane %v5001, 4
        %v5004 = vor.u32 %v5003, %v4999
        %v5005 = vrot.slane %v5004, 4
        %v5007 = vshll.u32 %v4626, 16
        %v5009 = vrot.slane %v5007, 5
        %v5010 = vsel %vm1089, %v5005, %v5009
        %s5011 = scalar_lea.vmem [#allocation7], 448
        %v5012 = vld [vmem:[%s5011] sm:$0xf]
        %v5013 = vld [vmem:[%s5011 + $0x4] sm:$0xf]
        %v5014 = vld [vmem:[%s5011 + $0x8] sm:$0xf]
        %v5015 = vld [vmem:[%s5011 + $0xc] sm:$0xf]
        %v5016 = vld [vmem:[%s5011 + $0x10] sm:$0xf]
        %v5017 = vld [vmem:[%s5011 + $0x14] sm:$0xf]
        %v5018 = vld [vmem:[%s5011 + $0x18] sm:$0xf]
        %v5019 = vld [vmem:[%s5011 + $0x1c] sm:$0xf]
        %v5020 = vld [vmem:[%s5011 + $0x20] sm:$0xf]
        %v5021 = vld [vmem:[%s5011 + $0x24] sm:$0xf]
        %v5022 = vld [vmem:[%s5011 + $0x28] sm:$0xf]
        %v5023 = vld [vmem:[%s5011 + $0x2c] sm:$0xf]
        %v5024 = vld [vmem:[%s5011 + $0x30] sm:$0xf]
        %v5025 = vld [vmem:[%s5011 + $0x34] sm:$0xf]
        %v5026 = vld [vmem:[%s5011 + $0x38] sm:$0xf]
        %v5027 = vld [vmem:[%s5011 + $0x3c] sm:$0xf]
        %v5028 = vunpack.c.l.b16 %v4640
        %v5029 = vunpack.c.l.b16 %v4650
        %v5030 = vunpack.c.l.b16 %v4664
        %v5031 = vunpack.c.l.b16 %v4674
        %v5032 = vunpack.c.l.b16 %v4688
        %v5033 = vunpack.c.l.b16 %v4698
        %v5034 = vunpack.c.l.b16 %v4712
        %v5035 = vunpack.c.l.b16 %v4722
        %v5036 = vunpack.c.l.b16 %v4736
        %v5037 = vunpack.c.l.b16 %v4746
        %v5038 = vunpack.c.l.b16 %v4760
        %v5039 = vunpack.c.l.b16 %v4770
        %v5040 = vunpack.c.l.b16 %v4784
        %v5041 = vunpack.c.l.b16 %v4794
        %v5042 = vunpack.c.l.b16 %v4808
        %v5043 = vunpack.c.l.b16 %v4818
        %v5044 = vunpack.c.l.b16 %v4832
        %v5045 = vunpack.c.l.b16 %v4842
        %v5046 = vunpack.c.l.b16 %v4856
        %v5047 = vunpack.c.l.b16 %v4866
        %v5048 = vunpack.c.l.b16 %v4880
        %v5049 = vunpack.c.l.b16 %v4890
        %v5050 = vunpack.c.l.b16 %v4904
        %v5051 = vunpack.c.l.b16 %v4914
        %v5052 = vunpack.c.l.b16 %v4928
        %v5053 = vunpack.c.l.b16 %v4938
        %v5054 = vunpack.c.l.b16 %v4952
        %v5055 = vunpack.c.l.b16 %v4962
        %v5056 = vunpack.c.l.b16 %v4976
        %v5057 = vunpack.c.l.b16 %v4986
        %v5058 = vunpack.c.l.b16 %v5000
        %v5059 = vunpack.c.l.b16 %v5010
        %v5060 = vpack.c.b16 %v5029, %v5028
        %v5061 = vpack.c.b16 %v5031, %v5030
        %v5062 = vpack.c.b16 %v5033, %v5032
        %v5063 = vpack.c.b16 %v5035, %v5034
        %v5064 = vpack.c.b16 %v5037, %v5036
        %v5065 = vpack.c.b16 %v5039, %v5038
        %v5066 = vpack.c.b16 %v5041, %v5040
        %v5067 = vpack.c.b16 %v5043, %v5042
        %v5068 = vpack.c.b16 %v5045, %v5044
        %v5069 = vpack.c.b16 %v5047, %v5046
        %v5070 = vpack.c.b16 %v5049, %v5048
        %v5071 = vpack.c.b16 %v5051, %v5050
        %v5072 = vpack.c.b16 %v5053, %v5052
        %v5073 = vpack.c.b16 %v5055, %v5054
        %v5074 = vpack.c.b16 %v5057, %v5056
        %v5075 = vpack.c.b16 %v5059, %v5058
        %v5108 = vunpack.c.l.b16 %v5012
        %v5109 = vunpack.c.l.b16 %v5013
        %v5110 = vunpack.c.l.b16 %v5014
        %v5111 = vunpack.c.l.b16 %v5015
        %v5112 = vunpack.c.l.b16 %v5016
        %v5113 = vunpack.c.l.b16 %v5017
        %v5114 = vunpack.c.l.b16 %v5018
        %v5115 = vunpack.c.l.b16 %v5019
        %v5116 = vunpack.c.l.b16 %v5020
        %v5117 = vunpack.c.l.b16 %v5021
        %v5118 = vunpack.c.l.b16 %v5022
        %v5119 = vunpack.c.l.b16 %v5023
        %v5120 = vunpack.c.l.b16 %v5024
        %v5121 = vunpack.c.l.b16 %v5025
        %v5122 = vunpack.c.l.b16 %v5026
        %v5123 = vunpack.c.l.b16 %v5027
        %v5124 = vpack.c.b16 %v5109, %v5108
        %v5125 = vpack.c.b16 %v5111, %v5110
        %v5126 = vpack.c.b16 %v5113, %v5112
        %v5127 = vpack.c.b16 %v5115, %v5114
        %v5128 = vpack.c.b16 %v5117, %v5116
        %v5129 = vpack.c.b16 %v5119, %v5118
        %v5130 = vpack.c.b16 %v5121, %v5120
        %v5131 = vpack.c.b16 %v5123, %v5122
        %5140 = vmatprep.subr.bf16.mxu0 0
        %5141 = vmatpush1.bf16.msra.mxu0 %v5124
        %5142 = vmatprep.subr.bf16.mxu0 0
        %5143 = vmatpush1.bf16.msra.mxu0 %v5125
        %5144 = vmatprep.subr.bf16.mxu0 0
        %5145 = vmatpush1.bf16.msra.mxu0 %v5126
        %5146 = vmatprep.subr.bf16.mxu0 0
        %5147 = vmatpush1.bf16.msra.mxu0 %v5127
        %5148 = vmatprep.subr.bf16.mxu0 0
        %5149 = vmatpush1.bf16.msra.mxu0 %v5128
        %5150 = vmatprep.subr.bf16.mxu0 0
        %5151 = vmatpush1.bf16.msra.mxu0 %v5129
        %5152 = vmatprep.subr.bf16.mxu0 0
        %5153 = vmatpush1.bf16.msra.mxu0 %v5130
        %5154 = vmatprep.subr.bf16.mxu0 0
        %5155 = vmatpush1.bf16.msra.mxu0 %v5131
        %5156 = vmatprep.subr.bf16.mxu0 0
        %5157 = vmatpush1.bf16.msra.mxu0 0
        %5158 = vmatprep.subr.bf16.mxu0 0
        %5159 = vmatpush1.bf16.msra.mxu0 0
        %5160 = vmatprep.subr.bf16.mxu0 0
        %5161 = vmatpush1.bf16.msra.mxu0 0
        %5162 = vmatprep.subr.bf16.mxu0 0
        %5163 = vmatpush1.bf16.msra.mxu0 0
        %5164 = vmatprep.subr.bf16.mxu0 0
        %5165 = vmatpush1.bf16.msra.mxu0 0
        %5166 = vmatprep.subr.bf16.mxu0 0
        %5167 = vmatpush1.bf16.msra.mxu0 0
        %5168 = vmatprep.subr.bf16.mxu0 0
        %5169 = vmatpush1.bf16.msra.mxu0 0
        %5170 = vmatprep.subr.bf16.mxu0 0
        %5171 = vmatpush1.bf16.msra.mxu0 0
        %5172 = vmatprep.mubr.bf16.mxu0 0
        %5173 = vmatmul.mubr.bf16.gmra.mrb[0].mxu0 %v5060
        %v5174 = vpop.f32.mrb[0].mxu0
        %v5175 = vadd.f32 0.0, %v5174
        %v5176 = vpop.f32.mrb[0].mxu0
        %v5177 = vpop.f32.mrb[0].mxu0
        %v5178 = vadd.f32 0.0, %v5177
        %v5179 = vpop.f32.mrb[0].mxu0
        %5180 = vmatprep.mubr.bf16.mxu0 0
        %5181 = vmatmul.mubr.bf16.gmra.mrb[0].mxu0 %v5061
        %v5182 = vpop.f32.mrb[0].mxu0
        %v5183 = vadd.f32 0.0, %v5182
        %v5184 = vpop.f32.mrb[0].mxu0
        %v5185 = vpop.f32.mrb[0].mxu0
        %v5186 = vadd.f32 0.0, %v5185
        %v5187 = vpop.f32.mrb[0].mxu0
        %5188 = vmatprep.mubr.bf16.mxu0 0
        %5189 = vmatmul.mubr.bf16.gmra.mrb[0].mxu0 %v5062
        %v5190 = vpop.f32.mrb[0].mxu0
        %v5191 = vadd.f32 0.0, %v5190
        %v5192 = vpop.f32.mrb[0].mxu0
        %v5193 = vpop.f32.mrb[0].mxu0
        %v5194 = vadd.f32 0.0, %v5193
        %v5195 = vpop.f32.mrb[0].mxu0
        %5196 = vmatprep.mubr.bf16.mxu0 0
        %5197 = vmatmul.mubr.bf16.gmra.mrb[0].mxu0 %v5063
        %v5198 = vpop.f32.mrb[0].mxu0
        %v5199 = vadd.f32 0.0, %v5198
        %v5200 = vpop.f32.mrb[0].mxu0
        %v5201 = vpop.f32.mrb[0].mxu0
        %v5202 = vadd.f32 0.0, %v5201
        %v5203 = vpop.f32.mrb[0].mxu0
        %5204 = vmatprep.mubr.bf16.mxu0 0
        %5205 = vmatmul.mubr.bf16.gmra.mrb[0].mxu0 %v5064
        %v5206 = vpop.f32.mrb[0].mxu0
        %v5207 = vadd.f32 0.0, %v5206
        %v5208 = vpop.f32.mrb[0].mxu0
        %v5209 = vpop.f32.mrb[0].mxu0
        %v5210 = vadd.f32 0.0, %v5209
        %v5211 = vpop.f32.mrb[0].mxu0
        %5212 = vmatprep.mubr.bf16.mxu0 0
        %5213 = vmatmul.mubr.bf16.gmra.mrb[0].mxu0 %v5065
        %v5214 = vpop.f32.mrb[0].mxu0
        %v5215 = vadd.f32 0.0, %v5214
        %v5216 = vpop.f32.mrb[0].mxu0
        %v5217 = vpop.f32.mrb[0].mxu0
        %v5218 = vadd.f32 0.0, %v5217
        %v5219 = vpop.f32.mrb[0].mxu0
        %5220 = vmatprep.mubr.bf16.mxu0 0
        %5221 = vmatmul.mubr.bf16.gmra.mrb[0].mxu0 %v5066
        %v5222 = vpop.f32.mrb[0].mxu0
        %v5223 = vadd.f32 0.0, %v5222
        %v5224 = vpop.f32.mrb[0].mxu0
        %v5225 = vpop.f32.mrb[0].mxu0
        %v5226 = vadd.f32 0.0, %v5225
        %v5227 = vpop.f32.mrb[0].mxu0
        %5228 = vmatprep.mubr.bf16.mxu0 0
        %5229 = vmatmul.mubr.bf16.gmra.mrb[0].mxu0 %v5067
        %v5230 = vpop.f32.mrb[0].mxu0
        %v5231 = vadd.f32 0.0, %v5230
        %v5232 = vpop.f32.mrb[0].mxu0
        %v5233 = vpop.f32.mrb[0].mxu0
        %v5234 = vadd.f32 0.0, %v5233
        %v5235 = vpop.f32.mrb[0].mxu0
        %5236 = vmatprep.mubr.bf16.mxu0 0
        %5237 = vmatmul.mubr.bf16.gmra.mrb[0].mxu0 %v5068
        %v5238 = vpop.f32.mrb[0].mxu0
        %v5239 = vadd.f32 0.0, %v5238
        %v5240 = vpop.f32.mrb[0].mxu0
        %v5241 = vpop.f32.mrb[0].mxu0
        %v5242 = vadd.f32 0.0, %v5241
        %v5243 = vpop.f32.mrb[0].mxu0
        %5244 = vmatprep.mubr.bf16.mxu0 0
        %5245 = vmatmul.mubr.bf16.gmra.mrb[0].mxu0 %v5069
        %v5246 = vpop.f32.mrb[0].mxu0
        %v5247 = vadd.f32 0.0, %v5246
        %v5248 = vpop.f32.mrb[0].mxu0
        %v5249 = vpop.f32.mrb[0].mxu0
        %v5250 = vadd.f32 0.0, %v5249
        %v5251 = vpop.f32.mrb[0].mxu0
        %5252 = vmatprep.mubr.bf16.mxu0 0
        %5253 = vmatmul.mubr.bf16.gmra.mrb[0].mxu0 %v5070
        %v5254 = vpop.f32.mrb[0].mxu0
        %v5255 = vadd.f32 0.0, %v5254
        %v5256 = vpop.f32.mrb[0].mxu0
        %v5257 = vpop.f32.mrb[0].mxu0
        %v5258 = vadd.f32 0.0, %v5257
        %v5259 = vpop.f32.mrb[0].mxu0
        %5260 = vmatprep.mubr.bf16.mxu0 0
        %5261 = vmatmul.mubr.bf16.gmra.mrb[0].mxu0 %v5071
        %v5262 = vpop.f32.mrb[0].mxu0
        %v5263 = vadd.f32 0.0, %v5262
        %v5264 = vpop.f32.mrb[0].mxu0
        %v5265 = vpop.f32.mrb[0].mxu0
        %v5266 = vadd.f32 0.0, %v5265
        %v5267 = vpop.f32.mrb[0].mxu0
        %5268 = vmatprep.mubr.bf16.mxu0 0
        %5269 = vmatmul.mubr.bf16.gmra.mrb[0].mxu0 %v5072
        %v5270 = vpop.f32.mrb[0].mxu0
        %v5271 = vadd.f32 0.0, %v5270
        %v5272 = vpop.f32.mrb[0].mxu0
        %v5273 = vpop.f32.mrb[0].mxu0
        %v5274 = vadd.f32 0.0, %v5273
        %v5275 = vpop.f32.mrb[0].mxu0
        %5276 = vmatprep.mubr.bf16.mxu0 0
        %5277 = vmatmul.mubr.bf16.gmra.mrb[0].mxu0 %v5073
        %v5278 = vpop.f32.mrb[0].mxu0
        %v5279 = vadd.f32 0.0, %v5278
        %v5280 = vpop.f32.mrb[0].mxu0
        %v5281 = vpop.f32.mrb[0].mxu0
        %v5282 = vadd.f32 0.0, %v5281
        %v5283 = vpop.f32.mrb[0].mxu0
        %5284 = vmatprep.mubr.bf16.mxu0 0
        %5285 = vmatmul.mubr.bf16.gmra.mrb[0].mxu0 %v5074
        %v5286 = vpop.f32.mrb[0].mxu0
        %v5287 = vadd.f32 0.0, %v5286
        %v5288 = vpop.f32.mrb[0].mxu0
        %v5289 = vpop.f32.mrb[0].mxu0
        %v5290 = vadd.f32 0.0, %v5289
        %v5291 = vpop.f32.mrb[0].mxu0
        %5292 = vmatprep.mubr.bf16.mxu0 0
        %5293 = vmatmul.mubr.bf16.gmra.mrb[0].mxu0 %v5075
        %v5294 = vpop.f32.mrb[0].mxu0
        %v5295 = vadd.f32 0.0, %v5294
        %v5296 = vpop.f32.mrb[0].mxu0
        %v5297 = vpop.f32.mrb[0].mxu0
        %v5298 = vadd.f32 0.0, %v5297
        %v5299 = vpop.f32.mrb[0].mxu0
        %5300 = vdwg.mxu0
        %v5301 = vadd.f32 %v4547, %v5175
        %v5302 = vadd.f32 %v4548, %v5178
        %v5303 = vadd.f32 %v4549, %v5183
        %v5304 = vadd.f32 %v4550, %v5186
        %v5305 = vadd.f32 %v4551, %v5191
        %v5306 = vadd.f32 %v4552, %v5194
        %v5307 = vadd.f32 %v4553, %v5199
        %v5308 = vadd.f32 %v4554, %v5202
        %v5309 = vadd.f32 %v4555, %v5207
        %v5310 = vadd.f32 %v4556, %v5210
        %v5311 = vadd.f32 %v4557, %v5215
        %v5312 = vadd.f32 %v4558, %v5218
        %v5313 = vadd.f32 %v4559, %v5223
        %v5314 = vadd.f32 %v4560, %v5226
        %v5315 = vadd.f32 %v4561, %v5231
        %v5316 = vadd.f32 %v4562, %v5234
        %v5317 = vadd.f32 %v4563, %v5239
        %v5318 = vadd.f32 %v4564, %v5242
        %v5319 = vadd.f32 %v4565, %v5247
        %v5320 = vadd.f32 %v4566, %v5250
        %v5321 = vadd.f32 %v4567, %v5255
        %v5322 = vadd.f32 %v4568, %v5258
        %v5323 = vadd.f32 %v4569, %v5263
        %v5324 = vadd.f32 %v4570, %v5266
        %v5325 = vadd.f32 %v4571, %v5271
        %v5326 = vadd.f32 %v4572, %v5274
        %v5327 = vadd.f32 %v4573, %v5279
        %v5328 = vadd.f32 %v4574, %v5282
        %v5329 = vadd.f32 %v4575, %v5287
        %v5330 = vadd.f32 %v4576, %v5290
        %v5331 = vadd.f32 %v4577, %v5295
        %v5332 = vadd.f32 %v4578, %v5298
        %v5333 = vld [vmem:[%s4192] sm:$0xe]
        %v5334 = vld [vmem:[%s4192 + $0xc] sm:$0xe]
        %v5335 = vld [vmem:[%s4192 + $0x18] sm:$0xe]
        %v5336 = vld [vmem:[%s4192 + $0x24] sm:$0xe]
        %v5337 = vld [vmem:[%s4192 + $0x30] sm:$0xe]
        %v5338 = vld [vmem:[%s4192 + $0x3c] sm:$0xe]
        %v5339 = vld [vmem:[%s4192 + $0x48] sm:$0xe]
        %v5340 = vld [vmem:[%s4192 + $0x54] sm:$0xe]
        %v5341 = vld [vmem:[%s4192 + $0x60] sm:$0xe]
        %v5342 = vld [vmem:[%s4192 + $0x6c] sm:$0xe]
        %v5343 = vld [vmem:[%s4192 + $0x78] sm:$0xe]
        %v5344 = vld [vmem:[%s4192 + $0x84] sm:$0xe]
        %v5345 = vld [vmem:[%s4192 + $0x90] sm:$0xe]
        %v5346 = vld [vmem:[%s4192 + $0x9c] sm:$0xe]
        %v5347 = vld [vmem:[%s4192 + $0xa8] sm:$0xe]
        %v5348 = vld [vmem:[%s4192 + $0xb4] sm:$0xe]
        %v5397 = vrot.slane %v5333, 5
        %v5398 = vrot.slane %v5397, 4
        %v5399 = vrot.slane %v4580, 5
        %v5400 = vsel %vm2119, %v5398, %v5399
        %v5401 = vrot.slane %v5399, 4
        %v5402 = vrot.slane %v4581, 5
        %v5403 = vsel %vm2119, %v5401, %v5402
        %v5404 = vrot.slane %v5334, 5
        %v5405 = vrot.slane %v5404, 4
        %v5406 = vrot.slane %v4583, 5
        %v5407 = vsel %vm2119, %v5405, %v5406
        %v5408 = vrot.slane %v5406, 4
        %v5409 = vrot.slane %v4584, 5
        %v5410 = vsel %vm2119, %v5408, %v5409
        %v5411 = vrot.slane %v5335, 5
        %v5412 = vrot.slane %v5411, 4
        %v5413 = vrot.slane %v4586, 5
        %v5414 = vsel %vm2119, %v5412, %v5413
        %v5415 = vrot.slane %v5413, 4
        %v5416 = vrot.slane %v4587, 5
        %v5417 = vsel %vm2119, %v5415, %v5416
        %v5418 = vrot.slane %v5336, 5
        %v5419 = vrot.slane %v5418, 4
        %v5420 = vrot.slane %v4589, 5
        %v5421 = vsel %vm2119, %v5419, %v5420
        %v5422 = vrot.slane %v5420, 4
        %v5423 = vrot.slane %v4590, 5
        %v5424 = vsel %vm2119, %v5422, %v5423
        %v5425 = vrot.slane %v5337, 5
        %v5426 = vrot.slane %v5425, 4
        %v5427 = vrot.slane %v4592, 5
        %v5428 = vsel %vm2119, %v5426, %v5427
        %v5429 = vrot.slane %v5427, 4
        %v5430 = vrot.slane %v4593, 5
        %v5431 = vsel %vm2119, %v5429, %v5430
        %v5432 = vrot.slane %v5338, 5
        %v5433 = vrot.slane %v5432, 4
        %v5434 = vrot.slane %v4595, 5
        %v5435 = vsel %vm2119, %v5433, %v5434
        %v5436 = vrot.slane %v5434, 4
        %v5437 = vrot.slane %v4596, 5
        %v5438 = vsel %vm2119, %v5436, %v5437
        %v5439 = vrot.slane %v5339, 5
        %v5440 = vrot.slane %v5439, 4
        %v5441 = vrot.slane %v4598, 5
        %v5442 = vsel %vm2119, %v5440, %v5441
        %v5443 = vrot.slane %v5441, 4
        %v5444 = vrot.slane %v4599, 5
        %v5445 = vsel %vm2119, %v5443, %v5444
        %v5446 = vrot.slane %v5340, 5
        %v5447 = vrot.slane %v5446, 4
        %v5448 = vrot.slane %v4601, 5
        %v5449 = vsel %vm2119, %v5447, %v5448
        %v5450 = vrot.slane %v5448, 4
        %v5451 = vrot.slane %v4602, 5
        %v5452 = vsel %vm2119, %v5450, %v5451
        %v5453 = vrot.slane %v5341, 5
        %v5454 = vrot.slane %v5453, 4
        %v5455 = vrot.slane %v4604, 5
        %v5456 = vsel %vm2119, %v5454, %v5455
        %v5457 = vrot.slane %v5455, 4
        %v5458 = vrot.slane %v4605, 5
        %v5459 = vsel %vm2119, %v5457, %v5458
        %v5460 = vrot.slane %v5342, 5
        %v5461 = vrot.slane %v5460, 4
        %v5462 = vrot.slane %v4607, 5
        %v5463 = vsel %vm2119, %v5461, %v5462
        %v5464 = vrot.slane %v5462, 4
        %v5465 = vrot.slane %v4608, 5
        %v5466 = vsel %vm2119, %v5464, %v5465
        %v5467 = vrot.slane %v5343, 5
        %v5468 = vrot.slane %v5467, 4
        %v5469 = vrot.slane %v4610, 5
        %v5470 = vsel %vm2119, %v5468, %v5469
        %v5471 = vrot.slane %v5469, 4
        %v5472 = vrot.slane %v4611, 5
        %v5473 = vsel %vm2119, %v5471, %v5472
        %v5474 = vrot.slane %v5344, 5
        %v5475 = vrot.slane %v5474, 4
        %v5476 = vrot.slane %v4613, 5
        %v5477 = vsel %vm2119, %v5475, %v5476
        %v5478 = vrot.slane %v5476, 4
        %v5479 = vrot.slane %v4614, 5
        %v5480 = vsel %vm2119, %v5478, %v5479
        %v5481 = vrot.slane %v5345, 5
        %v5482 = vrot.slane %v5481, 4
        %v5483 = vrot.slane %v4616, 5
        %v5484 = vsel %vm2119, %v5482, %v5483
        %v5485 = vrot.slane %v5483, 4
        %v5486 = vrot.slane %v4617, 5
        %v5487 = vsel %vm2119, %v5485, %v5486
        %v5488 = vrot.slane %v5346, 5
        %v5489 = vrot.slane %v5488, 4
        %v5490 = vrot.slane %v4619, 5
        %v5491 = vsel %vm2119, %v5489, %v5490
        %v5492 = vrot.slane %v5490, 4
        %v5493 = vrot.slane %v4620, 5
        %v5494 = vsel %vm2119, %v5492, %v5493
        %v5495 = vrot.slane %v5347, 5
        %v5496 = vrot.slane %v5495, 4
        %v5497 = vrot.slane %v4622, 5
        %v5498 = vsel %vm2119, %v5496, %v5497
        %v5499 = vrot.slane %v5497, 4
        %v5500 = vrot.slane %v4623, 5
        %v5501 = vsel %vm2119, %v5499, %v5500
        %v5502 = vrot.slane %v5348, 5
        %v5503 = vrot.slane %v5502, 4
        %v5504 = vrot.slane %v4625, 5
        %v5505 = vsel %vm2119, %v5503, %v5504
        %v5506 = vrot.slane %v5504, 4
        %v5507 = vrot.slane %v4626, 5
        %v5508 = vsel %vm2119, %v5506, %v5507
        %s5509 = scalar_lea.vmem [#allocation7], 512
        %v5510 = vld [vmem:[%s5509] sm:$0xf]
        %v5511 = vld [vmem:[%s5509 + $0x4] sm:$0xf]
        %v5512 = vld [vmem:[%s5509 + $0x8] sm:$0xf]
        %v5513 = vld [vmem:[%s5509 + $0xc] sm:$0xf]
        %v5514 = vld [vmem:[%s5509 + $0x10] sm:$0xf]
        %v5515 = vld [vmem:[%s5509 + $0x14] sm:$0xf]
        %v5516 = vld [vmem:[%s5509 + $0x18] sm:$0xf]
        %v5517 = vld [vmem:[%s5509 + $0x1c] sm:$0xf]
        %v5518 = vld [vmem:[%s5509 + $0x20] sm:$0xf]
        %v5519 = vld [vmem:[%s5509 + $0x24] sm:$0xf]
        %v5520 = vld [vmem:[%s5509 + $0x28] sm:$0xf]
        %v5521 = vld [vmem:[%s5509 + $0x2c] sm:$0xf]
        %v5522 = vld [vmem:[%s5509 + $0x30] sm:$0xf]
        %v5523 = vld [vmem:[%s5509 + $0x34] sm:$0xf]
        %v5524 = vld [vmem:[%s5509 + $0x38] sm:$0xf]
        %v5525 = vld [vmem:[%s5509 + $0x3c] sm:$0xf]
        %v5526 = vunpack.c.l.b16 %v5400
        %v5527 = vunpack.c.l.b16 %v5403
        %v5528 = vunpack.c.l.b16 %v5407
        %v5529 = vunpack.c.l.b16 %v5410
        %v5530 = vunpack.c.l.b16 %v5414
        %v5531 = vunpack.c.l.b16 %v5417
        %v5532 = vunpack.c.l.b16 %v5421
        %v5533 = vunpack.c.l.b16 %v5424
        %v5534 = vunpack.c.l.b16 %v5428
        %v5535 = vunpack.c.l.b16 %v5431
        %v5536 = vunpack.c.l.b16 %v5435
        %v5537 = vunpack.c.l.b16 %v5438
        %v5538 = vunpack.c.l.b16 %v5442
        %v5539 = vunpack.c.l.b16 %v5445
        %v5540 = vunpack.c.l.b16 %v5449
        %v5541 = vunpack.c.l.b16 %v5452
        %v5542 = vunpack.c.l.b16 %v5456
        %v5543 = vunpack.c.l.b16 %v5459
        %v5544 = vunpack.c.l.b16 %v5463
        %v5545 = vunpack.c.l.b16 %v5466
        %v5546 = vunpack.c.l.b16 %v5470
        %v5547 = vunpack.c.l.b16 %v5473
        %v5548 = vunpack.c.l.b16 %v5477
        %v5549 = vunpack.c.l.b16 %v5480
        %v5550 = vunpack.c.l.b16 %v5484
        %v5551 = vunpack.c.l.b16 %v5487
        %v5552 = vunpack.c.l.b16 %v5491
        %v5553 = vunpack.c.l.b16 %v5494
        %v5554 = vunpack.c.l.b16 %v5498
        %v5555 = vunpack.c.l.b16 %v5501
        %v5556 = vunpack.c.l.b16 %v5505
        %v5557 = vunpack.c.l.b16 %v5508
        %v5558 = vpack.c.b16 %v5527, %v5526
        %v5559 = vpack.c.b16 %v5529, %v5528
        %v5560 = vpack.c.b16 %v5531, %v5530
        %v5561 = vpack.c.b16 %v5533, %v5532
        %v5562 = vpack.c.b16 %v5535, %v5534
        %v5563 = vpack.c.b16 %v5537, %v5536
        %v5564 = vpack.c.b16 %v5539, %v5538
        %v5565 = vpack.c.b16 %v5541, %v5540
        %v5566 = vpack.c.b16 %v5543, %v5542
        %v5567 = vpack.c.b16 %v5545, %v5544
        %v5568 = vpack.c.b16 %v5547, %v5546
        %v5569 = vpack.c.b16 %v5549, %v5548
        %v5570 = vpack.c.b16 %v5551, %v5550
        %v5571 = vpack.c.b16 %v5553, %v5552
        %v5572 = vpack.c.b16 %v5555, %v5554
        %v5573 = vpack.c.b16 %v5557, %v5556
        %v5606 = vunpack.c.l.b16 %v5510
        %v5607 = vunpack.c.l.b16 %v5511
        %v5608 = vunpack.c.l.b16 %v5512
        %v5609 = vunpack.c.l.b16 %v5513
        %v5610 = vunpack.c.l.b16 %v5514
        %v5611 = vunpack.c.l.b16 %v5515
        %v5612 = vunpack.c.l.b16 %v5516
        %v5613 = vunpack.c.l.b16 %v5517
        %v5614 = vunpack.c.l.b16 %v5518
        %v5615 = vunpack.c.l.b16 %v5519
        %v5616 = vunpack.c.l.b16 %v5520
        %v5617 = vunpack.c.l.b16 %v5521
        %v5618 = vunpack.c.l.b16 %v5522
        %v5619 = vunpack.c.l.b16 %v5523
        %v5620 = vunpack.c.l.b16 %v5524
        %v5621 = vunpack.c.l.b16 %v5525
        %v5622 = vpack.c.b16 %v5607, %v5606
        %v5623 = vpack.c.b16 %v5609, %v5608
        %v5624 = vpack.c.b16 %v5611, %v5610
        %v5625 = vpack.c.b16 %v5613, %v5612
        %v5626 = vpack.c.b16 %v5615, %v5614
        %v5627 = vpack.c.b16 %v5617, %v5616
        %v5628 = vpack.c.b16 %v5619, %v5618
        %v5629 = vpack.c.b16 %v5621, %v5620
        %5638 = vmatprep.subr.bf16.mxu0 0
        %5639 = vmatpush1.bf16.msra.mxu0 %v5622
        %5640 = vmatprep.subr.bf16.mxu0 0
        %5641 = vmatpush1.bf16.msra.mxu0 %v5623
        %5642 = vmatprep.subr.bf16.mxu0 0
        %5643 = vmatpush1.bf16.msra.mxu0 %v5624
        %5644 = vmatprep.subr.bf16.mxu0 0
        %5645 = vmatpush1.bf16.msra.mxu0 %v5625
        %5646 = vmatprep.subr.bf16.mxu0 0
        %5647 = vmatpush1.bf16.msra.mxu0 %v5626
        %5648 = vmatprep.subr.bf16.mxu0 0
        %5649 = vmatpush1.bf16.msra.mxu0 %v5627
        %5650 = vmatprep.subr.bf16.mxu0 0
        %5651 = vmatpush1.bf16.msra.mxu0 %v5628
        %5652 = vmatprep.subr.bf16.mxu0 0
        %5653 = vmatpush1.bf16.msra.mxu0 %v5629
        %5654 = vmatprep.subr.bf16.mxu0 0
        %5655 = vmatpush1.bf16.msra.mxu0 0
        %5656 = vmatprep.subr.bf16.mxu0 0
        %5657 = vmatpush1.bf16.msra.mxu0 0
        %5658 = vmatprep.subr.bf16.mxu0 0
        %5659 = vmatpush1.bf16.msra.mxu0 0
        %5660 = vmatprep.subr.bf16.mxu0 0
        %5661 = vmatpush1.bf16.msra.mxu0 0
        %5662 = vmatprep.subr.bf16.mxu0 0
        %5663 = vmatpush1.bf16.msra.mxu0 0
        %5664 = vmatprep.subr.bf16.mxu0 0
        %5665 = vmatpush1.bf16.msra.mxu0 0
        %5666 = vmatprep.subr.bf16.mxu0 0
        %5667 = vmatpush1.bf16.msra.mxu0 0
        %5668 = vmatprep.subr.bf16.mxu0 0
        %5669 = vmatpush1.bf16.msra.mxu0 0
        %5670 = vmatprep.mubr.bf16.mxu0 0
        %5671 = vmatmul.mubr.bf16.gmra.mrb[0].mxu0 %v5558
        %v5672 = vpop.f32.mrb[0].mxu0
        %v5673 = vadd.f32 0.0, %v5672
        %v5674 = vpop.f32.mrb[0].mxu0
        %v5675 = vpop.f32.mrb[0].mxu0
        %v5676 = vadd.f32 0.0, %v5675
        %v5677 = vpop.f32.mrb[0].mxu0
        %5678 = vmatprep.mubr.bf16.mxu0 0
        %5679 = vmatmul.mubr.bf16.gmra.mrb[0].mxu0 %v5559
        %v5680 = vpop.f32.mrb[0].mxu0
        %v5681 = vadd.f32 0.0, %v5680
        %v5682 = vpop.f32.mrb[0].mxu0
        %v5683 = vpop.f32.mrb[0].mxu0
        %v5684 = vadd.f32 0.0, %v5683
        %v5685 = vpop.f32.mrb[0].mxu0
        %5686 = vmatprep.mubr.bf16.mxu0 0
        %5687 = vmatmul.mubr.bf16.gmra.mrb[0].mxu0 %v5560
        %v5688 = vpop.f32.mrb[0].mxu0
        %v5689 = vadd.f32 0.0, %v5688
        %v5690 = vpop.f32.mrb[0].mxu0
        %v5691 = vpop.f32.mrb[0].mxu0
        %v5692 = vadd.f32 0.0, %v5691
        %v5693 = vpop.f32.mrb[0].mxu0
        %5694 = vmatprep.mubr.bf16.mxu0 0
        %5695 = vmatmul.mubr.bf16.gmra.mrb[0].mxu0 %v5561
        %v5696 = vpop.f32.mrb[0].mxu0
        %v5697 = vadd.f32 0.0, %v5696
        %v5698 = vpop.f32.mrb[0].mxu0
        %v5699 = vpop.f32.mrb[0].mxu0
        %v5700 = vadd.f32 0.0, %v5699
        %v5701 = vpop.f32.mrb[0].mxu0
        %5702 = vmatprep.mubr.bf16.mxu0 0
        %5703 = vmatmul.mubr.bf16.gmra.mrb[0].mxu0 %v5562
        %v5704 = vpop.f32.mrb[0].mxu0
        %v5705 = vadd.f32 0.0, %v5704
        %v5706 = vpop.f32.mrb[0].mxu0
        %v5707 = vpop.f32.mrb[0].mxu0
        %v5708 = vadd.f32 0.0, %v5707
        %v5709 = vpop.f32.mrb[0].mxu0
        %5710 = vmatprep.mubr.bf16.mxu0 0
        %5711 = vmatmul.mubr.bf16.gmra.mrb[0].mxu0 %v5563
        %v5712 = vpop.f32.mrb[0].mxu0
        %v5713 = vadd.f32 0.0, %v5712
        %v5714 = vpop.f32.mrb[0].mxu0
        %v5715 = vpop.f32.mrb[0].mxu0
        %v5716 = vadd.f32 0.0, %v5715
        %v5717 = vpop.f32.mrb[0].mxu0
        %5718 = vmatprep.mubr.bf16.mxu0 0
        %5719 = vmatmul.mubr.bf16.gmra.mrb[0].mxu0 %v5564
        %v5720 = vpop.f32.mrb[0].mxu0
        %v5721 = vadd.f32 0.0, %v5720
        %v5722 = vpop.f32.mrb[0].mxu0
        %v5723 = vpop.f32.mrb[0].mxu0
        %v5724 = vadd.f32 0.0, %v5723
        %v5725 = vpop.f32.mrb[0].mxu0
        %5726 = vmatprep.mubr.bf16.mxu0 0
        %5727 = vmatmul.mubr.bf16.gmra.mrb[0].mxu0 %v5565
        %v5728 = vpop.f32.mrb[0].mxu0
        %v5729 = vadd.f32 0.0, %v5728
        %v5730 = vpop.f32.mrb[0].mxu0
        %v5731 = vpop.f32.mrb[0].mxu0
        %v5732 = vadd.f32 0.0, %v5731
        %v5733 = vpop.f32.mrb[0].mxu0
        %5734 = vmatprep.mubr.bf16.mxu0 0
        %5735 = vmatmul.mubr.bf16.gmra.mrb[0].mxu0 %v5566
        %v5736 = vpop.f32.mrb[0].mxu0
        %v5737 = vadd.f32 0.0, %v5736
        %v5738 = vpop.f32.mrb[0].mxu0
        %v5739 = vpop.f32.mrb[0].mxu0
        %v5740 = vadd.f32 0.0, %v5739
        %v5741 = vpop.f32.mrb[0].mxu0
        %5742 = vmatprep.mubr.bf16.mxu0 0
        %5743 = vmatmul.mubr.bf16.gmra.mrb[0].mxu0 %v5567
        %v5744 = vpop.f32.mrb[0].mxu0
        %v5745 = vadd.f32 0.0, %v5744
        %v5746 = vpop.f32.mrb[0].mxu0
        %v5747 = vpop.f32.mrb[0].mxu0
        %v5748 = vadd.f32 0.0, %v5747
        %v5749 = vpop.f32.mrb[0].mxu0
        %5750 = vmatprep.mubr.bf16.mxu0 0
        %5751 = vmatmul.mubr.bf16.gmra.mrb[0].mxu0 %v5568
        %v5752 = vpop.f32.mrb[0].mxu0
        %v5753 = vadd.f32 0.0, %v5752
        %v5754 = vpop.f32.mrb[0].mxu0
        %v5755 = vpop.f32.mrb[0].mxu0
        %v5756 = vadd.f32 0.0, %v5755
        %v5757 = vpop.f32.mrb[0].mxu0
        %5758 = vmatprep.mubr.bf16.mxu0 0
        %5759 = vmatmul.mubr.bf16.gmra.mrb[0].mxu0 %v5569
        %v5760 = vpop.f32.mrb[0].mxu0
        %v5761 = vadd.f32 0.0, %v5760
        %v5762 = vpop.f32.mrb[0].mxu0
        %v5763 = vpop.f32.mrb[0].mxu0
        %v5764 = vadd.f32 0.0, %v5763
        %v5765 = vpop.f32.mrb[0].mxu0
        %5766 = vmatprep.mubr.bf16.mxu0 0
        %5767 = vmatmul.mubr.bf16.gmra.mrb[0].mxu0 %v5570
        %v5768 = vpop.f32.mrb[0].mxu0
        %v5769 = vadd.f32 0.0, %v5768
        %v5770 = vpop.f32.mrb[0].mxu0
        %v5771 = vpop.f32.mrb[0].mxu0
        %v5772 = vadd.f32 0.0, %v5771
        %v5773 = vpop.f32.mrb[0].mxu0
        %5774 = vmatprep.mubr.bf16.mxu0 0
        %5775 = vmatmul.mubr.bf16.gmra.mrb[0].mxu0 %v5571
        %v5776 = vpop.f32.mrb[0].mxu0
        %v5777 = vadd.f32 0.0, %v5776
        %v5778 = vpop.f32.mrb[0].mxu0
        %v5779 = vpop.f32.mrb[0].mxu0
        %v5780 = vadd.f32 0.0, %v5779
        %v5781 = vpop.f32.mrb[0].mxu0
        %5782 = vmatprep.mubr.bf16.mxu0 0
        %5783 = vmatmul.mubr.bf16.gmra.mrb[0].mxu0 %v5572
        %v5784 = vpop.f32.mrb[0].mxu0
        %v5785 = vadd.f32 0.0, %v5784
        %v5786 = vpop.f32.mrb[0].mxu0
        %v5787 = vpop.f32.mrb[0].mxu0
        %v5788 = vadd.f32 0.0, %v5787
        %v5789 = vpop.f32.mrb[0].mxu0
        %5790 = vmatprep.mubr.bf16.mxu0 0
        %5791 = vmatmul.mubr.bf16.gmra.mrb[0].mxu0 %v5573
        %v5792 = vpop.f32.mrb[0].mxu0
        %v5793 = vadd.f32 0.0, %v5792
        %v5794 = vpop.f32.mrb[0].mxu0
        %v5795 = vpop.f32.mrb[0].mxu0
        %v5796 = vadd.f32 0.0, %v5795
        %v5797 = vpop.f32.mrb[0].mxu0
        %5798 = vdwg.mxu0
        %v5799 = vadd.f32 %v5301, %v5673
        %v5800 = vadd.f32 %v5302, %v5676
        %v5801 = vadd.f32 %v5303, %v5681
        %v5802 = vadd.f32 %v5304, %v5684
        %v5803 = vadd.f32 %v5305, %v5689
        %v5804 = vadd.f32 %v5306, %v5692
        %v5805 = vadd.f32 %v5307, %v5697
        %v5806 = vadd.f32 %v5308, %v5700
        %v5807 = vadd.f32 %v5309, %v5705
        %v5808 = vadd.f32 %v5310, %v5708
        %v5809 = vadd.f32 %v5311, %v5713
        %v5810 = vadd.f32 %v5312, %v5716
        %v5811 = vadd.f32 %v5313, %v5721
        %v5812 = vadd.f32 %v5314, %v5724
        %v5813 = vadd.f32 %v5315, %v5729
        %v5814 = vadd.f32 %v5316, %v5732
        %v5815 = vadd.f32 %v5317, %v5737
        %v5816 = vadd.f32 %v5318, %v5740
        %v5817 = vadd.f32 %v5319, %v5745
        %v5818 = vadd.f32 %v5320, %v5748
        %v5819 = vadd.f32 %v5321, %v5753
        %v5820 = vadd.f32 %v5322, %v5756
        %v5821 = vadd.f32 %v5323, %v5761
        %v5822 = vadd.f32 %v5324, %v5764
        %v5823 = vadd.f32 %v5325, %v5769
        %v5824 = vadd.f32 %v5326, %v5772
        %v5825 = vadd.f32 %v5327, %v5777
        %v5826 = vadd.f32 %v5328, %v5780
        %v5827 = vadd.f32 %v5329, %v5785
        %v5828 = vadd.f32 %v5330, %v5788
        %v5829 = vadd.f32 %v5331, %v5793
        %v5830 = vadd.f32 %v5332, %v5796
        %v5831 = vld [vmem:[%s3] sm:$0x1]
        %v5832 = vlaneseq
        %v5833 = vshrl.u32 %v5832, 7
        %v5834 = vsub.s32 0, %v5833
        %v5835 = vrot.slane %v5831, %v5834
        %v5836 = vadd.f32 %v5799, %v5835
        %v5837 = vadd.f32 %v5800, %v5835
        %v5838 = vadd.f32 %v5801, %v5835
        %v5839 = vadd.f32 %v5802, %v5835
        %v5840 = vadd.f32 %v5803, %v5835
        %v5841 = vadd.f32 %v5804, %v5835
        %v5842 = vadd.f32 %v5805, %v5835
        %v5843 = vadd.f32 %v5806, %v5835
        %v5844 = vadd.f32 %v5807, %v5835
        %v5845 = vadd.f32 %v5808, %v5835
        %v5846 = vadd.f32 %v5809, %v5835
        %v5847 = vadd.f32 %v5810, %v5835
        %v5848 = vadd.f32 %v5811, %v5835
        %v5849 = vadd.f32 %v5812, %v5835
        %v5850 = vadd.f32 %v5813, %v5835
        %v5851 = vadd.f32 %v5814, %v5835
        %v5852 = vadd.f32 %v5815, %v5835
        %v5853 = vadd.f32 %v5816, %v5835
        %v5854 = vadd.f32 %v5817, %v5835
        %v5855 = vadd.f32 %v5818, %v5835
        %v5856 = vadd.f32 %v5819, %v5835
        %v5857 = vadd.f32 %v5820, %v5835
        %v5858 = vadd.f32 %v5821, %v5835
        %v5859 = vadd.f32 %v5822, %v5835
        %v5860 = vadd.f32 %v5823, %v5835
        %v5861 = vadd.f32 %v5824, %v5835
        %v5862 = vadd.f32 %v5825, %v5835
        %v5863 = vadd.f32 %v5826, %v5835
        %v5864 = vadd.f32 %v5827, %v5835
        %v5865 = vadd.f32 %v5828, %v5835
        %v5866 = vadd.f32 %v5829, %v5835
        %v5867 = vadd.f32 %v5830, %v5835
        %v5868 = vmax.f32 %v5836, 0.0
        %v5869 = vmax.f32 %v5837, 0.0
        %v5870 = vmax.f32 %v5838, 0.0
        %v5871 = vmax.f32 %v5839, 0.0
        %v5872 = vmax.f32 %v5840, 0.0
        %v5873 = vmax.f32 %v5841, 0.0
        %v5874 = vmax.f32 %v5842, 0.0
        %v5875 = vmax.f32 %v5843, 0.0
        %v5876 = vmax.f32 %v5844, 0.0
        %v5877 = vmax.f32 %v5845, 0.0
        %v5878 = vmax.f32 %v5846, 0.0
        %v5879 = vmax.f32 %v5847, 0.0
        %v5880 = vmax.f32 %v5848, 0.0
        %v5881 = vmax.f32 %v5849, 0.0
        %v5882 = vmax.f32 %v5850, 0.0
        %v5883 = vmax.f32 %v5851, 0.0
        %v5884 = vmax.f32 %v5852, 0.0
        %v5885 = vmax.f32 %v5853, 0.0
        %v5886 = vmax.f32 %v5854, 0.0
        %v5887 = vmax.f32 %v5855, 0.0
        %v5888 = vmax.f32 %v5856, 0.0
        %v5889 = vmax.f32 %v5857, 0.0
        %v5890 = vmax.f32 %v5858, 0.0
        %v5891 = vmax.f32 %v5859, 0.0
        %v5892 = vmax.f32 %v5860, 0.0
        %v5893 = vmax.f32 %v5861, 0.0
        %v5894 = vmax.f32 %v5862, 0.0
        %v5895 = vmax.f32 %v5863, 0.0
        %v5896 = vmax.f32 %v5864, 0.0
        %v5897 = vmax.f32 %v5865, 0.0
        %v5898 = vmax.f32 %v5866, 0.0
        %v5899 = vmax.f32 %v5867, 0.0
        %v5900 = vpack.c.bf16 %v5869, %v5868
        %v5901 = vpack.c.bf16 %v5871, %v5870
        %v5902 = vpack.c.bf16 %v5873, %v5872
        %v5903 = vpack.c.bf16 %v5875, %v5874
        %v5904 = vpack.c.bf16 %v5877, %v5876
        %v5905 = vpack.c.bf16 %v5879, %v5878
        %v5906 = vpack.c.bf16 %v5881, %v5880
        %v5907 = vpack.c.bf16 %v5883, %v5882
        %v5908 = vpack.c.bf16 %v5885, %v5884
        %v5909 = vpack.c.bf16 %v5887, %v5886
        %v5910 = vpack.c.bf16 %v5889, %v5888
        %v5911 = vpack.c.bf16 %v5891, %v5890
        %v5912 = vpack.c.bf16 %v5893, %v5892
        %v5913 = vpack.c.bf16 %v5895, %v5894
        %v5914 = vpack.c.bf16 %v5897, %v5896
        %v5915 = vpack.c.bf16 %v5899, %v5898
        %v5932 = vunpack.c.l.b16 %v5900
        %v5933 = vunpack.c.h.b16 %v5900
        %v5934 = vunpack.c.l.b16 %v5901
        %v5935 = vunpack.c.h.b16 %v5901
        %v5936 = vunpack.c.l.b16 %v5902
        %v5937 = vunpack.c.h.b16 %v5902
        %v5938 = vunpack.c.l.b16 %v5903
        %v5939 = vunpack.c.h.b16 %v5903
        %v5940 = vunpack.c.l.b16 %v5904
        %v5941 = vunpack.c.h.b16 %v5904
        %v5942 = vunpack.c.l.b16 %v5905
        %v5943 = vunpack.c.h.b16 %v5905
        %v5944 = vunpack.c.l.b16 %v5906
        %v5945 = vunpack.c.h.b16 %v5906
        %v5946 = vunpack.c.l.b16 %v5907
        %v5947 = vunpack.c.h.b16 %v5907
        %v5948 = vunpack.c.l.b16 %v5908
        %v5949 = vunpack.c.h.b16 %v5908
        %v5950 = vunpack.c.l.b16 %v5909
        %v5951 = vunpack.c.h.b16 %v5909
        %v5952 = vunpack.c.l.b16 %v5910
        %v5953 = vunpack.c.h.b16 %v5910
        %v5954 = vunpack.c.l.b16 %v5911
        %v5955 = vunpack.c.h.b16 %v5911
        %v5956 = vunpack.c.l.b16 %v5912
        %v5957 = vunpack.c.h.b16 %v5912
        %v5958 = vunpack.c.l.b16 %v5913
        %v5959 = vunpack.c.h.b16 %v5913
        %v5960 = vunpack.c.l.b16 %v5914
        %v5961 = vunpack.c.h.b16 %v5914
        %v5962 = vunpack.c.l.b16 %v5915
        %v5963 = vunpack.c.h.b16 %v5915
        %v5964 = vpack.c.b16 %v5932, %v5932
        %v5965 = vpack.c.b16 %v5933, %v5933
        %v5966 = vpack.c.b16 %v5934, %v5934
        %v5967 = vpack.c.b16 %v5935, %v5935
        %v5968 = vpack.c.b16 %v5936, %v5936
        %v5969 = vpack.c.b16 %v5937, %v5937
        %v5970 = vpack.c.b16 %v5938, %v5938
        %v5971 = vpack.c.b16 %v5939, %v5939
        %v5972 = vpack.c.b16 %v5940, %v5940
        %v5973 = vpack.c.b16 %v5941, %v5941
        %v5974 = vpack.c.b16 %v5942, %v5942
        %v5975 = vpack.c.b16 %v5943, %v5943
        %v5976 = vpack.c.b16 %v5944, %v5944
        %v5977 = vpack.c.b16 %v5945, %v5945
        %v5978 = vpack.c.b16 %v5946, %v5946
        %v5979 = vpack.c.b16 %v5947, %v5947
        %v5980 = vpack.c.b16 %v5948, %v5948
        %v5981 = vpack.c.b16 %v5949, %v5949
        %v5982 = vpack.c.b16 %v5950, %v5950
        %v5983 = vpack.c.b16 %v5951, %v5951
        %v5984 = vpack.c.b16 %v5952, %v5952
        %v5985 = vpack.c.b16 %v5953, %v5953
        %v5986 = vpack.c.b16 %v5954, %v5954
        %v5987 = vpack.c.b16 %v5955, %v5955
        %v5988 = vpack.c.b16 %v5956, %v5956
        %v5989 = vpack.c.b16 %v5957, %v5957
        %v5990 = vpack.c.b16 %v5958, %v5958
        %v5991 = vpack.c.b16 %v5959, %v5959
        %v5992 = vpack.c.b16 %v5960, %v5960
        %v5993 = vpack.c.b16 %v5961, %v5961
        %v5994 = vpack.c.b16 %v5962, %v5962
        %v5995 = vpack.c.b16 %v5963, %v5963
        %v5997 = vshrl.u32 %v5964, 16
        %v5999 = vrot.slane %v5997, 7
        %v6000 = vshll.u32 %v5964, 16
        %v6002 = vor.u32 %v5999, %v6000
        %v6003 = vrot.slane %v5999, 4
        %v6005 = vshrl.u32 %v5965, 16
        %v6007 = vrot.slane %v6005, 7
        %v6008 = vshll.u32 %v5965, 16
        %v6010 = vor.u32 %v6007, %v6008
        %v6011 = vsel %vm588, %v6003, %v6010
        %v6012 = vrot.slane %v6007, 4
        %v6014 = vshrl.u32 %v5966, 16
        %v6016 = vrot.slane %v6014, 7
        %v6017 = vshll.u32 %v5966, 16
        %v6019 = vor.u32 %v6016, %v6017
        %v6020 = vrot.slane %v6016, 4
        %v6022 = vshrl.u32 %v5967, 16
        %v6024 = vrot.slane %v6022, 7
        %v6025 = vshll.u32 %v5967, 16
        %v6027 = vor.u32 %v6024, %v6025
        %v6028 = vsel %vm588, %v6020, %v6027
        %v6029 = vrot.slane %v6024, 4
        %v6031 = vshrl.u32 %v5968, 16
        %v6033 = vrot.slane %v6031, 7
        %v6034 = vshll.u32 %v5968, 16
        %v6036 = vor.u32 %v6033, %v6034
        %v6037 = vrot.slane %v6033, 4
        %v6039 = vshrl.u32 %v5969, 16
        %v6041 = vrot.slane %v6039, 7
        %v6042 = vshll.u32 %v5969, 16
        %v6044 = vor.u32 %v6041, %v6042
        %v6045 = vsel %vm588, %v6037, %v6044
        %v6046 = vrot.slane %v6041, 4
        %v6048 = vshrl.u32 %v5970, 16
        %v6050 = vrot.slane %v6048, 7
        %v6051 = vshll.u32 %v5970, 16
        %v6053 = vor.u32 %v6050, %v6051
        %v6054 = vrot.slane %v6050, 4
        %v6056 = vshrl.u32 %v5971, 16
        %v6058 = vrot.slane %v6056, 7
        %v6059 = vshll.u32 %v5971, 16
        %v6061 = vor.u32 %v6058, %v6059
        %v6062 = vsel %vm588, %v6054, %v6061
        %v6063 = vrot.slane %v6058, 4
        %v6065 = vshrl.u32 %v5972, 16
        %v6067 = vrot.slane %v6065, 7
        %v6068 = vshll.u32 %v5972, 16
        %v6070 = vor.u32 %v6067, %v6068
        %v6071 = vrot.slane %v6067, 4
        %v6073 = vshrl.u32 %v5973, 16
        %v6075 = vrot.slane %v6073, 7
        %v6076 = vshll.u32 %v5973, 16
        %v6078 = vor.u32 %v6075, %v6076
        %v6079 = vsel %vm588, %v6071, %v6078
        %v6080 = vrot.slane %v6075, 4
        %v6082 = vshrl.u32 %v5974, 16
        %v6084 = vrot.slane %v6082, 7
        %v6085 = vshll.u32 %v5974, 16
        %v6087 = vor.u32 %v6084, %v6085
        %v6088 = vrot.slane %v6084, 4
        %v6090 = vshrl.u32 %v5975, 16
        %v6092 = vrot.slane %v6090, 7
        %v6093 = vshll.u32 %v5975, 16
        %v6095 = vor.u32 %v6092, %v6093
        %v6096 = vsel %vm588, %v6088, %v6095
        %v6097 = vrot.slane %v6092, 4
        %v6099 = vshrl.u32 %v5976, 16
        %v6101 = vrot.slane %v6099, 7
        %v6102 = vshll.u32 %v5976, 16
        %v6104 = vor.u32 %v6101, %v6102
        %v6105 = vrot.slane %v6101, 4
        %v6107 = vshrl.u32 %v5977, 16
        %v6109 = vrot.slane %v6107, 7
        %v6110 = vshll.u32 %v5977, 16
        %v6112 = vor.u32 %v6109, %v6110
        %v6113 = vsel %vm588, %v6105, %v6112
        %v6114 = vrot.slane %v6109, 4
        %v6116 = vshrl.u32 %v5978, 16
        %v6118 = vrot.slane %v6116, 7
        %v6119 = vshll.u32 %v5978, 16
        %v6121 = vor.u32 %v6118, %v6119
        %v6122 = vrot.slane %v6118, 4
        %v6124 = vshrl.u32 %v5979, 16
        %v6126 = vrot.slane %v6124, 7
        %v6127 = vshll.u32 %v5979, 16
        %v6129 = vor.u32 %v6126, %v6127
        %v6130 = vsel %vm588, %v6122, %v6129
        %v6131 = vrot.slane %v6126, 4
        %v6133 = vshrl.u32 %v5980, 16
        %v6135 = vrot.slane %v6133, 7
        %v6136 = vshll.u32 %v5980, 16
        %v6138 = vor.u32 %v6135, %v6136
        %v6139 = vrot.slane %v6135, 4
        %v6141 = vshrl.u32 %v5981, 16
        %v6143 = vrot.slane %v6141, 7
        %v6144 = vshll.u32 %v5981, 16
        %v6146 = vor.u32 %v6143, %v6144
        %v6147 = vsel %vm588, %v6139, %v6146
        %v6148 = vrot.slane %v6143, 4
        %v6150 = vshrl.u32 %v5982, 16
        %v6152 = vrot.slane %v6150, 7
        %v6153 = vshll.u32 %v5982, 16
        %v6155 = vor.u32 %v6152, %v6153
        %v6156 = vrot.slane %v6152, 4
        %v6158 = vshrl.u32 %v5983, 16
        %v6160 = vrot.slane %v6158, 7
        %v6161 = vshll.u32 %v5983, 16
        %v6163 = vor.u32 %v6160, %v6161
        %v6164 = vsel %vm588, %v6156, %v6163
        %v6165 = vrot.slane %v6160, 4
        %v6167 = vshrl.u32 %v5984, 16
        %v6169 = vrot.slane %v6167, 7
        %v6170 = vshll.u32 %v5984, 16
        %v6172 = vor.u32 %v6169, %v6170
        %v6173 = vrot.slane %v6169, 4
        %v6175 = vshrl.u32 %v5985, 16
        %v6177 = vrot.slane %v6175, 7
        %v6178 = vshll.u32 %v5985, 16
        %v6180 = vor.u32 %v6177, %v6178
        %v6181 = vsel %vm588, %v6173, %v6180
        %v6182 = vrot.slane %v6177, 4
        %v6184 = vshrl.u32 %v5986, 16
        %v6186 = vrot.slane %v6184, 7
        %v6187 = vshll.u32 %v5986, 16
        %v6189 = vor.u32 %v6186, %v6187
        %v6190 = vrot.slane %v6186, 4
        %v6192 = vshrl.u32 %v5987, 16
        %v6194 = vrot.slane %v6192, 7
        %v6195 = vshll.u32 %v5987, 16
        %v6197 = vor.u32 %v6194, %v6195
        %v6198 = vsel %vm588, %v6190, %v6197
        %v6199 = vrot.slane %v6194, 4
        %v6201 = vshrl.u32 %v5988, 16
        %v6203 = vrot.slane %v6201, 7
        %v6204 = vshll.u32 %v5988, 16
        %v6206 = vor.u32 %v6203, %v6204
        %v6207 = vrot.slane %v6203, 4
        %v6209 = vshrl.u32 %v5989, 16
        %v6211 = vrot.slane %v6209, 7
        %v6212 = vshll.u32 %v5989, 16
        %v6214 = vor.u32 %v6211, %v6212
        %v6215 = vsel %vm588, %v6207, %v6214
        %v6216 = vrot.slane %v6211, 4
        %v6218 = vshrl.u32 %v5990, 16
        %v6220 = vrot.slane %v6218, 7
        %v6221 = vshll.u32 %v5990, 16
        %v6223 = vor.u32 %v6220, %v6221
        %v6224 = vrot.slane %v6220, 4
        %v6226 = vshrl.u32 %v5991, 16
        %v6228 = vrot.slane %v6226, 7
        %v6229 = vshll.u32 %v5991, 16
        %v6231 = vor.u32 %v6228, %v6229
        %v6232 = vsel %vm588, %v6224, %v6231
        %v6233 = vrot.slane %v6228, 4
        %v6235 = vshrl.u32 %v5992, 16
        %v6237 = vrot.slane %v6235, 7
        %v6238 = vshll.u32 %v5992, 16
        %v6240 = vor.u32 %v6237, %v6238
        %v6241 = vrot.slane %v6237, 4
        %v6243 = vshrl.u32 %v5993, 16
        %v6245 = vrot.slane %v6243, 7
        %v6246 = vshll.u32 %v5993, 16
        %v6248 = vor.u32 %v6245, %v6246
        %v6249 = vsel %vm588, %v6241, %v6248
        %v6250 = vrot.slane %v6245, 4
        %v6252 = vshrl.u32 %v5994, 16
        %v6254 = vrot.slane %v6252, 7
        %v6255 = vshll.u32 %v5994, 16
        %v6257 = vor.u32 %v6254, %v6255
        %v6258 = vrot.slane %v6254, 4
        %v6260 = vshrl.u32 %v5995, 16
        %v6262 = vrot.slane %v6260, 7
        %v6263 = vshll.u32 %v5995, 16
        %v6265 = vor.u32 %v6262, %v6263
        %v6266 = vsel %vm588, %v6258, %v6265
        %v6267 = vrot.slane %v6262, 4
        %v6316 = vld [vmem:[%s362] sm:$0xf]
        %v6317 = vsel %vm910, %v6002, %v6316
        %6318 = vst [vmem:[%s362] sm:$0xf] %v6317
        %6319 = vst [vmem:[%s362 + $0x4] sm:$0xf] %v6011
        %v6320 = vld [vmem:[%s362 + $0x8] sm:$0x1]
        %v6321 = vsel %vm256, %v6012, %v6320
        %6322 = vst [vmem:[%s362 + $0x8] sm:$0x1] %v6321
        %v6323 = vld [vmem:[%s362 + $0xc] sm:$0xf]
        %v6324 = vsel %vm910, %v6019, %v6323
        %6325 = vst [vmem:[%s362 + $0xc] sm:$0xf] %v6324
        %6326 = vst [vmem:[%s362 + $0x10] sm:$0xf] %v6028
        %v6327 = vld [vmem:[%s362 + $0x14] sm:$0x1]
        %v6328 = vsel %vm256, %v6029, %v6327
        %6329 = vst [vmem:[%s362 + $0x14] sm:$0x1] %v6328
        %v6330 = vld [vmem:[%s362 + $0x18] sm:$0xf]
        %v6331 = vsel %vm910, %v6036, %v6330
        %6332 = vst [vmem:[%s362 + $0x18] sm:$0xf] %v6331
        %6333 = vst [vmem:[%s362 + $0x1c] sm:$0xf] %v6045
        %v6334 = vld [vmem:[%s362 + $0x20] sm:$0x1]
        %v6335 = vsel %vm256, %v6046, %v6334
        %6336 = vst [vmem:[%s362 + $0x20] sm:$0x1] %v6335
        %v6337 = vld [vmem:[%s362 + $0x24] sm:$0xf]
        %v6338 = vsel %vm910, %v6053, %v6337
        %6339 = vst [vmem:[%s362 + $0x24] sm:$0xf] %v6338
        %6340 = vst [vmem:[%s362 + $0x28] sm:$0xf] %v6062
        %v6341 = vld [vmem:[%s362 + $0x2c] sm:$0x1]
        %v6342 = vsel %vm256, %v6063, %v6341
        %6343 = vst [vmem:[%s362 + $0x2c] sm:$0x1] %v6342
        %v6344 = vld [vmem:[%s362 + $0x30] sm:$0xf]
        %v6345 = vsel %vm910, %v6070, %v6344
        %6346 = vst [vmem:[%s362 + $0x30] sm:$0xf] %v6345
        %6347 = vst [vmem:[%s362 + $0x34] sm:$0xf] %v6079
        %v6348 = vld [vmem:[%s362 + $0x38] sm:$0x1]
        %v6349 = vsel %vm256, %v6080, %v6348
        %6350 = vst [vmem:[%s362 + $0x38] sm:$0x1] %v6349
        %v6351 = vld [vmem:[%s362 + $0x3c] sm:$0xf]
        %v6352 = vsel %vm910, %v6087, %v6351
        %6353 = vst [vmem:[%s362 + $0x3c] sm:$0xf] %v6352
        %6354 = vst [vmem:[%s362 + $0x40] sm:$0xf] %v6096
        %v6355 = vld [vmem:[%s362 + $0x44] sm:$0x1]
        %v6356 = vsel %vm256, %v6097, %v6355
        %6357 = vst [vmem:[%s362 + $0x44] sm:$0x1] %v6356
        %v6358 = vld [vmem:[%s362 + $0x48] sm:$0xf]
        %v6359 = vsel %vm910, %v6104, %v6358
        %6360 = vst [vmem:[%s362 + $0x48] sm:$0xf] %v6359
        %6361 = vst [vmem:[%s362 + $0x4c] sm:$0xf] %v6113
        %v6362 = vld [vmem:[%s362 + $0x50] sm:$0x1]
        %v6363 = vsel %vm256, %v6114, %v6362
        %6364 = vst [vmem:[%s362 + $0x50] sm:$0x1] %v6363
        %v6365 = vld [vmem:[%s362 + $0x54] sm:$0xf]
        %v6366 = vsel %vm910, %v6121, %v6365
        %6367 = vst [vmem:[%s362 + $0x54] sm:$0xf] %v6366
        %6368 = vst [vmem:[%s362 + $0x58] sm:$0xf] %v6130
        %v6369 = vld [vmem:[%s362 + $0x5c] sm:$0x1]
        %v6370 = vsel %vm256, %v6131, %v6369
        %6371 = vst [vmem:[%s362 + $0x5c] sm:$0x1] %v6370
        %v6372 = vld [vmem:[%s362 + $0x60] sm:$0xf]
        %v6373 = vsel %vm910, %v6138, %v6372
        %6374 = vst [vmem:[%s362 + $0x60] sm:$0xf] %v6373
        %6375 = vst [vmem:[%s362 + $0x64] sm:$0xf] %v6147
        %v6376 = vld [vmem:[%s362 + $0x68] sm:$0x1]
        %v6377 = vsel %vm256, %v6148, %v6376
        %6378 = vst [vmem:[%s362 + $0x68] sm:$0x1] %v6377
        %v6379 = vld [vmem:[%s362 + $0x6c] sm:$0xf]
        %v6380 = vsel %vm910, %v6155, %v6379
        %6381 = vst [vmem:[%s362 + $0x6c] sm:$0xf] %v6380
        %6382 = vst [vmem:[%s362 + $0x70] sm:$0xf] %v6164
        %v6383 = vld [vmem:[%s362 + $0x74] sm:$0x1]
        %v6384 = vsel %vm256, %v6165, %v6383
        %6385 = vst [vmem:[%s362 + $0x74] sm:$0x1] %v6384
        %v6386 = vld [vmem:[%s362 + $0x78] sm:$0xf]
        %v6387 = vsel %vm910, %v6172, %v6386
        %6388 = vst [vmem:[%s362 + $0x78] sm:$0xf] %v6387
        %6389 = vst [vmem:[%s362 + $0x7c] sm:$0xf] %v6181
        %v6390 = vld [vmem:[%s362 + $0x80] sm:$0x1]
        %v6391 = vsel %vm256, %v6182, %v6390
        %6392 = vst [vmem:[%s362 + $0x80] sm:$0x1] %v6391
        %v6393 = vld [vmem:[%s362 + $0x84] sm:$0xf]
        %v6394 = vsel %vm910, %v6189, %v6393
        %6395 = vst [vmem:[%s362 + $0x84] sm:$0xf] %v6394
        %6396 = vst [vmem:[%s362 + $0x88] sm:$0xf] %v6198
        %v6397 = vld [vmem:[%s362 + $0x8c] sm:$0x1]
        %v6398 = vsel %vm256, %v6199, %v6397
        %6399 = vst [vmem:[%s362 + $0x8c] sm:$0x1] %v6398
        %v6400 = vld [vmem:[%s362 + $0x90] sm:$0xf]
        %v6401 = vsel %vm910, %v6206, %v6400
        %6402 = vst [vmem:[%s362 + $0x90] sm:$0xf] %v6401
        %6403 = vst [vmem:[%s362 + $0x94] sm:$0xf] %v6215
        %v6404 = vld [vmem:[%s362 + $0x98] sm:$0x1]
        %v6405 = vsel %vm256, %v6216, %v6404
        %6406 = vst [vmem:[%s362 + $0x98] sm:$0x1] %v6405
        %v6407 = vld [vmem:[%s362 + $0x9c] sm:$0xf]
        %v6408 = vsel %vm910, %v6223, %v6407
        %6409 = vst [vmem:[%s362 + $0x9c] sm:$0xf] %v6408
        %6410 = vst [vmem:[%s362 + $0xa0] sm:$0xf] %v6232
        %v6411 = vld [vmem:[%s362 + $0xa4] sm:$0x1]
        %v6412 = vsel %vm256, %v6233, %v6411
        %6413 = vst [vmem:[%s362 + $0xa4] sm:$0x1] %v6412
        %v6414 = vld [vmem:[%s362 + $0xa8] sm:$0xf]
        %v6415 = vsel %vm910, %v6240, %v6414
        %6416 = vst [vmem:[%s362 + $0xa8] sm:$0xf] %v6415
        %6417 = vst [vmem:[%s362 + $0xac] sm:$0xf] %v6249
        %v6418 = vld [vmem:[%s362 + $0xb0] sm:$0x1]
        %v6419 = vsel %vm256, %v6250, %v6418
        %6420 = vst [vmem:[%s362 + $0xb0] sm:$0x1] %v6419
        %v6421 = vld [vmem:[%s362 + $0xb4] sm:$0xf]
        %v6422 = vsel %vm910, %v6257, %v6421
        %6423 = vst [vmem:[%s362 + $0xb4] sm:$0xf] %v6422
        %6424 = vst [vmem:[%s362 + $0xb8] sm:$0xf] %v6266
        %v6425 = vld [vmem:[%s362 + $0xbc] sm:$0x1]
        %v6426 = vsel %vm256, %v6267, %v6425
        %6427 = vst [vmem:[%s362 + $0xbc] sm:$0x1] %v6426
        %v6428 = vld [vmem:[#allocation3] sm:$0xf]
        %v6429 = vld [vmem:[#allocation3 + $0x4] sm:$0xf]
        %v6430 = vld [vmem:[#allocation3 + $0xc] sm:$0xf]
        %v6431 = vld [vmem:[#allocation3 + $0x10] sm:$0xf]
        %v6432 = vld [vmem:[#allocation3 + $0x18] sm:$0xf]
        %v6433 = vld [vmem:[#allocation3 + $0x1c] sm:$0xf]
        %v6434 = vld [vmem:[#allocation3 + $0x24] sm:$0xf]
        %v6435 = vld [vmem:[#allocation3 + $0x28] sm:$0xf]
        %v6436 = vld [vmem:[#allocation3 + $0x30] sm:$0xf]
        %v6437 = vld [vmem:[#allocation3 + $0x34] sm:$0xf]
        %v6438 = vld [vmem:[#allocation3 + $0x3c] sm:$0xf]
        %v6439 = vld [vmem:[#allocation3 + $0x40] sm:$0xf]
        %v6440 = vld [vmem:[#allocation3 + $0x48] sm:$0xf]
        %v6441 = vld [vmem:[#allocation3 + $0x4c] sm:$0xf]
        %v6442 = vld [vmem:[#allocation3 + $0x54] sm:$0xf]
        %v6443 = vld [vmem:[#allocation3 + $0x58] sm:$0xf]
        %v6444 = vld [vmem:[#allocation3 + $0x60] sm:$0xf]
        %v6445 = vld [vmem:[#allocation3 + $0x64] sm:$0xf]
        %v6446 = vld [vmem:[#allocation3 + $0x6c] sm:$0xf]
        %v6447 = vld [vmem:[#allocation3 + $0x70] sm:$0xf]
        %v6448 = vld [vmem:[#allocation3 + $0x78] sm:$0xf]
        %v6449 = vld [vmem:[#allocation3 + $0x7c] sm:$0xf]
        %v6450 = vld [vmem:[#allocation3 + $0x84] sm:$0xf]
        %v6451 = vld [vmem:[#allocation3 + $0x88] sm:$0xf]
        %v6452 = vld [vmem:[#allocation3 + $0x90] sm:$0xf]
        %v6453 = vld [vmem:[#allocation3 + $0x94] sm:$0xf]
        %v6454 = vld [vmem:[#allocation3 + $0x9c] sm:$0xf]
        %v6455 = vld [vmem:[#allocation3 + $0xa0] sm:$0xf]
        %v6456 = vld [vmem:[#allocation3 + $0xa8] sm:$0xf]
        %v6457 = vld [vmem:[#allocation3 + $0xac] sm:$0xf]
        %v6458 = vld [vmem:[#allocation3 + $0xb4] sm:$0xf]
        %v6459 = vld [vmem:[#allocation3 + $0xb8] sm:$0xf]
        %v6460 = vld [vmem:[#allocation9] sm:$0xf]
        %v6461 = vld [vmem:[#allocation9 + $0x4] sm:$0xf]
        %v6462 = vld [vmem:[#allocation9 + $0x8] sm:$0xf]
        %v6463 = vld [vmem:[#allocation9 + $0xc] sm:$0xf]
        %v6464 = vld [vmem:[#allocation9 + $0x10] sm:$0xf]
        %v6465 = vld [vmem:[#allocation9 + $0x14] sm:$0xf]
        %v6466 = vld [vmem:[#allocation9 + $0x18] sm:$0xf]
        %v6467 = vld [vmem:[#allocation9 + $0x1c] sm:$0xf]
        %v6468 = vld [vmem:[#allocation9 + $0x20] sm:$0xf]
        %v6469 = vld [vmem:[#allocation9 + $0x24] sm:$0xf]
        %v6470 = vld [vmem:[#allocation9 + $0x28] sm:$0xf]
        %v6471 = vld [vmem:[#allocation9 + $0x2c] sm:$0xf]
        %v6472 = vld [vmem:[#allocation9 + $0x30] sm:$0xf]
        %v6473 = vld [vmem:[#allocation9 + $0x34] sm:$0xf]
        %v6474 = vld [vmem:[#allocation9 + $0x38] sm:$0xf]
        %v6475 = vld [vmem:[#allocation9 + $0x3c] sm:$0xf]
        %v6476 = vld [vmem:[#allocation3 + $0x8] sm:$0x1]
        %v6477 = vld [vmem:[#allocation3 + $0x14] sm:$0x1]
        %v6478 = vld [vmem:[#allocation3 + $0x20] sm:$0x1]
        %v6479 = vld [vmem:[#allocation3 + $0x2c] sm:$0x1]
        %v6480 = vld [vmem:[#allocation3 + $0x38] sm:$0x1]
        %v6481 = vld [vmem:[#allocation3 + $0x44] sm:$0x1]
        %v6482 = vld [vmem:[#allocation3 + $0x50] sm:$0x1]
        %v6483 = vld [vmem:[#allocation3 + $0x5c] sm:$0x1]
        %v6484 = vld [vmem:[#allocation3 + $0x68] sm:$0x1]
        %v6485 = vld [vmem:[#allocation3 + $0x74] sm:$0x1]
        %v6486 = vld [vmem:[#allocation3 + $0x80] sm:$0x1]
        %v6487 = vld [vmem:[#allocation3 + $0x8c] sm:$0x1]
        %v6488 = vld [vmem:[#allocation3 + $0x98] sm:$0x1]
        %v6489 = vld [vmem:[#allocation3 + $0xa4] sm:$0x1]
        %v6490 = vld [vmem:[#allocation3 + $0xb0] sm:$0x1]
        %v6491 = vld [vmem:[#allocation3 + $0xbc] sm:$0x1]
        %v6493 = vshrl.u32 %v6428, 16
        %v6495 = vrot.slane %v6493, 4
        %v6496 = vshll.u32 %v6428, 16
        %v6498 = vrot.slane %v6496, 5
        %v6499 = vor.u32 %v6495, %v6498
        %v6500 = vrot.slane %v6499, 4
        %v6502 = vshll.u32 %v6429, 16
        %v6504 = vrot.slane %v6502, 5
        %v6505 = vsel %vm1089, %v6500, %v6504
        %v6506 = vshrl.u32 %v6429, 16
        %v6508 = vrot.slane %v6506, 4
        %v6509 = vor.u32 %v6508, %v6504
        %v6510 = vrot.slane %v6509, 4
        %v6512 = vshll.u32 %v6476, 16
        %v6514 = vrot.slane %v6512, 5
        %v6515 = vsel %vm1089, %v6510, %v6514
        %v6517 = vshrl.u32 %v6430, 16
        %v6519 = vrot.slane %v6517, 4
        %v6520 = vshll.u32 %v6430, 16
        %v6522 = vrot.slane %v6520, 5
        %v6523 = vor.u32 %v6519, %v6522
        %v6524 = vrot.slane %v6523, 4
        %v6526 = vshll.u32 %v6431, 16
        %v6528 = vrot.slane %v6526, 5
        %v6529 = vsel %vm1089, %v6524, %v6528
        %v6530 = vshrl.u32 %v6431, 16
        %v6532 = vrot.slane %v6530, 4
        %v6533 = vor.u32 %v6532, %v6528
        %v6534 = vrot.slane %v6533, 4
        %v6536 = vshll.u32 %v6477, 16
        %v6538 = vrot.slane %v6536, 5
        %v6539 = vsel %vm1089, %v6534, %v6538
        %v6541 = vshrl.u32 %v6432, 16
        %v6543 = vrot.slane %v6541, 4
        %v6544 = vshll.u32 %v6432, 16
        %v6546 = vrot.slane %v6544, 5
        %v6547 = vor.u32 %v6543, %v6546
        %v6548 = vrot.slane %v6547, 4
        %v6550 = vshll.u32 %v6433, 16
        %v6552 = vrot.slane %v6550, 5
        %v6553 = vsel %vm1089, %v6548, %v6552
        %v6554 = vshrl.u32 %v6433, 16
        %v6556 = vrot.slane %v6554, 4
        %v6557 = vor.u32 %v6556, %v6552
        %v6558 = vrot.slane %v6557, 4
        %v6560 = vshll.u32 %v6478, 16
        %v6562 = vrot.slane %v6560, 5
        %v6563 = vsel %vm1089, %v6558, %v6562
        %v6565 = vshrl.u32 %v6434, 16
        %v6567 = vrot.slane %v6565, 4
        %v6568 = vshll.u32 %v6434, 16
        %v6570 = vrot.slane %v6568, 5
        %v6571 = vor.u32 %v6567, %v6570
        %v6572 = vrot.slane %v6571, 4
        %v6574 = vshll.u32 %v6435, 16
        %v6576 = vrot.slane %v6574, 5
        %v6577 = vsel %vm1089, %v6572, %v6576
        %v6578 = vshrl.u32 %v6435, 16
        %v6580 = vrot.slane %v6578, 4
        %v6581 = vor.u32 %v6580, %v6576
        %v6582 = vrot.slane %v6581, 4
        %v6584 = vshll.u32 %v6479, 16
        %v6586 = vrot.slane %v6584, 5
        %v6587 = vsel %vm1089, %v6582, %v6586
        %v6589 = vshrl.u32 %v6436, 16
        %v6591 = vrot.slane %v6589, 4
        %v6592 = vshll.u32 %v6436, 16
        %v6594 = vrot.slane %v6592, 5
        %v6595 = vor.u32 %v6591, %v6594
        %v6596 = vrot.slane %v6595, 4
        %v6598 = vshll.u32 %v6437, 16
        %v6600 = vrot.slane %v6598, 5
        %v6601 = vsel %vm1089, %v6596, %v6600
        %v6602 = vshrl.u32 %v6437, 16
        %v6604 = vrot.slane %v6602, 4
        %v6605 = vor.u32 %v6604, %v6600
        %v6606 = vrot.slane %v6605, 4
        %v6608 = vshll.u32 %v6480, 16
        %v6610 = vrot.slane %v6608, 5
        %v6611 = vsel %vm1089, %v6606, %v6610
        %v6613 = vshrl.u32 %v6438, 16
        %v6615 = vrot.slane %v6613, 4
        %v6616 = vshll.u32 %v6438, 16
        %v6618 = vrot.slane %v6616, 5
        %v6619 = vor.u32 %v6615, %v6618
        %v6620 = vrot.slane %v6619, 4
        %v6622 = vshll.u32 %v6439, 16
        %v6624 = vrot.slane %v6622, 5
        %v6625 = vsel %vm1089, %v6620, %v6624
        %v6626 = vshrl.u32 %v6439, 16
        %v6628 = vrot.slane %v6626, 4
        %v6629 = vor.u32 %v6628, %v6624
        %v6630 = vrot.slane %v6629, 4
        %v6632 = vshll.u32 %v6481, 16
        %v6634 = vrot.slane %v6632, 5
        %v6635 = vsel %vm1089, %v6630, %v6634
        %v6637 = vshrl.u32 %v6440, 16
        %v6639 = vrot.slane %v6637, 4
        %v6640 = vshll.u32 %v6440, 16
        %v6642 = vrot.slane %v6640, 5
        %v6643 = vor.u32 %v6639, %v6642
        %v6644 = vrot.slane %v6643, 4
        %v6646 = vshll.u32 %v6441, 16
        %v6648 = vrot.slane %v6646, 5
        %v6649 = vsel %vm1089, %v6644, %v6648
        %v6650 = vshrl.u32 %v6441, 16
        %v6652 = vrot.slane %v6650, 4
        %v6653 = vor.u32 %v6652, %v6648
        %v6654 = vrot.slane %v6653, 4
        %v6656 = vshll.u32 %v6482, 16
        %v6658 = vrot.slane %v6656, 5
        %v6659 = vsel %vm1089, %v6654, %v6658
        %v6661 = vshrl.u32 %v6442, 16
        %v6663 = vrot.slane %v6661, 4
        %v6664 = vshll.u32 %v6442, 16
        %v6666 = vrot.slane %v6664, 5
        %v6667 = vor.u32 %v6663, %v6666
        %v6668 = vrot.slane %v6667, 4
        %v6670 = vshll.u32 %v6443, 16
        %v6672 = vrot.slane %v6670, 5
        %v6673 = vsel %vm1089, %v6668, %v6672
        %v6674 = vshrl.u32 %v6443, 16
        %v6676 = vrot.slane %v6674, 4
        %v6677 = vor.u32 %v6676, %v6672
        %v6678 = vrot.slane %v6677, 4
        %v6680 = vshll.u32 %v6483, 16
        %v6682 = vrot.slane %v6680, 5
        %v6683 = vsel %vm1089, %v6678, %v6682
        %v6685 = vshrl.u32 %v6444, 16
        %v6687 = vrot.slane %v6685, 4
        %v6688 = vshll.u32 %v6444, 16
        %v6690 = vrot.slane %v6688, 5
        %v6691 = vor.u32 %v6687, %v6690
        %v6692 = vrot.slane %v6691, 4
        %v6694 = vshll.u32 %v6445, 16
        %v6696 = vrot.slane %v6694, 5
        %v6697 = vsel %vm1089, %v6692, %v6696
        %v6698 = vshrl.u32 %v6445, 16
        %v6700 = vrot.slane %v6698, 4
        %v6701 = vor.u32 %v6700, %v6696
        %v6702 = vrot.slane %v6701, 4
        %v6704 = vshll.u32 %v6484, 16
        %v6706 = vrot.slane %v6704, 5
        %v6707 = vsel %vm1089, %v6702, %v6706
        %v6709 = vshrl.u32 %v6446, 16
        %v6711 = vrot.slane %v6709, 4
        %v6712 = vshll.u32 %v6446, 16
        %v6714 = vrot.slane %v6712, 5
        %v6715 = vor.u32 %v6711, %v6714
        %v6716 = vrot.slane %v6715, 4
        %v6718 = vshll.u32 %v6447, 16
        %v6720 = vrot.slane %v6718, 5
        %v6721 = vsel %vm1089, %v6716, %v6720
        %v6722 = vshrl.u32 %v6447, 16
        %v6724 = vrot.slane %v6722, 4
        %v6725 = vor.u32 %v6724, %v6720
        %v6726 = vrot.slane %v6725, 4
        %v6728 = vshll.u32 %v6485, 16
        %v6730 = vrot.slane %v6728, 5
        %v6731 = vsel %vm1089, %v6726, %v6730
        %v6733 = vshrl.u32 %v6448, 16
        %v6735 = vrot.slane %v6733, 4
        %v6736 = vshll.u32 %v6448, 16
        %v6738 = vrot.slane %v6736, 5
        %v6739 = vor.u32 %v6735, %v6738
        %v6740 = vrot.slane %v6739, 4
        %v6742 = vshll.u32 %v6449, 16
        %v6744 = vrot.slane %v6742, 5
        %v6745 = vsel %vm1089, %v6740, %v6744
        %v6746 = vshrl.u32 %v6449, 16
        %v6748 = vrot.slane %v6746, 4
        %v6749 = vor.u32 %v6748, %v6744
        %v6750 = vrot.slane %v6749, 4
        %v6752 = vshll.u32 %v6486, 16
        %v6754 = vrot.slane %v6752, 5
        %v6755 = vsel %vm1089, %v6750, %v6754
        %v6757 = vshrl.u32 %v6450, 16
        %v6759 = vrot.slane %v6757, 4
        %v6760 = vshll.u32 %v6450, 16
        %v6762 = vrot.slane %v6760, 5
        %v6763 = vor.u32 %v6759, %v6762
        %v6764 = vrot.slane %v6763, 4
        %v6766 = vshll.u32 %v6451, 16
        %v6768 = vrot.slane %v6766, 5
        %v6769 = vsel %vm1089, %v6764, %v6768
        %v6770 = vshrl.u32 %v6451, 16
        %v6772 = vrot.slane %v6770, 4
        %v6773 = vor.u32 %v6772, %v6768
        %v6774 = vrot.slane %v6773, 4
        %v6776 = vshll.u32 %v6487, 16
        %v6778 = vrot.slane %v6776, 5
        %v6779 = vsel %vm1089, %v6774, %v6778
        %v6781 = vshrl.u32 %v6452, 16
        %v6783 = vrot.slane %v6781, 4
        %v6784 = vshll.u32 %v6452, 16
        %v6786 = vrot.slane %v6784, 5
        %v6787 = vor.u32 %v6783, %v6786
        %v6788 = vrot.slane %v6787, 4
        %v6790 = vshll.u32 %v6453, 16
        %v6792 = vrot.slane %v6790, 5
        %v6793 = vsel %vm1089, %v6788, %v6792
        %v6794 = vshrl.u32 %v6453, 16
        %v6796 = vrot.slane %v6794, 4
        %v6797 = vor.u32 %v6796, %v6792
        %v6798 = vrot.slane %v6797, 4
        %v6800 = vshll.u32 %v6488, 16
        %v6802 = vrot.slane %v6800, 5
        %v6803 = vsel %vm1089, %v6798, %v6802
        %v6805 = vshrl.u32 %v6454, 16
        %v6807 = vrot.slane %v6805, 4
        %v6808 = vshll.u32 %v6454, 16
        %v6810 = vrot.slane %v6808, 5
        %v6811 = vor.u32 %v6807, %v6810
        %v6812 = vrot.slane %v6811, 4
        %v6814 = vshll.u32 %v6455, 16
        %v6816 = vrot.slane %v6814, 5
        %v6817 = vsel %vm1089, %v6812, %v6816
        %v6818 = vshrl.u32 %v6455, 16
        %v6820 = vrot.slane %v6818, 4
        %v6821 = vor.u32 %v6820, %v6816
        %v6822 = vrot.slane %v6821, 4
        %v6824 = vshll.u32 %v6489, 16
        %v6826 = vrot.slane %v6824, 5
        %v6827 = vsel %vm1089, %v6822, %v6826
        %v6829 = vshrl.u32 %v6456, 16
        %v6831 = vrot.slane %v6829, 4
        %v6832 = vshll.u32 %v6456, 16
        %v6834 = vrot.slane %v6832, 5
        %v6835 = vor.u32 %v6831, %v6834
        %v6836 = vrot.slane %v6835, 4
        %v6838 = vshll.u32 %v6457, 16
        %v6840 = vrot.slane %v6838, 5
        %v6841 = vsel %vm1089, %v6836, %v6840
        %v6842 = vshrl.u32 %v6457, 16
        %v6844 = vrot.slane %v6842, 4
        %v6845 = vor.u32 %v6844, %v6840
        %v6846 = vrot.slane %v6845, 4
        %v6848 = vshll.u32 %v6490, 16
        %v6850 = vrot.slane %v6848, 5
        %v6851 = vsel %vm1089, %v6846, %v6850
        %v6853 = vshrl.u32 %v6458, 16
        %v6855 = vrot.slane %v6853, 4
        %v6856 = vshll.u32 %v6458, 16
        %v6858 = vrot.slane %v6856, 5
        %v6859 = vor.u32 %v6855, %v6858
        %v6860 = vrot.slane %v6859, 4
        %v6862 = vshll.u32 %v6459, 16
        %v6864 = vrot.slane %v6862, 5
        %v6865 = vsel %vm1089, %v6860, %v6864
        %v6866 = vshrl.u32 %v6459, 16
        %v6868 = vrot.slane %v6866, 4
        %v6869 = vor.u32 %v6868, %v6864
        %v6870 = vrot.slane %v6869, 4
        %v6872 = vshll.u32 %v6491, 16
        %v6874 = vrot.slane %v6872, 5
        %v6875 = vsel %vm1089, %v6870, %v6874
        %s6876 = scalar_lea.vmem [#allocation9], 64
        %v6877 = vld [vmem:[%s6876] sm:$0xf]
        %v6878 = vld [vmem:[%s6876 + $0x4] sm:$0xf]
        %v6879 = vld [vmem:[%s6876 + $0x8] sm:$0xf]
        %v6880 = vld [vmem:[%s6876 + $0xc] sm:$0xf]
        %v6881 = vld [vmem:[%s6876 + $0x10] sm:$0xf]
        %v6882 = vld [vmem:[%s6876 + $0x14] sm:$0xf]
        %v6883 = vld [vmem:[%s6876 + $0x18] sm:$0xf]
        %v6884 = vld [vmem:[%s6876 + $0x1c] sm:$0xf]
        %v6885 = vld [vmem:[%s6876 + $0x20] sm:$0xf]
        %v6886 = vld [vmem:[%s6876 + $0x24] sm:$0xf]
        %v6887 = vld [vmem:[%s6876 + $0x28] sm:$0xf]
        %v6888 = vld [vmem:[%s6876 + $0x2c] sm:$0xf]
        %v6889 = vld [vmem:[%s6876 + $0x30] sm:$0xf]
        %v6890 = vld [vmem:[%s6876 + $0x34] sm:$0xf]
        %v6891 = vld [vmem:[%s6876 + $0x38] sm:$0xf]
        %v6892 = vld [vmem:[%s6876 + $0x3c] sm:$0xf]
        %v6893 = vunpack.c.l.b16 %v6505
        %v6894 = vunpack.c.l.b16 %v6515
        %v6895 = vunpack.c.l.b16 %v6529
        %v6896 = vunpack.c.l.b16 %v6539
        %v6897 = vunpack.c.l.b16 %v6553
        %v6898 = vunpack.c.l.b16 %v6563
        %v6899 = vunpack.c.l.b16 %v6577
        %v6900 = vunpack.c.l.b16 %v6587
        %v6901 = vunpack.c.l.b16 %v6601
        %v6902 = vunpack.c.l.b16 %v6611
        %v6903 = vunpack.c.l.b16 %v6625
        %v6904 = vunpack.c.l.b16 %v6635
        %v6905 = vunpack.c.l.b16 %v6649
        %v6906 = vunpack.c.l.b16 %v6659
        %v6907 = vunpack.c.l.b16 %v6673
        %v6908 = vunpack.c.l.b16 %v6683
        %v6909 = vunpack.c.l.b16 %v6697
        %v6910 = vunpack.c.l.b16 %v6707
        %v6911 = vunpack.c.l.b16 %v6721
        %v6912 = vunpack.c.l.b16 %v6731
        %v6913 = vunpack.c.l.b16 %v6745
        %v6914 = vunpack.c.l.b16 %v6755
        %v6915 = vunpack.c.l.b16 %v6769
        %v6916 = vunpack.c.l.b16 %v6779
        %v6917 = vunpack.c.l.b16 %v6793
        %v6918 = vunpack.c.l.b16 %v6803
        %v6919 = vunpack.c.l.b16 %v6817
        %v6920 = vunpack.c.l.b16 %v6827
        %v6921 = vunpack.c.l.b16 %v6841
        %v6922 = vunpack.c.l.b16 %v6851
        %v6923 = vunpack.c.l.b16 %v6865
        %v6924 = vunpack.c.l.b16 %v6875
        %v6925 = vpack.c.b16 %v6894, %v6893
        %v6926 = vpack.c.b16 %v6896, %v6895
        %v6927 = vpack.c.b16 %v6898, %v6897
        %v6928 = vpack.c.b16 %v6900, %v6899
        %v6929 = vpack.c.b16 %v6902, %v6901
        %v6930 = vpack.c.b16 %v6904, %v6903
        %v6931 = vpack.c.b16 %v6906, %v6905
        %v6932 = vpack.c.b16 %v6908, %v6907
        %v6933 = vpack.c.b16 %v6910, %v6909
        %v6934 = vpack.c.b16 %v6912, %v6911
        %v6935 = vpack.c.b16 %v6914, %v6913
        %v6936 = vpack.c.b16 %v6916, %v6915
        %v6937 = vpack.c.b16 %v6918, %v6917
        %v6938 = vpack.c.b16 %v6920, %v6919
        %v6939 = vpack.c.b16 %v6922, %v6921
        %v6940 = vpack.c.b16 %v6924, %v6923
        %v6973 = vunpack.c.l.b16 %v6877
        %v6974 = vunpack.c.l.b16 %v6878
        %v6975 = vunpack.c.l.b16 %v6879
        %v6976 = vunpack.c.l.b16 %v6880
        %v6977 = vunpack.c.l.b16 %v6881
        %v6978 = vunpack.c.l.b16 %v6882
        %v6979 = vunpack.c.l.b16 %v6883
        %v6980 = vunpack.c.l.b16 %v6884
        %v6981 = vunpack.c.l.b16 %v6885
        %v6982 = vunpack.c.l.b16 %v6886
        %v6983 = vunpack.c.l.b16 %v6887
        %v6984 = vunpack.c.l.b16 %v6888
        %v6985 = vunpack.c.l.b16 %v6889
        %v6986 = vunpack.c.l.b16 %v6890
        %v6987 = vunpack.c.l.b16 %v6891
        %v6988 = vunpack.c.l.b16 %v6892
        %v6989 = vpack.c.b16 %v6974, %v6973
        %v6990 = vpack.c.b16 %v6976, %v6975
        %v6991 = vpack.c.b16 %v6978, %v6977
        %v6992 = vpack.c.b16 %v6980, %v6979
        %v6993 = vpack.c.b16 %v6982, %v6981
        %v6994 = vpack.c.b16 %v6984, %v6983
        %v6995 = vpack.c.b16 %v6986, %v6985
        %v6996 = vpack.c.b16 %v6988, %v6987
        %7005 = vmatprep.subr.bf16.mxu0 0
        %7006 = vmatpush1.bf16.msra.mxu0 %v6989
        %7007 = vmatprep.subr.bf16.mxu0 0
        %7008 = vmatpush1.bf16.msra.mxu0 %v6990
        %7009 = vmatprep.subr.bf16.mxu0 0
        %7010 = vmatpush1.bf16.msra.mxu0 %v6991
        %7011 = vmatprep.subr.bf16.mxu0 0
        %7012 = vmatpush1.bf16.msra.mxu0 %v6992
        %7013 = vmatprep.subr.bf16.mxu0 0
        %7014 = vmatpush1.bf16.msra.mxu0 %v6993
        %7015 = vmatprep.subr.bf16.mxu0 0
        %7016 = vmatpush1.bf16.msra.mxu0 %v6994
        %7017 = vmatprep.subr.bf16.mxu0 0
        %7018 = vmatpush1.bf16.msra.mxu0 %v6995
        %7019 = vmatprep.subr.bf16.mxu0 0
        %7020 = vmatpush1.bf16.msra.mxu0 %v6996
        %7021 = vmatprep.subr.bf16.mxu0 0
        %7022 = vmatpush1.bf16.msra.mxu0 0
        %7023 = vmatprep.subr.bf16.mxu0 0
        %7024 = vmatpush1.bf16.msra.mxu0 0
        %7025 = vmatprep.subr.bf16.mxu0 0
        %7026 = vmatpush1.bf16.msra.mxu0 0
        %7027 = vmatprep.subr.bf16.mxu0 0
        %7028 = vmatpush1.bf16.msra.mxu0 0
        %7029 = vmatprep.subr.bf16.mxu0 0
        %7030 = vmatpush1.bf16.msra.mxu0 0
        %7031 = vmatprep.subr.bf16.mxu0 0
        %7032 = vmatpush1.bf16.msra.mxu0 0
        %7033 = vmatprep.subr.bf16.mxu0 0
        %7034 = vmatpush1.bf16.msra.mxu0 0
        %7035 = vmatprep.subr.bf16.mxu0 0
        %7036 = vmatpush1.bf16.msra.mxu0 0
        %7037 = vmatprep.mubr.bf16.mxu0 0
        %7038 = vmatmul.mubr.bf16.gmra.mrb[0].mxu0 %v6925
        %v7039 = vpop.f32.mrb[0].mxu0
        %v7040 = vadd.f32 0.0, %v7039
        %v7041 = vpop.f32.mrb[0].mxu0
        %v7042 = vpop.f32.mrb[0].mxu0
        %v7043 = vadd.f32 0.0, %v7042
        %v7044 = vpop.f32.mrb[0].mxu0
        %7045 = vmatprep.mubr.bf16.mxu0 0
        %7046 = vmatmul.mubr.bf16.gmra.mrb[0].mxu0 %v6926
        %v7047 = vpop.f32.mrb[0].mxu0
        %v7048 = vadd.f32 0.0, %v7047
        %v7049 = vpop.f32.mrb[0].mxu0
        %v7050 = vpop.f32.mrb[0].mxu0
        %v7051 = vadd.f32 0.0, %v7050
        %v7052 = vpop.f32.mrb[0].mxu0
        %7053 = vmatprep.mubr.bf16.mxu0 0
        %7054 = vmatmul.mubr.bf16.gmra.mrb[0].mxu0 %v6927
        %v7055 = vpop.f32.mrb[0].mxu0
        %v7056 = vadd.f32 0.0, %v7055
        %v7057 = vpop.f32.mrb[0].mxu0
        %v7058 = vpop.f32.mrb[0].mxu0
        %v7059 = vadd.f32 0.0, %v7058
        %v7060 = vpop.f32.mrb[0].mxu0
        %7061 = vmatprep.mubr.bf16.mxu0 0
        %7062 = vmatmul.mubr.bf16.gmra.mrb[0].mxu0 %v6928
        %v7063 = vpop.f32.mrb[0].mxu0
        %v7064 = vadd.f32 0.0, %v7063
        %v7065 = vpop.f32.mrb[0].mxu0
        %v7066 = vpop.f32.mrb[0].mxu0
        %v7067 = vadd.f32 0.0, %v7066
        %v7068 = vpop.f32.mrb[0].mxu0
        %7069 = vmatprep.mubr.bf16.mxu0 0
        %7070 = vmatmul.mubr.bf16.gmra.mrb[0].mxu0 %v6929
        %v7071 = vpop.f32.mrb[0].mxu0
        %v7072 = vadd.f32 0.0, %v7071
        %v7073 = vpop.f32.mrb[0].mxu0
        %v7074 = vpop.f32.mrb[0].mxu0
        %v7075 = vadd.f32 0.0, %v7074
        %v7076 = vpop.f32.mrb[0].mxu0
        %7077 = vmatprep.mubr.bf16.mxu0 0
        %7078 = vmatmul.mubr.bf16.gmra.mrb[0].mxu0 %v6930
        %v7079 = vpop.f32.mrb[0].mxu0
        %v7080 = vadd.f32 0.0, %v7079
        %v7081 = vpop.f32.mrb[0].mxu0
        %v7082 = vpop.f32.mrb[0].mxu0
        %v7083 = vadd.f32 0.0, %v7082
        %v7084 = vpop.f32.mrb[0].mxu0
        %7085 = vmatprep.mubr.bf16.mxu0 0
        %7086 = vmatmul.mubr.bf16.gmra.mrb[0].mxu0 %v6931
        %v7087 = vpop.f32.mrb[0].mxu0
        %v7088 = vadd.f32 0.0, %v7087
        %v7089 = vpop.f32.mrb[0].mxu0
        %v7090 = vpop.f32.mrb[0].mxu0
        %v7091 = vadd.f32 0.0, %v7090
        %v7092 = vpop.f32.mrb[0].mxu0
        %7093 = vmatprep.mubr.bf16.mxu0 0
        %7094 = vmatmul.mubr.bf16.gmra.mrb[0].mxu0 %v6932
        %v7095 = vpop.f32.mrb[0].mxu0
        %v7096 = vadd.f32 0.0, %v7095
        %v7097 = vpop.f32.mrb[0].mxu0
        %v7098 = vpop.f32.mrb[0].mxu0
        %v7099 = vadd.f32 0.0, %v7098
        %v7100 = vpop.f32.mrb[0].mxu0
        %7101 = vmatprep.mubr.bf16.mxu0 0
        %7102 = vmatmul.mubr.bf16.gmra.mrb[0].mxu0 %v6933
        %v7103 = vpop.f32.mrb[0].mxu0
        %v7104 = vadd.f32 0.0, %v7103
        %v7105 = vpop.f32.mrb[0].mxu0
        %v7106 = vpop.f32.mrb[0].mxu0
        %v7107 = vadd.f32 0.0, %v7106
        %v7108 = vpop.f32.mrb[0].mxu0
        %7109 = vmatprep.mubr.bf16.mxu0 0
        %7110 = vmatmul.mubr.bf16.gmra.mrb[0].mxu0 %v6934
        %v7111 = vpop.f32.mrb[0].mxu0
        %v7112 = vadd.f32 0.0, %v7111
        %v7113 = vpop.f32.mrb[0].mxu0
        %v7114 = vpop.f32.mrb[0].mxu0
        %v7115 = vadd.f32 0.0, %v7114
        %v7116 = vpop.f32.mrb[0].mxu0
        %7117 = vmatprep.mubr.bf16.mxu0 0
        %7118 = vmatmul.mubr.bf16.gmra.mrb[0].mxu0 %v6935
        %v7119 = vpop.f32.mrb[0].mxu0
        %v7120 = vadd.f32 0.0, %v7119
        %v7121 = vpop.f32.mrb[0].mxu0
        %v7122 = vpop.f32.mrb[0].mxu0
        %v7123 = vadd.f32 0.0, %v7122
        %v7124 = vpop.f32.mrb[0].mxu0
        %7125 = vmatprep.mubr.bf16.mxu0 0
        %7126 = vmatmul.mubr.bf16.gmra.mrb[0].mxu0 %v6936
        %v7127 = vpop.f32.mrb[0].mxu0
        %v7128 = vadd.f32 0.0, %v7127
        %v7129 = vpop.f32.mrb[0].mxu0
        %v7130 = vpop.f32.mrb[0].mxu0
        %v7131 = vadd.f32 0.0, %v7130
        %v7132 = vpop.f32.mrb[0].mxu0
        %7133 = vmatprep.mubr.bf16.mxu0 0
        %7134 = vmatmul.mubr.bf16.gmra.mrb[0].mxu0 %v6937
        %v7135 = vpop.f32.mrb[0].mxu0
        %v7136 = vadd.f32 0.0, %v7135
        %v7137 = vpop.f32.mrb[0].mxu0
        %v7138 = vpop.f32.mrb[0].mxu0
        %v7139 = vadd.f32 0.0, %v7138
        %v7140 = vpop.f32.mrb[0].mxu0
        %7141 = vmatprep.mubr.bf16.mxu0 0
        %7142 = vmatmul.mubr.bf16.gmra.mrb[0].mxu0 %v6938
        %v7143 = vpop.f32.mrb[0].mxu0
        %v7144 = vadd.f32 0.0, %v7143
        %v7145 = vpop.f32.mrb[0].mxu0
        %v7146 = vpop.f32.mrb[0].mxu0
        %v7147 = vadd.f32 0.0, %v7146
        %v7148 = vpop.f32.mrb[0].mxu0
        %7149 = vmatprep.mubr.bf16.mxu0 0
        %7150 = vmatmul.mubr.bf16.gmra.mrb[0].mxu0 %v6939
        %v7151 = vpop.f32.mrb[0].mxu0
        %v7152 = vadd.f32 0.0, %v7151
        %v7153 = vpop.f32.mrb[0].mxu0
        %v7154 = vpop.f32.mrb[0].mxu0
        %v7155 = vadd.f32 0.0, %v7154
        %v7156 = vpop.f32.mrb[0].mxu0
        %7157 = vmatprep.mubr.bf16.mxu0 0
        %7158 = vmatmul.mubr.bf16.gmra.mrb[0].mxu0 %v6940
        %v7159 = vpop.f32.mrb[0].mxu0
        %v7160 = vadd.f32 0.0, %v7159
        %v7161 = vpop.f32.mrb[0].mxu0
        %v7162 = vpop.f32.mrb[0].mxu0
        %v7163 = vadd.f32 0.0, %v7162
        %v7164 = vpop.f32.mrb[0].mxu0
        %7165 = vdwg.mxu0
        %v7198 = vunpack.c.l.b16 %v6428
        %v7199 = vunpack.c.l.b16 %v6429
        %v7200 = vunpack.c.l.b16 %v6430
        %v7201 = vunpack.c.l.b16 %v6431
        %v7202 = vunpack.c.l.b16 %v6432
        %v7203 = vunpack.c.l.b16 %v6433
        %v7204 = vunpack.c.l.b16 %v6434
        %v7205 = vunpack.c.l.b16 %v6435
        %v7206 = vunpack.c.l.b16 %v6436
        %v7207 = vunpack.c.l.b16 %v6437
        %v7208 = vunpack.c.l.b16 %v6438
        %v7209 = vunpack.c.l.b16 %v6439
        %v7210 = vunpack.c.l.b16 %v6440
        %v7211 = vunpack.c.l.b16 %v6441
        %v7212 = vunpack.c.l.b16 %v6442
        %v7213 = vunpack.c.l.b16 %v6443
        %v7214 = vunpack.c.l.b16 %v6444
        %v7215 = vunpack.c.l.b16 %v6445
        %v7216 = vunpack.c.l.b16 %v6446
        %v7217 = vunpack.c.l.b16 %v6447
        %v7218 = vunpack.c.l.b16 %v6448
        %v7219 = vunpack.c.l.b16 %v6449
        %v7220 = vunpack.c.l.b16 %v6450
        %v7221 = vunpack.c.l.b16 %v6451
        %v7222 = vunpack.c.l.b16 %v6452
        %v7223 = vunpack.c.l.b16 %v6453
        %v7224 = vunpack.c.l.b16 %v6454
        %v7225 = vunpack.c.l.b16 %v6455
        %v7226 = vunpack.c.l.b16 %v6456
        %v7227 = vunpack.c.l.b16 %v6457
        %v7228 = vunpack.c.l.b16 %v6458
        %v7229 = vunpack.c.l.b16 %v6459
        %v7230 = vpack.c.b16 %v7199, %v7198
        %v7231 = vpack.c.b16 %v7201, %v7200
        %v7232 = vpack.c.b16 %v7203, %v7202
        %v7233 = vpack.c.b16 %v7205, %v7204
        %v7234 = vpack.c.b16 %v7207, %v7206
        %v7235 = vpack.c.b16 %v7209, %v7208
        %v7236 = vpack.c.b16 %v7211, %v7210
        %v7237 = vpack.c.b16 %v7213, %v7212
        %v7238 = vpack.c.b16 %v7215, %v7214
        %v7239 = vpack.c.b16 %v7217, %v7216
        %v7240 = vpack.c.b16 %v7219, %v7218
        %v7241 = vpack.c.b16 %v7221, %v7220
        %v7242 = vpack.c.b16 %v7223, %v7222
        %v7243 = vpack.c.b16 %v7225, %v7224
        %v7244 = vpack.c.b16 %v7227, %v7226
        %v7245 = vpack.c.b16 %v7229, %v7228
        %v7278 = vunpack.c.l.b16 %v6460
        %v7279 = vunpack.c.l.b16 %v6461
        %v7280 = vunpack.c.l.b16 %v6462
        %v7281 = vunpack.c.l.b16 %v6463
        %v7282 = vunpack.c.l.b16 %v6464
        %v7283 = vunpack.c.l.b16 %v6465
        %v7284 = vunpack.c.l.b16 %v6466
        %v7285 = vunpack.c.l.b16 %v6467
        %v7286 = vunpack.c.l.b16 %v6468
        %v7287 = vunpack.c.l.b16 %v6469
        %v7288 = vunpack.c.l.b16 %v6470
        %v7289 = vunpack.c.l.b16 %v6471
        %v7290 = vunpack.c.l.b16 %v6472
        %v7291 = vunpack.c.l.b16 %v6473
        %v7292 = vunpack.c.l.b16 %v6474
        %v7293 = vunpack.c.l.b16 %v6475
        %v7294 = vpack.c.b16 %v7279, %v7278
        %v7295 = vpack.c.b16 %v7281, %v7280
        %v7296 = vpack.c.b16 %v7283, %v7282
        %v7297 = vpack.c.b16 %v7285, %v7284
        %v7298 = vpack.c.b16 %v7287, %v7286
        %v7299 = vpack.c.b16 %v7289, %v7288
        %v7300 = vpack.c.b16 %v7291, %v7290
        %v7301 = vpack.c.b16 %v7293, %v7292
        %7310 = vmatprep.subr.bf16.mxu0 0
        %7311 = vmatpush1.bf16.msra.mxu0 %v7294
        %7312 = vmatprep.subr.bf16.mxu0 0
        %7313 = vmatpush1.bf16.msra.mxu0 %v7295
        %7314 = vmatprep.subr.bf16.mxu0 0
        %7315 = vmatpush1.bf16.msra.mxu0 %v7296
        %7316 = vmatprep.subr.bf16.mxu0 0
        %7317 = vmatpush1.bf16.msra.mxu0 %v7297
        %7318 = vmatprep.subr.bf16.mxu0 0
        %7319 = vmatpush1.bf16.msra.mxu0 %v7298
        %7320 = vmatprep.subr.bf16.mxu0 0
        %7321 = vmatpush1.bf16.msra.mxu0 %v7299
        %7322 = vmatprep.subr.bf16.mxu0 0
        %7323 = vmatpush1.bf16.msra.mxu0 %v7300
        %7324 = vmatprep.subr.bf16.mxu0 0
        %7325 = vmatpush1.bf16.msra.mxu0 %v7301
        %7326 = vmatprep.subr.bf16.mxu0 0
        %7327 = vmatpush1.bf16.msra.mxu0 0
        %7328 = vmatprep.subr.bf16.mxu0 0
        %7329 = vmatpush1.bf16.msra.mxu0 0
        %7330 = vmatprep.subr.bf16.mxu0 0
        %7331 = vmatpush1.bf16.msra.mxu0 0
        %7332 = vmatprep.subr.bf16.mxu0 0
        %7333 = vmatpush1.bf16.msra.mxu0 0
        %7334 = vmatprep.subr.bf16.mxu0 0
        %7335 = vmatpush1.bf16.msra.mxu0 0
        %7336 = vmatprep.subr.bf16.mxu0 0
        %7337 = vmatpush1.bf16.msra.mxu0 0
        %7338 = vmatprep.subr.bf16.mxu0 0
        %7339 = vmatpush1.bf16.msra.mxu0 0
        %7340 = vmatprep.subr.bf16.mxu0 0
        %7341 = vmatpush1.bf16.msra.mxu0 0
        %7342 = vmatprep.mubr.bf16.mxu0 0
        %7343 = vmatmul.mubr.bf16.gmra.mrb[0].mxu0 %v7230
        %v7344 = vpop.f32.mrb[0].mxu0
        %v7345 = vadd.f32 %v7040, %v7344
        %v7346 = vpop.f32.mrb[0].mxu0
        %v7347 = vpop.f32.mrb[0].mxu0
        %v7348 = vadd.f32 %v7043, %v7347
        %v7349 = vpop.f32.mrb[0].mxu0
        %7350 = vmatprep.mubr.bf16.mxu0 0
        %7351 = vmatmul.mubr.bf16.gmra.mrb[0].mxu0 %v7231
        %v7352 = vpop.f32.mrb[0].mxu0
        %v7353 = vadd.f32 %v7048, %v7352
        %v7354 = vpop.f32.mrb[0].mxu0
        %v7355 = vpop.f32.mrb[0].mxu0
        %v7356 = vadd.f32 %v7051, %v7355
        %v7357 = vpop.f32.mrb[0].mxu0
        %7358 = vmatprep.mubr.bf16.mxu0 0
        %7359 = vmatmul.mubr.bf16.gmra.mrb[0].mxu0 %v7232
        %v7360 = vpop.f32.mrb[0].mxu0
        %v7361 = vadd.f32 %v7056, %v7360
        %v7362 = vpop.f32.mrb[0].mxu0
        %v7363 = vpop.f32.mrb[0].mxu0
        %v7364 = vadd.f32 %v7059, %v7363
        %v7365 = vpop.f32.mrb[0].mxu0
        %7366 = vmatprep.mubr.bf16.mxu0 0
        %7367 = vmatmul.mubr.bf16.gmra.mrb[0].mxu0 %v7233
        %v7368 = vpop.f32.mrb[0].mxu0
        %v7369 = vadd.f32 %v7064, %v7368
        %v7370 = vpop.f32.mrb[0].mxu0
        %v7371 = vpop.f32.mrb[0].mxu0
        %v7372 = vadd.f32 %v7067, %v7371
        %v7373 = vpop.f32.mrb[0].mxu0
        %7374 = vmatprep.mubr.bf16.mxu0 0
        %7375 = vmatmul.mubr.bf16.gmra.mrb[0].mxu0 %v7234
        %v7376 = vpop.f32.mrb[0].mxu0
        %v7377 = vadd.f32 %v7072, %v7376
        %v7378 = vpop.f32.mrb[0].mxu0
        %v7379 = vpop.f32.mrb[0].mxu0
        %v7380 = vadd.f32 %v7075, %v7379
        %v7381 = vpop.f32.mrb[0].mxu0
        %7382 = vmatprep.mubr.bf16.mxu0 0
        %7383 = vmatmul.mubr.bf16.gmra.mrb[0].mxu0 %v7235
        %v7384 = vpop.f32.mrb[0].mxu0
        %v7385 = vadd.f32 %v7080, %v7384
        %v7386 = vpop.f32.mrb[0].mxu0
        %v7387 = vpop.f32.mrb[0].mxu0
        %v7388 = vadd.f32 %v7083, %v7387
        %v7389 = vpop.f32.mrb[0].mxu0
        %7390 = vmatprep.mubr.bf16.mxu0 0
        %7391 = vmatmul.mubr.bf16.gmra.mrb[0].mxu0 %v7236
        %v7392 = vpop.f32.mrb[0].mxu0
        %v7393 = vadd.f32 %v7088, %v7392
        %v7394 = vpop.f32.mrb[0].mxu0
        %v7395 = vpop.f32.mrb[0].mxu0
        %v7396 = vadd.f32 %v7091, %v7395
        %v7397 = vpop.f32.mrb[0].mxu0
        %7398 = vmatprep.mubr.bf16.mxu0 0
        %7399 = vmatmul.mubr.bf16.gmra.mrb[0].mxu0 %v7237
        %v7400 = vpop.f32.mrb[0].mxu0
        %v7401 = vadd.f32 %v7096, %v7400
        %v7402 = vpop.f32.mrb[0].mxu0
        %v7403 = vpop.f32.mrb[0].mxu0
        %v7404 = vadd.f32 %v7099, %v7403
        %v7405 = vpop.f32.mrb[0].mxu0
        %7406 = vmatprep.mubr.bf16.mxu0 0
        %7407 = vmatmul.mubr.bf16.gmra.mrb[0].mxu0 %v7238
        %v7408 = vpop.f32.mrb[0].mxu0
        %v7409 = vadd.f32 %v7104, %v7408
        %v7410 = vpop.f32.mrb[0].mxu0
        %v7411 = vpop.f32.mrb[0].mxu0
        %v7412 = vadd.f32 %v7107, %v7411
        %v7413 = vpop.f32.mrb[0].mxu0
        %7414 = vmatprep.mubr.bf16.mxu0 0
        %7415 = vmatmul.mubr.bf16.gmra.mrb[0].mxu0 %v7239
        %v7416 = vpop.f32.mrb[0].mxu0
        %v7417 = vadd.f32 %v7112, %v7416
        %v7418 = vpop.f32.mrb[0].mxu0
        %v7419 = vpop.f32.mrb[0].mxu0
        %v7420 = vadd.f32 %v7115, %v7419
        %v7421 = vpop.f32.mrb[0].mxu0
        %7422 = vmatprep.mubr.bf16.mxu0 0
        %7423 = vmatmul.mubr.bf16.gmra.mrb[0].mxu0 %v7240
        %v7424 = vpop.f32.mrb[0].mxu0
        %v7425 = vadd.f32 %v7120, %v7424
        %v7426 = vpop.f32.mrb[0].mxu0
        %v7427 = vpop.f32.mrb[0].mxu0
        %v7428 = vadd.f32 %v7123, %v7427
        %v7429 = vpop.f32.mrb[0].mxu0
        %7430 = vmatprep.mubr.bf16.mxu0 0
        %7431 = vmatmul.mubr.bf16.gmra.mrb[0].mxu0 %v7241
        %v7432 = vpop.f32.mrb[0].mxu0
        %v7433 = vadd.f32 %v7128, %v7432
        %v7434 = vpop.f32.mrb[0].mxu0
        %v7435 = vpop.f32.mrb[0].mxu0
        %v7436 = vadd.f32 %v7131, %v7435
        %v7437 = vpop.f32.mrb[0].mxu0
        %7438 = vmatprep.mubr.bf16.mxu0 0
        %7439 = vmatmul.mubr.bf16.gmra.mrb[0].mxu0 %v7242
        %v7440 = vpop.f32.mrb[0].mxu0
        %v7441 = vadd.f32 %v7136, %v7440
        %v7442 = vpop.f32.mrb[0].mxu0
        %v7443 = vpop.f32.mrb[0].mxu0
        %v7444 = vadd.f32 %v7139, %v7443
        %v7445 = vpop.f32.mrb[0].mxu0
        %7446 = vmatprep.mubr.bf16.mxu0 0
        %7447 = vmatmul.mubr.bf16.gmra.mrb[0].mxu0 %v7243
        %v7448 = vpop.f32.mrb[0].mxu0
        %v7449 = vadd.f32 %v7144, %v7448
        %v7450 = vpop.f32.mrb[0].mxu0
        %v7451 = vpop.f32.mrb[0].mxu0
        %v7452 = vadd.f32 %v7147, %v7451
        %v7453 = vpop.f32.mrb[0].mxu0
        %7454 = vmatprep.mubr.bf16.mxu0 0
        %7455 = vmatmul.mubr.bf16.gmra.mrb[0].mxu0 %v7244
        %v7456 = vpop.f32.mrb[0].mxu0
        %v7457 = vadd.f32 %v7152, %v7456
        %v7458 = vpop.f32.mrb[0].mxu0
        %v7459 = vpop.f32.mrb[0].mxu0
        %v7460 = vadd.f32 %v7155, %v7459
        %v7461 = vpop.f32.mrb[0].mxu0
        %7462 = vmatprep.mubr.bf16.mxu0 0
        %7463 = vmatmul.mubr.bf16.gmra.mrb[0].mxu0 %v7245
        %v7464 = vpop.f32.mrb[0].mxu0
        %v7465 = vadd.f32 %v7160, %v7464
        %v7466 = vpop.f32.mrb[0].mxu0
        %v7467 = vpop.f32.mrb[0].mxu0
        %v7468 = vadd.f32 %v7163, %v7467
        %v7469 = vpop.f32.mrb[0].mxu0
        %7470 = vdwg.mxu0
        %v7471 = vld [vmem:[#allocation3] sm:$0xe]
        %v7472 = vld [vmem:[#allocation3 + $0xc] sm:$0xe]
        %v7473 = vld [vmem:[#allocation3 + $0x18] sm:$0xe]
        %v7474 = vld [vmem:[#allocation3 + $0x24] sm:$0xe]
        %v7475 = vld [vmem:[#allocation3 + $0x30] sm:$0xe]
        %v7476 = vld [vmem:[#allocation3 + $0x3c] sm:$0xe]
        %v7477 = vld [vmem:[#allocation3 + $0x48] sm:$0xe]
        %v7478 = vld [vmem:[#allocation3 + $0x54] sm:$0xe]
        %v7479 = vld [vmem:[#allocation3 + $0x60] sm:$0xe]
        %v7480 = vld [vmem:[#allocation3 + $0x6c] sm:$0xe]
        %v7481 = vld [vmem:[#allocation3 + $0x78] sm:$0xe]
        %v7482 = vld [vmem:[#allocation3 + $0x84] sm:$0xe]
        %v7483 = vld [vmem:[#allocation3 + $0x90] sm:$0xe]
        %v7484 = vld [vmem:[#allocation3 + $0x9c] sm:$0xe]
        %v7485 = vld [vmem:[#allocation3 + $0xa8] sm:$0xe]
        %v7486 = vld [vmem:[#allocation3 + $0xb4] sm:$0xe]
        %v7519 = vrot.slane %v7471, 5
        %v7520 = vrot.slane %v7519, 4
        %v7521 = vrot.slane %v6429, 5
        %v7522 = vsel %vm2119, %v7520, %v7521
        %v7523 = vrot.slane %v7521, 4
        %v7524 = vrot.slane %v6476, 5
        %v7525 = vsel %vm2119, %v7523, %v7524
        %v7526 = vrot.slane %v7472, 5
        %v7527 = vrot.slane %v7526, 4
        %v7528 = vrot.slane %v6431, 5
        %v7529 = vsel %vm2119, %v7527, %v7528
        %v7530 = vrot.slane %v7528, 4
        %v7531 = vrot.slane %v6477, 5
        %v7532 = vsel %vm2119, %v7530, %v7531
        %v7533 = vrot.slane %v7473, 5
        %v7534 = vrot.slane %v7533, 4
        %v7535 = vrot.slane %v6433, 5
        %v7536 = vsel %vm2119, %v7534, %v7535
        %v7537 = vrot.slane %v7535, 4
        %v7538 = vrot.slane %v6478, 5
        %v7539 = vsel %vm2119, %v7537, %v7538
        %v7540 = vrot.slane %v7474, 5
        %v7541 = vrot.slane %v7540, 4
        %v7542 = vrot.slane %v6435, 5
        %v7543 = vsel %vm2119, %v7541, %v7542
        %v7544 = vrot.slane %v7542, 4
        %v7545 = vrot.slane %v6479, 5
        %v7546 = vsel %vm2119, %v7544, %v7545
        %v7547 = vrot.slane %v7475, 5
        %v7548 = vrot.slane %v7547, 4
        %v7549 = vrot.slane %v6437, 5
        %v7550 = vsel %vm2119, %v7548, %v7549
        %v7551 = vrot.slane %v7549, 4
        %v7552 = vrot.slane %v6480, 5
        %v7553 = vsel %vm2119, %v7551, %v7552
        %v7554 = vrot.slane %v7476, 5
        %v7555 = vrot.slane %v7554, 4
        %v7556 = vrot.slane %v6439, 5
        %v7557 = vsel %vm2119, %v7555, %v7556
        %v7558 = vrot.slane %v7556, 4
        %v7559 = vrot.slane %v6481, 5
        %v7560 = vsel %vm2119, %v7558, %v7559
        %v7561 = vrot.slane %v7477, 5
        %v7562 = vrot.slane %v7561, 4
        %v7563 = vrot.slane %v6441, 5
        %v7564 = vsel %vm2119, %v7562, %v7563
        %v7565 = vrot.slane %v7563, 4
        %v7566 = vrot.slane %v6482, 5
        %v7567 = vsel %vm2119, %v7565, %v7566
        %v7568 = vrot.slane %v7478, 5
        %v7569 = vrot.slane %v7568, 4
        %v7570 = vrot.slane %v6443, 5
        %v7571 = vsel %vm2119, %v7569, %v7570
        %v7572 = vrot.slane %v7570, 4
        %v7573 = vrot.slane %v6483, 5
        %v7574 = vsel %vm2119, %v7572, %v7573
        %v7575 = vrot.slane %v7479, 5
        %v7576 = vrot.slane %v7575, 4
        %v7577 = vrot.slane %v6445, 5
        %v7578 = vsel %vm2119, %v7576, %v7577
        %v7579 = vrot.slane %v7577, 4
        %v7580 = vrot.slane %v6484, 5
        %v7581 = vsel %vm2119, %v7579, %v7580
        %v7582 = vrot.slane %v7480, 5
        %v7583 = vrot.slane %v7582, 4
        %v7584 = vrot.slane %v6447, 5
        %v7585 = vsel %vm2119, %v7583, %v7584
        %v7586 = vrot.slane %v7584, 4
        %v7587 = vrot.slane %v6485, 5
        %v7588 = vsel %vm2119, %v7586, %v7587
        %v7589 = vrot.slane %v7481, 5
        %v7590 = vrot.slane %v7589, 4
        %v7591 = vrot.slane %v6449, 5
        %v7592 = vsel %vm2119, %v7590, %v7591
        %v7593 = vrot.slane %v7591, 4
        %v7594 = vrot.slane %v6486, 5
        %v7595 = vsel %vm2119, %v7593, %v7594
        %v7596 = vrot.slane %v7482, 5
        %v7597 = vrot.slane %v7596, 4
        %v7598 = vrot.slane %v6451, 5
        %v7599 = vsel %vm2119, %v7597, %v7598
        %v7600 = vrot.slane %v7598, 4
        %v7601 = vrot.slane %v6487, 5
        %v7602 = vsel %vm2119, %v7600, %v7601
        %v7603 = vrot.slane %v7483, 5
        %v7604 = vrot.slane %v7603, 4
        %v7605 = vrot.slane %v6453, 5
        %v7606 = vsel %vm2119, %v7604, %v7605
        %v7607 = vrot.slane %v7605, 4
        %v7608 = vrot.slane %v6488, 5
        %v7609 = vsel %vm2119, %v7607, %v7608
        %v7610 = vrot.slane %v7484, 5
        %v7611 = vrot.slane %v7610, 4
        %v7612 = vrot.slane %v6455, 5
        %v7613 = vsel %vm2119, %v7611, %v7612
        %v7614 = vrot.slane %v7612, 4
        %v7615 = vrot.slane %v6489, 5
        %v7616 = vsel %vm2119, %v7614, %v7615
        %v7617 = vrot.slane %v7485, 5
        %v7618 = vrot.slane %v7617, 4
        %v7619 = vrot.slane %v6457, 5
        %v7620 = vsel %vm2119, %v7618, %v7619
        %v7621 = vrot.slane %v7619, 4
        %v7622 = vrot.slane %v6490, 5
        %v7623 = vsel %vm2119, %v7621, %v7622
        %v7624 = vrot.slane %v7486, 5
        %v7625 = vrot.slane %v7624, 4
        %v7626 = vrot.slane %v6459, 5
        %v7627 = vsel %vm2119, %v7625, %v7626
        %v7628 = vrot.slane %v7626, 4
        %v7629 = vrot.slane %v6491, 5
        %v7630 = vsel %vm2119, %v7628, %v7629
        %s7631 = scalar_lea.vmem [#allocation9], 128
        %v7632 = vld [vmem:[%s7631] sm:$0xf]
        %v7633 = vld [vmem:[%s7631 + $0x4] sm:$0xf]
        %v7634 = vld [vmem:[%s7631 + $0x8] sm:$0xf]
        %v7635 = vld [vmem:[%s7631 + $0xc] sm:$0xf]
        %v7636 = vld [vmem:[%s7631 + $0x10] sm:$0xf]
        %v7637 = vld [vmem:[%s7631 + $0x14] sm:$0xf]
        %v7638 = vld [vmem:[%s7631 + $0x18] sm:$0xf]
        %v7639 = vld [vmem:[%s7631 + $0x1c] sm:$0xf]
        %v7640 = vld [vmem:[%s7631 + $0x20] sm:$0xf]
        %v7641 = vld [vmem:[%s7631 + $0x24] sm:$0xf]
        %v7642 = vld [vmem:[%s7631 + $0x28] sm:$0xf]
        %v7643 = vld [vmem:[%s7631 + $0x2c] sm:$0xf]
        %v7644 = vld [vmem:[%s7631 + $0x30] sm:$0xf]
        %v7645 = vld [vmem:[%s7631 + $0x34] sm:$0xf]
        %v7646 = vld [vmem:[%s7631 + $0x38] sm:$0xf]
        %v7647 = vld [vmem:[%s7631 + $0x3c] sm:$0xf]
        %v7648 = vunpack.c.l.b16 %v7522
        %v7649 = vunpack.c.l.b16 %v7525
        %v7650 = vunpack.c.l.b16 %v7529
        %v7651 = vunpack.c.l.b16 %v7532
        %v7652 = vunpack.c.l.b16 %v7536
        %v7653 = vunpack.c.l.b16 %v7539
        %v7654 = vunpack.c.l.b16 %v7543
        %v7655 = vunpack.c.l.b16 %v7546
        %v7656 = vunpack.c.l.b16 %v7550
        %v7657 = vunpack.c.l.b16 %v7553
        %v7658 = vunpack.c.l.b16 %v7557
        %v7659 = vunpack.c.l.b16 %v7560
        %v7660 = vunpack.c.l.b16 %v7564
        %v7661 = vunpack.c.l.b16 %v7567
        %v7662 = vunpack.c.l.b16 %v7571
        %v7663 = vunpack.c.l.b16 %v7574
        %v7664 = vunpack.c.l.b16 %v7578
        %v7665 = vunpack.c.l.b16 %v7581
        %v7666 = vunpack.c.l.b16 %v7585
        %v7667 = vunpack.c.l.b16 %v7588
        %v7668 = vunpack.c.l.b16 %v7592
        %v7669 = vunpack.c.l.b16 %v7595
        %v7670 = vunpack.c.l.b16 %v7599
        %v7671 = vunpack.c.l.b16 %v7602
        %v7672 = vunpack.c.l.b16 %v7606
        %v7673 = vunpack.c.l.b16 %v7609
        %v7674 = vunpack.c.l.b16 %v7613
        %v7675 = vunpack.c.l.b16 %v7616
        %v7676 = vunpack.c.l.b16 %v7620
        %v7677 = vunpack.c.l.b16 %v7623
        %v7678 = vunpack.c.l.b16 %v7627
        %v7679 = vunpack.c.l.b16 %v7630
        %v7680 = vpack.c.b16 %v7649, %v7648
        %v7681 = vpack.c.b16 %v7651, %v7650
        %v7682 = vpack.c.b16 %v7653, %v7652
        %v7683 = vpack.c.b16 %v7655, %v7654
        %v7684 = vpack.c.b16 %v7657, %v7656
        %v7685 = vpack.c.b16 %v7659, %v7658
        %v7686 = vpack.c.b16 %v7661, %v7660
        %v7687 = vpack.c.b16 %v7663, %v7662
        %v7688 = vpack.c.b16 %v7665, %v7664
        %v7689 = vpack.c.b16 %v7667, %v7666
        %v7690 = vpack.c.b16 %v7669, %v7668
        %v7691 = vpack.c.b16 %v7671, %v7670
        %v7692 = vpack.c.b16 %v7673, %v7672
        %v7693 = vpack.c.b16 %v7675, %v7674
        %v7694 = vpack.c.b16 %v7677, %v7676
        %v7695 = vpack.c.b16 %v7679, %v7678
        %v7728 = vunpack.c.l.b16 %v7632
        %v7729 = vunpack.c.l.b16 %v7633
        %v7730 = vunpack.c.l.b16 %v7634
        %v7731 = vunpack.c.l.b16 %v7635
        %v7732 = vunpack.c.l.b16 %v7636
        %v7733 = vunpack.c.l.b16 %v7637
        %v7734 = vunpack.c.l.b16 %v7638
        %v7735 = vunpack.c.l.b16 %v7639
        %v7736 = vunpack.c.l.b16 %v7640
        %v7737 = vunpack.c.l.b16 %v7641
        %v7738 = vunpack.c.l.b16 %v7642
        %v7739 = vunpack.c.l.b16 %v7643
        %v7740 = vunpack.c.l.b16 %v7644
        %v7741 = vunpack.c.l.b16 %v7645
        %v7742 = vunpack.c.l.b16 %v7646
        %v7743 = vunpack.c.l.b16 %v7647
        %v7744 = vpack.c.b16 %v7729, %v7728
        %v7745 = vpack.c.b16 %v7731, %v7730
        %v7746 = vpack.c.b16 %v7733, %v7732
        %v7747 = vpack.c.b16 %v7735, %v7734
        %v7748 = vpack.c.b16 %v7737, %v7736
        %v7749 = vpack.c.b16 %v7739, %v7738
        %v7750 = vpack.c.b16 %v7741, %v7740
        %v7751 = vpack.c.b16 %v7743, %v7742
        %7760 = vmatprep.subr.bf16.mxu0 0
        %7761 = vmatpush1.bf16.msra.mxu0 %v7744
        %7762 = vmatprep.subr.bf16.mxu0 0
        %7763 = vmatpush1.bf16.msra.mxu0 %v7745
        %7764 = vmatprep.subr.bf16.mxu0 0
        %7765 = vmatpush1.bf16.msra.mxu0 %v7746
        %7766 = vmatprep.subr.bf16.mxu0 0
        %7767 = vmatpush1.bf16.msra.mxu0 %v7747
        %7768 = vmatprep.subr.bf16.mxu0 0
        %7769 = vmatpush1.bf16.msra.mxu0 %v7748
        %7770 = vmatprep.subr.bf16.mxu0 0
        %7771 = vmatpush1.bf16.msra.mxu0 %v7749
        %7772 = vmatprep.subr.bf16.mxu0 0
        %7773 = vmatpush1.bf16.msra.mxu0 %v7750
        %7774 = vmatprep.subr.bf16.mxu0 0
        %7775 = vmatpush1.bf16.msra.mxu0 %v7751
        %7776 = vmatprep.subr.bf16.mxu0 0
        %7777 = vmatpush1.bf16.msra.mxu0 0
        %7778 = vmatprep.subr.bf16.mxu0 0
        %7779 = vmatpush1.bf16.msra.mxu0 0
        %7780 = vmatprep.subr.bf16.mxu0 0
        %7781 = vmatpush1.bf16.msra.mxu0 0
        %7782 = vmatprep.subr.bf16.mxu0 0
        %7783 = vmatpush1.bf16.msra.mxu0 0
        %7784 = vmatprep.subr.bf16.mxu0 0
        %7785 = vmatpush1.bf16.msra.mxu0 0
        %7786 = vmatprep.subr.bf16.mxu0 0
        %7787 = vmatpush1.bf16.msra.mxu0 0
        %7788 = vmatprep.subr.bf16.mxu0 0
        %7789 = vmatpush1.bf16.msra.mxu0 0
        %7790 = vmatprep.subr.bf16.mxu0 0
        %7791 = vmatpush1.bf16.msra.mxu0 0
        %7792 = vmatprep.mubr.bf16.mxu0 0
        %7793 = vmatmul.mubr.bf16.gmra.mrb[0].mxu0 %v7680
        %v7794 = vpop.f32.mrb[0].mxu0
        %v7795 = vadd.f32 0.0, %v7794
        %v7796 = vpop.f32.mrb[0].mxu0
        %v7797 = vpop.f32.mrb[0].mxu0
        %v7798 = vadd.f32 0.0, %v7797
        %v7799 = vpop.f32.mrb[0].mxu0
        %7800 = vmatprep.mubr.bf16.mxu0 0
        %7801 = vmatmul.mubr.bf16.gmra.mrb[0].mxu0 %v7681
        %v7802 = vpop.f32.mrb[0].mxu0
        %v7803 = vadd.f32 0.0, %v7802
        %v7804 = vpop.f32.mrb[0].mxu0
        %v7805 = vpop.f32.mrb[0].mxu0
        %v7806 = vadd.f32 0.0, %v7805
        %v7807 = vpop.f32.mrb[0].mxu0
        %7808 = vmatprep.mubr.bf16.mxu0 0
        %7809 = vmatmul.mubr.bf16.gmra.mrb[0].mxu0 %v7682
        %v7810 = vpop.f32.mrb[0].mxu0
        %v7811 = vadd.f32 0.0, %v7810
        %v7812 = vpop.f32.mrb[0].mxu0
        %v7813 = vpop.f32.mrb[0].mxu0
        %v7814 = vadd.f32 0.0, %v7813
        %v7815 = vpop.f32.mrb[0].mxu0
        %7816 = vmatprep.mubr.bf16.mxu0 0
        %7817 = vmatmul.mubr.bf16.gmra.mrb[0].mxu0 %v7683
        %v7818 = vpop.f32.mrb[0].mxu0
        %v7819 = vadd.f32 0.0, %v7818
        %v7820 = vpop.f32.mrb[0].mxu0
        %v7821 = vpop.f32.mrb[0].mxu0
        %v7822 = vadd.f32 0.0, %v7821
        %v7823 = vpop.f32.mrb[0].mxu0
        %7824 = vmatprep.mubr.bf16.mxu0 0
        %7825 = vmatmul.mubr.bf16.gmra.mrb[0].mxu0 %v7684
        %v7826 = vpop.f32.mrb[0].mxu0
        %v7827 = vadd.f32 0.0, %v7826
        %v7828 = vpop.f32.mrb[0].mxu0
        %v7829 = vpop.f32.mrb[0].mxu0
        %v7830 = vadd.f32 0.0, %v7829
        %v7831 = vpop.f32.mrb[0].mxu0
        %7832 = vmatprep.mubr.bf16.mxu0 0
        %7833 = vmatmul.mubr.bf16.gmra.mrb[0].mxu0 %v7685
        %v7834 = vpop.f32.mrb[0].mxu0
        %v7835 = vadd.f32 0.0, %v7834
        %v7836 = vpop.f32.mrb[0].mxu0
        %v7837 = vpop.f32.mrb[0].mxu0
        %v7838 = vadd.f32 0.0, %v7837
        %v7839 = vpop.f32.mrb[0].mxu0
        %7840 = vmatprep.mubr.bf16.mxu0 0
        %7841 = vmatmul.mubr.bf16.gmra.mrb[0].mxu0 %v7686
        %v7842 = vpop.f32.mrb[0].mxu0
        %v7843 = vadd.f32 0.0, %v7842
        %v7844 = vpop.f32.mrb[0].mxu0
        %v7845 = vpop.f32.mrb[0].mxu0
        %v7846 = vadd.f32 0.0, %v7845
        %v7847 = vpop.f32.mrb[0].mxu0
        %7848 = vmatprep.mubr.bf16.mxu0 0
        %7849 = vmatmul.mubr.bf16.gmra.mrb[0].mxu0 %v7687
        %v7850 = vpop.f32.mrb[0].mxu0
        %v7851 = vadd.f32 0.0, %v7850
        %v7852 = vpop.f32.mrb[0].mxu0
        %v7853 = vpop.f32.mrb[0].mxu0
        %v7854 = vadd.f32 0.0, %v7853
        %v7855 = vpop.f32.mrb[0].mxu0
        %7856 = vmatprep.mubr.bf16.mxu0 0
        %7857 = vmatmul.mubr.bf16.gmra.mrb[0].mxu0 %v7688
        %v7858 = vpop.f32.mrb[0].mxu0
        %v7859 = vadd.f32 0.0, %v7858
        %v7860 = vpop.f32.mrb[0].mxu0
        %v7861 = vpop.f32.mrb[0].mxu0
        %v7862 = vadd.f32 0.0, %v7861
        %v7863 = vpop.f32.mrb[0].mxu0
        %7864 = vmatprep.mubr.bf16.mxu0 0
        %7865 = vmatmul.mubr.bf16.gmra.mrb[0].mxu0 %v7689
        %v7866 = vpop.f32.mrb[0].mxu0
        %v7867 = vadd.f32 0.0, %v7866
        %v7868 = vpop.f32.mrb[0].mxu0
        %v7869 = vpop.f32.mrb[0].mxu0
        %v7870 = vadd.f32 0.0, %v7869
        %v7871 = vpop.f32.mrb[0].mxu0
        %7872 = vmatprep.mubr.bf16.mxu0 0
        %7873 = vmatmul.mubr.bf16.gmra.mrb[0].mxu0 %v7690
        %v7874 = vpop.f32.mrb[0].mxu0
        %v7875 = vadd.f32 0.0, %v7874
        %v7876 = vpop.f32.mrb[0].mxu0
        %v7877 = vpop.f32.mrb[0].mxu0
        %v7878 = vadd.f32 0.0, %v7877
        %v7879 = vpop.f32.mrb[0].mxu0
        %7880 = vmatprep.mubr.bf16.mxu0 0
        %7881 = vmatmul.mubr.bf16.gmra.mrb[0].mxu0 %v7691
        %v7882 = vpop.f32.mrb[0].mxu0
        %v7883 = vadd.f32 0.0, %v7882
        %v7884 = vpop.f32.mrb[0].mxu0
        %v7885 = vpop.f32.mrb[0].mxu0
        %v7886 = vadd.f32 0.0, %v7885
        %v7887 = vpop.f32.mrb[0].mxu0
        %7888 = vmatprep.mubr.bf16.mxu0 0
        %7889 = vmatmul.mubr.bf16.gmra.mrb[0].mxu0 %v7692
        %v7890 = vpop.f32.mrb[0].mxu0
        %v7891 = vadd.f32 0.0, %v7890
        %v7892 = vpop.f32.mrb[0].mxu0
        %v7893 = vpop.f32.mrb[0].mxu0
        %v7894 = vadd.f32 0.0, %v7893
        %v7895 = vpop.f32.mrb[0].mxu0
        %7896 = vmatprep.mubr.bf16.mxu0 0
        %7897 = vmatmul.mubr.bf16.gmra.mrb[0].mxu0 %v7693
        %v7898 = vpop.f32.mrb[0].mxu0
        %v7899 = vadd.f32 0.0, %v7898
        %v7900 = vpop.f32.mrb[0].mxu0
        %v7901 = vpop.f32.mrb[0].mxu0
        %v7902 = vadd.f32 0.0, %v7901
        %v7903 = vpop.f32.mrb[0].mxu0
        %7904 = vmatprep.mubr.bf16.mxu0 0
        %7905 = vmatmul.mubr.bf16.gmra.mrb[0].mxu0 %v7694
        %v7906 = vpop.f32.mrb[0].mxu0
        %v7907 = vadd.f32 0.0, %v7906
        %v7908 = vpop.f32.mrb[0].mxu0
        %v7909 = vpop.f32.mrb[0].mxu0
        %v7910 = vadd.f32 0.0, %v7909
        %v7911 = vpop.f32.mrb[0].mxu0
        %7912 = vmatprep.mubr.bf16.mxu0 0
        %7913 = vmatmul.mubr.bf16.gmra.mrb[0].mxu0 %v7695
        %v7914 = vpop.f32.mrb[0].mxu0
        %v7915 = vadd.f32 0.0, %v7914
        %v7916 = vpop.f32.mrb[0].mxu0
        %v7917 = vpop.f32.mrb[0].mxu0
        %v7918 = vadd.f32 0.0, %v7917
        %v7919 = vpop.f32.mrb[0].mxu0
        %7920 = vdwg.mxu0
        %v7921 = vadd.f32 %v7345, %v7795
        %v7922 = vadd.f32 %v7348, %v7798
        %v7923 = vadd.f32 %v7353, %v7803
        %v7924 = vadd.f32 %v7356, %v7806
        %v7925 = vadd.f32 %v7361, %v7811
        %v7926 = vadd.f32 %v7364, %v7814
        %v7927 = vadd.f32 %v7369, %v7819
        %v7928 = vadd.f32 %v7372, %v7822
        %v7929 = vadd.f32 %v7377, %v7827
        %v7930 = vadd.f32 %v7380, %v7830
        %v7931 = vadd.f32 %v7385, %v7835
        %v7932 = vadd.f32 %v7388, %v7838
        %v7933 = vadd.f32 %v7393, %v7843
        %v7934 = vadd.f32 %v7396, %v7846
        %v7935 = vadd.f32 %v7401, %v7851
        %v7936 = vadd.f32 %v7404, %v7854
        %v7937 = vadd.f32 %v7409, %v7859
        %v7938 = vadd.f32 %v7412, %v7862
        %v7939 = vadd.f32 %v7417, %v7867
        %v7940 = vadd.f32 %v7420, %v7870
        %v7941 = vadd.f32 %v7425, %v7875
        %v7942 = vadd.f32 %v7428, %v7878
        %v7943 = vadd.f32 %v7433, %v7883
        %v7944 = vadd.f32 %v7436, %v7886
        %v7945 = vadd.f32 %v7441, %v7891
        %v7946 = vadd.f32 %v7444, %v7894
        %v7947 = vadd.f32 %v7449, %v7899
        %v7948 = vadd.f32 %v7452, %v7902
        %v7949 = vadd.f32 %v7457, %v7907
        %v7950 = vadd.f32 %v7460, %v7910
        %v7951 = vadd.f32 %v7465, %v7915
        %v7952 = vadd.f32 %v7468, %v7918
        %v7953 = vld [vmem:[%s362] sm:$0xf]
        %v7954 = vld [vmem:[%s362 + $0x4] sm:$0xf]
        %v7955 = vld [vmem:[%s362 + $0xc] sm:$0xf]
        %v7956 = vld [vmem:[%s362 + $0x10] sm:$0xf]
        %v7957 = vld [vmem:[%s362 + $0x18] sm:$0xf]
        %v7958 = vld [vmem:[%s362 + $0x1c] sm:$0xf]
        %v7959 = vld [vmem:[%s362 + $0x24] sm:$0xf]
        %v7960 = vld [vmem:[%s362 + $0x28] sm:$0xf]
        %v7961 = vld [vmem:[%s362 + $0x30] sm:$0xf]
        %v7962 = vld [vmem:[%s362 + $0x34] sm:$0xf]
        %v7963 = vld [vmem:[%s362 + $0x3c] sm:$0xf]
        %v7964 = vld [vmem:[%s362 + $0x40] sm:$0xf]
        %v7965 = vld [vmem:[%s362 + $0x48] sm:$0xf]
        %v7966 = vld [vmem:[%s362 + $0x4c] sm:$0xf]
        %v7967 = vld [vmem:[%s362 + $0x54] sm:$0xf]
        %v7968 = vld [vmem:[%s362 + $0x58] sm:$0xf]
        %v7969 = vld [vmem:[%s362 + $0x60] sm:$0xf]
        %v7970 = vld [vmem:[%s362 + $0x64] sm:$0xf]
        %v7971 = vld [vmem:[%s362 + $0x6c] sm:$0xf]
        %v7972 = vld [vmem:[%s362 + $0x70] sm:$0xf]
        %v7973 = vld [vmem:[%s362 + $0x78] sm:$0xf]
        %v7974 = vld [vmem:[%s362 + $0x7c] sm:$0xf]
        %v7975 = vld [vmem:[%s362 + $0x84] sm:$0xf]
        %v7976 = vld [vmem:[%s362 + $0x88] sm:$0xf]
        %v7977 = vld [vmem:[%s362 + $0x90] sm:$0xf]
        %v7978 = vld [vmem:[%s362 + $0x94] sm:$0xf]
        %v7979 = vld [vmem:[%s362 + $0x9c] sm:$0xf]
        %v7980 = vld [vmem:[%s362 + $0xa0] sm:$0xf]
        %v7981 = vld [vmem:[%s362 + $0xa8] sm:$0xf]
        %v7982 = vld [vmem:[%s362 + $0xac] sm:$0xf]
        %v7983 = vld [vmem:[%s362 + $0xb4] sm:$0xf]
        %v7984 = vld [vmem:[%s362 + $0xb8] sm:$0xf]
        %s7985 = scalar_lea.vmem [#allocation9], 192
        %v7986 = vld [vmem:[%s7985] sm:$0xf]
        %v7987 = vld [vmem:[%s7985 + $0x4] sm:$0xf]
        %v7988 = vld [vmem:[%s7985 + $0x8] sm:$0xf]
        %v7989 = vld [vmem:[%s7985 + $0xc] sm:$0xf]
        %v7990 = vld [vmem:[%s7985 + $0x10] sm:$0xf]
        %v7991 = vld [vmem:[%s7985 + $0x14] sm:$0xf]
        %v7992 = vld [vmem:[%s7985 + $0x18] sm:$0xf]
        %v7993 = vld [vmem:[%s7985 + $0x1c] sm:$0xf]
        %v7994 = vld [vmem:[%s7985 + $0x20] sm:$0xf]
        %v7995 = vld [vmem:[%s7985 + $0x24] sm:$0xf]
        %v7996 = vld [vmem:[%s7985 + $0x28] sm:$0xf]
        %v7997 = vld [vmem:[%s7985 + $0x2c] sm:$0xf]
        %v7998 = vld [vmem:[%s7985 + $0x30] sm:$0xf]
        %v7999 = vld [vmem:[%s7985 + $0x34] sm:$0xf]
        %v8000 = vld [vmem:[%s7985 + $0x38] sm:$0xf]
        %v8001 = vld [vmem:[%s7985 + $0x3c] sm:$0xf]
        %v8034 = vunpack.c.l.b16 %v7953
        %v8035 = vunpack.c.l.b16 %v7954
        %v8036 = vunpack.c.l.b16 %v7955
        %v8037 = vunpack.c.l.b16 %v7956
        %v8038 = vunpack.c.l.b16 %v7957
        %v8039 = vunpack.c.l.b16 %v7958
        %v8040 = vunpack.c.l.b16 %v7959
        %v8041 = vunpack.c.l.b16 %v7960
        %v8042 = vunpack.c.l.b16 %v7961
        %v8043 = vunpack.c.l.b16 %v7962
        %v8044 = vunpack.c.l.b16 %v7963
        %v8045 = vunpack.c.l.b16 %v7964
        %v8046 = vunpack.c.l.b16 %v7965
        %v8047 = vunpack.c.l.b16 %v7966
        %v8048 = vunpack.c.l.b16 %v7967
        %v8049 = vunpack.c.l.b16 %v7968
        %v8050 = vunpack.c.l.b16 %v7969
        %v8051 = vunpack.c.l.b16 %v7970
        %v8052 = vunpack.c.l.b16 %v7971
        %v8053 = vunpack.c.l.b16 %v7972
        %v8054 = vunpack.c.l.b16 %v7973
        %v8055 = vunpack.c.l.b16 %v7974
        %v8056 = vunpack.c.l.b16 %v7975
        %v8057 = vunpack.c.l.b16 %v7976
        %v8058 = vunpack.c.l.b16 %v7977
        %v8059 = vunpack.c.l.b16 %v7978
        %v8060 = vunpack.c.l.b16 %v7979
        %v8061 = vunpack.c.l.b16 %v7980
        %v8062 = vunpack.c.l.b16 %v7981
        %v8063 = vunpack.c.l.b16 %v7982
        %v8064 = vunpack.c.l.b16 %v7983
        %v8065 = vunpack.c.l.b16 %v7984
        %v8066 = vpack.c.b16 %v8035, %v8034
        %v8067 = vpack.c.b16 %v8037, %v8036
        %v8068 = vpack.c.b16 %v8039, %v8038
        %v8069 = vpack.c.b16 %v8041, %v8040
        %v8070 = vpack.c.b16 %v8043, %v8042
        %v8071 = vpack.c.b16 %v8045, %v8044
        %v8072 = vpack.c.b16 %v8047, %v8046
        %v8073 = vpack.c.b16 %v8049, %v8048
        %v8074 = vpack.c.b16 %v8051, %v8050
        %v8075 = vpack.c.b16 %v8053, %v8052
        %v8076 = vpack.c.b16 %v8055, %v8054
        %v8077 = vpack.c.b16 %v8057, %v8056
        %v8078 = vpack.c.b16 %v8059, %v8058
        %v8079 = vpack.c.b16 %v8061, %v8060
        %v8080 = vpack.c.b16 %v8063, %v8062
        %v8081 = vpack.c.b16 %v8065, %v8064
        %v8114 = vunpack.c.l.b16 %v7986
        %v8115 = vunpack.c.l.b16 %v7987
        %v8116 = vunpack.c.l.b16 %v7988
        %v8117 = vunpack.c.l.b16 %v7989
        %v8118 = vunpack.c.l.b16 %v7990
        %v8119 = vunpack.c.l.b16 %v7991
        %v8120 = vunpack.c.l.b16 %v7992
        %v8121 = vunpack.c.l.b16 %v7993
        %v8122 = vunpack.c.l.b16 %v7994
        %v8123 = vunpack.c.l.b16 %v7995
        %v8124 = vunpack.c.l.b16 %v7996
        %v8125 = vunpack.c.l.b16 %v7997
        %v8126 = vunpack.c.l.b16 %v7998
        %v8127 = vunpack.c.l.b16 %v7999
        %v8128 = vunpack.c.l.b16 %v8000
        %v8129 = vunpack.c.l.b16 %v8001
        %v8130 = vpack.c.b16 %v8115, %v8114
        %v8131 = vpack.c.b16 %v8117, %v8116
        %v8132 = vpack.c.b16 %v8119, %v8118
        %v8133 = vpack.c.b16 %v8121, %v8120
        %v8134 = vpack.c.b16 %v8123, %v8122
        %v8135 = vpack.c.b16 %v8125, %v8124
        %v8136 = vpack.c.b16 %v8127, %v8126
        %v8137 = vpack.c.b16 %v8129, %v8128
        %8146 = vmatprep.subr.bf16.mxu0 0
        %8147 = vmatpush1.bf16.msra.mxu0 %v8130
        %8148 = vmatprep.subr.bf16.mxu0 0
        %8149 = vmatpush1.bf16.msra.mxu0 %v8131
        %8150 = vmatprep.subr.bf16.mxu0 0
        %8151 = vmatpush1.bf16.msra.mxu0 %v8132
        %8152 = vmatprep.subr.bf16.mxu0 0
        %8153 = vmatpush1.bf16.msra.mxu0 %v8133
        %8154 = vmatprep.subr.bf16.mxu0 0
        %8155 = vmatpush1.bf16.msra.mxu0 %v8134
        %8156 = vmatprep.subr.bf16.mxu0 0
        %8157 = vmatpush1.bf16.msra.mxu0 %v8135
        %8158 = vmatprep.subr.bf16.mxu0 0
        %8159 = vmatpush1.bf16.msra.mxu0 %v8136
        %8160 = vmatprep.subr.bf16.mxu0 0
        %8161 = vmatpush1.bf16.msra.mxu0 %v8137
        %8162 = vmatprep.subr.bf16.mxu0 0
        %8163 = vmatpush1.bf16.msra.mxu0 0
        %8164 = vmatprep.subr.bf16.mxu0 0
        %8165 = vmatpush1.bf16.msra.mxu0 0
        %8166 = vmatprep.subr.bf16.mxu0 0
        %8167 = vmatpush1.bf16.msra.mxu0 0
        %8168 = vmatprep.subr.bf16.mxu0 0
        %8169 = vmatpush1.bf16.msra.mxu0 0
        %8170 = vmatprep.subr.bf16.mxu0 0
        %8171 = vmatpush1.bf16.msra.mxu0 0
        %8172 = vmatprep.subr.bf16.mxu0 0
        %8173 = vmatpush1.bf16.msra.mxu0 0
        %8174 = vmatprep.subr.bf16.mxu0 0
        %8175 = vmatpush1.bf16.msra.mxu0 0
        %8176 = vmatprep.subr.bf16.mxu0 0
        %8177 = vmatpush1.bf16.msra.mxu0 0
        %8178 = vmatprep.mubr.bf16.mxu0 0
        %8179 = vmatmul.mubr.bf16.gmra.mrb[0].mxu0 %v8066
        %v8180 = vpop.f32.mrb[0].mxu0
        %v8181 = vadd.f32 0.0, %v8180
        %v8182 = vpop.f32.mrb[0].mxu0
        %v8183 = vpop.f32.mrb[0].mxu0
        %v8184 = vadd.f32 0.0, %v8183
        %v8185 = vpop.f32.mrb[0].mxu0
        %8186 = vmatprep.mubr.bf16.mxu0 0
        %8187 = vmatmul.mubr.bf16.gmra.mrb[0].mxu0 %v8067
        %v8188 = vpop.f32.mrb[0].mxu0
        %v8189 = vadd.f32 0.0, %v8188
        %v8190 = vpop.f32.mrb[0].mxu0
        %v8191 = vpop.f32.mrb[0].mxu0
        %v8192 = vadd.f32 0.0, %v8191
        %v8193 = vpop.f32.mrb[0].mxu0
        %8194 = vmatprep.mubr.bf16.mxu0 0
        %8195 = vmatmul.mubr.bf16.gmra.mrb[0].mxu0 %v8068
        %v8196 = vpop.f32.mrb[0].mxu0
        %v8197 = vadd.f32 0.0, %v8196
        %v8198 = vpop.f32.mrb[0].mxu0
        %v8199 = vpop.f32.mrb[0].mxu0
        %v8200 = vadd.f32 0.0, %v8199
        %v8201 = vpop.f32.mrb[0].mxu0
        %8202 = vmatprep.mubr.bf16.mxu0 0
        %8203 = vmatmul.mubr.bf16.gmra.mrb[0].mxu0 %v8069
        %v8204 = vpop.f32.mrb[0].mxu0
        %v8205 = vadd.f32 0.0, %v8204
        %v8206 = vpop.f32.mrb[0].mxu0
        %v8207 = vpop.f32.mrb[0].mxu0
        %v8208 = vadd.f32 0.0, %v8207
        %v8209 = vpop.f32.mrb[0].mxu0
        %8210 = vmatprep.mubr.bf16.mxu0 0
        %8211 = vmatmul.mubr.bf16.gmra.mrb[0].mxu0 %v8070
        %v8212 = vpop.f32.mrb[0].mxu0
        %v8213 = vadd.f32 0.0, %v8212
        %v8214 = vpop.f32.mrb[0].mxu0
        %v8215 = vpop.f32.mrb[0].mxu0
        %v8216 = vadd.f32 0.0, %v8215
        %v8217 = vpop.f32.mrb[0].mxu0
        %8218 = vmatprep.mubr.bf16.mxu0 0
        %8219 = vmatmul.mubr.bf16.gmra.mrb[0].mxu0 %v8071
        %v8220 = vpop.f32.mrb[0].mxu0
        %v8221 = vadd.f32 0.0, %v8220
        %v8222 = vpop.f32.mrb[0].mxu0
        %v8223 = vpop.f32.mrb[0].mxu0
        %v8224 = vadd.f32 0.0, %v8223
        %v8225 = vpop.f32.mrb[0].mxu0
        %8226 = vmatprep.mubr.bf16.mxu0 0
        %8227 = vmatmul.mubr.bf16.gmra.mrb[0].mxu0 %v8072
        %v8228 = vpop.f32.mrb[0].mxu0
        %v8229 = vadd.f32 0.0, %v8228
        %v8230 = vpop.f32.mrb[0].mxu0
        %v8231 = vpop.f32.mrb[0].mxu0
        %v8232 = vadd.f32 0.0, %v8231
        %v8233 = vpop.f32.mrb[0].mxu0
        %8234 = vmatprep.mubr.bf16.mxu0 0
        %8235 = vmatmul.mubr.bf16.gmra.mrb[0].mxu0 %v8073
        %v8236 = vpop.f32.mrb[0].mxu0
        %v8237 = vadd.f32 0.0, %v8236
        %v8238 = vpop.f32.mrb[0].mxu0
        %v8239 = vpop.f32.mrb[0].mxu0
        %v8240 = vadd.f32 0.0, %v8239
        %v8241 = vpop.f32.mrb[0].mxu0
        %8242 = vmatprep.mubr.bf16.mxu0 0
        %8243 = vmatmul.mubr.bf16.gmra.mrb[0].mxu0 %v8074
        %v8244 = vpop.f32.mrb[0].mxu0
        %v8245 = vadd.f32 0.0, %v8244
        %v8246 = vpop.f32.mrb[0].mxu0
        %v8247 = vpop.f32.mrb[0].mxu0
        %v8248 = vadd.f32 0.0, %v8247
        %v8249 = vpop.f32.mrb[0].mxu0
        %8250 = vmatprep.mubr.bf16.mxu0 0
        %8251 = vmatmul.mubr.bf16.gmra.mrb[0].mxu0 %v8075
        %v8252 = vpop.f32.mrb[0].mxu0
        %v8253 = vadd.f32 0.0, %v8252
        %v8254 = vpop.f32.mrb[0].mxu0
        %v8255 = vpop.f32.mrb[0].mxu0
        %v8256 = vadd.f32 0.0, %v8255
        %v8257 = vpop.f32.mrb[0].mxu0
        %8258 = vmatprep.mubr.bf16.mxu0 0
        %8259 = vmatmul.mubr.bf16.gmra.mrb[0].mxu0 %v8076
        %v8260 = vpop.f32.mrb[0].mxu0
        %v8261 = vadd.f32 0.0, %v8260
        %v8262 = vpop.f32.mrb[0].mxu0
        %v8263 = vpop.f32.mrb[0].mxu0
        %v8264 = vadd.f32 0.0, %v8263
        %v8265 = vpop.f32.mrb[0].mxu0
        %8266 = vmatprep.mubr.bf16.mxu0 0
        %8267 = vmatmul.mubr.bf16.gmra.mrb[0].mxu0 %v8077
        %v8268 = vpop.f32.mrb[0].mxu0
        %v8269 = vadd.f32 0.0, %v8268
        %v8270 = vpop.f32.mrb[0].mxu0
        %v8271 = vpop.f32.mrb[0].mxu0
        %v8272 = vadd.f32 0.0, %v8271
        %v8273 = vpop.f32.mrb[0].mxu0
        %8274 = vmatprep.mubr.bf16.mxu0 0
        %8275 = vmatmul.mubr.bf16.gmra.mrb[0].mxu0 %v8078
        %v8276 = vpop.f32.mrb[0].mxu0
        %v8277 = vadd.f32 0.0, %v8276
        %v8278 = vpop.f32.mrb[0].mxu0
        %v8279 = vpop.f32.mrb[0].mxu0
        %v8280 = vadd.f32 0.0, %v8279
        %v8281 = vpop.f32.mrb[0].mxu0
        %8282 = vmatprep.mubr.bf16.mxu0 0
        %8283 = vmatmul.mubr.bf16.gmra.mrb[0].mxu0 %v8079
        %v8284 = vpop.f32.mrb[0].mxu0
        %v8285 = vadd.f32 0.0, %v8284
        %v8286 = vpop.f32.mrb[0].mxu0
        %v8287 = vpop.f32.mrb[0].mxu0
        %v8288 = vadd.f32 0.0, %v8287
        %v8289 = vpop.f32.mrb[0].mxu0
        %8290 = vmatprep.mubr.bf16.mxu0 0
        %8291 = vmatmul.mubr.bf16.gmra.mrb[0].mxu0 %v8080
        %v8292 = vpop.f32.mrb[0].mxu0
        %v8293 = vadd.f32 0.0, %v8292
        %v8294 = vpop.f32.mrb[0].mxu0
        %v8295 = vpop.f32.mrb[0].mxu0
        %v8296 = vadd.f32 0.0, %v8295
        %v8297 = vpop.f32.mrb[0].mxu0
        %8298 = vmatprep.mubr.bf16.mxu0 0
        %8299 = vmatmul.mubr.bf16.gmra.mrb[0].mxu0 %v8081
        %v8300 = vpop.f32.mrb[0].mxu0
        %v8301 = vadd.f32 0.0, %v8300
        %v8302 = vpop.f32.mrb[0].mxu0
        %v8303 = vpop.f32.mrb[0].mxu0
        %v8304 = vadd.f32 0.0, %v8303
        %v8305 = vpop.f32.mrb[0].mxu0
        %8306 = vdwg.mxu0
        %v8307 = vadd.f32 %v7921, %v8181
        %v8308 = vadd.f32 %v7922, %v8184
        %v8309 = vadd.f32 %v7923, %v8189
        %v8310 = vadd.f32 %v7924, %v8192
        %v8311 = vadd.f32 %v7925, %v8197
        %v8312 = vadd.f32 %v7926, %v8200
        %v8313 = vadd.f32 %v7927, %v8205
        %v8314 = vadd.f32 %v7928, %v8208
        %v8315 = vadd.f32 %v7929, %v8213
        %v8316 = vadd.f32 %v7930, %v8216
        %v8317 = vadd.f32 %v7931, %v8221
        %v8318 = vadd.f32 %v7932, %v8224
        %v8319 = vadd.f32 %v7933, %v8229
        %v8320 = vadd.f32 %v7934, %v8232
        %v8321 = vadd.f32 %v7935, %v8237
        %v8322 = vadd.f32 %v7936, %v8240
        %v8323 = vadd.f32 %v7937, %v8245
        %v8324 = vadd.f32 %v7938, %v8248
        %v8325 = vadd.f32 %v7939, %v8253
        %v8326 = vadd.f32 %v7940, %v8256
        %v8327 = vadd.f32 %v7941, %v8261
        %v8328 = vadd.f32 %v7942, %v8264
        %v8329 = vadd.f32 %v7943, %v8269
        %v8330 = vadd.f32 %v7944, %v8272
        %v8331 = vadd.f32 %v7945, %v8277
        %v8332 = vadd.f32 %v7946, %v8280
        %v8333 = vadd.f32 %v7947, %v8285
        %v8334 = vadd.f32 %v7948, %v8288
        %v8335 = vadd.f32 %v7949, %v8293
        %v8336 = vadd.f32 %v7950, %v8296
        %v8337 = vadd.f32 %v7951, %v8301
        %v8338 = vadd.f32 %v7952, %v8304
        %v8339 = vld [vmem:[%s362] sm:$0xf]
        %v8340 = vld [vmem:[%s362 + $0x4] sm:$0xf]
        %v8341 = vld [vmem:[%s362 + $0x8] sm:$0x1]
        %v8342 = vld [vmem:[%s362 + $0xc] sm:$0xf]
        %v8343 = vld [vmem:[%s362 + $0x10] sm:$0xf]
        %v8344 = vld [vmem:[%s362 + $0x14] sm:$0x1]
        %v8345 = vld [vmem:[%s362 + $0x18] sm:$0xf]
        %v8346 = vld [vmem:[%s362 + $0x1c] sm:$0xf]
        %v8347 = vld [vmem:[%s362 + $0x20] sm:$0x1]
        %v8348 = vld [vmem:[%s362 + $0x24] sm:$0xf]
        %v8349 = vld [vmem:[%s362 + $0x28] sm:$0xf]
        %v8350 = vld [vmem:[%s362 + $0x2c] sm:$0x1]
        %v8351 = vld [vmem:[%s362 + $0x30] sm:$0xf]
        %v8352 = vld [vmem:[%s362 + $0x34] sm:$0xf]
        %v8353 = vld [vmem:[%s362 + $0x38] sm:$0x1]
        %v8354 = vld [vmem:[%s362 + $0x3c] sm:$0xf]
        %v8355 = vld [vmem:[%s362 + $0x40] sm:$0xf]
        %v8356 = vld [vmem:[%s362 + $0x44] sm:$0x1]
        %v8357 = vld [vmem:[%s362 + $0x48] sm:$0xf]
        %v8358 = vld [vmem:[%s362 + $0x4c] sm:$0xf]
        %v8359 = vld [vmem:[%s362 + $0x50] sm:$0x1]
        %v8360 = vld [vmem:[%s362 + $0x54] sm:$0xf]
        %v8361 = vld [vmem:[%s362 + $0x58] sm:$0xf]
        %v8362 = vld [vmem:[%s362 + $0x5c] sm:$0x1]
        %v8363 = vld [vmem:[%s362 + $0x60] sm:$0xf]
        %v8364 = vld [vmem:[%s362 + $0x64] sm:$0xf]
        %v8365 = vld [vmem:[%s362 + $0x68] sm:$0x1]
        %v8366 = vld [vmem:[%s362 + $0x6c] sm:$0xf]
        %v8367 = vld [vmem:[%s362 + $0x70] sm:$0xf]
        %v8368 = vld [vmem:[%s362 + $0x74] sm:$0x1]
        %v8369 = vld [vmem:[%s362 + $0x78] sm:$0xf]
        %v8370 = vld [vmem:[%s362 + $0x7c] sm:$0xf]
        %v8371 = vld [vmem:[%s362 + $0x80] sm:$0x1]
        %v8372 = vld [vmem:[%s362 + $0x84] sm:$0xf]
        %v8373 = vld [vmem:[%s362 + $0x88] sm:$0xf]
        %v8374 = vld [vmem:[%s362 + $0x8c] sm:$0x1]
        %v8375 = vld [vmem:[%s362 + $0x90] sm:$0xf]
        %v8376 = vld [vmem:[%s362 + $0x94] sm:$0xf]
        %v8377 = vld [vmem:[%s362 + $0x98] sm:$0x1]
        %v8378 = vld [vmem:[%s362 + $0x9c] sm:$0xf]
        %v8379 = vld [vmem:[%s362 + $0xa0] sm:$0xf]
        %v8380 = vld [vmem:[%s362 + $0xa4] sm:$0x1]
        %v8381 = vld [vmem:[%s362 + $0xa8] sm:$0xf]
        %v8382 = vld [vmem:[%s362 + $0xac] sm:$0xf]
        %v8383 = vld [vmem:[%s362 + $0xb0] sm:$0x1]
        %v8384 = vld [vmem:[%s362 + $0xb4] sm:$0xf]
        %v8385 = vld [vmem:[%s362 + $0xb8] sm:$0xf]
        %v8386 = vld [vmem:[%s362 + $0xbc] sm:$0x1]
        %v8388 = vshrl.u32 %v8339, 16
        %v8390 = vrot.slane %v8388, 4
        %v8391 = vshll.u32 %v8339, 16
        %v8393 = vrot.slane %v8391, 5
        %v8394 = vor.u32 %v8390, %v8393
        %v8395 = vrot.slane %v8394, 4
        %v8397 = vshll.u32 %v8340, 16
        %v8399 = vrot.slane %v8397, 5
        %v8400 = vsel %vm1089, %v8395, %v8399
        %v8401 = vshrl.u32 %v8340, 16
        %v8403 = vrot.slane %v8401, 4
        %v8404 = vor.u32 %v8403, %v8399
        %v8405 = vrot.slane %v8404, 4
        %v8407 = vshll.u32 %v8341, 16
        %v8409 = vrot.slane %v8407, 5
        %v8410 = vsel %vm1089, %v8405, %v8409
        %v8412 = vshrl.u32 %v8342, 16
        %v8414 = vrot.slane %v8412, 4
        %v8415 = vshll.u32 %v8342, 16
        %v8417 = vrot.slane %v8415, 5
        %v8418 = vor.u32 %v8414, %v8417
        %v8419 = vrot.slane %v8418, 4
        %v8421 = vshll.u32 %v8343, 16
        %v8423 = vrot.slane %v8421, 5
        %v8424 = vsel %vm1089, %v8419, %v8423
        %v8425 = vshrl.u32 %v8343, 16
        %v8427 = vrot.slane %v8425, 4
        %v8428 = vor.u32 %v8427, %v8423
        %v8429 = vrot.slane %v8428, 4
        %v8431 = vshll.u32 %v8344, 16
        %v8433 = vrot.slane %v8431, 5
        %v8434 = vsel %vm1089, %v8429, %v8433
        %v8436 = vshrl.u32 %v8345, 16
        %v8438 = vrot.slane %v8436, 4
        %v8439 = vshll.u32 %v8345, 16
        %v8441 = vrot.slane %v8439, 5
        %v8442 = vor.u32 %v8438, %v8441
        %v8443 = vrot.slane %v8442, 4
        %v8445 = vshll.u32 %v8346, 16
        %v8447 = vrot.slane %v8445, 5
        %v8448 = vsel %vm1089, %v8443, %v8447
        %v8449 = vshrl.u32 %v8346, 16
        %v8451 = vrot.slane %v8449, 4
        %v8452 = vor.u32 %v8451, %v8447
        %v8453 = vrot.slane %v8452, 4
        %v8455 = vshll.u32 %v8347, 16
        %v8457 = vrot.slane %v8455, 5
        %v8458 = vsel %vm1089, %v8453, %v8457
        %v8460 = vshrl.u32 %v8348, 16
        %v8462 = vrot.slane %v8460, 4
        %v8463 = vshll.u32 %v8348, 16
        %v8465 = vrot.slane %v8463, 5
        %v8466 = vor.u32 %v8462, %v8465
        %v8467 = vrot.slane %v8466, 4
        %v8469 = vshll.u32 %v8349, 16
        %v8471 = vrot.slane %v8469, 5
        %v8472 = vsel %vm1089, %v8467, %v8471
        %v8473 = vshrl.u32 %v8349, 16
        %v8475 = vrot.slane %v8473, 4
        %v8476 = vor.u32 %v8475, %v8471
        %v8477 = vrot.slane %v8476, 4
        %v8479 = vshll.u32 %v8350, 16
        %v8481 = vrot.slane %v8479, 5
        %v8482 = vsel %vm1089, %v8477, %v8481
        %v8484 = vshrl.u32 %v8351, 16
        %v8486 = vrot.slane %v8484, 4
        %v8487 = vshll.u32 %v8351, 16
        %v8489 = vrot.slane %v8487, 5
        %v8490 = vor.u32 %v8486, %v8489
        %v8491 = vrot.slane %v8490, 4
        %v8493 = vshll.u32 %v8352, 16
        %v8495 = vrot.slane %v8493, 5
        %v8496 = vsel %vm1089, %v8491, %v8495
        %v8497 = vshrl.u32 %v8352, 16
        %v8499 = vrot.slane %v8497, 4
        %v8500 = vor.u32 %v8499, %v8495
        %v8501 = vrot.slane %v8500, 4
        %v8503 = vshll.u32 %v8353, 16
        %v8505 = vrot.slane %v8503, 5
        %v8506 = vsel %vm1089, %v8501, %v8505
        %v8508 = vshrl.u32 %v8354, 16
        %v8510 = vrot.slane %v8508, 4
        %v8511 = vshll.u32 %v8354, 16
        %v8513 = vrot.slane %v8511, 5
        %v8514 = vor.u32 %v8510, %v8513
        %v8515 = vrot.slane %v8514, 4
        %v8517 = vshll.u32 %v8355, 16
        %v8519 = vrot.slane %v8517, 5
        %v8520 = vsel %vm1089, %v8515, %v8519
        %v8521 = vshrl.u32 %v8355, 16
        %v8523 = vrot.slane %v8521, 4
        %v8524 = vor.u32 %v8523, %v8519
        %v8525 = vrot.slane %v8524, 4
        %v8527 = vshll.u32 %v8356, 16
        %v8529 = vrot.slane %v8527, 5
        %v8530 = vsel %vm1089, %v8525, %v8529
        %v8532 = vshrl.u32 %v8357, 16
        %v8534 = vrot.slane %v8532, 4
        %v8535 = vshll.u32 %v8357, 16
        %v8537 = vrot.slane %v8535, 5
        %v8538 = vor.u32 %v8534, %v8537
        %v8539 = vrot.slane %v8538, 4
        %v8541 = vshll.u32 %v8358, 16
        %v8543 = vrot.slane %v8541, 5
        %v8544 = vsel %vm1089, %v8539, %v8543
        %v8545 = vshrl.u32 %v8358, 16
        %v8547 = vrot.slane %v8545, 4
        %v8548 = vor.u32 %v8547, %v8543
        %v8549 = vrot.slane %v8548, 4
        %v8551 = vshll.u32 %v8359, 16
        %v8553 = vrot.slane %v8551, 5
        %v8554 = vsel %vm1089, %v8549, %v8553
        %v8556 = vshrl.u32 %v8360, 16
        %v8558 = vrot.slane %v8556, 4
        %v8559 = vshll.u32 %v8360, 16
        %v8561 = vrot.slane %v8559, 5
        %v8562 = vor.u32 %v8558, %v8561
        %v8563 = vrot.slane %v8562, 4
        %v8565 = vshll.u32 %v8361, 16
        %v8567 = vrot.slane %v8565, 5
        %v8568 = vsel %vm1089, %v8563, %v8567
        %v8569 = vshrl.u32 %v8361, 16
        %v8571 = vrot.slane %v8569, 4
        %v8572 = vor.u32 %v8571, %v8567
        %v8573 = vrot.slane %v8572, 4
        %v8575 = vshll.u32 %v8362, 16
        %v8577 = vrot.slane %v8575, 5
        %v8578 = vsel %vm1089, %v8573, %v8577
        %v8580 = vshrl.u32 %v8363, 16
        %v8582 = vrot.slane %v8580, 4
        %v8583 = vshll.u32 %v8363, 16
        %v8585 = vrot.slane %v8583, 5
        %v8586 = vor.u32 %v8582, %v8585
        %v8587 = vrot.slane %v8586, 4
        %v8589 = vshll.u32 %v8364, 16
        %v8591 = vrot.slane %v8589, 5
        %v8592 = vsel %vm1089, %v8587, %v8591
        %v8593 = vshrl.u32 %v8364, 16
        %v8595 = vrot.slane %v8593, 4
        %v8596 = vor.u32 %v8595, %v8591
        %v8597 = vrot.slane %v8596, 4
        %v8599 = vshll.u32 %v8365, 16
        %v8601 = vrot.slane %v8599, 5
        %v8602 = vsel %vm1089, %v8597, %v8601
        %v8604 = vshrl.u32 %v8366, 16
        %v8606 = vrot.slane %v8604, 4
        %v8607 = vshll.u32 %v8366, 16
        %v8609 = vrot.slane %v8607, 5
        %v8610 = vor.u32 %v8606, %v8609
        %v8611 = vrot.slane %v8610, 4
        %v8613 = vshll.u32 %v8367, 16
        %v8615 = vrot.slane %v8613, 5
        %v8616 = vsel %vm1089, %v8611, %v8615
        %v8617 = vshrl.u32 %v8367, 16
        %v8619 = vrot.slane %v8617, 4
        %v8620 = vor.u32 %v8619, %v8615
        %v8621 = vrot.slane %v8620, 4
        %v8623 = vshll.u32 %v8368, 16
        %v8625 = vrot.slane %v8623, 5
        %v8626 = vsel %vm1089, %v8621, %v8625
        %v8628 = vshrl.u32 %v8369, 16
        %v8630 = vrot.slane %v8628, 4
        %v8631 = vshll.u32 %v8369, 16
        %v8633 = vrot.slane %v8631, 5
        %v8634 = vor.u32 %v8630, %v8633
        %v8635 = vrot.slane %v8634, 4
        %v8637 = vshll.u32 %v8370, 16
        %v8639 = vrot.slane %v8637, 5
        %v8640 = vsel %vm1089, %v8635, %v8639
        %v8641 = vshrl.u32 %v8370, 16
        %v8643 = vrot.slane %v8641, 4
        %v8644 = vor.u32 %v8643, %v8639
        %v8645 = vrot.slane %v8644, 4
        %v8647 = vshll.u32 %v8371, 16
        %v8649 = vrot.slane %v8647, 5
        %v8650 = vsel %vm1089, %v8645, %v8649
        %v8652 = vshrl.u32 %v8372, 16
        %v8654 = vrot.slane %v8652, 4
        %v8655 = vshll.u32 %v8372, 16
        %v8657 = vrot.slane %v8655, 5
        %v8658 = vor.u32 %v8654, %v8657
        %v8659 = vrot.slane %v8658, 4
        %v8661 = vshll.u32 %v8373, 16
        %v8663 = vrot.slane %v8661, 5
        %v8664 = vsel %vm1089, %v8659, %v8663
        %v8665 = vshrl.u32 %v8373, 16
        %v8667 = vrot.slane %v8665, 4
        %v8668 = vor.u32 %v8667, %v8663
        %v8669 = vrot.slane %v8668, 4
        %v8671 = vshll.u32 %v8374, 16
        %v8673 = vrot.slane %v8671, 5
        %v8674 = vsel %vm1089, %v8669, %v8673
        %v8676 = vshrl.u32 %v8375, 16
        %v8678 = vrot.slane %v8676, 4
        %v8679 = vshll.u32 %v8375, 16
        %v8681 = vrot.slane %v8679, 5
        %v8682 = vor.u32 %v8678, %v8681
        %v8683 = vrot.slane %v8682, 4
        %v8685 = vshll.u32 %v8376, 16
        %v8687 = vrot.slane %v8685, 5
        %v8688 = vsel %vm1089, %v8683, %v8687
        %v8689 = vshrl.u32 %v8376, 16
        %v8691 = vrot.slane %v8689, 4
        %v8692 = vor.u32 %v8691, %v8687
        %v8693 = vrot.slane %v8692, 4
        %v8695 = vshll.u32 %v8377, 16
        %v8697 = vrot.slane %v8695, 5
        %v8698 = vsel %vm1089, %v8693, %v8697
        %v8700 = vshrl.u32 %v8378, 16
        %v8702 = vrot.slane %v8700, 4
        %v8703 = vshll.u32 %v8378, 16
        %v8705 = vrot.slane %v8703, 5
        %v8706 = vor.u32 %v8702, %v8705
        %v8707 = vrot.slane %v8706, 4
        %v8709 = vshll.u32 %v8379, 16
        %v8711 = vrot.slane %v8709, 5
        %v8712 = vsel %vm1089, %v8707, %v8711
        %v8713 = vshrl.u32 %v8379, 16
        %v8715 = vrot.slane %v8713, 4
        %v8716 = vor.u32 %v8715, %v8711
        %v8717 = vrot.slane %v8716, 4
        %v8719 = vshll.u32 %v8380, 16
        %v8721 = vrot.slane %v8719, 5
        %v8722 = vsel %vm1089, %v8717, %v8721
        %v8724 = vshrl.u32 %v8381, 16
        %v8726 = vrot.slane %v8724, 4
        %v8727 = vshll.u32 %v8381, 16
        %v8729 = vrot.slane %v8727, 5
        %v8730 = vor.u32 %v8726, %v8729
        %v8731 = vrot.slane %v8730, 4
        %v8733 = vshll.u32 %v8382, 16
        %v8735 = vrot.slane %v8733, 5
        %v8736 = vsel %vm1089, %v8731, %v8735
        %v8737 = vshrl.u32 %v8382, 16
        %v8739 = vrot.slane %v8737, 4
        %v8740 = vor.u32 %v8739, %v8735
        %v8741 = vrot.slane %v8740, 4
        %v8743 = vshll.u32 %v8383, 16
        %v8745 = vrot.slane %v8743, 5
        %v8746 = vsel %vm1089, %v8741, %v8745
        %v8748 = vshrl.u32 %v8384, 16
        %v8750 = vrot.slane %v8748, 4
        %v8751 = vshll.u32 %v8384, 16
        %v8753 = vrot.slane %v8751, 5
        %v8754 = vor.u32 %v8750, %v8753
        %v8755 = vrot.slane %v8754, 4
        %v8757 = vshll.u32 %v8385, 16
        %v8759 = vrot.slane %v8757, 5
        %v8760 = vsel %vm1089, %v8755, %v8759
        %v8761 = vshrl.u32 %v8385, 16
        %v8763 = vrot.slane %v8761, 4
        %v8764 = vor.u32 %v8763, %v8759
        %v8765 = vrot.slane %v8764, 4
        %v8767 = vshll.u32 %v8386, 16
        %v8769 = vrot.slane %v8767, 5
        %v8770 = vsel %vm1089, %v8765, %v8769
        %s8771 = scalar_lea.vmem [#allocation9], 256
        %v8772 = vld [vmem:[%s8771] sm:$0xf]
        %v8773 = vld [vmem:[%s8771 + $0x4] sm:$0xf]
        %v8774 = vld [vmem:[%s8771 + $0x8] sm:$0xf]
        %v8775 = vld [vmem:[%s8771 + $0xc] sm:$0xf]
        %v8776 = vld [vmem:[%s8771 + $0x10] sm:$0xf]
        %v8777 = vld [vmem:[%s8771 + $0x14] sm:$0xf]
        %v8778 = vld [vmem:[%s8771 + $0x18] sm:$0xf]
        %v8779 = vld [vmem:[%s8771 + $0x1c] sm:$0xf]
        %v8780 = vld [vmem:[%s8771 + $0x20] sm:$0xf]
        %v8781 = vld [vmem:[%s8771 + $0x24] sm:$0xf]
        %v8782 = vld [vmem:[%s8771 + $0x28] sm:$0xf]
        %v8783 = vld [vmem:[%s8771 + $0x2c] sm:$0xf]
        %v8784 = vld [vmem:[%s8771 + $0x30] sm:$0xf]
        %v8785 = vld [vmem:[%s8771 + $0x34] sm:$0xf]
        %v8786 = vld [vmem:[%s8771 + $0x38] sm:$0xf]
        %v8787 = vld [vmem:[%s8771 + $0x3c] sm:$0xf]
        %v8788 = vunpack.c.l.b16 %v8400
        %v8789 = vunpack.c.l.b16 %v8410
        %v8790 = vunpack.c.l.b16 %v8424
        %v8791 = vunpack.c.l.b16 %v8434
        %v8792 = vunpack.c.l.b16 %v8448
        %v8793 = vunpack.c.l.b16 %v8458
        %v8794 = vunpack.c.l.b16 %v8472
        %v8795 = vunpack.c.l.b16 %v8482
        %v8796 = vunpack.c.l.b16 %v8496
        %v8797 = vunpack.c.l.b16 %v8506
        %v8798 = vunpack.c.l.b16 %v8520
        %v8799 = vunpack.c.l.b16 %v8530
        %v8800 = vunpack.c.l.b16 %v8544
        %v8801 = vunpack.c.l.b16 %v8554
        %v8802 = vunpack.c.l.b16 %v8568
        %v8803 = vunpack.c.l.b16 %v8578
        %v8804 = vunpack.c.l.b16 %v8592
        %v8805 = vunpack.c.l.b16 %v8602
        %v8806 = vunpack.c.l.b16 %v8616
        %v8807 = vunpack.c.l.b16 %v8626
        %v8808 = vunpack.c.l.b16 %v8640
        %v8809 = vunpack.c.l.b16 %v8650
        %v8810 = vunpack.c.l.b16 %v8664
        %v8811 = vunpack.c.l.b16 %v8674
        %v8812 = vunpack.c.l.b16 %v8688
        %v8813 = vunpack.c.l.b16 %v8698
        %v8814 = vunpack.c.l.b16 %v8712
        %v8815 = vunpack.c.l.b16 %v8722
        %v8816 = vunpack.c.l.b16 %v8736
        %v8817 = vunpack.c.l.b16 %v8746
        %v8818 = vunpack.c.l.b16 %v8760
        %v8819 = vunpack.c.l.b16 %v8770
        %v8820 = vpack.c.b16 %v8789, %v8788
        %v8821 = vpack.c.b16 %v8791, %v8790
        %v8822 = vpack.c.b16 %v8793, %v8792
        %v8823 = vpack.c.b16 %v8795, %v8794
        %v8824 = vpack.c.b16 %v8797, %v8796
        %v8825 = vpack.c.b16 %v8799, %v8798
        %v8826 = vpack.c.b16 %v8801, %v8800
        %v8827 = vpack.c.b16 %v8803, %v8802
        %v8828 = vpack.c.b16 %v8805, %v8804
        %v8829 = vpack.c.b16 %v8807, %v8806
        %v8830 = vpack.c.b16 %v8809, %v8808
        %v8831 = vpack.c.b16 %v8811, %v8810
        %v8832 = vpack.c.b16 %v8813, %v8812
        %v8833 = vpack.c.b16 %v8815, %v8814
        %v8834 = vpack.c.b16 %v8817, %v8816
        %v8835 = vpack.c.b16 %v8819, %v8818
        %v8868 = vunpack.c.l.b16 %v8772
        %v8869 = vunpack.c.l.b16 %v8773
        %v8870 = vunpack.c.l.b16 %v8774
        %v8871 = vunpack.c.l.b16 %v8775
        %v8872 = vunpack.c.l.b16 %v8776
        %v8873 = vunpack.c.l.b16 %v8777
        %v8874 = vunpack.c.l.b16 %v8778
        %v8875 = vunpack.c.l.b16 %v8779
        %v8876 = vunpack.c.l.b16 %v8780
        %v8877 = vunpack.c.l.b16 %v8781
        %v8878 = vunpack.c.l.b16 %v8782
        %v8879 = vunpack.c.l.b16 %v8783
        %v8880 = vunpack.c.l.b16 %v8784
        %v8881 = vunpack.c.l.b16 %v8785
        %v8882 = vunpack.c.l.b16 %v8786
        %v8883 = vunpack.c.l.b16 %v8787
        %v8884 = vpack.c.b16 %v8869, %v8868
        %v8885 = vpack.c.b16 %v8871, %v8870
        %v8886 = vpack.c.b16 %v8873, %v8872
        %v8887 = vpack.c.b16 %v8875, %v8874
        %v8888 = vpack.c.b16 %v8877, %v8876
        %v8889 = vpack.c.b16 %v8879, %v8878
        %v8890 = vpack.c.b16 %v8881, %v8880
        %v8891 = vpack.c.b16 %v8883, %v8882
        %8900 = vmatprep.subr.bf16.mxu0 0
        %8901 = vmatpush1.bf16.msra.mxu0 %v8884
        %8902 = vmatprep.subr.bf16.mxu0 0
        %8903 = vmatpush1.bf16.msra.mxu0 %v8885
        %8904 = vmatprep.subr.bf16.mxu0 0
        %8905 = vmatpush1.bf16.msra.mxu0 %v8886
        %8906 = vmatprep.subr.bf16.mxu0 0
        %8907 = vmatpush1.bf16.msra.mxu0 %v8887
        %8908 = vmatprep.subr.bf16.mxu0 0
        %8909 = vmatpush1.bf16.msra.mxu0 %v8888
        %8910 = vmatprep.subr.bf16.mxu0 0
        %8911 = vmatpush1.bf16.msra.mxu0 %v8889
        %8912 = vmatprep.subr.bf16.mxu0 0
        %8913 = vmatpush1.bf16.msra.mxu0 %v8890
        %8914 = vmatprep.subr.bf16.mxu0 0
        %8915 = vmatpush1.bf16.msra.mxu0 %v8891
        %8916 = vmatprep.subr.bf16.mxu0 0
        %8917 = vmatpush1.bf16.msra.mxu0 0
        %8918 = vmatprep.subr.bf16.mxu0 0
        %8919 = vmatpush1.bf16.msra.mxu0 0
        %8920 = vmatprep.subr.bf16.mxu0 0
        %8921 = vmatpush1.bf16.msra.mxu0 0
        %8922 = vmatprep.subr.bf16.mxu0 0
        %8923 = vmatpush1.bf16.msra.mxu0 0
        %8924 = vmatprep.subr.bf16.mxu0 0
        %8925 = vmatpush1.bf16.msra.mxu0 0
        %8926 = vmatprep.subr.bf16.mxu0 0
        %8927 = vmatpush1.bf16.msra.mxu0 0
        %8928 = vmatprep.subr.bf16.mxu0 0
        %8929 = vmatpush1.bf16.msra.mxu0 0
        %8930 = vmatprep.subr.bf16.mxu0 0
        %8931 = vmatpush1.bf16.msra.mxu0 0
        %8932 = vmatprep.mubr.bf16.mxu0 0
        %8933 = vmatmul.mubr.bf16.gmra.mrb[0].mxu0 %v8820
        %v8934 = vpop.f32.mrb[0].mxu0
        %v8935 = vadd.f32 0.0, %v8934
        %v8936 = vpop.f32.mrb[0].mxu0
        %v8937 = vpop.f32.mrb[0].mxu0
        %v8938 = vadd.f32 0.0, %v8937
        %v8939 = vpop.f32.mrb[0].mxu0
        %8940 = vmatprep.mubr.bf16.mxu0 0
        %8941 = vmatmul.mubr.bf16.gmra.mrb[0].mxu0 %v8821
        %v8942 = vpop.f32.mrb[0].mxu0
        %v8943 = vadd.f32 0.0, %v8942
        %v8944 = vpop.f32.mrb[0].mxu0
        %v8945 = vpop.f32.mrb[0].mxu0
        %v8946 = vadd.f32 0.0, %v8945
        %v8947 = vpop.f32.mrb[0].mxu0
        %8948 = vmatprep.mubr.bf16.mxu0 0
        %8949 = vmatmul.mubr.bf16.gmra.mrb[0].mxu0 %v8822
        %v8950 = vpop.f32.mrb[0].mxu0
        %v8951 = vadd.f32 0.0, %v8950
        %v8952 = vpop.f32.mrb[0].mxu0
        %v8953 = vpop.f32.mrb[0].mxu0
        %v8954 = vadd.f32 0.0, %v8953
        %v8955 = vpop.f32.mrb[0].mxu0
        %8956 = vmatprep.mubr.bf16.mxu0 0
        %8957 = vmatmul.mubr.bf16.gmra.mrb[0].mxu0 %v8823
        %v8958 = vpop.f32.mrb[0].mxu0
        %v8959 = vadd.f32 0.0, %v8958
        %v8960 = vpop.f32.mrb[0].mxu0
        %v8961 = vpop.f32.mrb[0].mxu0
        %v8962 = vadd.f32 0.0, %v8961
        %v8963 = vpop.f32.mrb[0].mxu0
        %8964 = vmatprep.mubr.bf16.mxu0 0
        %8965 = vmatmul.mubr.bf16.gmra.mrb[0].mxu0 %v8824
        %v8966 = vpop.f32.mrb[0].mxu0
        %v8967 = vadd.f32 0.0, %v8966
        %v8968 = vpop.f32.mrb[0].mxu0
        %v8969 = vpop.f32.mrb[0].mxu0
        %v8970 = vadd.f32 0.0, %v8969
        %v8971 = vpop.f32.mrb[0].mxu0
        %8972 = vmatprep.mubr.bf16.mxu0 0
        %8973 = vmatmul.mubr.bf16.gmra.mrb[0].mxu0 %v8825
        %v8974 = vpop.f32.mrb[0].mxu0
        %v8975 = vadd.f32 0.0, %v8974
        %v8976 = vpop.f32.mrb[0].mxu0
        %v8977 = vpop.f32.mrb[0].mxu0
        %v8978 = vadd.f32 0.0, %v8977
        %v8979 = vpop.f32.mrb[0].mxu0
        %8980 = vmatprep.mubr.bf16.mxu0 0
        %8981 = vmatmul.mubr.bf16.gmra.mrb[0].mxu0 %v8826
        %v8982 = vpop.f32.mrb[0].mxu0
        %v8983 = vadd.f32 0.0, %v8982
        %v8984 = vpop.f32.mrb[0].mxu0
        %v8985 = vpop.f32.mrb[0].mxu0
        %v8986 = vadd.f32 0.0, %v8985
        %v8987 = vpop.f32.mrb[0].mxu0
        %8988 = vmatprep.mubr.bf16.mxu0 0
        %8989 = vmatmul.mubr.bf16.gmra.mrb[0].mxu0 %v8827
        %v8990 = vpop.f32.mrb[0].mxu0
        %v8991 = vadd.f32 0.0, %v8990
        %v8992 = vpop.f32.mrb[0].mxu0
        %v8993 = vpop.f32.mrb[0].mxu0
        %v8994 = vadd.f32 0.0, %v8993
        %v8995 = vpop.f32.mrb[0].mxu0
        %8996 = vmatprep.mubr.bf16.mxu0 0
        %8997 = vmatmul.mubr.bf16.gmra.mrb[0].mxu0 %v8828
        %v8998 = vpop.f32.mrb[0].mxu0
        %v8999 = vadd.f32 0.0, %v8998
        %v9000 = vpop.f32.mrb[0].mxu0
        %v9001 = vpop.f32.mrb[0].mxu0
        %v9002 = vadd.f32 0.0, %v9001
        %v9003 = vpop.f32.mrb[0].mxu0
        %9004 = vmatprep.mubr.bf16.mxu0 0
        %9005 = vmatmul.mubr.bf16.gmra.mrb[0].mxu0 %v8829
        %v9006 = vpop.f32.mrb[0].mxu0
        %v9007 = vadd.f32 0.0, %v9006
        %v9008 = vpop.f32.mrb[0].mxu0
        %v9009 = vpop.f32.mrb[0].mxu0
        %v9010 = vadd.f32 0.0, %v9009
        %v9011 = vpop.f32.mrb[0].mxu0
        %9012 = vmatprep.mubr.bf16.mxu0 0
        %9013 = vmatmul.mubr.bf16.gmra.mrb[0].mxu0 %v8830
        %v9014 = vpop.f32.mrb[0].mxu0
        %v9015 = vadd.f32 0.0, %v9014
        %v9016 = vpop.f32.mrb[0].mxu0
        %v9017 = vpop.f32.mrb[0].mxu0
        %v9018 = vadd.f32 0.0, %v9017
        %v9019 = vpop.f32.mrb[0].mxu0
        %9020 = vmatprep.mubr.bf16.mxu0 0
        %9021 = vmatmul.mubr.bf16.gmra.mrb[0].mxu0 %v8831
        %v9022 = vpop.f32.mrb[0].mxu0
        %v9023 = vadd.f32 0.0, %v9022
        %v9024 = vpop.f32.mrb[0].mxu0
        %v9025 = vpop.f32.mrb[0].mxu0
        %v9026 = vadd.f32 0.0, %v9025
        %v9027 = vpop.f32.mrb[0].mxu0
        %9028 = vmatprep.mubr.bf16.mxu0 0
        %9029 = vmatmul.mubr.bf16.gmra.mrb[0].mxu0 %v8832
        %v9030 = vpop.f32.mrb[0].mxu0
        %v9031 = vadd.f32 0.0, %v9030
        %v9032 = vpop.f32.mrb[0].mxu0
        %v9033 = vpop.f32.mrb[0].mxu0
        %v9034 = vadd.f32 0.0, %v9033
        %v9035 = vpop.f32.mrb[0].mxu0
        %9036 = vmatprep.mubr.bf16.mxu0 0
        %9037 = vmatmul.mubr.bf16.gmra.mrb[0].mxu0 %v8833
        %v9038 = vpop.f32.mrb[0].mxu0
        %v9039 = vadd.f32 0.0, %v9038
        %v9040 = vpop.f32.mrb[0].mxu0
        %v9041 = vpop.f32.mrb[0].mxu0
        %v9042 = vadd.f32 0.0, %v9041
        %v9043 = vpop.f32.mrb[0].mxu0
        %9044 = vmatprep.mubr.bf16.mxu0 0
        %9045 = vmatmul.mubr.bf16.gmra.mrb[0].mxu0 %v8834
        %v9046 = vpop.f32.mrb[0].mxu0
        %v9047 = vadd.f32 0.0, %v9046
        %v9048 = vpop.f32.mrb[0].mxu0
        %v9049 = vpop.f32.mrb[0].mxu0
        %v9050 = vadd.f32 0.0, %v9049
        %v9051 = vpop.f32.mrb[0].mxu0
        %9052 = vmatprep.mubr.bf16.mxu0 0
        %9053 = vmatmul.mubr.bf16.gmra.mrb[0].mxu0 %v8835
        %v9054 = vpop.f32.mrb[0].mxu0
        %v9055 = vadd.f32 0.0, %v9054
        %v9056 = vpop.f32.mrb[0].mxu0
        %v9057 = vpop.f32.mrb[0].mxu0
        %v9058 = vadd.f32 0.0, %v9057
        %v9059 = vpop.f32.mrb[0].mxu0
        %9060 = vdwg.mxu0
        %v9061 = vadd.f32 %v8307, %v8935
        %v9062 = vadd.f32 %v8308, %v8938
        %v9063 = vadd.f32 %v8309, %v8943
        %v9064 = vadd.f32 %v8310, %v8946
        %v9065 = vadd.f32 %v8311, %v8951
        %v9066 = vadd.f32 %v8312, %v8954
        %v9067 = vadd.f32 %v8313, %v8959
        %v9068 = vadd.f32 %v8314, %v8962
        %v9069 = vadd.f32 %v8315, %v8967
        %v9070 = vadd.f32 %v8316, %v8970
        %v9071 = vadd.f32 %v8317, %v8975
        %v9072 = vadd.f32 %v8318, %v8978
        %v9073 = vadd.f32 %v8319, %v8983
        %v9074 = vadd.f32 %v8320, %v8986
        %v9075 = vadd.f32 %v8321, %v8991
        %v9076 = vadd.f32 %v8322, %v8994
        %v9077 = vadd.f32 %v8323, %v8999
        %v9078 = vadd.f32 %v8324, %v9002
        %v9079 = vadd.f32 %v8325, %v9007
        %v9080 = vadd.f32 %v8326, %v9010
        %v9081 = vadd.f32 %v8327, %v9015
        %v9082 = vadd.f32 %v8328, %v9018
        %v9083 = vadd.f32 %v8329, %v9023
        %v9084 = vadd.f32 %v8330, %v9026
        %v9085 = vadd.f32 %v8331, %v9031
        %v9086 = vadd.f32 %v8332, %v9034
        %v9087 = vadd.f32 %v8333, %v9039
        %v9088 = vadd.f32 %v8334, %v9042
        %v9089 = vadd.f32 %v8335, %v9047
        %v9090 = vadd.f32 %v8336, %v9050
        %v9091 = vadd.f32 %v8337, %v9055
        %v9092 = vadd.f32 %v8338, %v9058
        %v9093 = vld [vmem:[%s362] sm:$0xe]
        %v9094 = vld [vmem:[%s362 + $0xc] sm:$0xe]
        %v9095 = vld [vmem:[%s362 + $0x18] sm:$0xe]
        %v9096 = vld [vmem:[%s362 + $0x24] sm:$0xe]
        %v9097 = vld [vmem:[%s362 + $0x30] sm:$0xe]
        %v9098 = vld [vmem:[%s362 + $0x3c] sm:$0xe]
        %v9099 = vld [vmem:[%s362 + $0x48] sm:$0xe]
        %v9100 = vld [vmem:[%s362 + $0x54] sm:$0xe]
        %v9101 = vld [vmem:[%s362 + $0x60] sm:$0xe]
        %v9102 = vld [vmem:[%s362 + $0x6c] sm:$0xe]
        %v9103 = vld [vmem:[%s362 + $0x78] sm:$0xe]
        %v9104 = vld [vmem:[%s362 + $0x84] sm:$0xe]
        %v9105 = vld [vmem:[%s362 + $0x90] sm:$0xe]
        %v9106 = vld [vmem:[%s362 + $0x9c] sm:$0xe]
        %v9107 = vld [vmem:[%s362 + $0xa8] sm:$0xe]
        %v9108 = vld [vmem:[%s362 + $0xb4] sm:$0xe]
        %v9157 = vrot.slane %v9093, 5
        %v9158 = vrot.slane %v9157, 4
        %v9159 = vrot.slane %v8340, 5
        %v9160 = vsel %vm2119, %v9158, %v9159
        %v9161 = vrot.slane %v9159, 4
        %v9162 = vrot.slane %v8341, 5
        %v9163 = vsel %vm2119, %v9161, %v9162
        %v9164 = vrot.slane %v9094, 5
        %v9165 = vrot.slane %v9164, 4
        %v9166 = vrot.slane %v8343, 5
        %v9167 = vsel %vm2119, %v9165, %v9166
        %v9168 = vrot.slane %v9166, 4
        %v9169 = vrot.slane %v8344, 5
        %v9170 = vsel %vm2119, %v9168, %v9169
        %v9171 = vrot.slane %v9095, 5
        %v9172 = vrot.slane %v9171, 4
        %v9173 = vrot.slane %v8346, 5
        %v9174 = vsel %vm2119, %v9172, %v9173
        %v9175 = vrot.slane %v9173, 4
        %v9176 = vrot.slane %v8347, 5
        %v9177 = vsel %vm2119, %v9175, %v9176
        %v9178 = vrot.slane %v9096, 5
        %v9179 = vrot.slane %v9178, 4
        %v9180 = vrot.slane %v8349, 5
        %v9181 = vsel %vm2119, %v9179, %v9180
        %v9182 = vrot.slane %v9180, 4
        %v9183 = vrot.slane %v8350, 5
        %v9184 = vsel %vm2119, %v9182, %v9183
        %v9185 = vrot.slane %v9097, 5
        %v9186 = vrot.slane %v9185, 4
        %v9187 = vrot.slane %v8352, 5
        %v9188 = vsel %vm2119, %v9186, %v9187
        %v9189 = vrot.slane %v9187, 4
        %v9190 = vrot.slane %v8353, 5
        %v9191 = vsel %vm2119, %v9189, %v9190
        %v9192 = vrot.slane %v9098, 5
        %v9193 = vrot.slane %v9192, 4
        %v9194 = vrot.slane %v8355, 5
        %v9195 = vsel %vm2119, %v9193, %v9194
        %v9196 = vrot.slane %v9194, 4
        %v9197 = vrot.slane %v8356, 5
        %v9198 = vsel %vm2119, %v9196, %v9197
        %v9199 = vrot.slane %v9099, 5
        %v9200 = vrot.slane %v9199, 4
        %v9201 = vrot.slane %v8358, 5
        %v9202 = vsel %vm2119, %v9200, %v9201
        %v9203 = vrot.slane %v9201, 4
        %v9204 = vrot.slane %v8359, 5
        %v9205 = vsel %vm2119, %v9203, %v9204
        %v9206 = vrot.slane %v9100, 5
        %v9207 = vrot.slane %v9206, 4
        %v9208 = vrot.slane %v8361, 5
        %v9209 = vsel %vm2119, %v9207, %v9208
        %v9210 = vrot.slane %v9208, 4
        %v9211 = vrot.slane %v8362, 5
        %v9212 = vsel %vm2119, %v9210, %v9211
        %v9213 = vrot.slane %v9101, 5
        %v9214 = vrot.slane %v9213, 4
        %v9215 = vrot.slane %v8364, 5
        %v9216 = vsel %vm2119, %v9214, %v9215
        %v9217 = vrot.slane %v9215, 4
        %v9218 = vrot.slane %v8365, 5
        %v9219 = vsel %vm2119, %v9217, %v9218
        %v9220 = vrot.slane %v9102, 5
        %v9221 = vrot.slane %v9220, 4
        %v9222 = vrot.slane %v8367, 5
        %v9223 = vsel %vm2119, %v9221, %v9222
        %v9224 = vrot.slane %v9222, 4
        %v9225 = vrot.slane %v8368, 5
        %v9226 = vsel %vm2119, %v9224, %v9225
        %v9227 = vrot.slane %v9103, 5
        %v9228 = vrot.slane %v9227, 4
        %v9229 = vrot.slane %v8370, 5
        %v9230 = vsel %vm2119, %v9228, %v9229
        %v9231 = vrot.slane %v9229, 4
        %v9232 = vrot.slane %v8371, 5
        %v9233 = vsel %vm2119, %v9231, %v9232
        %v9234 = vrot.slane %v9104, 5
        %v9235 = vrot.slane %v9234, 4
        %v9236 = vrot.slane %v8373, 5
        %v9237 = vsel %vm2119, %v9235, %v9236
        %v9238 = vrot.slane %v9236, 4
        %v9239 = vrot.slane %v8374, 5
        %v9240 = vsel %vm2119, %v9238, %v9239
        %v9241 = vrot.slane %v9105, 5
        %v9242 = vrot.slane %v9241, 4
        %v9243 = vrot.slane %v8376, 5
        %v9244 = vsel %vm2119, %v9242, %v9243
        %v9245 = vrot.slane %v9243, 4
        %v9246 = vrot.slane %v8377, 5
        %v9247 = vsel %vm2119, %v9245, %v9246
        %v9248 = vrot.slane %v9106, 5
        %v9249 = vrot.slane %v9248, 4
        %v9250 = vrot.slane %v8379, 5
        %v9251 = vsel %vm2119, %v9249, %v9250
        %v9252 = vrot.slane %v9250, 4
        %v9253 = vrot.slane %v8380, 5
        %v9254 = vsel %vm2119, %v9252, %v9253
        %v9255 = vrot.slane %v9107, 5
        %v9256 = vrot.slane %v9255, 4
        %v9257 = vrot.slane %v8382, 5
        %v9258 = vsel %vm2119, %v9256, %v9257
        %v9259 = vrot.slane %v9257, 4
        %v9260 = vrot.slane %v8383, 5
        %v9261 = vsel %vm2119, %v9259, %v9260
        %v9262 = vrot.slane %v9108, 5
        %v9263 = vrot.slane %v9262, 4
        %v9264 = vrot.slane %v8385, 5
        %v9265 = vsel %vm2119, %v9263, %v9264
        %v9266 = vrot.slane %v9264, 4
        %v9267 = vrot.slane %v8386, 5
        %v9268 = vsel %vm2119, %v9266, %v9267
        %s9269 = scalar_lea.vmem [#allocation9], 320
        %v9270 = vld [vmem:[%s9269] sm:$0xf]
        %v9271 = vld [vmem:[%s9269 + $0x4] sm:$0xf]
        %v9272 = vld [vmem:[%s9269 + $0x8] sm:$0xf]
        %v9273 = vld [vmem:[%s9269 + $0xc] sm:$0xf]
        %v9274 = vld [vmem:[%s9269 + $0x10] sm:$0xf]
        %v9275 = vld [vmem:[%s9269 + $0x14] sm:$0xf]
        %v9276 = vld [vmem:[%s9269 + $0x18] sm:$0xf]
        %v9277 = vld [vmem:[%s9269 + $0x1c] sm:$0xf]
        %v9278 = vld [vmem:[%s9269 + $0x20] sm:$0xf]
        %v9279 = vld [vmem:[%s9269 + $0x24] sm:$0xf]
        %v9280 = vld [vmem:[%s9269 + $0x28] sm:$0xf]
        %v9281 = vld [vmem:[%s9269 + $0x2c] sm:$0xf]
        %v9282 = vld [vmem:[%s9269 + $0x30] sm:$0xf]
        %v9283 = vld [vmem:[%s9269 + $0x34] sm:$0xf]
        %v9284 = vld [vmem:[%s9269 + $0x38] sm:$0xf]
        %v9285 = vld [vmem:[%s9269 + $0x3c] sm:$0xf]
        %v9286 = vunpack.c.l.b16 %v9160
        %v9287 = vunpack.c.l.b16 %v9163
        %v9288 = vunpack.c.l.b16 %v9167
        %v9289 = vunpack.c.l.b16 %v9170
        %v9290 = vunpack.c.l.b16 %v9174
        %v9291 = vunpack.c.l.b16 %v9177
        %v9292 = vunpack.c.l.b16 %v9181
        %v9293 = vunpack.c.l.b16 %v9184
        %v9294 = vunpack.c.l.b16 %v9188
        %v9295 = vunpack.c.l.b16 %v9191
        %v9296 = vunpack.c.l.b16 %v9195
        %v9297 = vunpack.c.l.b16 %v9198
        %v9298 = vunpack.c.l.b16 %v9202
        %v9299 = vunpack.c.l.b16 %v9205
        %v9300 = vunpack.c.l.b16 %v9209
        %v9301 = vunpack.c.l.b16 %v9212
        %v9302 = vunpack.c.l.b16 %v9216
        %v9303 = vunpack.c.l.b16 %v9219
        %v9304 = vunpack.c.l.b16 %v9223
        %v9305 = vunpack.c.l.b16 %v9226
        %v9306 = vunpack.c.l.b16 %v9230
        %v9307 = vunpack.c.l.b16 %v9233
        %v9308 = vunpack.c.l.b16 %v9237
        %v9309 = vunpack.c.l.b16 %v9240
        %v9310 = vunpack.c.l.b16 %v9244
        %v9311 = vunpack.c.l.b16 %v9247
        %v9312 = vunpack.c.l.b16 %v9251
        %v9313 = vunpack.c.l.b16 %v9254
        %v9314 = vunpack.c.l.b16 %v9258
        %v9315 = vunpack.c.l.b16 %v9261
        %v9316 = vunpack.c.l.b16 %v9265
        %v9317 = vunpack.c.l.b16 %v9268
        %v9318 = vpack.c.b16 %v9287, %v9286
        %v9319 = vpack.c.b16 %v9289, %v9288
        %v9320 = vpack.c.b16 %v9291, %v9290
        %v9321 = vpack.c.b16 %v9293, %v9292
        %v9322 = vpack.c.b16 %v9295, %v9294
        %v9323 = vpack.c.b16 %v9297, %v9296
        %v9324 = vpack.c.b16 %v9299, %v9298
        %v9325 = vpack.c.b16 %v9301, %v9300
        %v9326 = vpack.c.b16 %v9303, %v9302
        %v9327 = vpack.c.b16 %v9305, %v9304
        %v9328 = vpack.c.b16 %v9307, %v9306
        %v9329 = vpack.c.b16 %v9309, %v9308
        %v9330 = vpack.c.b16 %v9311, %v9310
        %v9331 = vpack.c.b16 %v9313, %v9312
        %v9332 = vpack.c.b16 %v9315, %v9314
        %v9333 = vpack.c.b16 %v9317, %v9316
        %v9366 = vunpack.c.l.b16 %v9270
        %v9367 = vunpack.c.l.b16 %v9271
        %v9368 = vunpack.c.l.b16 %v9272
        %v9369 = vunpack.c.l.b16 %v9273
        %v9370 = vunpack.c.l.b16 %v9274
        %v9371 = vunpack.c.l.b16 %v9275
        %v9372 = vunpack.c.l.b16 %v9276
        %v9373 = vunpack.c.l.b16 %v9277
        %v9374 = vunpack.c.l.b16 %v9278
        %v9375 = vunpack.c.l.b16 %v9279
        %v9376 = vunpack.c.l.b16 %v9280
        %v9377 = vunpack.c.l.b16 %v9281
        %v9378 = vunpack.c.l.b16 %v9282
        %v9379 = vunpack.c.l.b16 %v9283
        %v9380 = vunpack.c.l.b16 %v9284
        %v9381 = vunpack.c.l.b16 %v9285
        %v9382 = vpack.c.b16 %v9367, %v9366
        %v9383 = vpack.c.b16 %v9369, %v9368
        %v9384 = vpack.c.b16 %v9371, %v9370
        %v9385 = vpack.c.b16 %v9373, %v9372
        %v9386 = vpack.c.b16 %v9375, %v9374
        %v9387 = vpack.c.b16 %v9377, %v9376
        %v9388 = vpack.c.b16 %v9379, %v9378
        %v9389 = vpack.c.b16 %v9381, %v9380
        %9398 = vmatprep.subr.bf16.mxu0 0
        %9399 = vmatpush1.bf16.msra.mxu0 %v9382
        %9400 = vmatprep.subr.bf16.mxu0 0
        %9401 = vmatpush1.bf16.msra.mxu0 %v9383
        %9402 = vmatprep.subr.bf16.mxu0 0
        %9403 = vmatpush1.bf16.msra.mxu0 %v9384
        %9404 = vmatprep.subr.bf16.mxu0 0
        %9405 = vmatpush1.bf16.msra.mxu0 %v9385
        %9406 = vmatprep.subr.bf16.mxu0 0
        %9407 = vmatpush1.bf16.msra.mxu0 %v9386
        %9408 = vmatprep.subr.bf16.mxu0 0
        %9409 = vmatpush1.bf16.msra.mxu0 %v9387
        %9410 = vmatprep.subr.bf16.mxu0 0
        %9411 = vmatpush1.bf16.msra.mxu0 %v9388
        %9412 = vmatprep.subr.bf16.mxu0 0
        %9413 = vmatpush1.bf16.msra.mxu0 %v9389
        %9414 = vmatprep.subr.bf16.mxu0 0
        %9415 = vmatpush1.bf16.msra.mxu0 0
        %9416 = vmatprep.subr.bf16.mxu0 0
        %9417 = vmatpush1.bf16.msra.mxu0 0
        %9418 = vmatprep.subr.bf16.mxu0 0
        %9419 = vmatpush1.bf16.msra.mxu0 0
        %9420 = vmatprep.subr.bf16.mxu0 0
        %9421 = vmatpush1.bf16.msra.mxu0 0
        %9422 = vmatprep.subr.bf16.mxu0 0
        %9423 = vmatpush1.bf16.msra.mxu0 0
        %9424 = vmatprep.subr.bf16.mxu0 0
        %9425 = vmatpush1.bf16.msra.mxu0 0
        %9426 = vmatprep.subr.bf16.mxu0 0
        %9427 = vmatpush1.bf16.msra.mxu0 0
        %9428 = vmatprep.subr.bf16.mxu0 0
        %9429 = vmatpush1.bf16.msra.mxu0 0
        %9430 = vmatprep.mubr.bf16.mxu0 0
        %9431 = vmatmul.mubr.bf16.gmra.mrb[0].mxu0 %v9318
        %v9432 = vpop.f32.mrb[0].mxu0
        %v9433 = vadd.f32 0.0, %v9432
        %v9434 = vpop.f32.mrb[0].mxu0
        %v9435 = vpop.f32.mrb[0].mxu0
        %v9436 = vadd.f32 0.0, %v9435
        %v9437 = vpop.f32.mrb[0].mxu0
        %9438 = vmatprep.mubr.bf16.mxu0 0
        %9439 = vmatmul.mubr.bf16.gmra.mrb[0].mxu0 %v9319
        %v9440 = vpop.f32.mrb[0].mxu0
        %v9441 = vadd.f32 0.0, %v9440
        %v9442 = vpop.f32.mrb[0].mxu0
        %v9443 = vpop.f32.mrb[0].mxu0
        %v9444 = vadd.f32 0.0, %v9443
        %v9445 = vpop.f32.mrb[0].mxu0
        %9446 = vmatprep.mubr.bf16.mxu0 0
        %9447 = vmatmul.mubr.bf16.gmra.mrb[0].mxu0 %v9320
        %v9448 = vpop.f32.mrb[0].mxu0
        %v9449 = vadd.f32 0.0, %v9448
        %v9450 = vpop.f32.mrb[0].mxu0
        %v9451 = vpop.f32.mrb[0].mxu0
        %v9452 = vadd.f32 0.0, %v9451
        %v9453 = vpop.f32.mrb[0].mxu0
        %9454 = vmatprep.mubr.bf16.mxu0 0
        %9455 = vmatmul.mubr.bf16.gmra.mrb[0].mxu0 %v9321
        %v9456 = vpop.f32.mrb[0].mxu0
        %v9457 = vadd.f32 0.0, %v9456
        %v9458 = vpop.f32.mrb[0].mxu0
        %v9459 = vpop.f32.mrb[0].mxu0
        %v9460 = vadd.f32 0.0, %v9459
        %v9461 = vpop.f32.mrb[0].mxu0
        %9462 = vmatprep.mubr.bf16.mxu0 0
        %9463 = vmatmul.mubr.bf16.gmra.mrb[0].mxu0 %v9322
        %v9464 = vpop.f32.mrb[0].mxu0
        %v9465 = vadd.f32 0.0, %v9464
        %v9466 = vpop.f32.mrb[0].mxu0
        %v9467 = vpop.f32.mrb[0].mxu0
        %v9468 = vadd.f32 0.0, %v9467
        %v9469 = vpop.f32.mrb[0].mxu0
        %9470 = vmatprep.mubr.bf16.mxu0 0
        %9471 = vmatmul.mubr.bf16.gmra.mrb[0].mxu0 %v9323
        %v9472 = vpop.f32.mrb[0].mxu0
        %v9473 = vadd.f32 0.0, %v9472
        %v9474 = vpop.f32.mrb[0].mxu0
        %v9475 = vpop.f32.mrb[0].mxu0
        %v9476 = vadd.f32 0.0, %v9475
        %v9477 = vpop.f32.mrb[0].mxu0
        %9478 = vmatprep.mubr.bf16.mxu0 0
        %9479 = vmatmul.mubr.bf16.gmra.mrb[0].mxu0 %v9324
        %v9480 = vpop.f32.mrb[0].mxu0
        %v9481 = vadd.f32 0.0, %v9480
        %v9482 = vpop.f32.mrb[0].mxu0
        %v9483 = vpop.f32.mrb[0].mxu0
        %v9484 = vadd.f32 0.0, %v9483
        %v9485 = vpop.f32.mrb[0].mxu0
        %9486 = vmatprep.mubr.bf16.mxu0 0
        %9487 = vmatmul.mubr.bf16.gmra.mrb[0].mxu0 %v9325
        %v9488 = vpop.f32.mrb[0].mxu0
        %v9489 = vadd.f32 0.0, %v9488
        %v9490 = vpop.f32.mrb[0].mxu0
        %v9491 = vpop.f32.mrb[0].mxu0
        %v9492 = vadd.f32 0.0, %v9491
        %v9493 = vpop.f32.mrb[0].mxu0
        %9494 = vmatprep.mubr.bf16.mxu0 0
        %9495 = vmatmul.mubr.bf16.gmra.mrb[0].mxu0 %v9326
        %v9496 = vpop.f32.mrb[0].mxu0
        %v9497 = vadd.f32 0.0, %v9496
        %v9498 = vpop.f32.mrb[0].mxu0
        %v9499 = vpop.f32.mrb[0].mxu0
        %v9500 = vadd.f32 0.0, %v9499
        %v9501 = vpop.f32.mrb[0].mxu0
        %9502 = vmatprep.mubr.bf16.mxu0 0
        %9503 = vmatmul.mubr.bf16.gmra.mrb[0].mxu0 %v9327
        %v9504 = vpop.f32.mrb[0].mxu0
        %v9505 = vadd.f32 0.0, %v9504
        %v9506 = vpop.f32.mrb[0].mxu0
        %v9507 = vpop.f32.mrb[0].mxu0
        %v9508 = vadd.f32 0.0, %v9507
        %v9509 = vpop.f32.mrb[0].mxu0
        %9510 = vmatprep.mubr.bf16.mxu0 0
        %9511 = vmatmul.mubr.bf16.gmra.mrb[0].mxu0 %v9328
        %v9512 = vpop.f32.mrb[0].mxu0
        %v9513 = vadd.f32 0.0, %v9512
        %v9514 = vpop.f32.mrb[0].mxu0
        %v9515 = vpop.f32.mrb[0].mxu0
        %v9516 = vadd.f32 0.0, %v9515
        %v9517 = vpop.f32.mrb[0].mxu0
        %9518 = vmatprep.mubr.bf16.mxu0 0
        %9519 = vmatmul.mubr.bf16.gmra.mrb[0].mxu0 %v9329
        %v9520 = vpop.f32.mrb[0].mxu0
        %v9521 = vadd.f32 0.0, %v9520
        %v9522 = vpop.f32.mrb[0].mxu0
        %v9523 = vpop.f32.mrb[0].mxu0
        %v9524 = vadd.f32 0.0, %v9523
        %v9525 = vpop.f32.mrb[0].mxu0
        %9526 = vmatprep.mubr.bf16.mxu0 0
        %9527 = vmatmul.mubr.bf16.gmra.mrb[0].mxu0 %v9330
        %v9528 = vpop.f32.mrb[0].mxu0
        %v9529 = vadd.f32 0.0, %v9528
        %v9530 = vpop.f32.mrb[0].mxu0
        %v9531 = vpop.f32.mrb[0].mxu0
        %v9532 = vadd.f32 0.0, %v9531
        %v9533 = vpop.f32.mrb[0].mxu0
        %9534 = vmatprep.mubr.bf16.mxu0 0
        %9535 = vmatmul.mubr.bf16.gmra.mrb[0].mxu0 %v9331
        %v9536 = vpop.f32.mrb[0].mxu0
        %v9537 = vadd.f32 0.0, %v9536
        %v9538 = vpop.f32.mrb[0].mxu0
        %v9539 = vpop.f32.mrb[0].mxu0
        %v9540 = vadd.f32 0.0, %v9539
        %v9541 = vpop.f32.mrb[0].mxu0
        %9542 = vmatprep.mubr.bf16.mxu0 0
        %9543 = vmatmul.mubr.bf16.gmra.mrb[0].mxu0 %v9332
        %v9544 = vpop.f32.mrb[0].mxu0
        %v9545 = vadd.f32 0.0, %v9544
        %v9546 = vpop.f32.mrb[0].mxu0
        %v9547 = vpop.f32.mrb[0].mxu0
        %v9548 = vadd.f32 0.0, %v9547
        %v9549 = vpop.f32.mrb[0].mxu0
        %9550 = vmatprep.mubr.bf16.mxu0 0
        %9551 = vmatmul.mubr.bf16.gmra.mrb[0].mxu0 %v9333
        %v9552 = vpop.f32.mrb[0].mxu0
        %v9553 = vadd.f32 0.0, %v9552
        %v9554 = vpop.f32.mrb[0].mxu0
        %v9555 = vpop.f32.mrb[0].mxu0
        %v9556 = vadd.f32 0.0, %v9555
        %v9557 = vpop.f32.mrb[0].mxu0
        %9558 = vdwg.mxu0
        %v9559 = vadd.f32 %v9061, %v9433
        %v9560 = vadd.f32 %v9062, %v9436
        %v9561 = vadd.f32 %v9063, %v9441
        %v9562 = vadd.f32 %v9064, %v9444
        %v9563 = vadd.f32 %v9065, %v9449
        %v9564 = vadd.f32 %v9066, %v9452
        %v9565 = vadd.f32 %v9067, %v9457
        %v9566 = vadd.f32 %v9068, %v9460
        %v9567 = vadd.f32 %v9069, %v9465
        %v9568 = vadd.f32 %v9070, %v9468
        %v9569 = vadd.f32 %v9071, %v9473
        %v9570 = vadd.f32 %v9072, %v9476
        %v9571 = vadd.f32 %v9073, %v9481
        %v9572 = vadd.f32 %v9074, %v9484
        %v9573 = vadd.f32 %v9075, %v9489
        %v9574 = vadd.f32 %v9076, %v9492
        %v9575 = vadd.f32 %v9077, %v9497
        %v9576 = vadd.f32 %v9078, %v9500
        %v9577 = vadd.f32 %v9079, %v9505
        %v9578 = vadd.f32 %v9080, %v9508
        %v9579 = vadd.f32 %v9081, %v9513
        %v9580 = vadd.f32 %v9082, %v9516
        %v9581 = vadd.f32 %v9083, %v9521
        %v9582 = vadd.f32 %v9084, %v9524
        %v9583 = vadd.f32 %v9085, %v9529
        %v9584 = vadd.f32 %v9086, %v9532
        %v9585 = vadd.f32 %v9087, %v9537
        %v9586 = vadd.f32 %v9088, %v9540
        %v9587 = vadd.f32 %v9089, %v9545
        %v9588 = vadd.f32 %v9090, %v9548
        %v9589 = vadd.f32 %v9091, %v9553
        %v9590 = vadd.f32 %v9092, %v9556
        %s9591 = scalar_lea.vmem [#allocation3], 24
        %v9592 = vld [vmem:[%s9591] sm:$0xf]
        %v9593 = vld [vmem:[%s9591 + $0x4] sm:$0xf]
        %v9594 = vld [vmem:[%s9591 + $0xc] sm:$0xf]
        %v9595 = vld [vmem:[%s9591 + $0x10] sm:$0xf]
        %v9596 = vld [vmem:[%s9591 + $0x18] sm:$0xf]
        %v9597 = vld [vmem:[%s9591 + $0x1c] sm:$0xf]
        %v9598 = vld [vmem:[%s9591 + $0x24] sm:$0xf]
        %v9599 = vld [vmem:[%s9591 + $0x28] sm:$0xf]
        %v9600 = vld [vmem:[%s9591 + $0x30] sm:$0xf]
        %v9601 = vld [vmem:[%s9591 + $0x34] sm:$0xf]
        %v9602 = vld [vmem:[%s9591 + $0x3c] sm:$0xf]
        %v9603 = vld [vmem:[%s9591 + $0x40] sm:$0xf]
        %v9604 = vld [vmem:[%s9591 + $0x48] sm:$0xf]
        %v9605 = vld [vmem:[%s9591 + $0x4c] sm:$0xf]
        %v9606 = vld [vmem:[%s9591 + $0x54] sm:$0xf]
        %v9607 = vld [vmem:[%s9591 + $0x58] sm:$0xf]
        %v9608 = vld [vmem:[%s9591 + $0x60] sm:$0xf]
        %v9609 = vld [vmem:[%s9591 + $0x64] sm:$0xf]
        %v9610 = vld [vmem:[%s9591 + $0x6c] sm:$0xf]
        %v9611 = vld [vmem:[%s9591 + $0x70] sm:$0xf]
        %v9612 = vld [vmem:[%s9591 + $0x78] sm:$0xf]
        %v9613 = vld [vmem:[%s9591 + $0x7c] sm:$0xf]
        %v9614 = vld [vmem:[%s9591 + $0x84] sm:$0xf]
        %v9615 = vld [vmem:[%s9591 + $0x88] sm:$0xf]
        %v9616 = vld [vmem:[%s9591 + $0x90] sm:$0xf]
        %v9617 = vld [vmem:[%s9591 + $0x94] sm:$0xf]
        %v9618 = vld [vmem:[%s9591 + $0x9c] sm:$0xf]
        %v9619 = vld [vmem:[%s9591 + $0xa0] sm:$0xf]
        %v9620 = vld [vmem:[%s9591 + $0xa8] sm:$0xf]
        %v9621 = vld [vmem:[%s9591 + $0xac] sm:$0xf]
        %v9622 = vld [vmem:[%s9591 + $0xb4] sm:$0xf]
        %v9623 = vld [vmem:[%s9591 + $0xb8] sm:$0xf]
        %s9624 = scalar_lea.vmem [#allocation9], 384
        %v9625 = vld [vmem:[%s9624] sm:$0xf]
        %v9626 = vld [vmem:[%s9624 + $0x4] sm:$0xf]
        %v9627 = vld [vmem:[%s9624 + $0x8] sm:$0xf]
        %v9628 = vld [vmem:[%s9624 + $0xc] sm:$0xf]
        %v9629 = vld [vmem:[%s9624 + $0x10] sm:$0xf]
        %v9630 = vld [vmem:[%s9624 + $0x14] sm:$0xf]
        %v9631 = vld [vmem:[%s9624 + $0x18] sm:$0xf]
        %v9632 = vld [vmem:[%s9624 + $0x1c] sm:$0xf]
        %v9633 = vld [vmem:[%s9624 + $0x20] sm:$0xf]
        %v9634 = vld [vmem:[%s9624 + $0x24] sm:$0xf]
        %v9635 = vld [vmem:[%s9624 + $0x28] sm:$0xf]
        %v9636 = vld [vmem:[%s9624 + $0x2c] sm:$0xf]
        %v9637 = vld [vmem:[%s9624 + $0x30] sm:$0xf]
        %v9638 = vld [vmem:[%s9624 + $0x34] sm:$0xf]
        %v9639 = vld [vmem:[%s9624 + $0x38] sm:$0xf]
        %v9640 = vld [vmem:[%s9624 + $0x3c] sm:$0xf]
        %v9673 = vunpack.c.l.b16 %v9592
        %v9674 = vunpack.c.l.b16 %v9593
        %v9675 = vunpack.c.l.b16 %v9594
        %v9676 = vunpack.c.l.b16 %v9595
        %v9677 = vunpack.c.l.b16 %v9596
        %v9678 = vunpack.c.l.b16 %v9597
        %v9679 = vunpack.c.l.b16 %v9598
        %v9680 = vunpack.c.l.b16 %v9599
        %v9681 = vunpack.c.l.b16 %v9600
        %v9682 = vunpack.c.l.b16 %v9601
        %v9683 = vunpack.c.l.b16 %v9602
        %v9684 = vunpack.c.l.b16 %v9603
        %v9685 = vunpack.c.l.b16 %v9604
        %v9686 = vunpack.c.l.b16 %v9605
        %v9687 = vunpack.c.l.b16 %v9606
        %v9688 = vunpack.c.l.b16 %v9607
        %v9689 = vunpack.c.l.b16 %v9608
        %v9690 = vunpack.c.l.b16 %v9609
        %v9691 = vunpack.c.l.b16 %v9610
        %v9692 = vunpack.c.l.b16 %v9611
        %v9693 = vunpack.c.l.b16 %v9612
        %v9694 = vunpack.c.l.b16 %v9613
        %v9695 = vunpack.c.l.b16 %v9614
        %v9696 = vunpack.c.l.b16 %v9615
        %v9697 = vunpack.c.l.b16 %v9616
        %v9698 = vunpack.c.l.b16 %v9617
        %v9699 = vunpack.c.l.b16 %v9618
        %v9700 = vunpack.c.l.b16 %v9619
        %v9701 = vunpack.c.l.b16 %v9620
        %v9702 = vunpack.c.l.b16 %v9621
        %v9703 = vunpack.c.l.b16 %v9622
        %v9704 = vunpack.c.l.b16 %v9623
        %v9705 = vpack.c.b16 %v9674, %v9673
        %v9706 = vpack.c.b16 %v9676, %v9675
        %v9707 = vpack.c.b16 %v9678, %v9677
        %v9708 = vpack.c.b16 %v9680, %v9679
        %v9709 = vpack.c.b16 %v9682, %v9681
        %v9710 = vpack.c.b16 %v9684, %v9683
        %v9711 = vpack.c.b16 %v9686, %v9685
        %v9712 = vpack.c.b16 %v9688, %v9687
        %v9713 = vpack.c.b16 %v9690, %v9689
        %v9714 = vpack.c.b16 %v9692, %v9691
        %v9715 = vpack.c.b16 %v9694, %v9693
        %v9716 = vpack.c.b16 %v9696, %v9695
        %v9717 = vpack.c.b16 %v9698, %v9697
        %v9718 = vpack.c.b16 %v9700, %v9699
        %v9719 = vpack.c.b16 %v9702, %v9701
        %v9720 = vpack.c.b16 %v9704, %v9703
        %v9753 = vunpack.c.l.b16 %v9625
        %v9754 = vunpack.c.l.b16 %v9626
        %v9755 = vunpack.c.l.b16 %v9627
        %v9756 = vunpack.c.l.b16 %v9628
        %v9757 = vunpack.c.l.b16 %v9629
        %v9758 = vunpack.c.l.b16 %v9630
        %v9759 = vunpack.c.l.b16 %v9631
        %v9760 = vunpack.c.l.b16 %v9632
        %v9761 = vunpack.c.l.b16 %v9633
        %v9762 = vunpack.c.l.b16 %v9634
        %v9763 = vunpack.c.l.b16 %v9635
        %v9764 = vunpack.c.l.b16 %v9636
        %v9765 = vunpack.c.l.b16 %v9637
        %v9766 = vunpack.c.l.b16 %v9638
        %v9767 = vunpack.c.l.b16 %v9639
        %v9768 = vunpack.c.l.b16 %v9640
        %v9769 = vpack.c.b16 %v9754, %v9753
        %v9770 = vpack.c.b16 %v9756, %v9755
        %v9771 = vpack.c.b16 %v9758, %v9757
        %v9772 = vpack.c.b16 %v9760, %v9759
        %v9773 = vpack.c.b16 %v9762, %v9761
        %v9774 = vpack.c.b16 %v9764, %v9763
        %v9775 = vpack.c.b16 %v9766, %v9765
        %v9776 = vpack.c.b16 %v9768, %v9767
        %9785 = vmatprep.subr.bf16.mxu0 0
        %9786 = vmatpush1.bf16.msra.mxu0 %v9769
        %9787 = vmatprep.subr.bf16.mxu0 0
        %9788 = vmatpush1.bf16.msra.mxu0 %v9770
        %9789 = vmatprep.subr.bf16.mxu0 0
        %9790 = vmatpush1.bf16.msra.mxu0 %v9771
        %9791 = vmatprep.subr.bf16.mxu0 0
        %9792 = vmatpush1.bf16.msra.mxu0 %v9772
        %9793 = vmatprep.subr.bf16.mxu0 0
        %9794 = vmatpush1.bf16.msra.mxu0 %v9773
        %9795 = vmatprep.subr.bf16.mxu0 0
        %9796 = vmatpush1.bf16.msra.mxu0 %v9774
        %9797 = vmatprep.subr.bf16.mxu0 0
        %9798 = vmatpush1.bf16.msra.mxu0 %v9775
        %9799 = vmatprep.subr.bf16.mxu0 0
        %9800 = vmatpush1.bf16.msra.mxu0 %v9776
        %9801 = vmatprep.subr.bf16.mxu0 0
        %9802 = vmatpush1.bf16.msra.mxu0 0
        %9803 = vmatprep.subr.bf16.mxu0 0
        %9804 = vmatpush1.bf16.msra.mxu0 0
        %9805 = vmatprep.subr.bf16.mxu0 0
        %9806 = vmatpush1.bf16.msra.mxu0 0
        %9807 = vmatprep.subr.bf16.mxu0 0
        %9808 = vmatpush1.bf16.msra.mxu0 0
        %9809 = vmatprep.subr.bf16.mxu0 0
        %9810 = vmatpush1.bf16.msra.mxu0 0
        %9811 = vmatprep.subr.bf16.mxu0 0
        %9812 = vmatpush1.bf16.msra.mxu0 0
        %9813 = vmatprep.subr.bf16.mxu0 0
        %9814 = vmatpush1.bf16.msra.mxu0 0
        %9815 = vmatprep.subr.bf16.mxu0 0
        %9816 = vmatpush1.bf16.msra.mxu0 0
        %9817 = vmatprep.mubr.bf16.mxu0 0
        %9818 = vmatmul.mubr.bf16.gmra.mrb[0].mxu0 %v9705
        %v9819 = vpop.f32.mrb[0].mxu0
        %v9820 = vadd.f32 0.0, %v9819
        %v9821 = vpop.f32.mrb[0].mxu0
        %v9822 = vpop.f32.mrb[0].mxu0
        %v9823 = vadd.f32 0.0, %v9822
        %v9824 = vpop.f32.mrb[0].mxu0
        %9825 = vmatprep.mubr.bf16.mxu0 0
        %9826 = vmatmul.mubr.bf16.gmra.mrb[0].mxu0 %v9706
        %v9827 = vpop.f32.mrb[0].mxu0
        %v9828 = vadd.f32 0.0, %v9827
        %v9829 = vpop.f32.mrb[0].mxu0
        %v9830 = vpop.f32.mrb[0].mxu0
        %v9831 = vadd.f32 0.0, %v9830
        %v9832 = vpop.f32.mrb[0].mxu0
        %9833 = vmatprep.mubr.bf16.mxu0 0
        %9834 = vmatmul.mubr.bf16.gmra.mrb[0].mxu0 %v9707
        %v9835 = vpop.f32.mrb[0].mxu0
        %v9836 = vadd.f32 0.0, %v9835
        %v9837 = vpop.f32.mrb[0].mxu0
        %v9838 = vpop.f32.mrb[0].mxu0
        %v9839 = vadd.f32 0.0, %v9838
        %v9840 = vpop.f32.mrb[0].mxu0
        %9841 = vmatprep.mubr.bf16.mxu0 0
        %9842 = vmatmul.mubr.bf16.gmra.mrb[0].mxu0 %v9708
        %v9843 = vpop.f32.mrb[0].mxu0
        %v9844 = vadd.f32 0.0, %v9843
        %v9845 = vpop.f32.mrb[0].mxu0
        %v9846 = vpop.f32.mrb[0].mxu0
        %v9847 = vadd.f32 0.0, %v9846
        %v9848 = vpop.f32.mrb[0].mxu0
        %9849 = vmatprep.mubr.bf16.mxu0 0
        %9850 = vmatmul.mubr.bf16.gmra.mrb[0].mxu0 %v9709
        %v9851 = vpop.f32.mrb[0].mxu0
        %v9852 = vadd.f32 0.0, %v9851
        %v9853 = vpop.f32.mrb[0].mxu0
        %v9854 = vpop.f32.mrb[0].mxu0
        %v9855 = vadd.f32 0.0, %v9854
        %v9856 = vpop.f32.mrb[0].mxu0
        %9857 = vmatprep.mubr.bf16.mxu0 0
        %9858 = vmatmul.mubr.bf16.gmra.mrb[0].mxu0 %v9710
        %v9859 = vpop.f32.mrb[0].mxu0
        %v9860 = vadd.f32 0.0, %v9859
        %v9861 = vpop.f32.mrb[0].mxu0
        %v9862 = vpop.f32.mrb[0].mxu0
        %v9863 = vadd.f32 0.0, %v9862
        %v9864 = vpop.f32.mrb[0].mxu0
        %9865 = vmatprep.mubr.bf16.mxu0 0
        %9866 = vmatmul.mubr.bf16.gmra.mrb[0].mxu0 %v9711
        %v9867 = vpop.f32.mrb[0].mxu0
        %v9868 = vadd.f32 0.0, %v9867
        %v9869 = vpop.f32.mrb[0].mxu0
        %v9870 = vpop.f32.mrb[0].mxu0
        %v9871 = vadd.f32 0.0, %v9870
        %v9872 = vpop.f32.mrb[0].mxu0
        %9873 = vmatprep.mubr.bf16.mxu0 0
        %9874 = vmatmul.mubr.bf16.gmra.mrb[0].mxu0 %v9712
        %v9875 = vpop.f32.mrb[0].mxu0
        %v9876 = vadd.f32 0.0, %v9875
        %v9877 = vpop.f32.mrb[0].mxu0
        %v9878 = vpop.f32.mrb[0].mxu0
        %v9879 = vadd.f32 0.0, %v9878
        %v9880 = vpop.f32.mrb[0].mxu0
        %9881 = vmatprep.mubr.bf16.mxu0 0
        %9882 = vmatmul.mubr.bf16.gmra.mrb[0].mxu0 %v9713
        %v9883 = vpop.f32.mrb[0].mxu0
        %v9884 = vadd.f32 0.0, %v9883
        %v9885 = vpop.f32.mrb[0].mxu0
        %v9886 = vpop.f32.mrb[0].mxu0
        %v9887 = vadd.f32 0.0, %v9886
        %v9888 = vpop.f32.mrb[0].mxu0
        %9889 = vmatprep.mubr.bf16.mxu0 0
        %9890 = vmatmul.mubr.bf16.gmra.mrb[0].mxu0 %v9714
        %v9891 = vpop.f32.mrb[0].mxu0
        %v9892 = vadd.f32 0.0, %v9891
        %v9893 = vpop.f32.mrb[0].mxu0
        %v9894 = vpop.f32.mrb[0].mxu0
        %v9895 = vadd.f32 0.0, %v9894
        %v9896 = vpop.f32.mrb[0].mxu0
        %9897 = vmatprep.mubr.bf16.mxu0 0
        %9898 = vmatmul.mubr.bf16.gmra.mrb[0].mxu0 %v9715
        %v9899 = vpop.f32.mrb[0].mxu0
        %v9900 = vadd.f32 0.0, %v9899
        %v9901 = vpop.f32.mrb[0].mxu0
        %v9902 = vpop.f32.mrb[0].mxu0
        %v9903 = vadd.f32 0.0, %v9902
        %v9904 = vpop.f32.mrb[0].mxu0
        %9905 = vmatprep.mubr.bf16.mxu0 0
        %9906 = vmatmul.mubr.bf16.gmra.mrb[0].mxu0 %v9716
        %v9907 = vpop.f32.mrb[0].mxu0
        %v9908 = vadd.f32 0.0, %v9907
        %v9909 = vpop.f32.mrb[0].mxu0
        %v9910 = vpop.f32.mrb[0].mxu0
        %v9911 = vadd.f32 0.0, %v9910
        %v9912 = vpop.f32.mrb[0].mxu0
        %9913 = vmatprep.mubr.bf16.mxu0 0
        %9914 = vmatmul.mubr.bf16.gmra.mrb[0].mxu0 %v9717
        %v9915 = vpop.f32.mrb[0].mxu0
        %v9916 = vadd.f32 0.0, %v9915
        %v9917 = vpop.f32.mrb[0].mxu0
        %v9918 = vpop.f32.mrb[0].mxu0
        %v9919 = vadd.f32 0.0, %v9918
        %v9920 = vpop.f32.mrb[0].mxu0
        %9921 = vmatprep.mubr.bf16.mxu0 0
        %9922 = vmatmul.mubr.bf16.gmra.mrb[0].mxu0 %v9718
        %v9923 = vpop.f32.mrb[0].mxu0
        %v9924 = vadd.f32 0.0, %v9923
        %v9925 = vpop.f32.mrb[0].mxu0
        %v9926 = vpop.f32.mrb[0].mxu0
        %v9927 = vadd.f32 0.0, %v9926
        %v9928 = vpop.f32.mrb[0].mxu0
        %9929 = vmatprep.mubr.bf16.mxu0 0
        %9930 = vmatmul.mubr.bf16.gmra.mrb[0].mxu0 %v9719
        %v9931 = vpop.f32.mrb[0].mxu0
        %v9932 = vadd.f32 0.0, %v9931
        %v9933 = vpop.f32.mrb[0].mxu0
        %v9934 = vpop.f32.mrb[0].mxu0
        %v9935 = vadd.f32 0.0, %v9934
        %v9936 = vpop.f32.mrb[0].mxu0
        %9937 = vmatprep.mubr.bf16.mxu0 0
        %9938 = vmatmul.mubr.bf16.gmra.mrb[0].mxu0 %v9720
        %v9939 = vpop.f32.mrb[0].mxu0
        %v9940 = vadd.f32 0.0, %v9939
        %v9941 = vpop.f32.mrb[0].mxu0
        %v9942 = vpop.f32.mrb[0].mxu0
        %v9943 = vadd.f32 0.0, %v9942
        %v9944 = vpop.f32.mrb[0].mxu0
        %9945 = vdwg.mxu0
        %v9946 = vadd.f32 %v9559, %v9820
        %v9947 = vadd.f32 %v9560, %v9823
        %v9948 = vadd.f32 %v9561, %v9828
        %v9949 = vadd.f32 %v9562, %v9831
        %v9950 = vadd.f32 %v9563, %v9836
        %v9951 = vadd.f32 %v9564, %v9839
        %v9952 = vadd.f32 %v9565, %v9844
        %v9953 = vadd.f32 %v9566, %v9847
        %v9954 = vadd.f32 %v9567, %v9852
        %v9955 = vadd.f32 %v9568, %v9855
        %v9956 = vadd.f32 %v9569, %v9860
        %v9957 = vadd.f32 %v9570, %v9863
        %v9958 = vadd.f32 %v9571, %v9868
        %v9959 = vadd.f32 %v9572, %v9871
        %v9960 = vadd.f32 %v9573, %v9876
        %v9961 = vadd.f32 %v9574, %v9879
        %v9962 = vadd.f32 %v9575, %v9884
        %v9963 = vadd.f32 %v9576, %v9887
        %v9964 = vadd.f32 %v9577, %v9892
        %v9965 = vadd.f32 %v9578, %v9895
        %v9966 = vadd.f32 %v9579, %v9900
        %v9967 = vadd.f32 %v9580, %v9903
        %v9968 = vadd.f32 %v9581, %v9908
        %v9969 = vadd.f32 %v9582, %v9911
        %v9970 = vadd.f32 %v9583, %v9916
        %v9971 = vadd.f32 %v9584, %v9919
        %v9972 = vadd.f32 %v9585, %v9924
        %v9973 = vadd.f32 %v9586, %v9927
        %v9974 = vadd.f32 %v9587, %v9932
        %v9975 = vadd.f32 %v9588, %v9935
        %v9976 = vadd.f32 %v9589, %v9940
        %v9977 = vadd.f32 %v9590, %v9943
        %v9978 = vld [vmem:[%s9591] sm:$0xf]
        %v9979 = vld [vmem:[%s9591 + $0x4] sm:$0xf]
        %v9980 = vld [vmem:[%s9591 + $0x8] sm:$0x1]
        %v9981 = vld [vmem:[%s9591 + $0xc] sm:$0xf]
        %v9982 = vld [vmem:[%s9591 + $0x10] sm:$0xf]
        %v9983 = vld [vmem:[%s9591 + $0x14] sm:$0x1]
        %v9984 = vld [vmem:[%s9591 + $0x18] sm:$0xf]
        %v9985 = vld [vmem:[%s9591 + $0x1c] sm:$0xf]
        %v9986 = vld [vmem:[%s9591 + $0x20] sm:$0x1]
        %v9987 = vld [vmem:[%s9591 + $0x24] sm:$0xf]
        %v9988 = vld [vmem:[%s9591 + $0x28] sm:$0xf]
        %v9989 = vld [vmem:[%s9591 + $0x2c] sm:$0x1]
        %v9990 = vld [vmem:[%s9591 + $0x30] sm:$0xf]
        %v9991 = vld [vmem:[%s9591 + $0x34] sm:$0xf]
        %v9992 = vld [vmem:[%s9591 + $0x38] sm:$0x1]
        %v9993 = vld [vmem:[%s9591 + $0x3c] sm:$0xf]
        %v9994 = vld [vmem:[%s9591 + $0x40] sm:$0xf]
        %v9995 = vld [vmem:[%s9591 + $0x44] sm:$0x1]
        %v9996 = vld [vmem:[%s9591 + $0x48] sm:$0xf]
        %v9997 = vld [vmem:[%s9591 + $0x4c] sm:$0xf]
        %v9998 = vld [vmem:[%s9591 + $0x50] sm:$0x1]
        %v9999 = vld [vmem:[%s9591 + $0x54] sm:$0xf]
        %v10000 = vld [vmem:[%s9591 + $0x58] sm:$0xf]
        %v10001 = vld [vmem:[%s9591 + $0x5c] sm:$0x1]
        %v10002 = vld [vmem:[%s9591 + $0x60] sm:$0xf]
        %v10003 = vld [vmem:[%s9591 + $0x64] sm:$0xf]
        %v10004 = vld [vmem:[%s9591 + $0x68] sm:$0x1]
        %v10005 = vld [vmem:[%s9591 + $0x6c] sm:$0xf]
        %v10006 = vld [vmem:[%s9591 + $0x70] sm:$0xf]
        %v10007 = vld [vmem:[%s9591 + $0x74] sm:$0x1]
        %v10008 = vld [vmem:[%s9591 + $0x78] sm:$0xf]
        %v10009 = vld [vmem:[%s9591 + $0x7c] sm:$0xf]
        %v10010 = vld [vmem:[%s9591 + $0x80] sm:$0x1]
        %v10011 = vld [vmem:[%s9591 + $0x84] sm:$0xf]
        %v10012 = vld [vmem:[%s9591 + $0x88] sm:$0xf]
        %v10013 = vld [vmem:[%s9591 + $0x8c] sm:$0x1]
        %v10014 = vld [vmem:[%s9591 + $0x90] sm:$0xf]
        %v10015 = vld [vmem:[%s9591 + $0x94] sm:$0xf]
        %v10016 = vld [vmem:[%s9591 + $0x98] sm:$0x1]
        %v10017 = vld [vmem:[%s9591 + $0x9c] sm:$0xf]
        %v10018 = vld [vmem:[%s9591 + $0xa0] sm:$0xf]
        %v10019 = vld [vmem:[%s9591 + $0xa4] sm:$0x1]
        %v10020 = vld [vmem:[%s9591 + $0xa8] sm:$0xf]
        %v10021 = vld [vmem:[%s9591 + $0xac] sm:$0xf]
        %v10022 = vld [vmem:[%s9591 + $0xb0] sm:$0x1]
        %v10023 = vld [vmem:[%s9591 + $0xb4] sm:$0xf]
        %v10024 = vld [vmem:[%s9591 + $0xb8] sm:$0xf]
        %v10025 = vld [vmem:[%s9591 + $0xbc] sm:$0x1]
        %v10027 = vshrl.u32 %v9978, 16
        %v10029 = vrot.slane %v10027, 4
        %v10030 = vshll.u32 %v9978, 16
        %v10032 = vrot.slane %v10030, 5
        %v10033 = vor.u32 %v10029, %v10032
        %v10034 = vrot.slane %v10033, 4
        %v10036 = vshll.u32 %v9979, 16
        %v10038 = vrot.slane %v10036, 5
        %v10039 = vsel %vm1089, %v10034, %v10038
        %v10040 = vshrl.u32 %v9979, 16
        %v10042 = vrot.slane %v10040, 4
        %v10043 = vor.u32 %v10042, %v10038
        %v10044 = vrot.slane %v10043, 4
        %v10046 = vshll.u32 %v9980, 16
        %v10048 = vrot.slane %v10046, 5
        %v10049 = vsel %vm1089, %v10044, %v10048
        %v10051 = vshrl.u32 %v9981, 16
        %v10053 = vrot.slane %v10051, 4
        %v10054 = vshll.u32 %v9981, 16
        %v10056 = vrot.slane %v10054, 5
        %v10057 = vor.u32 %v10053, %v10056
        %v10058 = vrot.slane %v10057, 4
        %v10060 = vshll.u32 %v9982, 16
        %v10062 = vrot.slane %v10060, 5
        %v10063 = vsel %vm1089, %v10058, %v10062
        %v10064 = vshrl.u32 %v9982, 16
        %v10066 = vrot.slane %v10064, 4
        %v10067 = vor.u32 %v10066, %v10062
        %v10068 = vrot.slane %v10067, 4
        %v10070 = vshll.u32 %v9983, 16
        %v10072 = vrot.slane %v10070, 5
        %v10073 = vsel %vm1089, %v10068, %v10072
        %v10075 = vshrl.u32 %v9984, 16
        %v10077 = vrot.slane %v10075, 4
        %v10078 = vshll.u32 %v9984, 16
        %v10080 = vrot.slane %v10078, 5
        %v10081 = vor.u32 %v10077, %v10080
        %v10082 = vrot.slane %v10081, 4
        %v10084 = vshll.u32 %v9985, 16
        %v10086 = vrot.slane %v10084, 5
        %v10087 = vsel %vm1089, %v10082, %v10086
        %v10088 = vshrl.u32 %v9985, 16
        %v10090 = vrot.slane %v10088, 4
        %v10091 = vor.u32 %v10090, %v10086
        %v10092 = vrot.slane %v10091, 4
        %v10094 = vshll.u32 %v9986, 16
        %v10096 = vrot.slane %v10094, 5
        %v10097 = vsel %vm1089, %v10092, %v10096
        %v10099 = vshrl.u32 %v9987, 16
        %v10101 = vrot.slane %v10099, 4
        %v10102 = vshll.u32 %v9987, 16
        %v10104 = vrot.slane %v10102, 5
        %v10105 = vor.u32 %v10101, %v10104
        %v10106 = vrot.slane %v10105, 4
        %v10108 = vshll.u32 %v9988, 16
        %v10110 = vrot.slane %v10108, 5
        %v10111 = vsel %vm1089, %v10106, %v10110
        %v10112 = vshrl.u32 %v9988, 16
        %v10114 = vrot.slane %v10112, 4
        %v10115 = vor.u32 %v10114, %v10110
        %v10116 = vrot.slane %v10115, 4
        %v10118 = vshll.u32 %v9989, 16
        %v10120 = vrot.slane %v10118, 5
        %v10121 = vsel %vm1089, %v10116, %v10120
        %v10123 = vshrl.u32 %v9990, 16
        %v10125 = vrot.slane %v10123, 4
        %v10126 = vshll.u32 %v9990, 16
        %v10128 = vrot.slane %v10126, 5
        %v10129 = vor.u32 %v10125, %v10128
        %v10130 = vrot.slane %v10129, 4
        %v10132 = vshll.u32 %v9991, 16
        %v10134 = vrot.slane %v10132, 5
        %v10135 = vsel %vm1089, %v10130, %v10134
        %v10136 = vshrl.u32 %v9991, 16
        %v10138 = vrot.slane %v10136, 4
        %v10139 = vor.u32 %v10138, %v10134
        %v10140 = vrot.slane %v10139, 4
        %v10142 = vshll.u32 %v9992, 16
        %v10144 = vrot.slane %v10142, 5
        %v10145 = vsel %vm1089, %v10140, %v10144
        %v10147 = vshrl.u32 %v9993, 16
        %v10149 = vrot.slane %v10147, 4
        %v10150 = vshll.u32 %v9993, 16
        %v10152 = vrot.slane %v10150, 5
        %v10153 = vor.u32 %v10149, %v10152
        %v10154 = vrot.slane %v10153, 4
        %v10156 = vshll.u32 %v9994, 16
        %v10158 = vrot.slane %v10156, 5
        %v10159 = vsel %vm1089, %v10154, %v10158
        %v10160 = vshrl.u32 %v9994, 16
        %v10162 = vrot.slane %v10160, 4
        %v10163 = vor.u32 %v10162, %v10158
        %v10164 = vrot.slane %v10163, 4
        %v10166 = vshll.u32 %v9995, 16
        %v10168 = vrot.slane %v10166, 5
        %v10169 = vsel %vm1089, %v10164, %v10168
        %v10171 = vshrl.u32 %v9996, 16
        %v10173 = vrot.slane %v10171, 4
        %v10174 = vshll.u32 %v9996, 16
        %v10176 = vrot.slane %v10174, 5
        %v10177 = vor.u32 %v10173, %v10176
        %v10178 = vrot.slane %v10177, 4
        %v10180 = vshll.u32 %v9997, 16
        %v10182 = vrot.slane %v10180, 5
        %v10183 = vsel %vm1089, %v10178, %v10182
        %v10184 = vshrl.u32 %v9997, 16
        %v10186 = vrot.slane %v10184, 4
        %v10187 = vor.u32 %v10186, %v10182
        %v10188 = vrot.slane %v10187, 4
        %v10190 = vshll.u32 %v9998, 16
        %v10192 = vrot.slane %v10190, 5
        %v10193 = vsel %vm1089, %v10188, %v10192
        %v10195 = vshrl.u32 %v9999, 16
        %v10197 = vrot.slane %v10195, 4
        %v10198 = vshll.u32 %v9999, 16
        %v10200 = vrot.slane %v10198, 5
        %v10201 = vor.u32 %v10197, %v10200
        %v10202 = vrot.slane %v10201, 4
        %v10204 = vshll.u32 %v10000, 16
        %v10206 = vrot.slane %v10204, 5
        %v10207 = vsel %vm1089, %v10202, %v10206
        %v10208 = vshrl.u32 %v10000, 16
        %v10210 = vrot.slane %v10208, 4
        %v10211 = vor.u32 %v10210, %v10206
        %v10212 = vrot.slane %v10211, 4
        %v10214 = vshll.u32 %v10001, 16
        %v10216 = vrot.slane %v10214, 5
        %v10217 = vsel %vm1089, %v10212, %v10216
        %v10219 = vshrl.u32 %v10002, 16
        %v10221 = vrot.slane %v10219, 4
        %v10222 = vshll.u32 %v10002, 16
        %v10224 = vrot.slane %v10222, 5
        %v10225 = vor.u32 %v10221, %v10224
        %v10226 = vrot.slane %v10225, 4
        %v10228 = vshll.u32 %v10003, 16
        %v10230 = vrot.slane %v10228, 5
        %v10231 = vsel %vm1089, %v10226, %v10230
        %v10232 = vshrl.u32 %v10003, 16
        %v10234 = vrot.slane %v10232, 4
        %v10235 = vor.u32 %v10234, %v10230
        %v10236 = vrot.slane %v10235, 4
        %v10238 = vshll.u32 %v10004, 16
        %v10240 = vrot.slane %v10238, 5
        %v10241 = vsel %vm1089, %v10236, %v10240
        %v10243 = vshrl.u32 %v10005, 16
        %v10245 = vrot.slane %v10243, 4
        %v10246 = vshll.u32 %v10005, 16
        %v10248 = vrot.slane %v10246, 5
        %v10249 = vor.u32 %v10245, %v10248
        %v10250 = vrot.slane %v10249, 4
        %v10252 = vshll.u32 %v10006, 16
        %v10254 = vrot.slane %v10252, 5
        %v10255 = vsel %vm1089, %v10250, %v10254
        %v10256 = vshrl.u32 %v10006, 16
        %v10258 = vrot.slane %v10256, 4
        %v10259 = vor.u32 %v10258, %v10254
        %v10260 = vrot.slane %v10259, 4
        %v10262 = vshll.u32 %v10007, 16
        %v10264 = vrot.slane %v10262, 5
        %v10265 = vsel %vm1089, %v10260, %v10264
        %v10267 = vshrl.u32 %v10008, 16
        %v10269 = vrot.slane %v10267, 4
        %v10270 = vshll.u32 %v10008, 16
        %v10272 = vrot.slane %v10270, 5
        %v10273 = vor.u32 %v10269, %v10272
        %v10274 = vrot.slane %v10273, 4
        %v10276 = vshll.u32 %v10009, 16
        %v10278 = vrot.slane %v10276, 5
        %v10279 = vsel %vm1089, %v10274, %v10278
        %v10280 = vshrl.u32 %v10009, 16
        %v10282 = vrot.slane %v10280, 4
        %v10283 = vor.u32 %v10282, %v10278
        %v10284 = vrot.slane %v10283, 4
        %v10286 = vshll.u32 %v10010, 16
        %v10288 = vrot.slane %v10286, 5
        %v10289 = vsel %vm1089, %v10284, %v10288
        %v10291 = vshrl.u32 %v10011, 16
        %v10293 = vrot.slane %v10291, 4
        %v10294 = vshll.u32 %v10011, 16
        %v10296 = vrot.slane %v10294, 5
        %v10297 = vor.u32 %v10293, %v10296
        %v10298 = vrot.slane %v10297, 4
        %v10300 = vshll.u32 %v10012, 16
        %v10302 = vrot.slane %v10300, 5
        %v10303 = vsel %vm1089, %v10298, %v10302
        %v10304 = vshrl.u32 %v10012, 16
        %v10306 = vrot.slane %v10304, 4
        %v10307 = vor.u32 %v10306, %v10302
        %v10308 = vrot.slane %v10307, 4
        %v10310 = vshll.u32 %v10013, 16
        %v10312 = vrot.slane %v10310, 5
        %v10313 = vsel %vm1089, %v10308, %v10312
        %v10315 = vshrl.u32 %v10014, 16
        %v10317 = vrot.slane %v10315, 4
        %v10318 = vshll.u32 %v10014, 16
        %v10320 = vrot.slane %v10318, 5
        %v10321 = vor.u32 %v10317, %v10320
        %v10322 = vrot.slane %v10321, 4
        %v10324 = vshll.u32 %v10015, 16
        %v10326 = vrot.slane %v10324, 5
        %v10327 = vsel %vm1089, %v10322, %v10326
        %v10328 = vshrl.u32 %v10015, 16
        %v10330 = vrot.slane %v10328, 4
        %v10331 = vor.u32 %v10330, %v10326
        %v10332 = vrot.slane %v10331, 4
        %v10334 = vshll.u32 %v10016, 16
        %v10336 = vrot.slane %v10334, 5
        %v10337 = vsel %vm1089, %v10332, %v10336
        %v10339 = vshrl.u32 %v10017, 16
        %v10341 = vrot.slane %v10339, 4
        %v10342 = vshll.u32 %v10017, 16
        %v10344 = vrot.slane %v10342, 5
        %v10345 = vor.u32 %v10341, %v10344
        %v10346 = vrot.slane %v10345, 4
        %v10348 = vshll.u32 %v10018, 16
        %v10350 = vrot.slane %v10348, 5
        %v10351 = vsel %vm1089, %v10346, %v10350
        %v10352 = vshrl.u32 %v10018, 16
        %v10354 = vrot.slane %v10352, 4
        %v10355 = vor.u32 %v10354, %v10350
        %v10356 = vrot.slane %v10355, 4
        %v10358 = vshll.u32 %v10019, 16
        %v10360 = vrot.slane %v10358, 5
        %v10361 = vsel %vm1089, %v10356, %v10360
        %v10363 = vshrl.u32 %v10020, 16
        %v10365 = vrot.slane %v10363, 4
        %v10366 = vshll.u32 %v10020, 16
        %v10368 = vrot.slane %v10366, 5
        %v10369 = vor.u32 %v10365, %v10368
        %v10370 = vrot.slane %v10369, 4
        %v10372 = vshll.u32 %v10021, 16
        %v10374 = vrot.slane %v10372, 5
        %v10375 = vsel %vm1089, %v10370, %v10374
        %v10376 = vshrl.u32 %v10021, 16
        %v10378 = vrot.slane %v10376, 4
        %v10379 = vor.u32 %v10378, %v10374
        %v10380 = vrot.slane %v10379, 4
        %v10382 = vshll.u32 %v10022, 16
        %v10384 = vrot.slane %v10382, 5
        %v10385 = vsel %vm1089, %v10380, %v10384
        %v10387 = vshrl.u32 %v10023, 16
        %v10389 = vrot.slane %v10387, 4
        %v10390 = vshll.u32 %v10023, 16
        %v10392 = vrot.slane %v10390, 5
        %v10393 = vor.u32 %v10389, %v10392
        %v10394 = vrot.slane %v10393, 4
        %v10396 = vshll.u32 %v10024, 16
        %v10398 = vrot.slane %v10396, 5
        %v10399 = vsel %vm1089, %v10394, %v10398
        %v10400 = vshrl.u32 %v10024, 16
        %v10402 = vrot.slane %v10400, 4
        %v10403 = vor.u32 %v10402, %v10398
        %v10404 = vrot.slane %v10403, 4
        %v10406 = vshll.u32 %v10025, 16
        %v10408 = vrot.slane %v10406, 5
        %v10409 = vsel %vm1089, %v10404, %v10408
        %s10410 = scalar_lea.vmem [#allocation9], 448
        %v10411 = vld [vmem:[%s10410] sm:$0xf]
        %v10412 = vld [vmem:[%s10410 + $0x4] sm:$0xf]
        %v10413 = vld [vmem:[%s10410 + $0x8] sm:$0xf]
        %v10414 = vld [vmem:[%s10410 + $0xc] sm:$0xf]
        %v10415 = vld [vmem:[%s10410 + $0x10] sm:$0xf]
        %v10416 = vld [vmem:[%s10410 + $0x14] sm:$0xf]
        %v10417 = vld [vmem:[%s10410 + $0x18] sm:$0xf]
        %v10418 = vld [vmem:[%s10410 + $0x1c] sm:$0xf]
        %v10419 = vld [vmem:[%s10410 + $0x20] sm:$0xf]
        %v10420 = vld [vmem:[%s10410 + $0x24] sm:$0xf]
        %v10421 = vld [vmem:[%s10410 + $0x28] sm:$0xf]
        %v10422 = vld [vmem:[%s10410 + $0x2c] sm:$0xf]
        %v10423 = vld [vmem:[%s10410 + $0x30] sm:$0xf]
        %v10424 = vld [vmem:[%s10410 + $0x34] sm:$0xf]
        %v10425 = vld [vmem:[%s10410 + $0x38] sm:$0xf]
        %v10426 = vld [vmem:[%s10410 + $0x3c] sm:$0xf]
        %v10427 = vunpack.c.l.b16 %v10039
        %v10428 = vunpack.c.l.b16 %v10049
        %v10429 = vunpack.c.l.b16 %v10063
        %v10430 = vunpack.c.l.b16 %v10073
        %v10431 = vunpack.c.l.b16 %v10087
        %v10432 = vunpack.c.l.b16 %v10097
        %v10433 = vunpack.c.l.b16 %v10111
        %v10434 = vunpack.c.l.b16 %v10121
        %v10435 = vunpack.c.l.b16 %v10135
        %v10436 = vunpack.c.l.b16 %v10145
        %v10437 = vunpack.c.l.b16 %v10159
        %v10438 = vunpack.c.l.b16 %v10169
        %v10439 = vunpack.c.l.b16 %v10183
        %v10440 = vunpack.c.l.b16 %v10193
        %v10441 = vunpack.c.l.b16 %v10207
        %v10442 = vunpack.c.l.b16 %v10217
        %v10443 = vunpack.c.l.b16 %v10231
        %v10444 = vunpack.c.l.b16 %v10241
        %v10445 = vunpack.c.l.b16 %v10255
        %v10446 = vunpack.c.l.b16 %v10265
        %v10447 = vunpack.c.l.b16 %v10279
        %v10448 = vunpack.c.l.b16 %v10289
        %v10449 = vunpack.c.l.b16 %v10303
        %v10450 = vunpack.c.l.b16 %v10313
        %v10451 = vunpack.c.l.b16 %v10327
        %v10452 = vunpack.c.l.b16 %v10337
        %v10453 = vunpack.c.l.b16 %v10351
        %v10454 = vunpack.c.l.b16 %v10361
        %v10455 = vunpack.c.l.b16 %v10375
        %v10456 = vunpack.c.l.b16 %v10385
        %v10457 = vunpack.c.l.b16 %v10399
        %v10458 = vunpack.c.l.b16 %v10409
        %v10459 = vpack.c.b16 %v10428, %v10427
        %v10460 = vpack.c.b16 %v10430, %v10429
        %v10461 = vpack.c.b16 %v10432, %v10431
        %v10462 = vpack.c.b16 %v10434, %v10433
        %v10463 = vpack.c.b16 %v10436, %v10435
        %v10464 = vpack.c.b16 %v10438, %v10437
        %v10465 = vpack.c.b16 %v10440, %v10439
        %v10466 = vpack.c.b16 %v10442, %v10441
        %v10467 = vpack.c.b16 %v10444, %v10443
        %v10468 = vpack.c.b16 %v10446, %v10445
        %v10469 = vpack.c.b16 %v10448, %v10447
        %v10470 = vpack.c.b16 %v10450, %v10449
        %v10471 = vpack.c.b16 %v10452, %v10451
        %v10472 = vpack.c.b16 %v10454, %v10453
        %v10473 = vpack.c.b16 %v10456, %v10455
        %v10474 = vpack.c.b16 %v10458, %v10457
        %v10507 = vunpack.c.l.b16 %v10411
        %v10508 = vunpack.c.l.b16 %v10412
        %v10509 = vunpack.c.l.b16 %v10413
        %v10510 = vunpack.c.l.b16 %v10414
        %v10511 = vunpack.c.l.b16 %v10415
        %v10512 = vunpack.c.l.b16 %v10416
        %v10513 = vunpack.c.l.b16 %v10417
        %v10514 = vunpack.c.l.b16 %v10418
        %v10515 = vunpack.c.l.b16 %v10419
        %v10516 = vunpack.c.l.b16 %v10420
        %v10517 = vunpack.c.l.b16 %v10421
        %v10518 = vunpack.c.l.b16 %v10422
        %v10519 = vunpack.c.l.b16 %v10423
        %v10520 = vunpack.c.l.b16 %v10424
        %v10521 = vunpack.c.l.b16 %v10425
        %v10522 = vunpack.c.l.b16 %v10426
        %v10523 = vpack.c.b16 %v10508, %v10507
        %v10524 = vpack.c.b16 %v10510, %v10509
        %v10525 = vpack.c.b16 %v10512, %v10511
        %v10526 = vpack.c.b16 %v10514, %v10513
        %v10527 = vpack.c.b16 %v10516, %v10515
        %v10528 = vpack.c.b16 %v10518, %v10517
        %v10529 = vpack.c.b16 %v10520, %v10519
        %v10530 = vpack.c.b16 %v10522, %v10521
        %10539 = vmatprep.subr.bf16.mxu0 0
        %10540 = vmatpush1.bf16.msra.mxu0 %v10523
        %10541 = vmatprep.subr.bf16.mxu0 0
        %10542 = vmatpush1.bf16.msra.mxu0 %v10524
        %10543 = vmatprep.subr.bf16.mxu0 0
        %10544 = vmatpush1.bf16.msra.mxu0 %v10525
        %10545 = vmatprep.subr.bf16.mxu0 0
        %10546 = vmatpush1.bf16.msra.mxu0 %v10526
        %10547 = vmatprep.subr.bf16.mxu0 0
        %10548 = vmatpush1.bf16.msra.mxu0 %v10527
        %10549 = vmatprep.subr.bf16.mxu0 0
        %10550 = vmatpush1.bf16.msra.mxu0 %v10528
        %10551 = vmatprep.subr.bf16.mxu0 0
        %10552 = vmatpush1.bf16.msra.mxu0 %v10529
        %10553 = vmatprep.subr.bf16.mxu0 0
        %10554 = vmatpush1.bf16.msra.mxu0 %v10530
        %10555 = vmatprep.subr.bf16.mxu0 0
        %10556 = vmatpush1.bf16.msra.mxu0 0
        %10557 = vmatprep.subr.bf16.mxu0 0
        %10558 = vmatpush1.bf16.msra.mxu0 0
        %10559 = vmatprep.subr.bf16.mxu0 0
        %10560 = vmatpush1.bf16.msra.mxu0 0
        %10561 = vmatprep.subr.bf16.mxu0 0
        %10562 = vmatpush1.bf16.msra.mxu0 0
        %10563 = vmatprep.subr.bf16.mxu0 0
        %10564 = vmatpush1.bf16.msra.mxu0 0
        %10565 = vmatprep.subr.bf16.mxu0 0
        %10566 = vmatpush1.bf16.msra.mxu0 0
        %10567 = vmatprep.subr.bf16.mxu0 0
        %10568 = vmatpush1.bf16.msra.mxu0 0
        %10569 = vmatprep.subr.bf16.mxu0 0
        %10570 = vmatpush1.bf16.msra.mxu0 0
        %10571 = vmatprep.mubr.bf16.mxu0 0
        %10572 = vmatmul.mubr.bf16.gmra.mrb[0].mxu0 %v10459
        %v10573 = vpop.f32.mrb[0].mxu0
        %v10574 = vadd.f32 0.0, %v10573
        %v10575 = vpop.f32.mrb[0].mxu0
        %v10576 = vpop.f32.mrb[0].mxu0
        %v10577 = vadd.f32 0.0, %v10576
        %v10578 = vpop.f32.mrb[0].mxu0
        %10579 = vmatprep.mubr.bf16.mxu0 0
        %10580 = vmatmul.mubr.bf16.gmra.mrb[0].mxu0 %v10460
        %v10581 = vpop.f32.mrb[0].mxu0
        %v10582 = vadd.f32 0.0, %v10581
        %v10583 = vpop.f32.mrb[0].mxu0
        %v10584 = vpop.f32.mrb[0].mxu0
        %v10585 = vadd.f32 0.0, %v10584
        %v10586 = vpop.f32.mrb[0].mxu0
        %10587 = vmatprep.mubr.bf16.mxu0 0
        %10588 = vmatmul.mubr.bf16.gmra.mrb[0].mxu0 %v10461
        %v10589 = vpop.f32.mrb[0].mxu0
        %v10590 = vadd.f32 0.0, %v10589
        %v10591 = vpop.f32.mrb[0].mxu0
        %v10592 = vpop.f32.mrb[0].mxu0
        %v10593 = vadd.f32 0.0, %v10592
        %v10594 = vpop.f32.mrb[0].mxu0
        %10595 = vmatprep.mubr.bf16.mxu0 0
        %10596 = vmatmul.mubr.bf16.gmra.mrb[0].mxu0 %v10462
        %v10597 = vpop.f32.mrb[0].mxu0
        %v10598 = vadd.f32 0.0, %v10597
        %v10599 = vpop.f32.mrb[0].mxu0
        %v10600 = vpop.f32.mrb[0].mxu0
        %v10601 = vadd.f32 0.0, %v10600
        %v10602 = vpop.f32.mrb[0].mxu0
        %10603 = vmatprep.mubr.bf16.mxu0 0
        %10604 = vmatmul.mubr.bf16.gmra.mrb[0].mxu0 %v10463
        %v10605 = vpop.f32.mrb[0].mxu0
        %v10606 = vadd.f32 0.0, %v10605
        %v10607 = vpop.f32.mrb[0].mxu0
        %v10608 = vpop.f32.mrb[0].mxu0
        %v10609 = vadd.f32 0.0, %v10608
        %v10610 = vpop.f32.mrb[0].mxu0
        %10611 = vmatprep.mubr.bf16.mxu0 0
        %10612 = vmatmul.mubr.bf16.gmra.mrb[0].mxu0 %v10464
        %v10613 = vpop.f32.mrb[0].mxu0
        %v10614 = vadd.f32 0.0, %v10613
        %v10615 = vpop.f32.mrb[0].mxu0
        %v10616 = vpop.f32.mrb[0].mxu0
        %v10617 = vadd.f32 0.0, %v10616
        %v10618 = vpop.f32.mrb[0].mxu0
        %10619 = vmatprep.mubr.bf16.mxu0 0
        %10620 = vmatmul.mubr.bf16.gmra.mrb[0].mxu0 %v10465
        %v10621 = vpop.f32.mrb[0].mxu0
        %v10622 = vadd.f32 0.0, %v10621
        %v10623 = vpop.f32.mrb[0].mxu0
        %v10624 = vpop.f32.mrb[0].mxu0
        %v10625 = vadd.f32 0.0, %v10624
        %v10626 = vpop.f32.mrb[0].mxu0
        %10627 = vmatprep.mubr.bf16.mxu0 0
        %10628 = vmatmul.mubr.bf16.gmra.mrb[0].mxu0 %v10466
        %v10629 = vpop.f32.mrb[0].mxu0
        %v10630 = vadd.f32 0.0, %v10629
        %v10631 = vpop.f32.mrb[0].mxu0
        %v10632 = vpop.f32.mrb[0].mxu0
        %v10633 = vadd.f32 0.0, %v10632
        %v10634 = vpop.f32.mrb[0].mxu0
        %10635 = vmatprep.mubr.bf16.mxu0 0
        %10636 = vmatmul.mubr.bf16.gmra.mrb[0].mxu0 %v10467
        %v10637 = vpop.f32.mrb[0].mxu0
        %v10638 = vadd.f32 0.0, %v10637
        %v10639 = vpop.f32.mrb[0].mxu0
        %v10640 = vpop.f32.mrb[0].mxu0
        %v10641 = vadd.f32 0.0, %v10640
        %v10642 = vpop.f32.mrb[0].mxu0
        %10643 = vmatprep.mubr.bf16.mxu0 0
        %10644 = vmatmul.mubr.bf16.gmra.mrb[0].mxu0 %v10468
        %v10645 = vpop.f32.mrb[0].mxu0
        %v10646 = vadd.f32 0.0, %v10645
        %v10647 = vpop.f32.mrb[0].mxu0
        %v10648 = vpop.f32.mrb[0].mxu0
        %v10649 = vadd.f32 0.0, %v10648
        %v10650 = vpop.f32.mrb[0].mxu0
        %10651 = vmatprep.mubr.bf16.mxu0 0
        %10652 = vmatmul.mubr.bf16.gmra.mrb[0].mxu0 %v10469
        %v10653 = vpop.f32.mrb[0].mxu0
        %v10654 = vadd.f32 0.0, %v10653
        %v10655 = vpop.f32.mrb[0].mxu0
        %v10656 = vpop.f32.mrb[0].mxu0
        %v10657 = vadd.f32 0.0, %v10656
        %v10658 = vpop.f32.mrb[0].mxu0
        %10659 = vmatprep.mubr.bf16.mxu0 0
        %10660 = vmatmul.mubr.bf16.gmra.mrb[0].mxu0 %v10470
        %v10661 = vpop.f32.mrb[0].mxu0
        %v10662 = vadd.f32 0.0, %v10661
        %v10663 = vpop.f32.mrb[0].mxu0
        %v10664 = vpop.f32.mrb[0].mxu0
        %v10665 = vadd.f32 0.0, %v10664
        %v10666 = vpop.f32.mrb[0].mxu0
        %10667 = vmatprep.mubr.bf16.mxu0 0
        %10668 = vmatmul.mubr.bf16.gmra.mrb[0].mxu0 %v10471
        %v10669 = vpop.f32.mrb[0].mxu0
        %v10670 = vadd.f32 0.0, %v10669
        %v10671 = vpop.f32.mrb[0].mxu0
        %v10672 = vpop.f32.mrb[0].mxu0
        %v10673 = vadd.f32 0.0, %v10672
        %v10674 = vpop.f32.mrb[0].mxu0
        %10675 = vmatprep.mubr.bf16.mxu0 0
        %10676 = vmatmul.mubr.bf16.gmra.mrb[0].mxu0 %v10472
        %v10677 = vpop.f32.mrb[0].mxu0
        %v10678 = vadd.f32 0.0, %v10677
        %v10679 = vpop.f32.mrb[0].mxu0
        %v10680 = vpop.f32.mrb[0].mxu0
        %v10681 = vadd.f32 0.0, %v10680
        %v10682 = vpop.f32.mrb[0].mxu0
        %10683 = vmatprep.mubr.bf16.mxu0 0
        %10684 = vmatmul.mubr.bf16.gmra.mrb[0].mxu0 %v10473
        %v10685 = vpop.f32.mrb[0].mxu0
        %v10686 = vadd.f32 0.0, %v10685
        %v10687 = vpop.f32.mrb[0].mxu0
        %v10688 = vpop.f32.mrb[0].mxu0
        %v10689 = vadd.f32 0.0, %v10688
        %v10690 = vpop.f32.mrb[0].mxu0
        %10691 = vmatprep.mubr.bf16.mxu0 0
        %10692 = vmatmul.mubr.bf16.gmra.mrb[0].mxu0 %v10474
        %v10693 = vpop.f32.mrb[0].mxu0
        %v10694 = vadd.f32 0.0, %v10693
        %v10695 = vpop.f32.mrb[0].mxu0
        %v10696 = vpop.f32.mrb[0].mxu0
        %v10697 = vadd.f32 0.0, %v10696
        %v10698 = vpop.f32.mrb[0].mxu0
        %10699 = vdwg.mxu0
        %v10700 = vadd.f32 %v9946, %v10574
        %v10701 = vadd.f32 %v9947, %v10577
        %v10702 = vadd.f32 %v9948, %v10582
        %v10703 = vadd.f32 %v9949, %v10585
        %v10704 = vadd.f32 %v9950, %v10590
        %v10705 = vadd.f32 %v9951, %v10593
        %v10706 = vadd.f32 %v9952, %v10598
        %v10707 = vadd.f32 %v9953, %v10601
        %v10708 = vadd.f32 %v9954, %v10606
        %v10709 = vadd.f32 %v9955, %v10609
        %v10710 = vadd.f32 %v9956, %v10614
        %v10711 = vadd.f32 %v9957, %v10617
        %v10712 = vadd.f32 %v9958, %v10622
        %v10713 = vadd.f32 %v9959, %v10625
        %v10714 = vadd.f32 %v9960, %v10630
        %v10715 = vadd.f32 %v9961, %v10633
        %v10716 = vadd.f32 %v9962, %v10638
        %v10717 = vadd.f32 %v9963, %v10641
        %v10718 = vadd.f32 %v9964, %v10646
        %v10719 = vadd.f32 %v9965, %v10649
        %v10720 = vadd.f32 %v9966, %v10654
        %v10721 = vadd.f32 %v9967, %v10657
        %v10722 = vadd.f32 %v9968, %v10662
        %v10723 = vadd.f32 %v9969, %v10665
        %v10724 = vadd.f32 %v9970, %v10670
        %v10725 = vadd.f32 %v9971, %v10673
        %v10726 = vadd.f32 %v9972, %v10678
        %v10727 = vadd.f32 %v9973, %v10681
        %v10728 = vadd.f32 %v9974, %v10686
        %v10729 = vadd.f32 %v9975, %v10689
        %v10730 = vadd.f32 %v9976, %v10694
        %v10731 = vadd.f32 %v9977, %v10697
        %v10732 = vld [vmem:[%s9591] sm:$0xe]
        %v10733 = vld [vmem:[%s9591 + $0xc] sm:$0xe]
        %v10734 = vld [vmem:[%s9591 + $0x18] sm:$0xe]
        %v10735 = vld [vmem:[%s9591 + $0x24] sm:$0xe]
        %v10736 = vld [vmem:[%s9591 + $0x30] sm:$0xe]
        %v10737 = vld [vmem:[%s9591 + $0x3c] sm:$0xe]
        %v10738 = vld [vmem:[%s9591 + $0x48] sm:$0xe]
        %v10739 = vld [vmem:[%s9591 + $0x54] sm:$0xe]
        %v10740 = vld [vmem:[%s9591 + $0x60] sm:$0xe]
        %v10741 = vld [vmem:[%s9591 + $0x6c] sm:$0xe]
        %v10742 = vld [vmem:[%s9591 + $0x78] sm:$0xe]
        %v10743 = vld [vmem:[%s9591 + $0x84] sm:$0xe]
        %v10744 = vld [vmem:[%s9591 + $0x90] sm:$0xe]
        %v10745 = vld [vmem:[%s9591 + $0x9c] sm:$0xe]
        %v10746 = vld [vmem:[%s9591 + $0xa8] sm:$0xe]
        %v10747 = vld [vmem:[%s9591 + $0xb4] sm:$0xe]
        %v10796 = vrot.slane %v10732, 5
        %v10797 = vrot.slane %v10796, 4
        %v10798 = vrot.slane %v9979, 5
        %v10799 = vsel %vm2119, %v10797, %v10798
        %v10800 = vrot.slane %v10798, 4
        %v10801 = vrot.slane %v9980, 5
        %v10802 = vsel %vm2119, %v10800, %v10801
        %v10803 = vrot.slane %v10733, 5
        %v10804 = vrot.slane %v10803, 4
        %v10805 = vrot.slane %v9982, 5
        %v10806 = vsel %vm2119, %v10804, %v10805
        %v10807 = vrot.slane %v10805, 4
        %v10808 = vrot.slane %v9983, 5
        %v10809 = vsel %vm2119, %v10807, %v10808
        %v10810 = vrot.slane %v10734, 5
        %v10811 = vrot.slane %v10810, 4
        %v10812 = vrot.slane %v9985, 5
        %v10813 = vsel %vm2119, %v10811, %v10812
        %v10814 = vrot.slane %v10812, 4
        %v10815 = vrot.slane %v9986, 5
        %v10816 = vsel %vm2119, %v10814, %v10815
        %v10817 = vrot.slane %v10735, 5
        %v10818 = vrot.slane %v10817, 4
        %v10819 = vrot.slane %v9988, 5
        %v10820 = vsel %vm2119, %v10818, %v10819
        %v10821 = vrot.slane %v10819, 4
        %v10822 = vrot.slane %v9989, 5
        %v10823 = vsel %vm2119, %v10821, %v10822
        %v10824 = vrot.slane %v10736, 5
        %v10825 = vrot.slane %v10824, 4
        %v10826 = vrot.slane %v9991, 5
        %v10827 = vsel %vm2119, %v10825, %v10826
        %v10828 = vrot.slane %v10826, 4
        %v10829 = vrot.slane %v9992, 5
        %v10830 = vsel %vm2119, %v10828, %v10829
        %v10831 = vrot.slane %v10737, 5
        %v10832 = vrot.slane %v10831, 4
        %v10833 = vrot.slane %v9994, 5
        %v10834 = vsel %vm2119, %v10832, %v10833
        %v10835 = vrot.slane %v10833, 4
        %v10836 = vrot.slane %v9995, 5
        %v10837 = vsel %vm2119, %v10835, %v10836
        %v10838 = vrot.slane %v10738, 5
        %v10839 = vrot.slane %v10838, 4
        %v10840 = vrot.slane %v9997, 5
        %v10841 = vsel %vm2119, %v10839, %v10840
        %v10842 = vrot.slane %v10840, 4
        %v10843 = vrot.slane %v9998, 5
        %v10844 = vsel %vm2119, %v10842, %v10843
        %v10845 = vrot.slane %v10739, 5
        %v10846 = vrot.slane %v10845, 4
        %v10847 = vrot.slane %v10000, 5
        %v10848 = vsel %vm2119, %v10846, %v10847
        %v10849 = vrot.slane %v10847, 4
        %v10850 = vrot.slane %v10001, 5
        %v10851 = vsel %vm2119, %v10849, %v10850
        %v10852 = vrot.slane %v10740, 5
        %v10853 = vrot.slane %v10852, 4
        %v10854 = vrot.slane %v10003, 5
        %v10855 = vsel %vm2119, %v10853, %v10854
        %v10856 = vrot.slane %v10854, 4
        %v10857 = vrot.slane %v10004, 5
        %v10858 = vsel %vm2119, %v10856, %v10857
        %v10859 = vrot.slane %v10741, 5
        %v10860 = vrot.slane %v10859, 4
        %v10861 = vrot.slane %v10006, 5
        %v10862 = vsel %vm2119, %v10860, %v10861
        %v10863 = vrot.slane %v10861, 4
        %v10864 = vrot.slane %v10007, 5
        %v10865 = vsel %vm2119, %v10863, %v10864
        %v10866 = vrot.slane %v10742, 5
        %v10867 = vrot.slane %v10866, 4
        %v10868 = vrot.slane %v10009, 5
        %v10869 = vsel %vm2119, %v10867, %v10868
        %v10870 = vrot.slane %v10868, 4
        %v10871 = vrot.slane %v10010, 5
        %v10872 = vsel %vm2119, %v10870, %v10871
        %v10873 = vrot.slane %v10743, 5
        %v10874 = vrot.slane %v10873, 4
        %v10875 = vrot.slane %v10012, 5
        %v10876 = vsel %vm2119, %v10874, %v10875
        %v10877 = vrot.slane %v10875, 4
        %v10878 = vrot.slane %v10013, 5
        %v10879 = vsel %vm2119, %v10877, %v10878
        %v10880 = vrot.slane %v10744, 5
        %v10881 = vrot.slane %v10880, 4
        %v10882 = vrot.slane %v10015, 5
        %v10883 = vsel %vm2119, %v10881, %v10882
        %v10884 = vrot.slane %v10882, 4
        %v10885 = vrot.slane %v10016, 5
        %v10886 = vsel %vm2119, %v10884, %v10885
        %v10887 = vrot.slane %v10745, 5
        %v10888 = vrot.slane %v10887, 4
        %v10889 = vrot.slane %v10018, 5
        %v10890 = vsel %vm2119, %v10888, %v10889
        %v10891 = vrot.slane %v10889, 4
        %v10892 = vrot.slane %v10019, 5
        %v10893 = vsel %vm2119, %v10891, %v10892
        %v10894 = vrot.slane %v10746, 5
        %v10895 = vrot.slane %v10894, 4
        %v10896 = vrot.slane %v10021, 5
        %v10897 = vsel %vm2119, %v10895, %v10896
        %v10898 = vrot.slane %v10896, 4
        %v10899 = vrot.slane %v10022, 5
        %v10900 = vsel %vm2119, %v10898, %v10899
        %v10901 = vrot.slane %v10747, 5
        %v10902 = vrot.slane %v10901, 4
        %v10903 = vrot.slane %v10024, 5
        %v10904 = vsel %vm2119, %v10902, %v10903
        %v10905 = vrot.slane %v10903, 4
        %v10906 = vrot.slane %v10025, 5
        %v10907 = vsel %vm2119, %v10905, %v10906
        %s10908 = scalar_lea.vmem [#allocation9], 512
        %v10909 = vld [vmem:[%s10908] sm:$0xf]
        %v10910 = vld [vmem:[%s10908 + $0x4] sm:$0xf]
        %v10911 = vld [vmem:[%s10908 + $0x8] sm:$0xf]
        %v10912 = vld [vmem:[%s10908 + $0xc] sm:$0xf]
        %v10913 = vld [vmem:[%s10908 + $0x10] sm:$0xf]
        %v10914 = vld [vmem:[%s10908 + $0x14] sm:$0xf]
        %v10915 = vld [vmem:[%s10908 + $0x18] sm:$0xf]
        %v10916 = vld [vmem:[%s10908 + $0x1c] sm:$0xf]
        %v10917 = vld [vmem:[%s10908 + $0x20] sm:$0xf]
        %v10918 = vld [vmem:[%s10908 + $0x24] sm:$0xf]
        %v10919 = vld [vmem:[%s10908 + $0x28] sm:$0xf]
        %v10920 = vld [vmem:[%s10908 + $0x2c] sm:$0xf]
        %v10921 = vld [vmem:[%s10908 + $0x30] sm:$0xf]
        %v10922 = vld [vmem:[%s10908 + $0x34] sm:$0xf]
        %v10923 = vld [vmem:[%s10908 + $0x38] sm:$0xf]
        %v10924 = vld [vmem:[%s10908 + $0x3c] sm:$0xf]
        %v10925 = vunpack.c.l.b16 %v10799
        %v10926 = vunpack.c.l.b16 %v10802
        %v10927 = vunpack.c.l.b16 %v10806
        %v10928 = vunpack.c.l.b16 %v10809
        %v10929 = vunpack.c.l.b16 %v10813
        %v10930 = vunpack.c.l.b16 %v10816
        %v10931 = vunpack.c.l.b16 %v10820
        %v10932 = vunpack.c.l.b16 %v10823
        %v10933 = vunpack.c.l.b16 %v10827
        %v10934 = vunpack.c.l.b16 %v10830
        %v10935 = vunpack.c.l.b16 %v10834
        %v10936 = vunpack.c.l.b16 %v10837
        %v10937 = vunpack.c.l.b16 %v10841
        %v10938 = vunpack.c.l.b16 %v10844
        %v10939 = vunpack.c.l.b16 %v10848
        %v10940 = vunpack.c.l.b16 %v10851
        %v10941 = vunpack.c.l.b16 %v10855
        %v10942 = vunpack.c.l.b16 %v10858
        %v10943 = vunpack.c.l.b16 %v10862
        %v10944 = vunpack.c.l.b16 %v10865
        %v10945 = vunpack.c.l.b16 %v10869
        %v10946 = vunpack.c.l.b16 %v10872
        %v10947 = vunpack.c.l.b16 %v10876
        %v10948 = vunpack.c.l.b16 %v10879
        %v10949 = vunpack.c.l.b16 %v10883
        %v10950 = vunpack.c.l.b16 %v10886
        %v10951 = vunpack.c.l.b16 %v10890
        %v10952 = vunpack.c.l.b16 %v10893
        %v10953 = vunpack.c.l.b16 %v10897
        %v10954 = vunpack.c.l.b16 %v10900
        %v10955 = vunpack.c.l.b16 %v10904
        %v10956 = vunpack.c.l.b16 %v10907
        %v10957 = vpack.c.b16 %v10926, %v10925
        %v10958 = vpack.c.b16 %v10928, %v10927
        %v10959 = vpack.c.b16 %v10930, %v10929
        %v10960 = vpack.c.b16 %v10932, %v10931
        %v10961 = vpack.c.b16 %v10934, %v10933
        %v10962 = vpack.c.b16 %v10936, %v10935
        %v10963 = vpack.c.b16 %v10938, %v10937
        %v10964 = vpack.c.b16 %v10940, %v10939
        %v10965 = vpack.c.b16 %v10942, %v10941
        %v10966 = vpack.c.b16 %v10944, %v10943
        %v10967 = vpack.c.b16 %v10946, %v10945
        %v10968 = vpack.c.b16 %v10948, %v10947
        %v10969 = vpack.c.b16 %v10950, %v10949
        %v10970 = vpack.c.b16 %v10952, %v10951
        %v10971 = vpack.c.b16 %v10954, %v10953
        %v10972 = vpack.c.b16 %v10956, %v10955
        %v11005 = vunpack.c.l.b16 %v10909
        %v11006 = vunpack.c.l.b16 %v10910
        %v11007 = vunpack.c.l.b16 %v10911
        %v11008 = vunpack.c.l.b16 %v10912
        %v11009 = vunpack.c.l.b16 %v10913
        %v11010 = vunpack.c.l.b16 %v10914
        %v11011 = vunpack.c.l.b16 %v10915
        %v11012 = vunpack.c.l.b16 %v10916
        %v11013 = vunpack.c.l.b16 %v10917
        %v11014 = vunpack.c.l.b16 %v10918
        %v11015 = vunpack.c.l.b16 %v10919
        %v11016 = vunpack.c.l.b16 %v10920
        %v11017 = vunpack.c.l.b16 %v10921
        %v11018 = vunpack.c.l.b16 %v10922
        %v11019 = vunpack.c.l.b16 %v10923
        %v11020 = vunpack.c.l.b16 %v10924
        %v11021 = vpack.c.b16 %v11006, %v11005
        %v11022 = vpack.c.b16 %v11008, %v11007
        %v11023 = vpack.c.b16 %v11010, %v11009
        %v11024 = vpack.c.b16 %v11012, %v11011
        %v11025 = vpack.c.b16 %v11014, %v11013
        %v11026 = vpack.c.b16 %v11016, %v11015
        %v11027 = vpack.c.b16 %v11018, %v11017
        %v11028 = vpack.c.b16 %v11020, %v11019
        %11037 = vmatprep.subr.bf16.mxu0 0
        %11038 = vmatpush1.bf16.msra.mxu0 %v11021
        %11039 = vmatprep.subr.bf16.mxu0 0
        %11040 = vmatpush1.bf16.msra.mxu0 %v11022
        %11041 = vmatprep.subr.bf16.mxu0 0
        %11042 = vmatpush1.bf16.msra.mxu0 %v11023
        %11043 = vmatprep.subr.bf16.mxu0 0
        %11044 = vmatpush1.bf16.msra.mxu0 %v11024
        %11045 = vmatprep.subr.bf16.mxu0 0
        %11046 = vmatpush1.bf16.msra.mxu0 %v11025
        %11047 = vmatprep.subr.bf16.mxu0 0
        %11048 = vmatpush1.bf16.msra.mxu0 %v11026
        %11049 = vmatprep.subr.bf16.mxu0 0
        %11050 = vmatpush1.bf16.msra.mxu0 %v11027
        %11051 = vmatprep.subr.bf16.mxu0 0
        %11052 = vmatpush1.bf16.msra.mxu0 %v11028
        %11053 = vmatprep.subr.bf16.mxu0 0
        %11054 = vmatpush1.bf16.msra.mxu0 0
        %11055 = vmatprep.subr.bf16.mxu0 0
        %11056 = vmatpush1.bf16.msra.mxu0 0
        %11057 = vmatprep.subr.bf16.mxu0 0
        %11058 = vmatpush1.bf16.msra.mxu0 0
        %11059 = vmatprep.subr.bf16.mxu0 0
        %11060 = vmatpush1.bf16.msra.mxu0 0
        %11061 = vmatprep.subr.bf16.mxu0 0
        %11062 = vmatpush1.bf16.msra.mxu0 0
        %11063 = vmatprep.subr.bf16.mxu0 0
        %11064 = vmatpush1.bf16.msra.mxu0 0
        %11065 = vmatprep.subr.bf16.mxu0 0
        %11066 = vmatpush1.bf16.msra.mxu0 0
        %11067 = vmatprep.subr.bf16.mxu0 0
        %11068 = vmatpush1.bf16.msra.mxu0 0
        %11069 = vmatprep.mubr.bf16.mxu0 0
        %11070 = vmatmul.mubr.bf16.gmra.mrb[0].mxu0 %v10957
        %v11071 = vpop.f32.mrb[0].mxu0
        %v11072 = vadd.f32 0.0, %v11071
        %v11073 = vpop.f32.mrb[0].mxu0
        %v11074 = vpop.f32.mrb[0].mxu0
        %v11075 = vadd.f32 0.0, %v11074
        %v11076 = vpop.f32.mrb[0].mxu0
        %11077 = vmatprep.mubr.bf16.mxu0 0
        %11078 = vmatmul.mubr.bf16.gmra.mrb[0].mxu0 %v10958
        %v11079 = vpop.f32.mrb[0].mxu0
        %v11080 = vadd.f32 0.0, %v11079
        %v11081 = vpop.f32.mrb[0].mxu0
        %v11082 = vpop.f32.mrb[0].mxu0
        %v11083 = vadd.f32 0.0, %v11082
        %v11084 = vpop.f32.mrb[0].mxu0
        %11085 = vmatprep.mubr.bf16.mxu0 0
        %11086 = vmatmul.mubr.bf16.gmra.mrb[0].mxu0 %v10959
        %v11087 = vpop.f32.mrb[0].mxu0
        %v11088 = vadd.f32 0.0, %v11087
        %v11089 = vpop.f32.mrb[0].mxu0
        %v11090 = vpop.f32.mrb[0].mxu0
        %v11091 = vadd.f32 0.0, %v11090
        %v11092 = vpop.f32.mrb[0].mxu0
        %11093 = vmatprep.mubr.bf16.mxu0 0
        %11094 = vmatmul.mubr.bf16.gmra.mrb[0].mxu0 %v10960
        %v11095 = vpop.f32.mrb[0].mxu0
        %v11096 = vadd.f32 0.0, %v11095
        %v11097 = vpop.f32.mrb[0].mxu0
        %v11098 = vpop.f32.mrb[0].mxu0
        %v11099 = vadd.f32 0.0, %v11098
        %v11100 = vpop.f32.mrb[0].mxu0
        %11101 = vmatprep.mubr.bf16.mxu0 0
        %11102 = vmatmul.mubr.bf16.gmra.mrb[0].mxu0 %v10961
        %v11103 = vpop.f32.mrb[0].mxu0
        %v11104 = vadd.f32 0.0, %v11103
        %v11105 = vpop.f32.mrb[0].mxu0
        %v11106 = vpop.f32.mrb[0].mxu0
        %v11107 = vadd.f32 0.0, %v11106
        %v11108 = vpop.f32.mrb[0].mxu0
        %11109 = vmatprep.mubr.bf16.mxu0 0
        %11110 = vmatmul.mubr.bf16.gmra.mrb[0].mxu0 %v10962
        %v11111 = vpop.f32.mrb[0].mxu0
        %v11112 = vadd.f32 0.0, %v11111
        %v11113 = vpop.f32.mrb[0].mxu0
        %v11114 = vpop.f32.mrb[0].mxu0
        %v11115 = vadd.f32 0.0, %v11114
        %v11116 = vpop.f32.mrb[0].mxu0
        %11117 = vmatprep.mubr.bf16.mxu0 0
        %11118 = vmatmul.mubr.bf16.gmra.mrb[0].mxu0 %v10963
        %v11119 = vpop.f32.mrb[0].mxu0
        %v11120 = vadd.f32 0.0, %v11119
        %v11121 = vpop.f32.mrb[0].mxu0
        %v11122 = vpop.f32.mrb[0].mxu0
        %v11123 = vadd.f32 0.0, %v11122
        %v11124 = vpop.f32.mrb[0].mxu0
        %11125 = vmatprep.mubr.bf16.mxu0 0
        %11126 = vmatmul.mubr.bf16.gmra.mrb[0].mxu0 %v10964
        %v11127 = vpop.f32.mrb[0].mxu0
        %v11128 = vadd.f32 0.0, %v11127
        %v11129 = vpop.f32.mrb[0].mxu0
        %v11130 = vpop.f32.mrb[0].mxu0
        %v11131 = vadd.f32 0.0, %v11130
        %v11132 = vpop.f32.mrb[0].mxu0
        %11133 = vmatprep.mubr.bf16.mxu0 0
        %11134 = vmatmul.mubr.bf16.gmra.mrb[0].mxu0 %v10965
        %v11135 = vpop.f32.mrb[0].mxu0
        %v11136 = vadd.f32 0.0, %v11135
        %v11137 = vpop.f32.mrb[0].mxu0
        %v11138 = vpop.f32.mrb[0].mxu0
        %v11139 = vadd.f32 0.0, %v11138
        %v11140 = vpop.f32.mrb[0].mxu0
        %11141 = vmatprep.mubr.bf16.mxu0 0
        %11142 = vmatmul.mubr.bf16.gmra.mrb[0].mxu0 %v10966
        %v11143 = vpop.f32.mrb[0].mxu0
        %v11144 = vadd.f32 0.0, %v11143
        %v11145 = vpop.f32.mrb[0].mxu0
        %v11146 = vpop.f32.mrb[0].mxu0
        %v11147 = vadd.f32 0.0, %v11146
        %v11148 = vpop.f32.mrb[0].mxu0
        %11149 = vmatprep.mubr.bf16.mxu0 0
        %11150 = vmatmul.mubr.bf16.gmra.mrb[0].mxu0 %v10967
        %v11151 = vpop.f32.mrb[0].mxu0
        %v11152 = vadd.f32 0.0, %v11151
        %v11153 = vpop.f32.mrb[0].mxu0
        %v11154 = vpop.f32.mrb[0].mxu0
        %v11155 = vadd.f32 0.0, %v11154
        %v11156 = vpop.f32.mrb[0].mxu0
        %11157 = vmatprep.mubr.bf16.mxu0 0
        %11158 = vmatmul.mubr.bf16.gmra.mrb[0].mxu0 %v10968
        %v11159 = vpop.f32.mrb[0].mxu0
        %v11160 = vadd.f32 0.0, %v11159
        %v11161 = vpop.f32.mrb[0].mxu0
        %v11162 = vpop.f32.mrb[0].mxu0
        %v11163 = vadd.f32 0.0, %v11162
        %v11164 = vpop.f32.mrb[0].mxu0
        %11165 = vmatprep.mubr.bf16.mxu0 0
        %11166 = vmatmul.mubr.bf16.gmra.mrb[0].mxu0 %v10969
        %v11167 = vpop.f32.mrb[0].mxu0
        %v11168 = vadd.f32 0.0, %v11167
        %v11169 = vpop.f32.mrb[0].mxu0
        %v11170 = vpop.f32.mrb[0].mxu0
        %v11171 = vadd.f32 0.0, %v11170
        %v11172 = vpop.f32.mrb[0].mxu0
        %11173 = vmatprep.mubr.bf16.mxu0 0
        %11174 = vmatmul.mubr.bf16.gmra.mrb[0].mxu0 %v10970
        %v11175 = vpop.f32.mrb[0].mxu0
        %v11176 = vadd.f32 0.0, %v11175
        %v11177 = vpop.f32.mrb[0].mxu0
        %v11178 = vpop.f32.mrb[0].mxu0
        %v11179 = vadd.f32 0.0, %v11178
        %v11180 = vpop.f32.mrb[0].mxu0
        %11181 = vmatprep.mubr.bf16.mxu0 0
        %11182 = vmatmul.mubr.bf16.gmra.mrb[0].mxu0 %v10971
        %v11183 = vpop.f32.mrb[0].mxu0
        %v11184 = vadd.f32 0.0, %v11183
        %v11185 = vpop.f32.mrb[0].mxu0
        %v11186 = vpop.f32.mrb[0].mxu0
        %v11187 = vadd.f32 0.0, %v11186
        %v11188 = vpop.f32.mrb[0].mxu0
        %11189 = vmatprep.mubr.bf16.mxu0 0
        %11190 = vmatmul.mubr.bf16.gmra.mrb[0].mxu0 %v10972
        %v11191 = vpop.f32.mrb[0].mxu0
        %v11192 = vadd.f32 0.0, %v11191
        %v11193 = vpop.f32.mrb[0].mxu0
        %v11194 = vpop.f32.mrb[0].mxu0
        %v11195 = vadd.f32 0.0, %v11194
        %v11196 = vpop.f32.mrb[0].mxu0
        %11197 = vdwg.mxu0
        %v11198 = vadd.f32 %v10700, %v11072
        %v11199 = vadd.f32 %v10701, %v11075
        %v11200 = vadd.f32 %v10702, %v11080
        %v11201 = vadd.f32 %v10703, %v11083
        %v11202 = vadd.f32 %v10704, %v11088
        %v11203 = vadd.f32 %v10705, %v11091
        %v11204 = vadd.f32 %v10706, %v11096
        %v11205 = vadd.f32 %v10707, %v11099
        %v11206 = vadd.f32 %v10708, %v11104
        %v11207 = vadd.f32 %v10709, %v11107
        %v11208 = vadd.f32 %v10710, %v11112
        %v11209 = vadd.f32 %v10711, %v11115
        %v11210 = vadd.f32 %v10712, %v11120
        %v11211 = vadd.f32 %v10713, %v11123
        %v11212 = vadd.f32 %v10714, %v11128
        %v11213 = vadd.f32 %v10715, %v11131
        %v11214 = vadd.f32 %v10716, %v11136
        %v11215 = vadd.f32 %v10717, %v11139
        %v11216 = vadd.f32 %v10718, %v11144
        %v11217 = vadd.f32 %v10719, %v11147
        %v11218 = vadd.f32 %v10720, %v11152
        %v11219 = vadd.f32 %v10721, %v11155
        %v11220 = vadd.f32 %v10722, %v11160
        %v11221 = vadd.f32 %v10723, %v11163
        %v11222 = vadd.f32 %v10724, %v11168
        %v11223 = vadd.f32 %v10725, %v11171
        %v11224 = vadd.f32 %v10726, %v11176
        %v11225 = vadd.f32 %v10727, %v11179
        %v11226 = vadd.f32 %v10728, %v11184
        %v11227 = vadd.f32 %v10729, %v11187
        %v11228 = vadd.f32 %v10730, %v11192
        %v11229 = vadd.f32 %v10731, %v11195
        %v11230 = vld [vmem:[%s3 + $0x1] sm:$0x1]
        %v11231 = vlaneseq
        %v11232 = vshrl.u32 %v11231, 7
        %v11233 = vsub.s32 0, %v11232
        %v11234 = vrot.slane %v11230, %v11233
        %v11235 = vadd.f32 %v11198, %v11234
        %v11236 = vadd.f32 %v11199, %v11234
        %v11237 = vadd.f32 %v11200, %v11234
        %v11238 = vadd.f32 %v11201, %v11234
        %v11239 = vadd.f32 %v11202, %v11234
        %v11240 = vadd.f32 %v11203, %v11234
        %v11241 = vadd.f32 %v11204, %v11234
        %v11242 = vadd.f32 %v11205, %v11234
        %v11243 = vadd.f32 %v11206, %v11234
        %v11244 = vadd.f32 %v11207, %v11234
        %v11245 = vadd.f32 %v11208, %v11234
        %v11246 = vadd.f32 %v11209, %v11234
        %v11247 = vadd.f32 %v11210, %v11234
        %v11248 = vadd.f32 %v11211, %v11234
        %v11249 = vadd.f32 %v11212, %v11234
        %v11250 = vadd.f32 %v11213, %v11234
        %v11251 = vadd.f32 %v11214, %v11234
        %v11252 = vadd.f32 %v11215, %v11234
        %v11253 = vadd.f32 %v11216, %v11234
        %v11254 = vadd.f32 %v11217, %v11234
        %v11255 = vadd.f32 %v11218, %v11234
        %v11256 = vadd.f32 %v11219, %v11234
        %v11257 = vadd.f32 %v11220, %v11234
        %v11258 = vadd.f32 %v11221, %v11234
        %v11259 = vadd.f32 %v11222, %v11234
        %v11260 = vadd.f32 %v11223, %v11234
        %v11261 = vadd.f32 %v11224, %v11234
        %v11262 = vadd.f32 %v11225, %v11234
        %v11263 = vadd.f32 %v11226, %v11234
        %v11264 = vadd.f32 %v11227, %v11234
        %v11265 = vadd.f32 %v11228, %v11234
        %v11266 = vadd.f32 %v11229, %v11234
        %v11267 = vadd.f32 %v11235, %v459
        %v11268 = vadd.f32 %v11236, %v460
        %v11269 = vadd.f32 %v11237, %v461
        %v11270 = vadd.f32 %v11238, %v462
        %v11271 = vadd.f32 %v11239, %v463
        %v11272 = vadd.f32 %v11240, %v464
        %v11273 = vadd.f32 %v11241, %v465
        %v11274 = vadd.f32 %v11242, %v466
        %v11275 = vadd.f32 %v11243, %v467
        %v11276 = vadd.f32 %v11244, %v468
        %v11277 = vadd.f32 %v11245, %v469
        %v11278 = vadd.f32 %v11246, %v470
        %v11279 = vadd.f32 %v11247, %v471
        %v11280 = vadd.f32 %v11248, %v472
        %v11281 = vadd.f32 %v11249, %v473
        %v11282 = vadd.f32 %v11250, %v474
        %v11283 = vadd.f32 %v11251, %v475
        %v11284 = vadd.f32 %v11252, %v476
        %v11285 = vadd.f32 %v11253, %v477
        %v11286 = vadd.f32 %v11254, %v478
        %v11287 = vadd.f32 %v11255, %v479
        %v11288 = vadd.f32 %v11256, %v480
        %v11289 = vadd.f32 %v11257, %v481
        %v11290 = vadd.f32 %v11258, %v482
        %v11291 = vadd.f32 %v11259, %v483
        %v11292 = vadd.f32 %v11260, %v484
        %v11293 = vadd.f32 %v11261, %v485
        %v11294 = vadd.f32 %v11262, %v486
        %v11295 = vadd.f32 %v11263, %v487
        %v11296 = vadd.f32 %v11264, %v488
        %v11297 = vadd.f32 %v11265, %v489
        %v11298 = vadd.f32 %v11266, %v490
        %v11299 = vmax.f32 %v11267, 0.0
        %v11300 = vmax.f32 %v11268, 0.0
        %v11301 = vmax.f32 %v11269, 0.0
        %v11302 = vmax.f32 %v11270, 0.0
        %v11303 = vmax.f32 %v11271, 0.0
        %v11304 = vmax.f32 %v11272, 0.0
        %v11305 = vmax.f32 %v11273, 0.0
        %v11306 = vmax.f32 %v11274, 0.0
        %v11307 = vmax.f32 %v11275, 0.0
        %v11308 = vmax.f32 %v11276, 0.0
        %v11309 = vmax.f32 %v11277, 0.0
        %v11310 = vmax.f32 %v11278, 0.0
        %v11311 = vmax.f32 %v11279, 0.0
        %v11312 = vmax.f32 %v11280, 0.0
        %v11313 = vmax.f32 %v11281, 0.0
        %v11314 = vmax.f32 %v11282, 0.0
        %v11315 = vmax.f32 %v11283, 0.0
        %v11316 = vmax.f32 %v11284, 0.0
        %v11317 = vmax.f32 %v11285, 0.0
        %v11318 = vmax.f32 %v11286, 0.0
        %v11319 = vmax.f32 %v11287, 0.0
        %v11320 = vmax.f32 %v11288, 0.0
        %v11321 = vmax.f32 %v11289, 0.0
        %v11322 = vmax.f32 %v11290, 0.0
        %v11323 = vmax.f32 %v11291, 0.0
        %v11324 = vmax.f32 %v11292, 0.0
        %v11325 = vmax.f32 %v11293, 0.0
        %v11326 = vmax.f32 %v11294, 0.0
        %v11327 = vmax.f32 %v11295, 0.0
        %v11328 = vmax.f32 %v11296, 0.0
        %v11329 = vmax.f32 %v11297, 0.0
        %v11330 = vmax.f32 %v11298, 0.0
        %11331 = vst [vmem:[%s244] sm:$0xff] %v11299
        %11332 = vst [vmem:[%s244 + $0x8] sm:$0xff] %v11300
        %11333 = vst [vmem:[%s244 + $0x10] sm:$0xff] %v11301
        %11334 = vst [vmem:[%s244 + $0x18] sm:$0xff] %v11302
        %11335 = vst [vmem:[%s244 + $0x20] sm:$0xff] %v11303
        %11336 = vst [vmem:[%s244 + $0x28] sm:$0xff] %v11304
        %11337 = vst [vmem:[%s244 + $0x30] sm:$0xff] %v11305
        %11338 = vst [vmem:[%s244 + $0x38] sm:$0xff] %v11306
        %11339 = vst [vmem:[%s244 + $0x40] sm:$0xff] %v11307
        %11340 = vst [vmem:[%s244 + $0x48] sm:$0xff] %v11308
        %11341 = vst [vmem:[%s244 + $0x50] sm:$0xff] %v11309
        %11342 = vst [vmem:[%s244 + $0x58] sm:$0xff] %v11310
        %11343 = vst [vmem:[%s244 + $0x60] sm:$0xff] %v11311
        %11344 = vst [vmem:[%s244 + $0x68] sm:$0xff] %v11312
        %11345 = vst [vmem:[%s244 + $0x70] sm:$0xff] %v11313
        %11346 = vst [vmem:[%s244 + $0x78] sm:$0xff] %v11314
        %11347 = vst [vmem:[%s244 + $0x80] sm:$0xff] %v11315
        %11348 = vst [vmem:[%s244 + $0x88] sm:$0xff] %v11316
        %11349 = vst [vmem:[%s244 + $0x90] sm:$0xff] %v11317
        %11350 = vst [vmem:[%s244 + $0x98] sm:$0xff] %v11318
        %11351 = vst [vmem:[%s244 + $0xa0] sm:$0xff] %v11319
        %11352 = vst [vmem:[%s244 + $0xa8] sm:$0xff] %v11320
        %11353 = vst [vmem:[%s244 + $0xb0] sm:$0xff] %v11321
        %11354 = vst [vmem:[%s244 + $0xb8] sm:$0xff] %v11322
        %11355 = vst [vmem:[%s244 + $0xc0] sm:$0xff] %v11323
        %11356 = vst [vmem:[%s244 + $0xc8] sm:$0xff] %v11324
        %11357 = vst [vmem:[%s244 + $0xd0] sm:$0xff] %v11325
        %11358 = vst [vmem:[%s244 + $0xd8] sm:$0xff] %v11326
        %11359 = vst [vmem:[%s244 + $0xe0] sm:$0xff] %v11327
        %11360 = vst [vmem:[%s244 + $0xe8] sm:$0xff] %v11328
        %11361 = vst [vmem:[%s244 + $0xf0] sm:$0xff] %v11329
        %11362 = vst [vmem:[%s244 + $0xf8] sm:$0xff] %v11330
        %s11363 = sand.u32 %s119, 1
        %s11364 = scalar_lea.sflag [#allocation6], %s11363
        %s11365 = sand.u32 %s119, 1
        %s11366 = smul.addr %s11365, 256
        %s11367 = scalar_lea.vmem [#allocation10], %s11366
        // Predicated region
        $region49: #{tpu_custom_call.1} parent=35 // pred_check
          %p11368 = pneg %p129
        $region50: #{tpu_custom_call.1} parent=35 // pred_check_branch
          %11370 = sbr.rel (%p11368) target = $region52
        $region51: #{tpu_custom_call.1} parent=35 // pred_region
          %s11372 = ssub.s32 4096, 4096
          %11373 = vsyncadd %s11364, %s11372
          %s11374 = smul.addr %s22, 32
          %s11375 = smul.addr %s11374, 128
          %s11376 = scalar_lea.hbm %s4, %s11375
          %s11377 = sshll.u32 %s11367, 4
          %s11378 = int_to_ptr.vmem [resolvable:$true] %s11377
          %11383 = dma.vmem_to_hbm [thread:$0]  %s11378, 4096, %s11376, %s11364, 128, 128, 8
        $region52: #{tpu_custom_call.1} parent=35 // pred_fallthru
          _
      $region36: #{tpu_custom_call.1} parent=5 // pred_fallthru
        _
      %p11384 = scmp.le.s32.totalorder 2, %s17
      // Predicated region
      $region53: #{tpu_custom_call.1} parent=5 // pred_check
        %p11385 = pneg %p11384
      $region54: #{tpu_custom_call.1} parent=5 // pred_check_branch
        %11387 = sbr.rel (%p11385) target = $region56
      $region55: #{tpu_custom_call.1} parent=5 // pred_region
        %s11388 = ssub.s32 %s17, 2
        // Predicated region
        $region57: #{tpu_custom_call.1} parent=55 // pred_check
          %p11389 = pneg %p135
        $region58: #{tpu_custom_call.1} parent=55 // pred_check_branch
          %11391 = sbr.rel (%p11389) target = $region60
        $region59: #{tpu_custom_call.1} parent=55 // pred_region
          %s11392 = sand.u32 %s120, 1
          %s11393 = scalar_lea.sflag [#allocation6], %s11392
          %s11394 = sand.u32 %s120, 1
          %s11395 = smul.addr %s11394, 256
          %s11396 = scalar_lea.vmem [#allocation10], %s11395
          %11397 = dma.done %s11393, 4096
        $region60: #{tpu_custom_call.1} parent=55 // pred_fallthru
          _
      $region56: #{tpu_custom_call.1} parent=5 // pred_fallthru
        _
    $region6: #{tpu_custom_call.1} parent=1 // loop_footer
      %s21 = sadd.s32 1, %s17
    $region7: #{tpu_custom_call.1} parent=1 // loop_footer_branch
      %16 = sbr.rel target = $region3
    $region8: #{tpu_custom_call.1} parent=1 // loop_exit
      _
    %11398 = vsyncpa [#allocation5], 1
    %s11399 = scalar_lea.sflag [#allocation5], 1
    %11400 = vsyncpa %s11399, 1
    %11401 = vsyncpa [#allocation8], 1
    %11402 = vsyncpa [#allocation6], 1
    %s11403 = scalar_lea.sflag [#allocation6], 1
    %11404 = vsyncpa %s11403, 1

</llo_original>
